<compile_context>
chip_gen: v5e
topology: v5e:2x2
jax: 0.10.0
libtpu: 0.0.40
codegen_flags: <defaults>
</compile_context>

<pallas_src>
import math

import jax
import jax.numpy as jnp
from jax.experimental import pallas as pl
from jax.experimental.pallas import tpu as pltpu

K = 5                    # conv kernel size of every layer
N_LAYERS = 4
ROW_STRIDE = 128         # lane stride of one image row -> kh taps are vreg-aligned
SHRINK = 5 * ROW_STRIDE  # lane width dropped per layer (>= (K-1)*(ROW_STRIDE+1), mult of 128)
TAIL = N_LAYERS * (SHRINK - (K - 1) * ROW_STRIDE)  # zero tail so layer 4 keeps all valid lanes
BIAS_ROWS = 32           # sublane-padded bias pack (max Cout_pad = 32)


def _round_up(x, m):
    return (x + m - 1) // m * m


def decoder_ca_pallas(x_nchw, params):
    """x_nchw: (N, ndims, H, W) f32. Returns NCHW (N, 1, H-16, W-16) f32."""
    n_batch, cin, H, W = x_nchw.shape
    assert H >= 4 * N_LAYERS + 1 and 4 * N_LAYERS + 1 <= W <= ROW_STRIDE

    couts = [w.shape[-1] for w, _ in params]
    cins = [cin] + couts[:-1]
    cin_pads = [_round_up(c, 8) for c in cins]     # sublane-aligned stacking
    cout_pads = [_round_up(c, 8) for c in couts]

    # Batch packed into lanes: `ipg` images per 128-lane row group, extra images
    # in further H x ROW_STRIDE row blocks.  One grid step for everything.
    ipg = max(1, ROW_STRIDE // W)                  # images per row group
    n_rb = -(-n_batch // ipg)                      # row blocks
    widths = [n_rb * H * ROW_STRIDE + TAIL - l * SHRINK for l in range(N_LAYERS + 1)]

    # Lane-dense weight/bias packing (wrapper-side layout plumbing, zero kernel cost):
    #   wp[l][kh, co, kw*Cin_pad + ci] = w[kh, kw, ci, co], zeros in padded rows/cols.
    w_packs = []
    b_pack = jnp.zeros((BIAS_ROWS, N_LAYERS), jnp.float32)
    for l, (w, b) in enumerate(params):
        co, ci = couts[l], cins[l]
        wp4 = jnp.zeros((K, cout_pads[l], K, cin_pads[l]), jnp.float32)
        wp4 = wp4.at[:, :co, :, :ci].set(jnp.transpose(w, (0, 3, 1, 2)))  # (kh,co,kw,ci)
        w_packs.append(wp4.reshape(K, cout_pads[l], K * cin_pads[l]))
        b_pack = b_pack.at[:co, l].set(b)

    # Input slab (Cin_pad, L0): flat lane = row*128 + col, image i placed at
    # (row block * H, (i % ipg) * W); zeros elsewhere keep garbage lanes finite.
    slab = jnp.zeros((cin_pads[0], n_rb * H, ROW_STRIDE), jnp.float32)
    for i in range(n_batch):
        r, c = divmod(i, ipg)
        slab = slab.at[:cin, r * H:(r + 1) * H, c * W:(c + 1) * W].set(
            x_nchw[i].astype(jnp.float32))
    x_slab = jnp.pad(slab.reshape(cin_pads[0], n_rb * H * ROW_STRIDE),
                     ((0, 0), (0, widths[0] - n_rb * H * ROW_STRIDE)))

    def kernel(x_ref, w1_ref, w2_ref, w3_ref, w4_ref, b_ref, o_ref):
        w_refs = (w1_ref, w2_ref, w3_ref, w4_ref)
        b_all = b_ref[...]                                    # (32, 4)
        h = x_ref[...]                                        # (Cin_pad0, L0)
        for l in range(N_LAYERS):
            l_in, l_out = widths[l], widths[l + 1]
            l_mid = l_in - ROW_STRIDE
            cp_out = cout_pads[l]
            # Single sublane-aligned stack of the 5 kw-shifted activations:
            #   r_stack[kw*Cin_pad + c, j] = h[c, j + kw]
            r_stack = jnp.concatenate([h[:, kw:kw + l_mid] for kw in range(K)],
                                      axis=0)                 # (K*Cin_pad, l_mid)
            # 5 fused matmuls (one per kh); RHS = vreg-aligned lane slice of the stack.
            acc = jnp.dot(w_refs[l][0], r_stack[:, :l_out],
                          preferred_element_type=jnp.float32)
            for kh in range(1, K):
                acc = acc + jnp.dot(
                    w_refs[l][kh],
                    r_stack[:, kh * ROW_STRIDE:kh * ROW_STRIDE + l_out],
                    preferred_element_type=jnp.float32)
            h = jnp.maximum(acc + b_all[:cp_out, l:l + 1], 0.0)  # (Cout_pad, l_out)
        o_ref[...] = h                                        # lane-dense (8, L4) store

    out_slab = pl.pallas_call(
        kernel,
        out_shape=jax.ShapeDtypeStruct((cout_pads[-1], widths[-1]), jnp.float32),
        grid=(1,),
        in_specs=(
            [pl.BlockSpec((cin_pads[0], widths[0]), lambda i: (0, 0))]
            + [pl.BlockSpec(wp.shape, lambda i: (0, 0, 0)) for wp in w_packs]
            + [pl.BlockSpec(b_pack.shape, lambda i: (0, 0))]),
        out_specs=pl.BlockSpec((cout_pads[-1], widths[-1]), lambda i: (0, 0)),
        compiler_params=pltpu.CompilerParams(
            dimension_semantics=("arbitrary",)),
    )(x_slab, *w_packs, b_pack)

    # Lane-dense slab -> NCHW.
    Ho, Wo = H - 4 * N_LAYERS, W - 4 * N_LAYERS
    rows = out_slab[0].reshape(widths[-1] // ROW_STRIDE, ROW_STRIDE)
    imgs = []
    for i in range(n_batch):
        r, c = divmod(i, ipg)
        imgs.append(rows[r * H:r * H + Ho, c * W:c * W + Wo])
    return jnp.stack(imgs)[:, None, :, :]


# ---------------- deterministic parameter init (PyTorch-like fan-in) ---------

def _init_conv(key, cin, cout, k=K):
    kw_, kb_ = jax.random.split(key)
    bound = 1.0 / math.sqrt(cin * k * k)
    w = jax.random.uniform(kw_, (k, k, cin, cout), jnp.float32, -bound, bound)
    b = jax.random.uniform(kb_, (cout,), jnp.float32, -bound, bound)
    return w, b


def make_params(key, ndims=1):
    k1, k2, k3, k4 = jax.random.split(key, 4)
    return (
        _init_conv(k1, ndims, 5),
        _init_conv(k2, 5, 15),
        _init_conv(k3, 15, 25),
        _init_conv(k4, 25, 1),
    )


# ---------------- pure-JAX reference for validation --------------------------

def decoder_ca_ref(x_nchw, params):
    h = x_nchw
    for w, b in params:
        h = jax.lax.conv_general_dilated(
            h, w, window_strides=(1, 1), padding="VALID",
            dimension_numbers=("NCHW", "HWIO", "NCHW"),
            precision=jax.lax.Precision.HIGHEST)
        h = jnp.maximum(h + b[None, :, None, None], 0.0)
    return h


if __name__ == "__main__":
    key = jax.random.PRNGKey(0)
    kx, kp = jax.random.split(key)

    ndims = 1
    N, H, W = 2, 24, 24                  # rec_field = 17, so 24x24 -> 8x8 output
    x_nchw = jax.random.normal(kx, (N, ndims, H, W), jnp.float32)
    params = make_params(kp, ndims=ndims)

    out = jax.jit(decoder_ca_pallas)(x_nchw, params)
    out = jax.block_until_ready(out)

    ref = decoder_ca_ref(x_nchw, params)
    assert out.shape == (N, 1, H - 16, W - 16), out.shape
    max_err = float(jnp.max(jnp.abs(out - ref)))
    assert jnp.allclose(out, ref, atol=2e-2, rtol=1e-2), max_err

    print("KERNEL_OK")
</pallas_src>

<mosaic_0001>
module attributes {stable_mosaic.version = 11 : i64} {
  func.func @kernel(%arg0: i32, %arg1: memref<8x3584xf32, #tpu.memory_space<vmem>>, %arg2: memref<5x8x40xf32, #tpu.memory_space<vmem>>, %arg3: memref<5x16x40xf32, #tpu.memory_space<vmem>>, %arg4: memref<5x32x80xf32, #tpu.memory_space<vmem>>, %arg5: memref<5x8x160xf32, #tpu.memory_space<vmem>>, %arg6: memref<32x4xf32, #tpu.memory_space<vmem>>, %arg7: memref<8x1024xf32, #tpu.memory_space<vmem>>) attributes {dimension_semantics = [#tpu.dimension_semantics<arbitrary>], iteration_bounds = array<i64: 1>, scalar_prefetch = 0 : i64, scratch_operands = 0 : i64, tpu.core_type = #tpu.core_type<tc>, window_params = [{pipeline_mode = #tpu.pipeline_mode<synchronous>, transform_indices = @transform_0, window_bounds = array<i64: 8, 3584>}, {pipeline_mode = #tpu.pipeline_mode<synchronous>, transform_indices = @transform_1, window_bounds = array<i64: 5, 8, 40>}, {pipeline_mode = #tpu.pipeline_mode<synchronous>, transform_indices = @transform_2, window_bounds = array<i64: 5, 16, 40>}, {pipeline_mode = #tpu.pipeline_mode<synchronous>, transform_indices = @transform_3, window_bounds = array<i64: 5, 32, 80>}, {pipeline_mode = #tpu.pipeline_mode<synchronous>, transform_indices = @transform_4, window_bounds = array<i64: 5, 8, 160>}, {pipeline_mode = #tpu.pipeline_mode<synchronous>, transform_indices = @transform_5, window_bounds = array<i64: 32, 4>}, {pipeline_mode = #tpu.pipeline_mode<synchronous>, transform_indices = @transform_6, window_bounds = array<i64: 8, 1024>}]} {
    %c0 = arith.constant 0 : index
    %c0_0 = arith.constant 0 : index
    %0 = vector.load %arg6[%c0, %c0_0] : memref<32x4xf32, #tpu.memory_space<vmem>>, vector<32x4xf32>
    %c0_1 = arith.constant 0 : index
    %c0_2 = arith.constant 0 : index
    %1 = vector.load %arg1[%c0_1, %c0_2] : memref<8x3584xf32, #tpu.memory_space<vmem>>, vector<8x3584xf32>
    %2 = vector.extract_strided_slice %1 {offsets = [0, 0], sizes = [8, 3456], strides = [1, 1]} : vector<8x3584xf32> to vector<8x3456xf32>
    %3 = vector.extract_strided_slice %1 {offsets = [0, 1], sizes = [8, 3456], strides = [1, 1]} : vector<8x3584xf32> to vector<8x3456xf32>
    %4 = vector.extract_strided_slice %1 {offsets = [0, 2], sizes = [8, 3456], strides = [1, 1]} : vector<8x3584xf32> to vector<8x3456xf32>
    %5 = vector.extract_strided_slice %1 {offsets = [0, 3], sizes = [8, 3456], strides = [1, 1]} : vector<8x3584xf32> to vector<8x3456xf32>
    %6 = vector.extract_strided_slice %1 {offsets = [0, 4], sizes = [8, 3456], strides = [1, 1]} : vector<8x3584xf32> to vector<8x3456xf32>
    %7 = tpu.concatenate %2, %3, %4, %5, %6 in 0 : vector<8x3456xf32>, vector<8x3456xf32>, vector<8x3456xf32>, vector<8x3456xf32>, vector<8x3456xf32> -> vector<40x3456xf32>
    %c0_3 = arith.constant 0 : index
    %c0_4 = arith.constant 0 : index
    %c0_5 = arith.constant 0 : index
    %8 = vector.load %arg2[%c0_3, %c0_4, %c0_5] : memref<5x8x40xf32, #tpu.memory_space<vmem>>, vector<1x8x40xf32>
    %9 = vector.shape_cast %8 : vector<1x8x40xf32> to vector<8x40xf32>
    %10 = vector.extract_strided_slice %7 {offsets = [0, 0], sizes = [40, 2944], strides = [1, 1]} : vector<40x3456xf32> to vector<40x2944xf32>
    %cst = arith.constant dense<0.000000e+00> : vector<8x2944xf32>
    %11 = tpu.matmul %9, %10, %cst {dimension_numbers = #tpu.dot_dimension_numbers<[1], [0], [0], [1], [0, 0, 1, 1], [], []>} : vector<8x40xf32>, vector<40x2944xf32>, vector<8x2944xf32> -> vector<8x2944xf32>
    %c1 = arith.constant 1 : index
    %c0_6 = arith.constant 0 : index
    %c0_7 = arith.constant 0 : index
    %12 = vector.load %arg2[%c1, %c0_6, %c0_7] : memref<5x8x40xf32, #tpu.memory_space<vmem>>, vector<1x8x40xf32>
    %13 = vector.shape_cast %12 : vector<1x8x40xf32> to vector<8x40xf32>
    %14 = vector.extract_strided_slice %7 {offsets = [0, 128], sizes = [40, 2944], strides = [1, 1]} : vector<40x3456xf32> to vector<40x2944xf32>
    %cst_8 = arith.constant dense<0.000000e+00> : vector<8x2944xf32>
    %15 = tpu.matmul %13, %14, %cst_8 {dimension_numbers = #tpu.dot_dimension_numbers<[1], [0], [0], [1], [0, 0, 1, 1], [], []>} : vector<8x40xf32>, vector<40x2944xf32>, vector<8x2944xf32> -> vector<8x2944xf32>
    %16 = arith.addf %11, %15 : vector<8x2944xf32>
    %c2 = arith.constant 2 : index
    %c0_9 = arith.constant 0 : index
    %c0_10 = arith.constant 0 : index
    %17 = vector.load %arg2[%c2, %c0_9, %c0_10] : memref<5x8x40xf32, #tpu.memory_space<vmem>>, vector<1x8x40xf32>
    %18 = vector.shape_cast %17 : vector<1x8x40xf32> to vector<8x40xf32>
    %19 = vector.extract_strided_slice %7 {offsets = [0, 256], sizes = [40, 2944], strides = [1, 1]} : vector<40x3456xf32> to vector<40x2944xf32>
    %cst_11 = arith.constant dense<0.000000e+00> : vector<8x2944xf32>
    %20 = tpu.matmul %18, %19, %cst_11 {dimension_numbers = #tpu.dot_dimension_numbers<[1], [0], [0], [1], [0, 0, 1, 1], [], []>} : vector<8x40xf32>, vector<40x2944xf32>, vector<8x2944xf32> -> vector<8x2944xf32>
    %21 = arith.addf %16, %20 : vector<8x2944xf32>
    %c3 = arith.constant 3 : index
    %c0_12 = arith.constant 0 : index
    %c0_13 = arith.constant 0 : index
    %22 = vector.load %arg2[%c3, %c0_12, %c0_13] : memref<5x8x40xf32, #tpu.memory_space<vmem>>, vector<1x8x40xf32>
    %23 = vector.shape_cast %22 : vector<1x8x40xf32> to vector<8x40xf32>
    %24 = vector.extract_strided_slice %7 {offsets = [0, 384], sizes = [40, 2944], strides = [1, 1]} : vector<40x3456xf32> to vector<40x2944xf32>
    %cst_14 = arith.constant dense<0.000000e+00> : vector<8x2944xf32>
    %25 = tpu.matmul %23, %24, %cst_14 {dimension_numbers = #tpu.dot_dimension_numbers<[1], [0], [0], [1], [0, 0, 1, 1], [], []>} : vector<8x40xf32>, vector<40x2944xf32>, vector<8x2944xf32> -> vector<8x2944xf32>
    %26 = arith.addf %21, %25 : vector<8x2944xf32>
    %c4 = arith.constant 4 : index
    %c0_15 = arith.constant 0 : index
    %c0_16 = arith.constant 0 : index
    %27 = vector.load %arg2[%c4, %c0_15, %c0_16] : memref<5x8x40xf32, #tpu.memory_space<vmem>>, vector<1x8x40xf32>
    %28 = vector.shape_cast %27 : vector<1x8x40xf32> to vector<8x40xf32>
    %29 = vector.extract_strided_slice %7 {offsets = [0, 512], sizes = [40, 2944], strides = [1, 1]} : vector<40x3456xf32> to vector<40x2944xf32>
    %cst_17 = arith.constant dense<0.000000e+00> : vector<8x2944xf32>
    %30 = tpu.matmul %28, %29, %cst_17 {dimension_numbers = #tpu.dot_dimension_numbers<[1], [0], [0], [1], [0, 0, 1, 1], [], []>} : vector<8x40xf32>, vector<40x2944xf32>, vector<8x2944xf32> -> vector<8x2944xf32>
    %31 = arith.addf %26, %30 : vector<8x2944xf32>
    %32 = vector.extract_strided_slice %0 {offsets = [0, 0], sizes = [8, 1], strides = [1, 1]} : vector<32x4xf32> to vector<8x1xf32>
    %33 = vector.broadcast %32 : vector<8x1xf32> to vector<8x2944xf32>
    %34 = arith.addf %31, %33 : vector<8x2944xf32>
    %cst_18 = arith.constant 0.000000e+00 : f32
    %35 = vector.broadcast %cst_18 : f32 to vector<8x2944xf32>
    %36 = arith.maximumf %34, %35 : vector<8x2944xf32>
    %37 = vector.extract_strided_slice %36 {offsets = [0, 0], sizes = [8, 2816], strides = [1, 1]} : vector<8x2944xf32> to vector<8x2816xf32>
    %38 = vector.extract_strided_slice %36 {offsets = [0, 1], sizes = [8, 2816], strides = [1, 1]} : vector<8x2944xf32> to vector<8x2816xf32>
    %39 = vector.extract_strided_slice %36 {offsets = [0, 2], sizes = [8, 2816], strides = [1, 1]} : vector<8x2944xf32> to vector<8x2816xf32>
    %40 = vector.extract_strided_slice %36 {offsets = [0, 3], sizes = [8, 2816], strides = [1, 1]} : vector<8x2944xf32> to vector<8x2816xf32>
    %41 = vector.extract_strided_slice %36 {offsets = [0, 4], sizes = [8, 2816], strides = [1, 1]} : vector<8x2944xf32> to vector<8x2816xf32>
    %42 = tpu.concatenate %37, %38, %39, %40, %41 in 0 : vector<8x2816xf32>, vector<8x2816xf32>, vector<8x2816xf32>, vector<8x2816xf32>, vector<8x2816xf32> -> vector<40x2816xf32>
    %c0_19 = arith.constant 0 : index
    %c0_20 = arith.constant 0 : index
    %c0_21 = arith.constant 0 : index
    %43 = vector.load %arg3[%c0_19, %c0_20, %c0_21] : memref<5x16x40xf32, #tpu.memory_space<vmem>>, vector<1x16x40xf32>
    %44 = vector.shape_cast %43 : vector<1x16x40xf32> to vector<16x40xf32>
    %45 = vector.extract_strided_slice %42 {offsets = [0, 0], sizes = [40, 2304], strides = [1, 1]} : vector<40x2816xf32> to vector<40x2304xf32>
    %cst_22 = arith.constant dense<0.000000e+00> : vector<16x2304xf32>
    %46 = tpu.matmul %44, %45, %cst_22 {dimension_numbers = #tpu.dot_dimension_numbers<[1], [0], [0], [1], [0, 0, 1, 1], [], []>} : vector<16x40xf32>, vector<40x2304xf32>, vector<16x2304xf32> -> vector<16x2304xf32>
    %c1_23 = arith.constant 1 : index
    %c0_24 = arith.constant 0 : index
    %c0_25 = arith.constant 0 : index
    %47 = vector.load %arg3[%c1_23, %c0_24, %c0_25] : memref<5x16x40xf32, #tpu.memory_space<vmem>>, vector<1x16x40xf32>
    %48 = vector.shape_cast %47 : vector<1x16x40xf32> to vector<16x40xf32>
    %49 = vector.extract_strided_slice %42 {offsets = [0, 128], sizes = [40, 2304], strides = [1, 1]} : vector<40x2816xf32> to vector<40x2304xf32>
    %cst_26 = arith.constant dense<0.000000e+00> : vector<16x2304xf32>
    %50 = tpu.matmul %48, %49, %cst_26 {dimension_numbers = #tpu.dot_dimension_numbers<[1], [0], [0], [1], [0, 0, 1, 1], [], []>} : vector<16x40xf32>, vector<40x2304xf32>, vector<16x2304xf32> -> vector<16x2304xf32>
    %51 = arith.addf %46, %50 : vector<16x2304xf32>
    %c2_27 = arith.constant 2 : index
    %c0_28 = arith.constant 0 : index
    %c0_29 = arith.constant 0 : index
    %52 = vector.load %arg3[%c2_27, %c0_28, %c0_29] : memref<5x16x40xf32, #tpu.memory_space<vmem>>, vector<1x16x40xf32>
    %53 = vector.shape_cast %52 : vector<1x16x40xf32> to vector<16x40xf32>
    %54 = vector.extract_strided_slice %42 {offsets = [0, 256], sizes = [40, 2304], strides = [1, 1]} : vector<40x2816xf32> to vector<40x2304xf32>
    %cst_30 = arith.constant dense<0.000000e+00> : vector<16x2304xf32>
    %55 = tpu.matmul %53, %54, %cst_30 {dimension_numbers = #tpu.dot_dimension_numbers<[1], [0], [0], [1], [0, 0, 1, 1], [], []>} : vector<16x40xf32>, vector<40x2304xf32>, vector<16x2304xf32> -> vector<16x2304xf32>
    %56 = arith.addf %51, %55 : vector<16x2304xf32>
    %c3_31 = arith.constant 3 : index
    %c0_32 = arith.constant 0 : index
    %c0_33 = arith.constant 0 : index
    %57 = vector.load %arg3[%c3_31, %c0_32, %c0_33] : memref<5x16x40xf32, #tpu.memory_space<vmem>>, vector<1x16x40xf32>
    %58 = vector.shape_cast %57 : vector<1x16x40xf32> to vector<16x40xf32>
    %59 = vector.extract_strided_slice %42 {offsets = [0, 384], sizes = [40, 2304], strides = [1, 1]} : vector<40x2816xf32> to vector<40x2304xf32>
    %cst_34 = arith.constant dense<0.000000e+00> : vector<16x2304xf32>
    %60 = tpu.matmul %58, %59, %cst_34 {dimension_numbers = #tpu.dot_dimension_numbers<[1], [0], [0], [1], [0, 0, 1, 1], [], []>} : vector<16x40xf32>, vector<40x2304xf32>, vector<16x2304xf32> -> vector<16x2304xf32>
    %61 = arith.addf %56, %60 : vector<16x2304xf32>
    %c4_35 = arith.constant 4 : index
    %c0_36 = arith.constant 0 : index
    %c0_37 = arith.constant 0 : index
    %62 = vector.load %arg3[%c4_35, %c0_36, %c0_37] : memref<5x16x40xf32, #tpu.memory_space<vmem>>, vector<1x16x40xf32>
    %63 = vector.shape_cast %62 : vector<1x16x40xf32> to vector<16x40xf32>
    %64 = vector.extract_strided_slice %42 {offsets = [0, 512], sizes = [40, 2304], strides = [1, 1]} : vector<40x2816xf32> to vector<40x2304xf32>
    %cst_38 = arith.constant dense<0.000000e+00> : vector<16x2304xf32>
    %65 = tpu.matmul %63, %64, %cst_38 {dimension_numbers = #tpu.dot_dimension_numbers<[1], [0], [0], [1], [0, 0, 1, 1], [], []>} : vector<16x40xf32>, vector<40x2304xf32>, vector<16x2304xf32> -> vector<16x2304xf32>
    %66 = arith.addf %61, %65 : vector<16x2304xf32>
    %67 = vector.extract_strided_slice %0 {offsets = [0, 1], sizes = [16, 1], strides = [1, 1]} : vector<32x4xf32> to vector<16x1xf32>
    %68 = vector.broadcast %67 : vector<16x1xf32> to vector<16x2304xf32>
    %69 = arith.addf %66, %68 : vector<16x2304xf32>
    %cst_39 = arith.constant 0.000000e+00 : f32
    %70 = vector.broadcast %cst_39 : f32 to vector<16x2304xf32>
    %71 = arith.maximumf %69, %70 : vector<16x2304xf32>
    %72 = vector.extract_strided_slice %71 {offsets = [0, 0], sizes = [16, 2176], strides = [1, 1]} : vector<16x2304xf32> to vector<16x2176xf32>
    %73 = vector.extract_strided_slice %71 {offsets = [0, 1], sizes = [16, 2176], strides = [1, 1]} : vector<16x2304xf32> to vector<16x2176xf32>
    %74 = vector.extract_strided_slice %71 {offsets = [0, 2], sizes = [16, 2176], strides = [1, 1]} : vector<16x2304xf32> to vector<16x2176xf32>
    %75 = vector.extract_strided_slice %71 {offsets = [0, 3], sizes = [16, 2176], strides = [1, 1]} : vector<16x2304xf32> to vector<16x2176xf32>
    %76 = vector.extract_strided_slice %71 {offsets = [0, 4], sizes = [16, 2176], strides = [1, 1]} : vector<16x2304xf32> to vector<16x2176xf32>
    %77 = tpu.concatenate %72, %73, %74, %75, %76 in 0 : vector<16x2176xf32>, vector<16x2176xf32>, vector<16x2176xf32>, vector<16x2176xf32>, vector<16x2176xf32> -> vector<80x2176xf32>
    %c0_40 = arith.constant 0 : index
    %c0_41 = arith.constant 0 : index
    %c0_42 = arith.constant 0 : index
    %78 = vector.load %arg4[%c0_40, %c0_41, %c0_42] : memref<5x32x80xf32, #tpu.memory_space<vmem>>, vector<1x32x80xf32>
    %79 = vector.shape_cast %78 : vector<1x32x80xf32> to vector<32x80xf32>
    %80 = vector.extract_strided_slice %77 {offsets = [0, 0], sizes = [80, 1664], strides = [1, 1]} : vector<80x2176xf32> to vector<80x1664xf32>
    %cst_43 = arith.constant dense<0.000000e+00> : vector<32x1664xf32>
    %81 = tpu.matmul %79, %80, %cst_43 {dimension_numbers = #tpu.dot_dimension_numbers<[1], [0], [0], [1], [0, 0, 1, 1], [], []>} : vector<32x80xf32>, vector<80x1664xf32>, vector<32x1664xf32> -> vector<32x1664xf32>
    %c1_44 = arith.constant 1 : index
    %c0_45 = arith.constant 0 : index
    %c0_46 = arith.constant 0 : index
    %82 = vector.load %arg4[%c1_44, %c0_45, %c0_46] : memref<5x32x80xf32, #tpu.memory_space<vmem>>, vector<1x32x80xf32>
    %83 = vector.shape_cast %82 : vector<1x32x80xf32> to vector<32x80xf32>
    %84 = vector.extract_strided_slice %77 {offsets = [0, 128], sizes = [80, 1664], strides = [1, 1]} : vector<80x2176xf32> to vector<80x1664xf32>
    %cst_47 = arith.constant dense<0.000000e+00> : vector<32x1664xf32>
    %85 = tpu.matmul %83, %84, %cst_47 {dimension_numbers = #tpu.dot_dimension_numbers<[1], [0], [0], [1], [0, 0, 1, 1], [], []>} : vector<32x80xf32>, vector<80x1664xf32>, vector<32x1664xf32> -> vector<32x1664xf32>
    %86 = arith.addf %81, %85 : vector<32x1664xf32>
    %c2_48 = arith.constant 2 : index
    %c0_49 = arith.constant 0 : index
    %c0_50 = arith.constant 0 : index
    %87 = vector.load %arg4[%c2_48, %c0_49, %c0_50] : memref<5x32x80xf32, #tpu.memory_space<vmem>>, vector<1x32x80xf32>
    %88 = vector.shape_cast %87 : vector<1x32x80xf32> to vector<32x80xf32>
    %89 = vector.extract_strided_slice %77 {offsets = [0, 256], sizes = [80, 1664], strides = [1, 1]} : vector<80x2176xf32> to vector<80x1664xf32>
    %cst_51 = arith.constant dense<0.000000e+00> : vector<32x1664xf32>
    %90 = tpu.matmul %88, %89, %cst_51 {dimension_numbers = #tpu.dot_dimension_numbers<[1], [0], [0], [1], [0, 0, 1, 1], [], []>} : vector<32x80xf32>, vector<80x1664xf32>, vector<32x1664xf32> -> vector<32x1664xf32>
    %91 = arith.addf %86, %90 : vector<32x1664xf32>
    %c3_52 = arith.constant 3 : index
    %c0_53 = arith.constant 0 : index
    %c0_54 = arith.constant 0 : index
    %92 = vector.load %arg4[%c3_52, %c0_53, %c0_54] : memref<5x32x80xf32, #tpu.memory_space<vmem>>, vector<1x32x80xf32>
    %93 = vector.shape_cast %92 : vector<1x32x80xf32> to vector<32x80xf32>
    %94 = vector.extract_strided_slice %77 {offsets = [0, 384], sizes = [80, 1664], strides = [1, 1]} : vector<80x2176xf32> to vector<80x1664xf32>
    %cst_55 = arith.constant dense<0.000000e+00> : vector<32x1664xf32>
    %95 = tpu.matmul %93, %94, %cst_55 {dimension_numbers = #tpu.dot_dimension_numbers<[1], [0], [0], [1], [0, 0, 1, 1], [], []>} : vector<32x80xf32>, vector<80x1664xf32>, vector<32x1664xf32> -> vector<32x1664xf32>
    %96 = arith.addf %91, %95 : vector<32x1664xf32>
    %c4_56 = arith.constant 4 : index
    %c0_57 = arith.constant 0 : index
    %c0_58 = arith.constant 0 : index
    %97 = vector.load %arg4[%c4_56, %c0_57, %c0_58] : memref<5x32x80xf32, #tpu.memory_space<vmem>>, vector<1x32x80xf32>
    %98 = vector.shape_cast %97 : vector<1x32x80xf32> to vector<32x80xf32>
    %99 = vector.extract_strided_slice %77 {offsets = [0, 512], sizes = [80, 1664], strides = [1, 1]} : vector<80x2176xf32> to vector<80x1664xf32>
    %cst_59 = arith.constant dense<0.000000e+00> : vector<32x1664xf32>
    %100 = tpu.matmul %98, %99, %cst_59 {dimension_numbers = #tpu.dot_dimension_numbers<[1], [0], [0], [1], [0, 0, 1, 1], [], []>} : vector<32x80xf32>, vector<80x1664xf32>, vector<32x1664xf32> -> vector<32x1664xf32>
    %101 = arith.addf %96, %100 : vector<32x1664xf32>
    %102 = vector.extract_strided_slice %0 {offsets = [0, 2], sizes = [32, 1], strides = [1, 1]} : vector<32x4xf32> to vector<32x1xf32>
    %103 = vector.broadcast %102 : vector<32x1xf32> to vector<32x1664xf32>
    %104 = arith.addf %101, %103 : vector<32x1664xf32>
    %cst_60 = arith.constant 0.000000e+00 : f32
    %105 = vector.broadcast %cst_60 : f32 to vector<32x1664xf32>
    %106 = arith.maximumf %104, %105 : vector<32x1664xf32>
    %107 = vector.extract_strided_slice %106 {offsets = [0, 0], sizes = [32, 1536], strides = [1, 1]} : vector<32x1664xf32> to vector<32x1536xf32>
    %108 = vector.extract_strided_slice %106 {offsets = [0, 1], sizes = [32, 1536], strides = [1, 1]} : vector<32x1664xf32> to vector<32x1536xf32>
    %109 = vector.extract_strided_slice %106 {offsets = [0, 2], sizes = [32, 1536], strides = [1, 1]} : vector<32x1664xf32> to vector<32x1536xf32>
    %110 = vector.extract_strided_slice %106 {offsets = [0, 3], sizes = [32, 1536], strides = [1, 1]} : vector<32x1664xf32> to vector<32x1536xf32>
    %111 = vector.extract_strided_slice %106 {offsets = [0, 4], sizes = [32, 1536], strides = [1, 1]} : vector<32x1664xf32> to vector<32x1536xf32>
    %112 = tpu.concatenate %107, %108, %109, %110, %111 in 0 : vector<32x1536xf32>, vector<32x1536xf32>, vector<32x1536xf32>, vector<32x1536xf32>, vector<32x1536xf32> -> vector<160x1536xf32>
    %c0_61 = arith.constant 0 : index
    %c0_62 = arith.constant 0 : index
    %c0_63 = arith.constant 0 : index
    %113 = vector.load %arg5[%c0_61, %c0_62, %c0_63] : memref<5x8x160xf32, #tpu.memory_space<vmem>>, vector<1x8x160xf32>
    %114 = vector.shape_cast %113 : vector<1x8x160xf32> to vector<8x160xf32>
    %115 = vector.extract_strided_slice %112 {offsets = [0, 0], sizes = [160, 1024], strides = [1, 1]} : vector<160x1536xf32> to vector<160x1024xf32>
    %cst_64 = arith.constant dense<0.000000e+00> : vector<8x1024xf32>
    %116 = tpu.matmul %114, %115, %cst_64 {dimension_numbers = #tpu.dot_dimension_numbers<[1], [0], [0], [1], [0, 0, 1, 1], [], []>} : vector<8x160xf32>, vector<160x1024xf32>, vector<8x1024xf32> -> vector<8x1024xf32>
    %c1_65 = arith.constant 1 : index
    %c0_66 = arith.constant 0 : index
    %c0_67 = arith.constant 0 : index
    %117 = vector.load %arg5[%c1_65, %c0_66, %c0_67] : memref<5x8x160xf32, #tpu.memory_space<vmem>>, vector<1x8x160xf32>
    %118 = vector.shape_cast %117 : vector<1x8x160xf32> to vector<8x160xf32>
    %119 = vector.extract_strided_slice %112 {offsets = [0, 128], sizes = [160, 1024], strides = [1, 1]} : vector<160x1536xf32> to vector<160x1024xf32>
    %cst_68 = arith.constant dense<0.000000e+00> : vector<8x1024xf32>
    %120 = tpu.matmul %118, %119, %cst_68 {dimension_numbers = #tpu.dot_dimension_numbers<[1], [0], [0], [1], [0, 0, 1, 1], [], []>} : vector<8x160xf32>, vector<160x1024xf32>, vector<8x1024xf32> -> vector<8x1024xf32>
    %121 = arith.addf %116, %120 : vector<8x1024xf32>
    %c2_69 = arith.constant 2 : index
    %c0_70 = arith.constant 0 : index
    %c0_71 = arith.constant 0 : index
    %122 = vector.load %arg5[%c2_69, %c0_70, %c0_71] : memref<5x8x160xf32, #tpu.memory_space<vmem>>, vector<1x8x160xf32>
    %123 = vector.shape_cast %122 : vector<1x8x160xf32> to vector<8x160xf32>
    %124 = vector.extract_strided_slice %112 {offsets = [0, 256], sizes = [160, 1024], strides = [1, 1]} : vector<160x1536xf32> to vector<160x1024xf32>
    %cst_72 = arith.constant dense<0.000000e+00> : vector<8x1024xf32>
    %125 = tpu.matmul %123, %124, %cst_72 {dimension_numbers = #tpu.dot_dimension_numbers<[1], [0], [0], [1], [0, 0, 1, 1], [], []>} : vector<8x160xf32>, vector<160x1024xf32>, vector<8x1024xf32> -> vector<8x1024xf32>
    %126 = arith.addf %121, %125 : vector<8x1024xf32>
    %c3_73 = arith.constant 3 : index
    %c0_74 = arith.constant 0 : index
    %c0_75 = arith.constant 0 : index
    %127 = vector.load %arg5[%c3_73, %c0_74, %c0_75] : memref<5x8x160xf32, #tpu.memory_space<vmem>>, vector<1x8x160xf32>
    %128 = vector.shape_cast %127 : vector<1x8x160xf32> to vector<8x160xf32>
    %129 = vector.extract_strided_slice %112 {offsets = [0, 384], sizes = [160, 1024], strides = [1, 1]} : vector<160x1536xf32> to vector<160x1024xf32>
    %cst_76 = arith.constant dense<0.000000e+00> : vector<8x1024xf32>
    %130 = tpu.matmul %128, %129, %cst_76 {dimension_numbers = #tpu.dot_dimension_numbers<[1], [0], [0], [1], [0, 0, 1, 1], [], []>} : vector<8x160xf32>, vector<160x1024xf32>, vector<8x1024xf32> -> vector<8x1024xf32>
    %131 = arith.addf %126, %130 : vector<8x1024xf32>
    %c4_77 = arith.constant 4 : index
    %c0_78 = arith.constant 0 : index
    %c0_79 = arith.constant 0 : index
    %132 = vector.load %arg5[%c4_77, %c0_78, %c0_79] : memref<5x8x160xf32, #tpu.memory_space<vmem>>, vector<1x8x160xf32>
    %133 = vector.shape_cast %132 : vector<1x8x160xf32> to vector<8x160xf32>
    %134 = vector.extract_strided_slice %112 {offsets = [0, 512], sizes = [160, 1024], strides = [1, 1]} : vector<160x1536xf32> to vector<160x1024xf32>
    %cst_80 = arith.constant dense<0.000000e+00> : vector<8x1024xf32>
    %135 = tpu.matmul %133, %134, %cst_80 {dimension_numbers = #tpu.dot_dimension_numbers<[1], [0], [0], [1], [0, 0, 1, 1], [], []>} : vector<8x160xf32>, vector<160x1024xf32>, vector<8x1024xf32> -> vector<8x1024xf32>
    %136 = arith.addf %131, %135 : vector<8x1024xf32>
    %137 = vector.extract_strided_slice %0 {offsets = [0, 3], sizes = [8, 1], strides = [1, 1]} : vector<32x4xf32> to vector<8x1xf32>
    %138 = vector.broadcast %137 : vector<8x1xf32> to vector<8x1024xf32>
    %139 = arith.addf %136, %138 : vector<8x1024xf32>
    %cst_81 = arith.constant 0.000000e+00 : f32
    %140 = vector.broadcast %cst_81 : f32 to vector<8x1024xf32>
    %141 = arith.maximumf %139, %140 : vector<8x1024xf32>
    %c0_82 = arith.constant 0 : index
    %c0_83 = arith.constant 0 : index
    %142 = vector.load %arg7[%c0_82, %c0_83] : memref<8x1024xf32, #tpu.memory_space<vmem>>, vector<8x1024xf32>
    tpu.vector_store %arg7[%c0_82, %c0_83], %141 {strides = array<i32>} : memref<8x1024xf32, #tpu.memory_space<vmem>>, vector<8x1024xf32>,
    return
  }
  func.func @transform_0(%arg0: i32) -> (i32, i32) {
    %c0_i32 = arith.constant 0 : i32
    %c0_i32_0 = arith.constant 0 : i32
    %c0_i32_1 = arith.constant 0 : i32
    return %c0_i32, %c0_i32_0 : i32, i32
  }
  func.func @transform_1(%arg0: i32) -> (i32, i32, i32) {
    %c0_i32 = arith.constant 0 : i32
    %c0_i32_0 = arith.constant 0 : i32
    %c0_i32_1 = arith.constant 0 : i32
    %c0_i32_2 = arith.constant 0 : i32
    return %c0_i32, %c0_i32_0, %c0_i32_1 : i32, i32, i32
  }
  func.func @transform_2(%arg0: i32) -> (i32, i32, i32) {
    %c0_i32 = arith.constant 0 : i32
    %c0_i32_0 = arith.constant 0 : i32
    %c0_i32_1 = arith.constant 0 : i32
    %c0_i32_2 = arith.constant 0 : i32
    return %c0_i32, %c0_i32_0, %c0_i32_1 : i32, i32, i32
  }
  func.func @transform_3(%arg0: i32) -> (i32, i32, i32) {
    %c0_i32 = arith.constant 0 : i32
    %c0_i32_0 = arith.constant 0 : i32
    %c0_i32_1 = arith.constant 0 : i32
    %c0_i32_2 = arith.constant 0 : i32
    return %c0_i32, %c0_i32_0, %c0_i32_1 : i32, i32, i32
  }
  func.func @transform_4(%arg0: i32) -> (i32, i32, i32) {
    %c0_i32 = arith.constant 0 : i32
    %c0_i32_0 = arith.constant 0 : i32
    %c0_i32_1 = arith.constant 0 : i32
    %c0_i32_2 = arith.constant 0 : i32
    return %c0_i32, %c0_i32_0, %c0_i32_1 : i32, i32, i32
  }
  func.func @transform_5(%arg0: i32) -> (i32, i32) {
    %c0_i32 = arith.constant 0 : i32
    %c0_i32_0 = arith.constant 0 : i32
    %c0_i32_1 = arith.constant 0 : i32
    return %c0_i32, %c0_i32_0 : i32, i32
  }
  func.func @transform_6(%arg0: i32) -> (i32, i32) {
    %c0_i32 = arith.constant 0 : i32
    %c0_i32_0 = arith.constant 0 : i32
    %c0_i32_1 = arith.constant 0 : i32
    return %c0_i32, %c0_i32_0 : i32, i32
  }
}

</mosaic_0001>

<llo_original>
// kernel: decoder_ca_pallas.1
$region0: #{decoder_ca_pallas.1}
  #allocation0 [shape = 'u32[]', space=smem, size = 0x4, offset = 0x4, fixed_abs, tag = 'smem constant byte address 0x4 - core index']
  #allocation1 [shape = 'u32[72,128]{1,0:T(1,128)}', space=vmem, size = 0x9000, scoped, tag = 'internal scratch']
  %s0 = inlined_call_operand.vmem [shape: f32[8,3584], index: 0, kind: input, shape index: {}]
  %s1 = inlined_call_operand.vmem [shape: f32[5,8,40], index: 1, kind: input, shape index: {}]
  %s2 = inlined_call_operand.vmem [shape: f32[5,16,40], index: 2, kind: input, shape index: {}]
  %s3 = inlined_call_operand.vmem [shape: f32[5,32,80], index: 3, kind: input, shape index: {}]
  %s4 = inlined_call_operand.vmem [shape: f32[5,8,160], index: 4, kind: input, shape index: {}]
  %s5 = inlined_call_operand.vmem [shape: f32[32,4], index: 5, kind: input, shape index: {}]
  %s6 = inlined_call_operand.vmem [shape: f32[8,1024], index: 6, kind: output, shape index: {}]
  %s7 = sld [smem:[#allocation0]]
  $region34: #{decoder_ca_pallas.1} parent=0
    _
  %s9 = ssub.s32 1, %s7
  %s10 = scalar_select 0, %s9, %s7
  // Predicated region
  $region2: #{decoder_ca_pallas.1} parent=0 // pred_check
    _
  $region3: #{decoder_ca_pallas.1} parent=0 // pred_check_branch
    %12 = sbr.rel (0) target = $region5
  $region4: #{decoder_ca_pallas.1} parent=0 // pred_region
    _
  $region5: #{decoder_ca_pallas.1} parent=0 // pred_fallthru
    _
  // Predicated region
  $region6: #{decoder_ca_pallas.1} parent=0 // pred_check
    _
  $region7: #{decoder_ca_pallas.1} parent=0 // pred_check_branch
    %14 = sbr.rel (0) target = $region9
  $region8: #{decoder_ca_pallas.1} parent=0 // pred_region
    _
  $region9: #{decoder_ca_pallas.1} parent=0 // pred_fallthru
    _
  // Predicated region
  $region10: #{decoder_ca_pallas.1} parent=0 // pred_check
    _
  $region11: #{decoder_ca_pallas.1} parent=0 // pred_check_branch
    %16 = sbr.rel (0) target = $region13
  $region12: #{decoder_ca_pallas.1} parent=0 // pred_region
    _
  $region13: #{decoder_ca_pallas.1} parent=0 // pred_fallthru
    _
  // Predicated region
  $region14: #{decoder_ca_pallas.1} parent=0 // pred_check
    _
  $region15: #{decoder_ca_pallas.1} parent=0 // pred_check_branch
    %18 = sbr.rel (0) target = $region17
  $region16: #{decoder_ca_pallas.1} parent=0 // pred_region
    _
  $region17: #{decoder_ca_pallas.1} parent=0 // pred_fallthru
    _
  // Predicated region
  $region18: #{decoder_ca_pallas.1} parent=0 // pred_check
    _
  $region19: #{decoder_ca_pallas.1} parent=0 // pred_check_branch
    %20 = sbr.rel (0) target = $region21
  $region20: #{decoder_ca_pallas.1} parent=0 // pred_region
    _
  $region21: #{decoder_ca_pallas.1} parent=0 // pred_fallthru
    _
  // Predicated region
  $region22: #{decoder_ca_pallas.1} parent=0 // pred_check
    _
  $region23: #{decoder_ca_pallas.1} parent=0 // pred_check_branch
    %22 = sbr.rel (0) target = $region25
  $region24: #{decoder_ca_pallas.1} parent=0 // pred_region
    _
  $region25: #{decoder_ca_pallas.1} parent=0 // pred_fallthru
    _
  %v23 = vld [vmem:[%s5] sm:$0xff]
  %v24 = vld [vmem:[%s5 + $0x8] sm:$0xff]
  %v25 = vld [vmem:[%s5 + $0x10] sm:$0xff]
  %v26 = vld [vmem:[%s5 + $0x18] sm:$0xff]
  %v27 = vld [vmem:[%s0] sm:$0xff]
  %v28 = vld [vmem:[%s0 + $0x8] sm:$0xff]
  %v29 = vld [vmem:[%s0 + $0x10] sm:$0xff]
  %v30 = vld [vmem:[%s0 + $0x18] sm:$0xff]
  %v31 = vld [vmem:[%s0 + $0x20] sm:$0xff]
  %v32 = vld [vmem:[%s0 + $0x28] sm:$0xff]
  %v33 = vld [vmem:[%s0 + $0x30] sm:$0xff]
  %v34 = vld [vmem:[%s0 + $0x38] sm:$0xff]
  %v35 = vld [vmem:[%s0 + $0x40] sm:$0xff]
  %v36 = vld [vmem:[%s0 + $0x48] sm:$0xff]
  %v37 = vld [vmem:[%s0 + $0x50] sm:$0xff]
  %v38 = vld [vmem:[%s0 + $0x58] sm:$0xff]
  %v39 = vld [vmem:[%s0 + $0x60] sm:$0xff]
  %v40 = vld [vmem:[%s0 + $0x68] sm:$0xff]
  %v41 = vld [vmem:[%s0 + $0x70] sm:$0xff]
  %v42 = vld [vmem:[%s0 + $0x78] sm:$0xff]
  %v43 = vld [vmem:[%s0 + $0x80] sm:$0xff]
  %v44 = vld [vmem:[%s0 + $0x88] sm:$0xff]
  %v45 = vld [vmem:[%s0 + $0x90] sm:$0xff]
  %v46 = vld [vmem:[%s0 + $0x98] sm:$0xff]
  %v47 = vld [vmem:[%s0 + $0xa0] sm:$0xff]
  %v48 = vld [vmem:[%s0 + $0xa8] sm:$0xff]
  %v49 = vld [vmem:[%s0 + $0xb0] sm:$0xff]
  %v50 = vld [vmem:[%s0 + $0xb8] sm:$0xff]
  %v51 = vld [vmem:[%s0 + $0xc0] sm:$0xff]
  %v52 = vld [vmem:[%s0 + $0xc8] sm:$0xff]
  %v53 = vld [vmem:[%s0 + $0xd0] sm:$0xff]
  %v54 = vld [vmem:[%s0 + $0xd8] sm:$0xff]
  %83 = vrot.lane.b32.xlu0 %v27, 127
  %v84 = vpop.permute.xlu0 %83
  %85 = vrot.lane.b32.xlu0 %v28, 127
  %v86 = vpop.permute.xlu0 %85
  %87 = vrot.lane.b32.xlu0 %v29, 127
  %v88 = vpop.permute.xlu0 %87
  %89 = vrot.lane.b32.xlu0 %v30, 127
  %v90 = vpop.permute.xlu0 %89
  %91 = vrot.lane.b32.xlu0 %v31, 127
  %v92 = vpop.permute.xlu0 %91
  %93 = vrot.lane.b32.xlu0 %v32, 127
  %v94 = vpop.permute.xlu0 %93
  %95 = vrot.lane.b32.xlu0 %v33, 127
  %v96 = vpop.permute.xlu0 %95
  %97 = vrot.lane.b32.xlu0 %v34, 127
  %v98 = vpop.permute.xlu0 %97
  %99 = vrot.lane.b32.xlu0 %v35, 127
  %v100 = vpop.permute.xlu0 %99
  %101 = vrot.lane.b32.xlu0 %v36, 127
  %v102 = vpop.permute.xlu0 %101
  %103 = vrot.lane.b32.xlu0 %v37, 127
  %v104 = vpop.permute.xlu0 %103
  %105 = vrot.lane.b32.xlu0 %v38, 127
  %v106 = vpop.permute.xlu0 %105
  %107 = vrot.lane.b32.xlu0 %v39, 127
  %v108 = vpop.permute.xlu0 %107
  %109 = vrot.lane.b32.xlu0 %v40, 127
  %v110 = vpop.permute.xlu0 %109
  %111 = vrot.lane.b32.xlu0 %v41, 127
  %v112 = vpop.permute.xlu0 %111
  %113 = vrot.lane.b32.xlu0 %v42, 127
  %v114 = vpop.permute.xlu0 %113
  %115 = vrot.lane.b32.xlu0 %v43, 127
  %v116 = vpop.permute.xlu0 %115
  %117 = vrot.lane.b32.xlu0 %v44, 127
  %v118 = vpop.permute.xlu0 %117
  %119 = vrot.lane.b32.xlu0 %v45, 127
  %v120 = vpop.permute.xlu0 %119
  %121 = vrot.lane.b32.xlu0 %v46, 127
  %v122 = vpop.permute.xlu0 %121
  %123 = vrot.lane.b32.xlu0 %v47, 127
  %v124 = vpop.permute.xlu0 %123
  %125 = vrot.lane.b32.xlu0 %v48, 127
  %v126 = vpop.permute.xlu0 %125
  %127 = vrot.lane.b32.xlu0 %v49, 127
  %v128 = vpop.permute.xlu0 %127
  %129 = vrot.lane.b32.xlu0 %v50, 127
  %v130 = vpop.permute.xlu0 %129
  %131 = vrot.lane.b32.xlu0 %v51, 127
  %v132 = vpop.permute.xlu0 %131
  %133 = vrot.lane.b32.xlu0 %v52, 127
  %v134 = vpop.permute.xlu0 %133
  %135 = vrot.lane.b32.xlu0 %v53, 127
  %v136 = vpop.permute.xlu0 %135
  %137 = vrot.lane.b32.xlu0 %v54, 127
  %v138 = vpop.permute.xlu0 %137
  %vm139 = vcmask 1039360
  %v140 = vsel %vm139, %v84, %v86
  %v141 = vsel %vm139, %v86, %v88
  %v142 = vsel %vm139, %v88, %v90
  %v143 = vsel %vm139, %v90, %v92
  %v144 = vsel %vm139, %v92, %v94
  %v145 = vsel %vm139, %v94, %v96
  %v146 = vsel %vm139, %v96, %v98
  %v147 = vsel %vm139, %v98, %v100
  %v148 = vsel %vm139, %v100, %v102
  %v149 = vsel %vm139, %v102, %v104
  %v150 = vsel %vm139, %v104, %v106
  %v151 = vsel %vm139, %v106, %v108
  %v152 = vsel %vm139, %v108, %v110
  %v153 = vsel %vm139, %v110, %v112
  %v154 = vsel %vm139, %v112, %v114
  %v155 = vsel %vm139, %v114, %v116
  %v156 = vsel %vm139, %v116, %v118
  %v157 = vsel %vm139, %v118, %v120
  %v158 = vsel %vm139, %v120, %v122
  %v159 = vsel %vm139, %v122, %v124
  %v160 = vsel %vm139, %v124, %v126
  %v161 = vsel %vm139, %v126, %v128
  %v162 = vsel %vm139, %v128, %v130
  %v163 = vsel %vm139, %v130, %v132
  %v164 = vsel %vm139, %v132, %v134
  %v165 = vsel %vm139, %v134, %v136
  %v166 = vsel %vm139, %v136, %v138
  %194 = vrot.lane.b32.xlu0 %v27, 126
  %v195 = vpop.permute.xlu0 %194
  %196 = vrot.lane.b32.xlu0 %v28, 126
  %v197 = vpop.permute.xlu0 %196
  %198 = vrot.lane.b32.xlu0 %v29, 126
  %v199 = vpop.permute.xlu0 %198
  %200 = vrot.lane.b32.xlu0 %v30, 126
  %v201 = vpop.permute.xlu0 %200
  %202 = vrot.lane.b32.xlu0 %v31, 126
  %v203 = vpop.permute.xlu0 %202
  %204 = vrot.lane.b32.xlu0 %v32, 126
  %v205 = vpop.permute.xlu0 %204
  %206 = vrot.lane.b32.xlu0 %v33, 126
  %v207 = vpop.permute.xlu0 %206
  %208 = vrot.lane.b32.xlu0 %v34, 126
  %v209 = vpop.permute.xlu0 %208
  %210 = vrot.lane.b32.xlu0 %v35, 126
  %v211 = vpop.permute.xlu0 %210
  %212 = vrot.lane.b32.xlu0 %v36, 126
  %v213 = vpop.permute.xlu0 %212
  %214 = vrot.lane.b32.xlu0 %v37, 126
  %v215 = vpop.permute.xlu0 %214
  %216 = vrot.lane.b32.xlu0 %v38, 126
  %v217 = vpop.permute.xlu0 %216
  %218 = vrot.lane.b32.xlu0 %v39, 126
  %v219 = vpop.permute.xlu0 %218
  %220 = vrot.lane.b32.xlu0 %v40, 126
  %v221 = vpop.permute.xlu0 %220
  %222 = vrot.lane.b32.xlu0 %v41, 126
  %v223 = vpop.permute.xlu0 %222
  %224 = vrot.lane.b32.xlu0 %v42, 126
  %v225 = vpop.permute.xlu0 %224
  %226 = vrot.lane.b32.xlu0 %v43, 126
  %v227 = vpop.permute.xlu0 %226
  %228 = vrot.lane.b32.xlu0 %v44, 126
  %v229 = vpop.permute.xlu0 %228
  %230 = vrot.lane.b32.xlu0 %v45, 126
  %v231 = vpop.permute.xlu0 %230
  %232 = vrot.lane.b32.xlu0 %v46, 126
  %v233 = vpop.permute.xlu0 %232
  %234 = vrot.lane.b32.xlu0 %v47, 126
  %v235 = vpop.permute.xlu0 %234
  %236 = vrot.lane.b32.xlu0 %v48, 126
  %v237 = vpop.permute.xlu0 %236
  %238 = vrot.lane.b32.xlu0 %v49, 126
  %v239 = vpop.permute.xlu0 %238
  %240 = vrot.lane.b32.xlu0 %v50, 126
  %v241 = vpop.permute.xlu0 %240
  %242 = vrot.lane.b32.xlu0 %v51, 126
  %v243 = vpop.permute.xlu0 %242
  %244 = vrot.lane.b32.xlu0 %v52, 126
  %v245 = vpop.permute.xlu0 %244
  %246 = vrot.lane.b32.xlu0 %v53, 126
  %v247 = vpop.permute.xlu0 %246
  %248 = vrot.lane.b32.xlu0 %v54, 126
  %v249 = vpop.permute.xlu0 %248
  %vm250 = vcmask 1031168
  %v251 = vsel %vm250, %v195, %v197
  %v252 = vsel %vm250, %v197, %v199
  %v253 = vsel %vm250, %v199, %v201
  %v254 = vsel %vm250, %v201, %v203
  %v255 = vsel %vm250, %v203, %v205
  %v256 = vsel %vm250, %v205, %v207
  %v257 = vsel %vm250, %v207, %v209
  %v258 = vsel %vm250, %v209, %v211
  %v259 = vsel %vm250, %v211, %v213
  %v260 = vsel %vm250, %v213, %v215
  %v261 = vsel %vm250, %v215, %v217
  %v262 = vsel %vm250, %v217, %v219
  %v263 = vsel %vm250, %v219, %v221
  %v264 = vsel %vm250, %v221, %v223
  %v265 = vsel %vm250, %v223, %v225
  %v266 = vsel %vm250, %v225, %v227
  %v267 = vsel %vm250, %v227, %v229
  %v268 = vsel %vm250, %v229, %v231
  %v269 = vsel %vm250, %v231, %v233
  %v270 = vsel %vm250, %v233, %v235
  %v271 = vsel %vm250, %v235, %v237
  %v272 = vsel %vm250, %v237, %v239
  %v273 = vsel %vm250, %v239, %v241
  %v274 = vsel %vm250, %v241, %v243
  %v275 = vsel %vm250, %v243, %v245
  %v276 = vsel %vm250, %v245, %v247
  %v277 = vsel %vm250, %v247, %v249
  %305 = vrot.lane.b32.xlu0 %v27, 125
  %v306 = vpop.permute.xlu0 %305
  %307 = vrot.lane.b32.xlu0 %v28, 125
  %v308 = vpop.permute.xlu0 %307
  %309 = vrot.lane.b32.xlu0 %v29, 125
  %v310 = vpop.permute.xlu0 %309
  %311 = vrot.lane.b32.xlu0 %v30, 125
  %v312 = vpop.permute.xlu0 %311
  %313 = vrot.lane.b32.xlu0 %v31, 125
  %v314 = vpop.permute.xlu0 %313
  %315 = vrot.lane.b32.xlu0 %v32, 125
  %v316 = vpop.permute.xlu0 %315
  %317 = vrot.lane.b32.xlu0 %v33, 125
  %v318 = vpop.permute.xlu0 %317
  %319 = vrot.lane.b32.xlu0 %v34, 125
  %v320 = vpop.permute.xlu0 %319
  %321 = vrot.lane.b32.xlu0 %v35, 125
  %v322 = vpop.permute.xlu0 %321
  %323 = vrot.lane.b32.xlu0 %v36, 125
  %v324 = vpop.permute.xlu0 %323
  %325 = vrot.lane.b32.xlu0 %v37, 125
  %v326 = vpop.permute.xlu0 %325
  %327 = vrot.lane.b32.xlu0 %v38, 125
  %v328 = vpop.permute.xlu0 %327
  %329 = vrot.lane.b32.xlu0 %v39, 125
  %v330 = vpop.permute.xlu0 %329
  %331 = vrot.lane.b32.xlu0 %v40, 125
  %v332 = vpop.permute.xlu0 %331
  %333 = vrot.lane.b32.xlu0 %v41, 125
  %v334 = vpop.permute.xlu0 %333
  %335 = vrot.lane.b32.xlu0 %v42, 125
  %v336 = vpop.permute.xlu0 %335
  %337 = vrot.lane.b32.xlu0 %v43, 125
  %v338 = vpop.permute.xlu0 %337
  %339 = vrot.lane.b32.xlu0 %v44, 125
  %v340 = vpop.permute.xlu0 %339
  %341 = vrot.lane.b32.xlu0 %v45, 125
  %v342 = vpop.permute.xlu0 %341
  %343 = vrot.lane.b32.xlu0 %v46, 125
  %v344 = vpop.permute.xlu0 %343
  %345 = vrot.lane.b32.xlu0 %v47, 125
  %v346 = vpop.permute.xlu0 %345
  %347 = vrot.lane.b32.xlu0 %v48, 125
  %v348 = vpop.permute.xlu0 %347
  %349 = vrot.lane.b32.xlu0 %v49, 125
  %v350 = vpop.permute.xlu0 %349
  %351 = vrot.lane.b32.xlu0 %v50, 125
  %v352 = vpop.permute.xlu0 %351
  %353 = vrot.lane.b32.xlu0 %v51, 125
  %v354 = vpop.permute.xlu0 %353
  %355 = vrot.lane.b32.xlu0 %v52, 125
  %v356 = vpop.permute.xlu0 %355
  %357 = vrot.lane.b32.xlu0 %v53, 125
  %v358 = vpop.permute.xlu0 %357
  %359 = vrot.lane.b32.xlu0 %v54, 125
  %v360 = vpop.permute.xlu0 %359
  %vm361 = vcmask 1022976
  %v362 = vsel %vm361, %v306, %v308
  %v363 = vsel %vm361, %v308, %v310
  %v364 = vsel %vm361, %v310, %v312
  %v365 = vsel %vm361, %v312, %v314
  %v366 = vsel %vm361, %v314, %v316
  %v367 = vsel %vm361, %v316, %v318
  %v368 = vsel %vm361, %v318, %v320
  %v369 = vsel %vm361, %v320, %v322
  %v370 = vsel %vm361, %v322, %v324
  %v371 = vsel %vm361, %v324, %v326
  %v372 = vsel %vm361, %v326, %v328
  %v373 = vsel %vm361, %v328, %v330
  %v374 = vsel %vm361, %v330, %v332
  %v375 = vsel %vm361, %v332, %v334
  %v376 = vsel %vm361, %v334, %v336
  %v377 = vsel %vm361, %v336, %v338
  %v378 = vsel %vm361, %v338, %v340
  %v379 = vsel %vm361, %v340, %v342
  %v380 = vsel %vm361, %v342, %v344
  %v381 = vsel %vm361, %v344, %v346
  %v382 = vsel %vm361, %v346, %v348
  %v383 = vsel %vm361, %v348, %v350
  %v384 = vsel %vm361, %v350, %v352
  %v385 = vsel %vm361, %v352, %v354
  %v386 = vsel %vm361, %v354, %v356
  %v387 = vsel %vm361, %v356, %v358
  %v388 = vsel %vm361, %v358, %v360
  %416 = vrot.lane.b32.xlu0 %v27, 124
  %v417 = vpop.permute.xlu0 %416
  %418 = vrot.lane.b32.xlu0 %v28, 124
  %v419 = vpop.permute.xlu0 %418
  %420 = vrot.lane.b32.xlu0 %v29, 124
  %v421 = vpop.permute.xlu0 %420
  %422 = vrot.lane.b32.xlu0 %v30, 124
  %v423 = vpop.permute.xlu0 %422
  %424 = vrot.lane.b32.xlu0 %v31, 124
  %v425 = vpop.permute.xlu0 %424
  %426 = vrot.lane.b32.xlu0 %v32, 124
  %v427 = vpop.permute.xlu0 %426
  %428 = vrot.lane.b32.xlu0 %v33, 124
  %v429 = vpop.permute.xlu0 %428
  %430 = vrot.lane.b32.xlu0 %v34, 124
  %v431 = vpop.permute.xlu0 %430
  %432 = vrot.lane.b32.xlu0 %v35, 124
  %v433 = vpop.permute.xlu0 %432
  %434 = vrot.lane.b32.xlu0 %v36, 124
  %v435 = vpop.permute.xlu0 %434
  %436 = vrot.lane.b32.xlu0 %v37, 124
  %v437 = vpop.permute.xlu0 %436
  %438 = vrot.lane.b32.xlu0 %v38, 124
  %v439 = vpop.permute.xlu0 %438
  %440 = vrot.lane.b32.xlu0 %v39, 124
  %v441 = vpop.permute.xlu0 %440
  %442 = vrot.lane.b32.xlu0 %v40, 124
  %v443 = vpop.permute.xlu0 %442
  %444 = vrot.lane.b32.xlu0 %v41, 124
  %v445 = vpop.permute.xlu0 %444
  %446 = vrot.lane.b32.xlu0 %v42, 124
  %v447 = vpop.permute.xlu0 %446
  %448 = vrot.lane.b32.xlu0 %v43, 124
  %v449 = vpop.permute.xlu0 %448
  %450 = vrot.lane.b32.xlu0 %v44, 124
  %v451 = vpop.permute.xlu0 %450
  %452 = vrot.lane.b32.xlu0 %v45, 124
  %v453 = vpop.permute.xlu0 %452
  %454 = vrot.lane.b32.xlu0 %v46, 124
  %v455 = vpop.permute.xlu0 %454
  %456 = vrot.lane.b32.xlu0 %v47, 124
  %v457 = vpop.permute.xlu0 %456
  %458 = vrot.lane.b32.xlu0 %v48, 124
  %v459 = vpop.permute.xlu0 %458
  %460 = vrot.lane.b32.xlu0 %v49, 124
  %v461 = vpop.permute.xlu0 %460
  %462 = vrot.lane.b32.xlu0 %v50, 124
  %v463 = vpop.permute.xlu0 %462
  %464 = vrot.lane.b32.xlu0 %v51, 124
  %v465 = vpop.permute.xlu0 %464
  %466 = vrot.lane.b32.xlu0 %v52, 124
  %v467 = vpop.permute.xlu0 %466
  %468 = vrot.lane.b32.xlu0 %v53, 124
  %v469 = vpop.permute.xlu0 %468
  %470 = vrot.lane.b32.xlu0 %v54, 124
  %v471 = vpop.permute.xlu0 %470
  %vm472 = vcmask 1014784
  %v473 = vsel %vm472, %v417, %v419
  %v474 = vsel %vm472, %v419, %v421
  %v475 = vsel %vm472, %v421, %v423
  %v476 = vsel %vm472, %v423, %v425
  %v477 = vsel %vm472, %v425, %v427
  %v478 = vsel %vm472, %v427, %v429
  %v479 = vsel %vm472, %v429, %v431
  %v480 = vsel %vm472, %v431, %v433
  %v481 = vsel %vm472, %v433, %v435
  %v482 = vsel %vm472, %v435, %v437
  %v483 = vsel %vm472, %v437, %v439
  %v484 = vsel %vm472, %v439, %v441
  %v485 = vsel %vm472, %v441, %v443
  %v486 = vsel %vm472, %v443, %v445
  %v487 = vsel %vm472, %v445, %v447
  %v488 = vsel %vm472, %v447, %v449
  %v489 = vsel %vm472, %v449, %v451
  %v490 = vsel %vm472, %v451, %v453
  %v491 = vsel %vm472, %v453, %v455
  %v492 = vsel %vm472, %v455, %v457
  %v493 = vsel %vm472, %v457, %v459
  %v494 = vsel %vm472, %v459, %v461
  %v495 = vsel %vm472, %v461, %v463
  %v496 = vsel %vm472, %v463, %v465
  %v497 = vsel %vm472, %v465, %v467
  %v498 = vsel %vm472, %v467, %v469
  %v499 = vsel %vm472, %v469, %v471
  %v527 = vld [vmem:[%s1] sm:$0xff]
  %s528 = scalar_lea.vmem %s1, 8
  %v529 = vld [vmem:[%s528] sm:$0xff]
  %vm530 = vcmask 326656
  %v532 = vsel %vm530, %v529, 0
  %534 = vmatpush.msra.mxu0 0.0
  %535 = vmatpush.msra.mxu0 0.0
  %536 = vmatpush.msra.mxu0 0.0
  %537 = vmatpush.msra.mxu0 0.0
  %538 = vmatpush.msra.mxu0 0.0
  %539 = vmatpush.msra.mxu0 0.0
  %540 = vmatpush.msra.mxu0 0.0
  %541 = vmatpush.msra.mxu0 0.0
  %542 = vmatpush.msra.mxu0 0.0
  %543 = vmatpush.msra.mxu0 0.0
  %544 = vmatpush.msra.mxu0 0.0
  %545 = vmatpush.msra.mxu0 %v474
  %546 = vmatpush.msra.mxu0 %v363
  %547 = vmatpush.msra.mxu0 %v252
  %548 = vmatpush.msra.mxu0 %v141
  %549 = vmatpush.msra.mxu0 %v28
  %550 = vmatmul.f32.gmra.mxu0 %v532
  %v551 = vpop.f32.mrf.mxu0
  %v552 = vadd.f32 0.0, %v551
  %553 = vdwg.mxu0
  %554 = vmatpush.msra.mxu0 0.0
  %555 = vmatpush.msra.mxu0 0.0
  %556 = vmatpush.msra.mxu0 0.0
  %557 = vmatpush.msra.mxu0 0.0
  %558 = vmatpush.msra.mxu0 0.0
  %559 = vmatpush.msra.mxu0 0.0
  %560 = vmatpush.msra.mxu0 0.0
  %561 = vmatpush.msra.mxu0 0.0
  %562 = vmatpush.msra.mxu0 0.0
  %563 = vmatpush.msra.mxu0 0.0
  %564 = vmatpush.msra.mxu0 0.0
  %565 = vmatpush.msra.mxu0 %v475
  %566 = vmatpush.msra.mxu0 %v364
  %567 = vmatpush.msra.mxu0 %v253
  %568 = vmatpush.msra.mxu0 %v142
  %569 = vmatpush.msra.mxu0 %v29
  %570 = vmatmul.f32.gmra.mxu0 %v532
  %v571 = vpop.f32.mrf.mxu0
  %v572 = vadd.f32 0.0, %v571
  %573 = vdwg.mxu0
  %574 = vmatpush.msra.mxu0 0.0
  %575 = vmatpush.msra.mxu0 0.0
  %576 = vmatpush.msra.mxu0 0.0
  %577 = vmatpush.msra.mxu0 0.0
  %578 = vmatpush.msra.mxu0 0.0
  %579 = vmatpush.msra.mxu0 0.0
  %580 = vmatpush.msra.mxu0 0.0
  %581 = vmatpush.msra.mxu0 0.0
  %582 = vmatpush.msra.mxu0 0.0
  %583 = vmatpush.msra.mxu0 0.0
  %584 = vmatpush.msra.mxu0 0.0
  %585 = vmatpush.msra.mxu0 %v476
  %586 = vmatpush.msra.mxu0 %v365
  %587 = vmatpush.msra.mxu0 %v254
  %588 = vmatpush.msra.mxu0 %v143
  %589 = vmatpush.msra.mxu0 %v30
  %590 = vmatmul.f32.gmra.mxu0 %v532
  %v591 = vpop.f32.mrf.mxu0
  %v592 = vadd.f32 0.0, %v591
  %593 = vdwg.mxu0
  %594 = vmatpush.msra.mxu0 0.0
  %595 = vmatpush.msra.mxu0 0.0
  %596 = vmatpush.msra.mxu0 0.0
  %597 = vmatpush.msra.mxu0 0.0
  %598 = vmatpush.msra.mxu0 0.0
  %599 = vmatpush.msra.mxu0 0.0
  %600 = vmatpush.msra.mxu0 0.0
  %601 = vmatpush.msra.mxu0 0.0
  %602 = vmatpush.msra.mxu0 0.0
  %603 = vmatpush.msra.mxu0 0.0
  %604 = vmatpush.msra.mxu0 0.0
  %605 = vmatpush.msra.mxu0 %v477
  %606 = vmatpush.msra.mxu0 %v366
  %607 = vmatpush.msra.mxu0 %v255
  %608 = vmatpush.msra.mxu0 %v144
  %609 = vmatpush.msra.mxu0 %v31
  %610 = vmatmul.f32.gmra.mxu0 %v532
  %v611 = vpop.f32.mrf.mxu0
  %v612 = vadd.f32 0.0, %v611
  %613 = vdwg.mxu0
  %614 = vmatpush.msra.mxu0 0.0
  %615 = vmatpush.msra.mxu0 0.0
  %616 = vmatpush.msra.mxu0 0.0
  %617 = vmatpush.msra.mxu0 0.0
  %618 = vmatpush.msra.mxu0 0.0
  %619 = vmatpush.msra.mxu0 0.0
  %620 = vmatpush.msra.mxu0 0.0
  %621 = vmatpush.msra.mxu0 0.0
  %622 = vmatpush.msra.mxu0 0.0
  %623 = vmatpush.msra.mxu0 0.0
  %624 = vmatpush.msra.mxu0 0.0
  %625 = vmatpush.msra.mxu0 %v478
  %626 = vmatpush.msra.mxu0 %v367
  %627 = vmatpush.msra.mxu0 %v256
  %628 = vmatpush.msra.mxu0 %v145
  %629 = vmatpush.msra.mxu0 %v32
  %630 = vmatmul.f32.gmra.mxu0 %v532
  %v631 = vpop.f32.mrf.mxu0
  %v632 = vadd.f32 0.0, %v631
  %633 = vdwg.mxu0
  %634 = vmatpush.msra.mxu0 0.0
  %635 = vmatpush.msra.mxu0 0.0
  %636 = vmatpush.msra.mxu0 0.0
  %637 = vmatpush.msra.mxu0 0.0
  %638 = vmatpush.msra.mxu0 0.0
  %639 = vmatpush.msra.mxu0 0.0
  %640 = vmatpush.msra.mxu0 0.0
  %641 = vmatpush.msra.mxu0 0.0
  %642 = vmatpush.msra.mxu0 0.0
  %643 = vmatpush.msra.mxu0 0.0
  %644 = vmatpush.msra.mxu0 0.0
  %645 = vmatpush.msra.mxu0 %v479
  %646 = vmatpush.msra.mxu0 %v368
  %647 = vmatpush.msra.mxu0 %v257
  %648 = vmatpush.msra.mxu0 %v146
  %649 = vmatpush.msra.mxu0 %v33
  %650 = vmatmul.f32.gmra.mxu0 %v532
  %v651 = vpop.f32.mrf.mxu0
  %v652 = vadd.f32 0.0, %v651
  %653 = vdwg.mxu0
  %654 = vmatpush.msra.mxu0 0.0
  %655 = vmatpush.msra.mxu0 0.0
  %656 = vmatpush.msra.mxu0 0.0
  %657 = vmatpush.msra.mxu0 0.0
  %658 = vmatpush.msra.mxu0 0.0
  %659 = vmatpush.msra.mxu0 0.0
  %660 = vmatpush.msra.mxu0 0.0
  %661 = vmatpush.msra.mxu0 0.0
  %662 = vmatpush.msra.mxu0 0.0
  %663 = vmatpush.msra.mxu0 0.0
  %664 = vmatpush.msra.mxu0 0.0
  %665 = vmatpush.msra.mxu0 %v480
  %666 = vmatpush.msra.mxu0 %v369
  %667 = vmatpush.msra.mxu0 %v258
  %668 = vmatpush.msra.mxu0 %v147
  %669 = vmatpush.msra.mxu0 %v34
  %670 = vmatmul.f32.gmra.mxu0 %v532
  %v671 = vpop.f32.mrf.mxu0
  %v672 = vadd.f32 0.0, %v671
  %673 = vdwg.mxu0
  %674 = vmatpush.msra.mxu0 0.0
  %675 = vmatpush.msra.mxu0 0.0
  %676 = vmatpush.msra.mxu0 0.0
  %677 = vmatpush.msra.mxu0 0.0
  %678 = vmatpush.msra.mxu0 0.0
  %679 = vmatpush.msra.mxu0 0.0
  %680 = vmatpush.msra.mxu0 0.0
  %681 = vmatpush.msra.mxu0 0.0
  %682 = vmatpush.msra.mxu0 0.0
  %683 = vmatpush.msra.mxu0 0.0
  %684 = vmatpush.msra.mxu0 0.0
  %685 = vmatpush.msra.mxu0 %v481
  %686 = vmatpush.msra.mxu0 %v370
  %687 = vmatpush.msra.mxu0 %v259
  %688 = vmatpush.msra.mxu0 %v148
  %689 = vmatpush.msra.mxu0 %v35
  %690 = vmatmul.f32.gmra.mxu0 %v532
  %v691 = vpop.f32.mrf.mxu0
  %v692 = vadd.f32 0.0, %v691
  %693 = vdwg.mxu0
  %694 = vmatpush.msra.mxu0 0.0
  %695 = vmatpush.msra.mxu0 0.0
  %696 = vmatpush.msra.mxu0 0.0
  %697 = vmatpush.msra.mxu0 0.0
  %698 = vmatpush.msra.mxu0 0.0
  %699 = vmatpush.msra.mxu0 0.0
  %700 = vmatpush.msra.mxu0 0.0
  %701 = vmatpush.msra.mxu0 0.0
  %702 = vmatpush.msra.mxu0 0.0
  %703 = vmatpush.msra.mxu0 0.0
  %704 = vmatpush.msra.mxu0 0.0
  %705 = vmatpush.msra.mxu0 %v482
  %706 = vmatpush.msra.mxu0 %v371
  %707 = vmatpush.msra.mxu0 %v260
  %708 = vmatpush.msra.mxu0 %v149
  %709 = vmatpush.msra.mxu0 %v36
  %710 = vmatmul.f32.gmra.mxu0 %v532
  %v711 = vpop.f32.mrf.mxu0
  %v712 = vadd.f32 0.0, %v711
  %713 = vdwg.mxu0
  %714 = vmatpush.msra.mxu0 0.0
  %715 = vmatpush.msra.mxu0 0.0
  %716 = vmatpush.msra.mxu0 0.0
  %717 = vmatpush.msra.mxu0 0.0
  %718 = vmatpush.msra.mxu0 0.0
  %719 = vmatpush.msra.mxu0 0.0
  %720 = vmatpush.msra.mxu0 0.0
  %721 = vmatpush.msra.mxu0 0.0
  %722 = vmatpush.msra.mxu0 0.0
  %723 = vmatpush.msra.mxu0 0.0
  %724 = vmatpush.msra.mxu0 0.0
  %725 = vmatpush.msra.mxu0 %v483
  %726 = vmatpush.msra.mxu0 %v372
  %727 = vmatpush.msra.mxu0 %v261
  %728 = vmatpush.msra.mxu0 %v150
  %729 = vmatpush.msra.mxu0 %v37
  %730 = vmatmul.f32.gmra.mxu0 %v532
  %v731 = vpop.f32.mrf.mxu0
  %v732 = vadd.f32 0.0, %v731
  %733 = vdwg.mxu0
  %734 = vmatpush.msra.mxu0 0.0
  %735 = vmatpush.msra.mxu0 0.0
  %736 = vmatpush.msra.mxu0 0.0
  %737 = vmatpush.msra.mxu0 0.0
  %738 = vmatpush.msra.mxu0 0.0
  %739 = vmatpush.msra.mxu0 0.0
  %740 = vmatpush.msra.mxu0 0.0
  %741 = vmatpush.msra.mxu0 0.0
  %742 = vmatpush.msra.mxu0 0.0
  %743 = vmatpush.msra.mxu0 0.0
  %744 = vmatpush.msra.mxu0 0.0
  %745 = vmatpush.msra.mxu0 %v484
  %746 = vmatpush.msra.mxu0 %v373
  %747 = vmatpush.msra.mxu0 %v262
  %748 = vmatpush.msra.mxu0 %v151
  %749 = vmatpush.msra.mxu0 %v38
  %750 = vmatmul.f32.gmra.mxu0 %v532
  %v751 = vpop.f32.mrf.mxu0
  %v752 = vadd.f32 0.0, %v751
  %753 = vdwg.mxu0
  %754 = vmatpush.msra.mxu0 0.0
  %755 = vmatpush.msra.mxu0 0.0
  %756 = vmatpush.msra.mxu0 0.0
  %757 = vmatpush.msra.mxu0 0.0
  %758 = vmatpush.msra.mxu0 0.0
  %759 = vmatpush.msra.mxu0 0.0
  %760 = vmatpush.msra.mxu0 0.0
  %761 = vmatpush.msra.mxu0 0.0
  %762 = vmatpush.msra.mxu0 0.0
  %763 = vmatpush.msra.mxu0 0.0
  %764 = vmatpush.msra.mxu0 0.0
  %765 = vmatpush.msra.mxu0 %v485
  %766 = vmatpush.msra.mxu0 %v374
  %767 = vmatpush.msra.mxu0 %v263
  %768 = vmatpush.msra.mxu0 %v152
  %769 = vmatpush.msra.mxu0 %v39
  %770 = vmatmul.f32.gmra.mxu0 %v532
  %v771 = vpop.f32.mrf.mxu0
  %v772 = vadd.f32 0.0, %v771
  %773 = vdwg.mxu0
  %774 = vmatpush.msra.mxu0 0.0
  %775 = vmatpush.msra.mxu0 0.0
  %776 = vmatpush.msra.mxu0 0.0
  %777 = vmatpush.msra.mxu0 0.0
  %778 = vmatpush.msra.mxu0 0.0
  %779 = vmatpush.msra.mxu0 0.0
  %780 = vmatpush.msra.mxu0 0.0
  %781 = vmatpush.msra.mxu0 0.0
  %782 = vmatpush.msra.mxu0 0.0
  %783 = vmatpush.msra.mxu0 0.0
  %784 = vmatpush.msra.mxu0 0.0
  %785 = vmatpush.msra.mxu0 %v486
  %786 = vmatpush.msra.mxu0 %v375
  %787 = vmatpush.msra.mxu0 %v264
  %788 = vmatpush.msra.mxu0 %v153
  %789 = vmatpush.msra.mxu0 %v40
  %790 = vmatmul.f32.gmra.mxu0 %v532
  %v791 = vpop.f32.mrf.mxu0
  %v792 = vadd.f32 0.0, %v791
  %793 = vdwg.mxu0
  %794 = vmatpush.msra.mxu0 0.0
  %795 = vmatpush.msra.mxu0 0.0
  %796 = vmatpush.msra.mxu0 0.0
  %797 = vmatpush.msra.mxu0 0.0
  %798 = vmatpush.msra.mxu0 0.0
  %799 = vmatpush.msra.mxu0 0.0
  %800 = vmatpush.msra.mxu0 0.0
  %801 = vmatpush.msra.mxu0 0.0
  %802 = vmatpush.msra.mxu0 0.0
  %803 = vmatpush.msra.mxu0 0.0
  %804 = vmatpush.msra.mxu0 0.0
  %805 = vmatpush.msra.mxu0 %v487
  %806 = vmatpush.msra.mxu0 %v376
  %807 = vmatpush.msra.mxu0 %v265
  %808 = vmatpush.msra.mxu0 %v154
  %809 = vmatpush.msra.mxu0 %v41
  %810 = vmatmul.f32.gmra.mxu0 %v532
  %v811 = vpop.f32.mrf.mxu0
  %v812 = vadd.f32 0.0, %v811
  %813 = vdwg.mxu0
  %814 = vmatpush.msra.mxu0 0.0
  %815 = vmatpush.msra.mxu0 0.0
  %816 = vmatpush.msra.mxu0 0.0
  %817 = vmatpush.msra.mxu0 0.0
  %818 = vmatpush.msra.mxu0 0.0
  %819 = vmatpush.msra.mxu0 0.0
  %820 = vmatpush.msra.mxu0 0.0
  %821 = vmatpush.msra.mxu0 0.0
  %822 = vmatpush.msra.mxu0 0.0
  %823 = vmatpush.msra.mxu0 0.0
  %824 = vmatpush.msra.mxu0 0.0
  %825 = vmatpush.msra.mxu0 %v488
  %826 = vmatpush.msra.mxu0 %v377
  %827 = vmatpush.msra.mxu0 %v266
  %828 = vmatpush.msra.mxu0 %v155
  %829 = vmatpush.msra.mxu0 %v42
  %830 = vmatmul.f32.gmra.mxu0 %v532
  %v831 = vpop.f32.mrf.mxu0
  %v832 = vadd.f32 0.0, %v831
  %833 = vdwg.mxu0
  %834 = vmatpush.msra.mxu0 0.0
  %835 = vmatpush.msra.mxu0 0.0
  %836 = vmatpush.msra.mxu0 0.0
  %837 = vmatpush.msra.mxu0 0.0
  %838 = vmatpush.msra.mxu0 0.0
  %839 = vmatpush.msra.mxu0 0.0
  %840 = vmatpush.msra.mxu0 0.0
  %841 = vmatpush.msra.mxu0 0.0
  %842 = vmatpush.msra.mxu0 0.0
  %843 = vmatpush.msra.mxu0 0.0
  %844 = vmatpush.msra.mxu0 0.0
  %845 = vmatpush.msra.mxu0 %v489
  %846 = vmatpush.msra.mxu0 %v378
  %847 = vmatpush.msra.mxu0 %v267
  %848 = vmatpush.msra.mxu0 %v156
  %849 = vmatpush.msra.mxu0 %v43
  %850 = vmatmul.f32.gmra.mxu0 %v532
  %v851 = vpop.f32.mrf.mxu0
  %v852 = vadd.f32 0.0, %v851
  %853 = vdwg.mxu0
  %854 = vmatpush.msra.mxu0 0.0
  %855 = vmatpush.msra.mxu0 0.0
  %856 = vmatpush.msra.mxu0 0.0
  %857 = vmatpush.msra.mxu0 0.0
  %858 = vmatpush.msra.mxu0 0.0
  %859 = vmatpush.msra.mxu0 0.0
  %860 = vmatpush.msra.mxu0 0.0
  %861 = vmatpush.msra.mxu0 0.0
  %862 = vmatpush.msra.mxu0 0.0
  %863 = vmatpush.msra.mxu0 0.0
  %864 = vmatpush.msra.mxu0 0.0
  %865 = vmatpush.msra.mxu0 %v490
  %866 = vmatpush.msra.mxu0 %v379
  %867 = vmatpush.msra.mxu0 %v268
  %868 = vmatpush.msra.mxu0 %v157
  %869 = vmatpush.msra.mxu0 %v44
  %870 = vmatmul.f32.gmra.mxu0 %v532
  %v871 = vpop.f32.mrf.mxu0
  %v872 = vadd.f32 0.0, %v871
  %873 = vdwg.mxu0
  %874 = vmatpush.msra.mxu0 0.0
  %875 = vmatpush.msra.mxu0 0.0
  %876 = vmatpush.msra.mxu0 0.0
  %877 = vmatpush.msra.mxu0 0.0
  %878 = vmatpush.msra.mxu0 0.0
  %879 = vmatpush.msra.mxu0 0.0
  %880 = vmatpush.msra.mxu0 0.0
  %881 = vmatpush.msra.mxu0 0.0
  %882 = vmatpush.msra.mxu0 0.0
  %883 = vmatpush.msra.mxu0 0.0
  %884 = vmatpush.msra.mxu0 0.0
  %885 = vmatpush.msra.mxu0 %v491
  %886 = vmatpush.msra.mxu0 %v380
  %887 = vmatpush.msra.mxu0 %v269
  %888 = vmatpush.msra.mxu0 %v158
  %889 = vmatpush.msra.mxu0 %v45
  %890 = vmatmul.f32.gmra.mxu0 %v532
  %v891 = vpop.f32.mrf.mxu0
  %v892 = vadd.f32 0.0, %v891
  %893 = vdwg.mxu0
  %894 = vmatpush.msra.mxu0 0.0
  %895 = vmatpush.msra.mxu0 0.0
  %896 = vmatpush.msra.mxu0 0.0
  %897 = vmatpush.msra.mxu0 0.0
  %898 = vmatpush.msra.mxu0 0.0
  %899 = vmatpush.msra.mxu0 0.0
  %900 = vmatpush.msra.mxu0 0.0
  %901 = vmatpush.msra.mxu0 0.0
  %902 = vmatpush.msra.mxu0 0.0
  %903 = vmatpush.msra.mxu0 0.0
  %904 = vmatpush.msra.mxu0 0.0
  %905 = vmatpush.msra.mxu0 %v492
  %906 = vmatpush.msra.mxu0 %v381
  %907 = vmatpush.msra.mxu0 %v270
  %908 = vmatpush.msra.mxu0 %v159
  %909 = vmatpush.msra.mxu0 %v46
  %910 = vmatmul.f32.gmra.mxu0 %v532
  %v911 = vpop.f32.mrf.mxu0
  %v912 = vadd.f32 0.0, %v911
  %913 = vdwg.mxu0
  %914 = vmatpush.msra.mxu0 0.0
  %915 = vmatpush.msra.mxu0 0.0
  %916 = vmatpush.msra.mxu0 0.0
  %917 = vmatpush.msra.mxu0 0.0
  %918 = vmatpush.msra.mxu0 0.0
  %919 = vmatpush.msra.mxu0 0.0
  %920 = vmatpush.msra.mxu0 0.0
  %921 = vmatpush.msra.mxu0 0.0
  %922 = vmatpush.msra.mxu0 0.0
  %923 = vmatpush.msra.mxu0 0.0
  %924 = vmatpush.msra.mxu0 0.0
  %925 = vmatpush.msra.mxu0 %v493
  %926 = vmatpush.msra.mxu0 %v382
  %927 = vmatpush.msra.mxu0 %v271
  %928 = vmatpush.msra.mxu0 %v160
  %929 = vmatpush.msra.mxu0 %v47
  %930 = vmatmul.f32.gmra.mxu0 %v532
  %v931 = vpop.f32.mrf.mxu0
  %v932 = vadd.f32 0.0, %v931
  %933 = vdwg.mxu0
  %934 = vmatpush.msra.mxu0 0.0
  %935 = vmatpush.msra.mxu0 0.0
  %936 = vmatpush.msra.mxu0 0.0
  %937 = vmatpush.msra.mxu0 0.0
  %938 = vmatpush.msra.mxu0 0.0
  %939 = vmatpush.msra.mxu0 0.0
  %940 = vmatpush.msra.mxu0 0.0
  %941 = vmatpush.msra.mxu0 0.0
  %942 = vmatpush.msra.mxu0 0.0
  %943 = vmatpush.msra.mxu0 0.0
  %944 = vmatpush.msra.mxu0 0.0
  %945 = vmatpush.msra.mxu0 %v494
  %946 = vmatpush.msra.mxu0 %v383
  %947 = vmatpush.msra.mxu0 %v272
  %948 = vmatpush.msra.mxu0 %v161
  %949 = vmatpush.msra.mxu0 %v48
  %950 = vmatmul.f32.gmra.mxu0 %v532
  %v951 = vpop.f32.mrf.mxu0
  %v952 = vadd.f32 0.0, %v951
  %953 = vdwg.mxu0
  %954 = vmatpush.msra.mxu0 0.0
  %955 = vmatpush.msra.mxu0 0.0
  %956 = vmatpush.msra.mxu0 0.0
  %957 = vmatpush.msra.mxu0 0.0
  %958 = vmatpush.msra.mxu0 0.0
  %959 = vmatpush.msra.mxu0 0.0
  %960 = vmatpush.msra.mxu0 0.0
  %961 = vmatpush.msra.mxu0 0.0
  %962 = vmatpush.msra.mxu0 0.0
  %963 = vmatpush.msra.mxu0 0.0
  %964 = vmatpush.msra.mxu0 0.0
  %965 = vmatpush.msra.mxu0 %v495
  %966 = vmatpush.msra.mxu0 %v384
  %967 = vmatpush.msra.mxu0 %v273
  %968 = vmatpush.msra.mxu0 %v162
  %969 = vmatpush.msra.mxu0 %v49
  %970 = vmatmul.f32.gmra.mxu0 %v532
  %v971 = vpop.f32.mrf.mxu0
  %v972 = vadd.f32 0.0, %v971
  %973 = vdwg.mxu0
  %974 = vmatpush.msra.mxu0 0.0
  %975 = vmatpush.msra.mxu0 0.0
  %976 = vmatpush.msra.mxu0 0.0
  %977 = vmatpush.msra.mxu0 0.0
  %978 = vmatpush.msra.mxu0 0.0
  %979 = vmatpush.msra.mxu0 0.0
  %980 = vmatpush.msra.mxu0 0.0
  %981 = vmatpush.msra.mxu0 0.0
  %982 = vmatpush.msra.mxu0 0.0
  %983 = vmatpush.msra.mxu0 0.0
  %984 = vmatpush.msra.mxu0 0.0
  %985 = vmatpush.msra.mxu0 %v496
  %986 = vmatpush.msra.mxu0 %v385
  %987 = vmatpush.msra.mxu0 %v274
  %988 = vmatpush.msra.mxu0 %v163
  %989 = vmatpush.msra.mxu0 %v50
  %990 = vmatmul.f32.gmra.mxu0 %v532
  %v991 = vpop.f32.mrf.mxu0
  %v992 = vadd.f32 0.0, %v991
  %993 = vdwg.mxu0
  %v995 = vsel %vm530, %v527, 0
  %997 = vmatpush.msra.mxu0 0.0
  %998 = vmatpush.msra.mxu0 0.0
  %999 = vmatpush.msra.mxu0 0.0
  %1000 = vmatpush.msra.mxu0 0.0
  %1001 = vmatpush.msra.mxu0 0.0
  %1002 = vmatpush.msra.mxu0 0.0
  %1003 = vmatpush.msra.mxu0 0.0
  %1004 = vmatpush.msra.mxu0 0.0
  %1005 = vmatpush.msra.mxu0 0.0
  %1006 = vmatpush.msra.mxu0 0.0
  %1007 = vmatpush.msra.mxu0 0.0
  %1008 = vmatpush.msra.mxu0 %v473
  %1009 = vmatpush.msra.mxu0 %v362
  %1010 = vmatpush.msra.mxu0 %v251
  %1011 = vmatpush.msra.mxu0 %v140
  %1012 = vmatpush.msra.mxu0 %v27
  %1013 = vmatmul.f32.gmra.mxu0 %v995
  %v1014 = vpop.f32.mrf.mxu0
  %v1015 = vadd.f32 %v552, %v1014
  %1016 = vdwg.mxu0
  %1017 = vmatpush.msra.mxu0 0.0
  %1018 = vmatpush.msra.mxu0 0.0
  %1019 = vmatpush.msra.mxu0 0.0
  %1020 = vmatpush.msra.mxu0 0.0
  %1021 = vmatpush.msra.mxu0 0.0
  %1022 = vmatpush.msra.mxu0 0.0
  %1023 = vmatpush.msra.mxu0 0.0
  %1024 = vmatpush.msra.mxu0 0.0
  %1025 = vmatpush.msra.mxu0 0.0
  %1026 = vmatpush.msra.mxu0 0.0
  %1027 = vmatpush.msra.mxu0 0.0
  %1028 = vmatpush.msra.mxu0 %v474
  %1029 = vmatpush.msra.mxu0 %v363
  %1030 = vmatpush.msra.mxu0 %v252
  %1031 = vmatpush.msra.mxu0 %v141
  %1032 = vmatpush.msra.mxu0 %v28
  %1033 = vmatmul.f32.gmra.mxu0 %v995
  %v1034 = vpop.f32.mrf.mxu0
  %v1035 = vadd.f32 %v572, %v1034
  %1036 = vdwg.mxu0
  %1037 = vmatpush.msra.mxu0 0.0
  %1038 = vmatpush.msra.mxu0 0.0
  %1039 = vmatpush.msra.mxu0 0.0
  %1040 = vmatpush.msra.mxu0 0.0
  %1041 = vmatpush.msra.mxu0 0.0
  %1042 = vmatpush.msra.mxu0 0.0
  %1043 = vmatpush.msra.mxu0 0.0
  %1044 = vmatpush.msra.mxu0 0.0
  %1045 = vmatpush.msra.mxu0 0.0
  %1046 = vmatpush.msra.mxu0 0.0
  %1047 = vmatpush.msra.mxu0 0.0
  %1048 = vmatpush.msra.mxu0 %v475
  %1049 = vmatpush.msra.mxu0 %v364
  %1050 = vmatpush.msra.mxu0 %v253
  %1051 = vmatpush.msra.mxu0 %v142
  %1052 = vmatpush.msra.mxu0 %v29
  %1053 = vmatmul.f32.gmra.mxu0 %v995
  %v1054 = vpop.f32.mrf.mxu0
  %v1055 = vadd.f32 %v592, %v1054
  %1056 = vdwg.mxu0
  %1057 = vmatpush.msra.mxu0 0.0
  %1058 = vmatpush.msra.mxu0 0.0
  %1059 = vmatpush.msra.mxu0 0.0
  %1060 = vmatpush.msra.mxu0 0.0
  %1061 = vmatpush.msra.mxu0 0.0
  %1062 = vmatpush.msra.mxu0 0.0
  %1063 = vmatpush.msra.mxu0 0.0
  %1064 = vmatpush.msra.mxu0 0.0
  %1065 = vmatpush.msra.mxu0 0.0
  %1066 = vmatpush.msra.mxu0 0.0
  %1067 = vmatpush.msra.mxu0 0.0
  %1068 = vmatpush.msra.mxu0 %v476
  %1069 = vmatpush.msra.mxu0 %v365
  %1070 = vmatpush.msra.mxu0 %v254
  %1071 = vmatpush.msra.mxu0 %v143
  %1072 = vmatpush.msra.mxu0 %v30
  %1073 = vmatmul.f32.gmra.mxu0 %v995
  %v1074 = vpop.f32.mrf.mxu0
  %v1075 = vadd.f32 %v612, %v1074
  %1076 = vdwg.mxu0
  %1077 = vmatpush.msra.mxu0 0.0
  %1078 = vmatpush.msra.mxu0 0.0
  %1079 = vmatpush.msra.mxu0 0.0
  %1080 = vmatpush.msra.mxu0 0.0
  %1081 = vmatpush.msra.mxu0 0.0
  %1082 = vmatpush.msra.mxu0 0.0
  %1083 = vmatpush.msra.mxu0 0.0
  %1084 = vmatpush.msra.mxu0 0.0
  %1085 = vmatpush.msra.mxu0 0.0
  %1086 = vmatpush.msra.mxu0 0.0
  %1087 = vmatpush.msra.mxu0 0.0
  %1088 = vmatpush.msra.mxu0 %v477
  %1089 = vmatpush.msra.mxu0 %v366
  %1090 = vmatpush.msra.mxu0 %v255
  %1091 = vmatpush.msra.mxu0 %v144
  %1092 = vmatpush.msra.mxu0 %v31
  %1093 = vmatmul.f32.gmra.mxu0 %v995
  %v1094 = vpop.f32.mrf.mxu0
  %v1095 = vadd.f32 %v632, %v1094
  %1096 = vdwg.mxu0
  %1097 = vmatpush.msra.mxu0 0.0
  %1098 = vmatpush.msra.mxu0 0.0
  %1099 = vmatpush.msra.mxu0 0.0
  %1100 = vmatpush.msra.mxu0 0.0
  %1101 = vmatpush.msra.mxu0 0.0
  %1102 = vmatpush.msra.mxu0 0.0
  %1103 = vmatpush.msra.mxu0 0.0
  %1104 = vmatpush.msra.mxu0 0.0
  %1105 = vmatpush.msra.mxu0 0.0
  %1106 = vmatpush.msra.mxu0 0.0
  %1107 = vmatpush.msra.mxu0 0.0
  %1108 = vmatpush.msra.mxu0 %v478
  %1109 = vmatpush.msra.mxu0 %v367
  %1110 = vmatpush.msra.mxu0 %v256
  %1111 = vmatpush.msra.mxu0 %v145
  %1112 = vmatpush.msra.mxu0 %v32
  %1113 = vmatmul.f32.gmra.mxu0 %v995
  %v1114 = vpop.f32.mrf.mxu0
  %v1115 = vadd.f32 %v652, %v1114
  %1116 = vdwg.mxu0
  %1117 = vmatpush.msra.mxu0 0.0
  %1118 = vmatpush.msra.mxu0 0.0
  %1119 = vmatpush.msra.mxu0 0.0
  %1120 = vmatpush.msra.mxu0 0.0
  %1121 = vmatpush.msra.mxu0 0.0
  %1122 = vmatpush.msra.mxu0 0.0
  %1123 = vmatpush.msra.mxu0 0.0
  %1124 = vmatpush.msra.mxu0 0.0
  %1125 = vmatpush.msra.mxu0 0.0
  %1126 = vmatpush.msra.mxu0 0.0
  %1127 = vmatpush.msra.mxu0 0.0
  %1128 = vmatpush.msra.mxu0 %v479
  %1129 = vmatpush.msra.mxu0 %v368
  %1130 = vmatpush.msra.mxu0 %v257
  %1131 = vmatpush.msra.mxu0 %v146
  %1132 = vmatpush.msra.mxu0 %v33
  %1133 = vmatmul.f32.gmra.mxu0 %v995
  %v1134 = vpop.f32.mrf.mxu0
  %v1135 = vadd.f32 %v672, %v1134
  %1136 = vdwg.mxu0
  %1137 = vmatpush.msra.mxu0 0.0
  %1138 = vmatpush.msra.mxu0 0.0
  %1139 = vmatpush.msra.mxu0 0.0
  %1140 = vmatpush.msra.mxu0 0.0
  %1141 = vmatpush.msra.mxu0 0.0
  %1142 = vmatpush.msra.mxu0 0.0
  %1143 = vmatpush.msra.mxu0 0.0
  %1144 = vmatpush.msra.mxu0 0.0
  %1145 = vmatpush.msra.mxu0 0.0
  %1146 = vmatpush.msra.mxu0 0.0
  %1147 = vmatpush.msra.mxu0 0.0
  %1148 = vmatpush.msra.mxu0 %v480
  %1149 = vmatpush.msra.mxu0 %v369
  %1150 = vmatpush.msra.mxu0 %v258
  %1151 = vmatpush.msra.mxu0 %v147
  %1152 = vmatpush.msra.mxu0 %v34
  %1153 = vmatmul.f32.gmra.mxu0 %v995
  %v1154 = vpop.f32.mrf.mxu0
  %v1155 = vadd.f32 %v692, %v1154
  %1156 = vdwg.mxu0
  %1157 = vmatpush.msra.mxu0 0.0
  %1158 = vmatpush.msra.mxu0 0.0
  %1159 = vmatpush.msra.mxu0 0.0
  %1160 = vmatpush.msra.mxu0 0.0
  %1161 = vmatpush.msra.mxu0 0.0
  %1162 = vmatpush.msra.mxu0 0.0
  %1163 = vmatpush.msra.mxu0 0.0
  %1164 = vmatpush.msra.mxu0 0.0
  %1165 = vmatpush.msra.mxu0 0.0
  %1166 = vmatpush.msra.mxu0 0.0
  %1167 = vmatpush.msra.mxu0 0.0
  %1168 = vmatpush.msra.mxu0 %v481
  %1169 = vmatpush.msra.mxu0 %v370
  %1170 = vmatpush.msra.mxu0 %v259
  %1171 = vmatpush.msra.mxu0 %v148
  %1172 = vmatpush.msra.mxu0 %v35
  %1173 = vmatmul.f32.gmra.mxu0 %v995
  %v1174 = vpop.f32.mrf.mxu0
  %v1175 = vadd.f32 %v712, %v1174
  %1176 = vdwg.mxu0
  %1177 = vmatpush.msra.mxu0 0.0
  %1178 = vmatpush.msra.mxu0 0.0
  %1179 = vmatpush.msra.mxu0 0.0
  %1180 = vmatpush.msra.mxu0 0.0
  %1181 = vmatpush.msra.mxu0 0.0
  %1182 = vmatpush.msra.mxu0 0.0
  %1183 = vmatpush.msra.mxu0 0.0
  %1184 = vmatpush.msra.mxu0 0.0
  %1185 = vmatpush.msra.mxu0 0.0
  %1186 = vmatpush.msra.mxu0 0.0
  %1187 = vmatpush.msra.mxu0 0.0
  %1188 = vmatpush.msra.mxu0 %v482
  %1189 = vmatpush.msra.mxu0 %v371
  %1190 = vmatpush.msra.mxu0 %v260
  %1191 = vmatpush.msra.mxu0 %v149
  %1192 = vmatpush.msra.mxu0 %v36
  %1193 = vmatmul.f32.gmra.mxu0 %v995
  %v1194 = vpop.f32.mrf.mxu0
  %v1195 = vadd.f32 %v732, %v1194
  %1196 = vdwg.mxu0
  %1197 = vmatpush.msra.mxu0 0.0
  %1198 = vmatpush.msra.mxu0 0.0
  %1199 = vmatpush.msra.mxu0 0.0
  %1200 = vmatpush.msra.mxu0 0.0
  %1201 = vmatpush.msra.mxu0 0.0
  %1202 = vmatpush.msra.mxu0 0.0
  %1203 = vmatpush.msra.mxu0 0.0
  %1204 = vmatpush.msra.mxu0 0.0
  %1205 = vmatpush.msra.mxu0 0.0
  %1206 = vmatpush.msra.mxu0 0.0
  %1207 = vmatpush.msra.mxu0 0.0
  %1208 = vmatpush.msra.mxu0 %v483
  %1209 = vmatpush.msra.mxu0 %v372
  %1210 = vmatpush.msra.mxu0 %v261
  %1211 = vmatpush.msra.mxu0 %v150
  %1212 = vmatpush.msra.mxu0 %v37
  %1213 = vmatmul.f32.gmra.mxu0 %v995
  %v1214 = vpop.f32.mrf.mxu0
  %v1215 = vadd.f32 %v752, %v1214
  %1216 = vdwg.mxu0
  %1217 = vmatpush.msra.mxu0 0.0
  %1218 = vmatpush.msra.mxu0 0.0
  %1219 = vmatpush.msra.mxu0 0.0
  %1220 = vmatpush.msra.mxu0 0.0
  %1221 = vmatpush.msra.mxu0 0.0
  %1222 = vmatpush.msra.mxu0 0.0
  %1223 = vmatpush.msra.mxu0 0.0
  %1224 = vmatpush.msra.mxu0 0.0
  %1225 = vmatpush.msra.mxu0 0.0
  %1226 = vmatpush.msra.mxu0 0.0
  %1227 = vmatpush.msra.mxu0 0.0
  %1228 = vmatpush.msra.mxu0 %v484
  %1229 = vmatpush.msra.mxu0 %v373
  %1230 = vmatpush.msra.mxu0 %v262
  %1231 = vmatpush.msra.mxu0 %v151
  %1232 = vmatpush.msra.mxu0 %v38
  %1233 = vmatmul.f32.gmra.mxu0 %v995
  %v1234 = vpop.f32.mrf.mxu0
  %v1235 = vadd.f32 %v772, %v1234
  %1236 = vdwg.mxu0
  %1237 = vmatpush.msra.mxu0 0.0
  %1238 = vmatpush.msra.mxu0 0.0
  %1239 = vmatpush.msra.mxu0 0.0
  %1240 = vmatpush.msra.mxu0 0.0
  %1241 = vmatpush.msra.mxu0 0.0
  %1242 = vmatpush.msra.mxu0 0.0
  %1243 = vmatpush.msra.mxu0 0.0
  %1244 = vmatpush.msra.mxu0 0.0
  %1245 = vmatpush.msra.mxu0 0.0
  %1246 = vmatpush.msra.mxu0 0.0
  %1247 = vmatpush.msra.mxu0 0.0
  %1248 = vmatpush.msra.mxu0 %v485
  %1249 = vmatpush.msra.mxu0 %v374
  %1250 = vmatpush.msra.mxu0 %v263
  %1251 = vmatpush.msra.mxu0 %v152
  %1252 = vmatpush.msra.mxu0 %v39
  %1253 = vmatmul.f32.gmra.mxu0 %v995
  %v1254 = vpop.f32.mrf.mxu0
  %v1255 = vadd.f32 %v792, %v1254
  %1256 = vdwg.mxu0
  %1257 = vmatpush.msra.mxu0 0.0
  %1258 = vmatpush.msra.mxu0 0.0
  %1259 = vmatpush.msra.mxu0 0.0
  %1260 = vmatpush.msra.mxu0 0.0
  %1261 = vmatpush.msra.mxu0 0.0
  %1262 = vmatpush.msra.mxu0 0.0
  %1263 = vmatpush.msra.mxu0 0.0
  %1264 = vmatpush.msra.mxu0 0.0
  %1265 = vmatpush.msra.mxu0 0.0
  %1266 = vmatpush.msra.mxu0 0.0
  %1267 = vmatpush.msra.mxu0 0.0
  %1268 = vmatpush.msra.mxu0 %v486
  %1269 = vmatpush.msra.mxu0 %v375
  %1270 = vmatpush.msra.mxu0 %v264
  %1271 = vmatpush.msra.mxu0 %v153
  %1272 = vmatpush.msra.mxu0 %v40
  %1273 = vmatmul.f32.gmra.mxu0 %v995
  %v1274 = vpop.f32.mrf.mxu0
  %v1275 = vadd.f32 %v812, %v1274
  %1276 = vdwg.mxu0
  %1277 = vmatpush.msra.mxu0 0.0
  %1278 = vmatpush.msra.mxu0 0.0
  %1279 = vmatpush.msra.mxu0 0.0
  %1280 = vmatpush.msra.mxu0 0.0
  %1281 = vmatpush.msra.mxu0 0.0
  %1282 = vmatpush.msra.mxu0 0.0
  %1283 = vmatpush.msra.mxu0 0.0
  %1284 = vmatpush.msra.mxu0 0.0
  %1285 = vmatpush.msra.mxu0 0.0
  %1286 = vmatpush.msra.mxu0 0.0
  %1287 = vmatpush.msra.mxu0 0.0
  %1288 = vmatpush.msra.mxu0 %v487
  %1289 = vmatpush.msra.mxu0 %v376
  %1290 = vmatpush.msra.mxu0 %v265
  %1291 = vmatpush.msra.mxu0 %v154
  %1292 = vmatpush.msra.mxu0 %v41
  %1293 = vmatmul.f32.gmra.mxu0 %v995
  %v1294 = vpop.f32.mrf.mxu0
  %v1295 = vadd.f32 %v832, %v1294
  %1296 = vdwg.mxu0
  %1297 = vmatpush.msra.mxu0 0.0
  %1298 = vmatpush.msra.mxu0 0.0
  %1299 = vmatpush.msra.mxu0 0.0
  %1300 = vmatpush.msra.mxu0 0.0
  %1301 = vmatpush.msra.mxu0 0.0
  %1302 = vmatpush.msra.mxu0 0.0
  %1303 = vmatpush.msra.mxu0 0.0
  %1304 = vmatpush.msra.mxu0 0.0
  %1305 = vmatpush.msra.mxu0 0.0
  %1306 = vmatpush.msra.mxu0 0.0
  %1307 = vmatpush.msra.mxu0 0.0
  %1308 = vmatpush.msra.mxu0 %v488
  %1309 = vmatpush.msra.mxu0 %v377
  %1310 = vmatpush.msra.mxu0 %v266
  %1311 = vmatpush.msra.mxu0 %v155
  %1312 = vmatpush.msra.mxu0 %v42
  %1313 = vmatmul.f32.gmra.mxu0 %v995
  %v1314 = vpop.f32.mrf.mxu0
  %v1315 = vadd.f32 %v852, %v1314
  %1316 = vdwg.mxu0
  %1317 = vmatpush.msra.mxu0 0.0
  %1318 = vmatpush.msra.mxu0 0.0
  %1319 = vmatpush.msra.mxu0 0.0
  %1320 = vmatpush.msra.mxu0 0.0
  %1321 = vmatpush.msra.mxu0 0.0
  %1322 = vmatpush.msra.mxu0 0.0
  %1323 = vmatpush.msra.mxu0 0.0
  %1324 = vmatpush.msra.mxu0 0.0
  %1325 = vmatpush.msra.mxu0 0.0
  %1326 = vmatpush.msra.mxu0 0.0
  %1327 = vmatpush.msra.mxu0 0.0
  %1328 = vmatpush.msra.mxu0 %v489
  %1329 = vmatpush.msra.mxu0 %v378
  %1330 = vmatpush.msra.mxu0 %v267
  %1331 = vmatpush.msra.mxu0 %v156
  %1332 = vmatpush.msra.mxu0 %v43
  %1333 = vmatmul.f32.gmra.mxu0 %v995
  %v1334 = vpop.f32.mrf.mxu0
  %v1335 = vadd.f32 %v872, %v1334
  %1336 = vdwg.mxu0
  %1337 = vmatpush.msra.mxu0 0.0
  %1338 = vmatpush.msra.mxu0 0.0
  %1339 = vmatpush.msra.mxu0 0.0
  %1340 = vmatpush.msra.mxu0 0.0
  %1341 = vmatpush.msra.mxu0 0.0
  %1342 = vmatpush.msra.mxu0 0.0
  %1343 = vmatpush.msra.mxu0 0.0
  %1344 = vmatpush.msra.mxu0 0.0
  %1345 = vmatpush.msra.mxu0 0.0
  %1346 = vmatpush.msra.mxu0 0.0
  %1347 = vmatpush.msra.mxu0 0.0
  %1348 = vmatpush.msra.mxu0 %v490
  %1349 = vmatpush.msra.mxu0 %v379
  %1350 = vmatpush.msra.mxu0 %v268
  %1351 = vmatpush.msra.mxu0 %v157
  %1352 = vmatpush.msra.mxu0 %v44
  %1353 = vmatmul.f32.gmra.mxu0 %v995
  %v1354 = vpop.f32.mrf.mxu0
  %v1355 = vadd.f32 %v892, %v1354
  %1356 = vdwg.mxu0
  %1357 = vmatpush.msra.mxu0 0.0
  %1358 = vmatpush.msra.mxu0 0.0
  %1359 = vmatpush.msra.mxu0 0.0
  %1360 = vmatpush.msra.mxu0 0.0
  %1361 = vmatpush.msra.mxu0 0.0
  %1362 = vmatpush.msra.mxu0 0.0
  %1363 = vmatpush.msra.mxu0 0.0
  %1364 = vmatpush.msra.mxu0 0.0
  %1365 = vmatpush.msra.mxu0 0.0
  %1366 = vmatpush.msra.mxu0 0.0
  %1367 = vmatpush.msra.mxu0 0.0
  %1368 = vmatpush.msra.mxu0 %v491
  %1369 = vmatpush.msra.mxu0 %v380
  %1370 = vmatpush.msra.mxu0 %v269
  %1371 = vmatpush.msra.mxu0 %v158
  %1372 = vmatpush.msra.mxu0 %v45
  %1373 = vmatmul.f32.gmra.mxu0 %v995
  %v1374 = vpop.f32.mrf.mxu0
  %v1375 = vadd.f32 %v912, %v1374
  %1376 = vdwg.mxu0
  %1377 = vmatpush.msra.mxu0 0.0
  %1378 = vmatpush.msra.mxu0 0.0
  %1379 = vmatpush.msra.mxu0 0.0
  %1380 = vmatpush.msra.mxu0 0.0
  %1381 = vmatpush.msra.mxu0 0.0
  %1382 = vmatpush.msra.mxu0 0.0
  %1383 = vmatpush.msra.mxu0 0.0
  %1384 = vmatpush.msra.mxu0 0.0
  %1385 = vmatpush.msra.mxu0 0.0
  %1386 = vmatpush.msra.mxu0 0.0
  %1387 = vmatpush.msra.mxu0 0.0
  %1388 = vmatpush.msra.mxu0 %v492
  %1389 = vmatpush.msra.mxu0 %v381
  %1390 = vmatpush.msra.mxu0 %v270
  %1391 = vmatpush.msra.mxu0 %v159
  %1392 = vmatpush.msra.mxu0 %v46
  %1393 = vmatmul.f32.gmra.mxu0 %v995
  %v1394 = vpop.f32.mrf.mxu0
  %v1395 = vadd.f32 %v932, %v1394
  %1396 = vdwg.mxu0
  %1397 = vmatpush.msra.mxu0 0.0
  %1398 = vmatpush.msra.mxu0 0.0
  %1399 = vmatpush.msra.mxu0 0.0
  %1400 = vmatpush.msra.mxu0 0.0
  %1401 = vmatpush.msra.mxu0 0.0
  %1402 = vmatpush.msra.mxu0 0.0
  %1403 = vmatpush.msra.mxu0 0.0
  %1404 = vmatpush.msra.mxu0 0.0
  %1405 = vmatpush.msra.mxu0 0.0
  %1406 = vmatpush.msra.mxu0 0.0
  %1407 = vmatpush.msra.mxu0 0.0
  %1408 = vmatpush.msra.mxu0 %v493
  %1409 = vmatpush.msra.mxu0 %v382
  %1410 = vmatpush.msra.mxu0 %v271
  %1411 = vmatpush.msra.mxu0 %v160
  %1412 = vmatpush.msra.mxu0 %v47
  %1413 = vmatmul.f32.gmra.mxu0 %v995
  %v1414 = vpop.f32.mrf.mxu0
  %v1415 = vadd.f32 %v952, %v1414
  %1416 = vdwg.mxu0
  %1417 = vmatpush.msra.mxu0 0.0
  %1418 = vmatpush.msra.mxu0 0.0
  %1419 = vmatpush.msra.mxu0 0.0
  %1420 = vmatpush.msra.mxu0 0.0
  %1421 = vmatpush.msra.mxu0 0.0
  %1422 = vmatpush.msra.mxu0 0.0
  %1423 = vmatpush.msra.mxu0 0.0
  %1424 = vmatpush.msra.mxu0 0.0
  %1425 = vmatpush.msra.mxu0 0.0
  %1426 = vmatpush.msra.mxu0 0.0
  %1427 = vmatpush.msra.mxu0 0.0
  %1428 = vmatpush.msra.mxu0 %v494
  %1429 = vmatpush.msra.mxu0 %v383
  %1430 = vmatpush.msra.mxu0 %v272
  %1431 = vmatpush.msra.mxu0 %v161
  %1432 = vmatpush.msra.mxu0 %v48
  %1433 = vmatmul.f32.gmra.mxu0 %v995
  %v1434 = vpop.f32.mrf.mxu0
  %v1435 = vadd.f32 %v972, %v1434
  %1436 = vdwg.mxu0
  %1437 = vmatpush.msra.mxu0 0.0
  %1438 = vmatpush.msra.mxu0 0.0
  %1439 = vmatpush.msra.mxu0 0.0
  %1440 = vmatpush.msra.mxu0 0.0
  %1441 = vmatpush.msra.mxu0 0.0
  %1442 = vmatpush.msra.mxu0 0.0
  %1443 = vmatpush.msra.mxu0 0.0
  %1444 = vmatpush.msra.mxu0 0.0
  %1445 = vmatpush.msra.mxu0 0.0
  %1446 = vmatpush.msra.mxu0 0.0
  %1447 = vmatpush.msra.mxu0 0.0
  %1448 = vmatpush.msra.mxu0 %v495
  %1449 = vmatpush.msra.mxu0 %v384
  %1450 = vmatpush.msra.mxu0 %v273
  %1451 = vmatpush.msra.mxu0 %v162
  %1452 = vmatpush.msra.mxu0 %v49
  %1453 = vmatmul.f32.gmra.mxu0 %v995
  %v1454 = vpop.f32.mrf.mxu0
  %v1455 = vadd.f32 %v992, %v1454
  %1456 = vdwg.mxu0
  %s1457 = scalar_lea.vmem %s1, 16
  %v1458 = vld [vmem:[%s1457] sm:$0xff]
  %v1460 = vsel %vm530, %v1458, 0
  %1462 = vmatpush.msra.mxu0 0.0
  %1463 = vmatpush.msra.mxu0 0.0
  %1464 = vmatpush.msra.mxu0 0.0
  %1465 = vmatpush.msra.mxu0 0.0
  %1466 = vmatpush.msra.mxu0 0.0
  %1467 = vmatpush.msra.mxu0 0.0
  %1468 = vmatpush.msra.mxu0 0.0
  %1469 = vmatpush.msra.mxu0 0.0
  %1470 = vmatpush.msra.mxu0 0.0
  %1471 = vmatpush.msra.mxu0 0.0
  %1472 = vmatpush.msra.mxu0 0.0
  %1473 = vmatpush.msra.mxu0 %v475
  %1474 = vmatpush.msra.mxu0 %v364
  %1475 = vmatpush.msra.mxu0 %v253
  %1476 = vmatpush.msra.mxu0 %v142
  %1477 = vmatpush.msra.mxu0 %v29
  %1478 = vmatmul.f32.gmra.mxu0 %v1460
  %v1479 = vpop.f32.mrf.mxu0
  %v1480 = vadd.f32 0.0, %v1479
  %1481 = vdwg.mxu0
  %1482 = vmatpush.msra.mxu0 0.0
  %1483 = vmatpush.msra.mxu0 0.0
  %1484 = vmatpush.msra.mxu0 0.0
  %1485 = vmatpush.msra.mxu0 0.0
  %1486 = vmatpush.msra.mxu0 0.0
  %1487 = vmatpush.msra.mxu0 0.0
  %1488 = vmatpush.msra.mxu0 0.0
  %1489 = vmatpush.msra.mxu0 0.0
  %1490 = vmatpush.msra.mxu0 0.0
  %1491 = vmatpush.msra.mxu0 0.0
  %1492 = vmatpush.msra.mxu0 0.0
  %1493 = vmatpush.msra.mxu0 %v476
  %1494 = vmatpush.msra.mxu0 %v365
  %1495 = vmatpush.msra.mxu0 %v254
  %1496 = vmatpush.msra.mxu0 %v143
  %1497 = vmatpush.msra.mxu0 %v30
  %1498 = vmatmul.f32.gmra.mxu0 %v1460
  %v1499 = vpop.f32.mrf.mxu0
  %v1500 = vadd.f32 0.0, %v1499
  %1501 = vdwg.mxu0
  %1502 = vmatpush.msra.mxu0 0.0
  %1503 = vmatpush.msra.mxu0 0.0
  %1504 = vmatpush.msra.mxu0 0.0
  %1505 = vmatpush.msra.mxu0 0.0
  %1506 = vmatpush.msra.mxu0 0.0
  %1507 = vmatpush.msra.mxu0 0.0
  %1508 = vmatpush.msra.mxu0 0.0
  %1509 = vmatpush.msra.mxu0 0.0
  %1510 = vmatpush.msra.mxu0 0.0
  %1511 = vmatpush.msra.mxu0 0.0
  %1512 = vmatpush.msra.mxu0 0.0
  %1513 = vmatpush.msra.mxu0 %v477
  %1514 = vmatpush.msra.mxu0 %v366
  %1515 = vmatpush.msra.mxu0 %v255
  %1516 = vmatpush.msra.mxu0 %v144
  %1517 = vmatpush.msra.mxu0 %v31
  %1518 = vmatmul.f32.gmra.mxu0 %v1460
  %v1519 = vpop.f32.mrf.mxu0
  %v1520 = vadd.f32 0.0, %v1519
  %1521 = vdwg.mxu0
  %1522 = vmatpush.msra.mxu0 0.0
  %1523 = vmatpush.msra.mxu0 0.0
  %1524 = vmatpush.msra.mxu0 0.0
  %1525 = vmatpush.msra.mxu0 0.0
  %1526 = vmatpush.msra.mxu0 0.0
  %1527 = vmatpush.msra.mxu0 0.0
  %1528 = vmatpush.msra.mxu0 0.0
  %1529 = vmatpush.msra.mxu0 0.0
  %1530 = vmatpush.msra.mxu0 0.0
  %1531 = vmatpush.msra.mxu0 0.0
  %1532 = vmatpush.msra.mxu0 0.0
  %1533 = vmatpush.msra.mxu0 %v478
  %1534 = vmatpush.msra.mxu0 %v367
  %1535 = vmatpush.msra.mxu0 %v256
  %1536 = vmatpush.msra.mxu0 %v145
  %1537 = vmatpush.msra.mxu0 %v32
  %1538 = vmatmul.f32.gmra.mxu0 %v1460
  %v1539 = vpop.f32.mrf.mxu0
  %v1540 = vadd.f32 0.0, %v1539
  %1541 = vdwg.mxu0
  %1542 = vmatpush.msra.mxu0 0.0
  %1543 = vmatpush.msra.mxu0 0.0
  %1544 = vmatpush.msra.mxu0 0.0
  %1545 = vmatpush.msra.mxu0 0.0
  %1546 = vmatpush.msra.mxu0 0.0
  %1547 = vmatpush.msra.mxu0 0.0
  %1548 = vmatpush.msra.mxu0 0.0
  %1549 = vmatpush.msra.mxu0 0.0
  %1550 = vmatpush.msra.mxu0 0.0
  %1551 = vmatpush.msra.mxu0 0.0
  %1552 = vmatpush.msra.mxu0 0.0
  %1553 = vmatpush.msra.mxu0 %v479
  %1554 = vmatpush.msra.mxu0 %v368
  %1555 = vmatpush.msra.mxu0 %v257
  %1556 = vmatpush.msra.mxu0 %v146
  %1557 = vmatpush.msra.mxu0 %v33
  %1558 = vmatmul.f32.gmra.mxu0 %v1460
  %v1559 = vpop.f32.mrf.mxu0
  %v1560 = vadd.f32 0.0, %v1559
  %1561 = vdwg.mxu0
  %1562 = vmatpush.msra.mxu0 0.0
  %1563 = vmatpush.msra.mxu0 0.0
  %1564 = vmatpush.msra.mxu0 0.0
  %1565 = vmatpush.msra.mxu0 0.0
  %1566 = vmatpush.msra.mxu0 0.0
  %1567 = vmatpush.msra.mxu0 0.0
  %1568 = vmatpush.msra.mxu0 0.0
  %1569 = vmatpush.msra.mxu0 0.0
  %1570 = vmatpush.msra.mxu0 0.0
  %1571 = vmatpush.msra.mxu0 0.0
  %1572 = vmatpush.msra.mxu0 0.0
  %1573 = vmatpush.msra.mxu0 %v480
  %1574 = vmatpush.msra.mxu0 %v369
  %1575 = vmatpush.msra.mxu0 %v258
  %1576 = vmatpush.msra.mxu0 %v147
  %1577 = vmatpush.msra.mxu0 %v34
  %1578 = vmatmul.f32.gmra.mxu0 %v1460
  %v1579 = vpop.f32.mrf.mxu0
  %v1580 = vadd.f32 0.0, %v1579
  %1581 = vdwg.mxu0
  %1582 = vmatpush.msra.mxu0 0.0
  %1583 = vmatpush.msra.mxu0 0.0
  %1584 = vmatpush.msra.mxu0 0.0
  %1585 = vmatpush.msra.mxu0 0.0
  %1586 = vmatpush.msra.mxu0 0.0
  %1587 = vmatpush.msra.mxu0 0.0
  %1588 = vmatpush.msra.mxu0 0.0
  %1589 = vmatpush.msra.mxu0 0.0
  %1590 = vmatpush.msra.mxu0 0.0
  %1591 = vmatpush.msra.mxu0 0.0
  %1592 = vmatpush.msra.mxu0 0.0
  %1593 = vmatpush.msra.mxu0 %v481
  %1594 = vmatpush.msra.mxu0 %v370
  %1595 = vmatpush.msra.mxu0 %v259
  %1596 = vmatpush.msra.mxu0 %v148
  %1597 = vmatpush.msra.mxu0 %v35
  %1598 = vmatmul.f32.gmra.mxu0 %v1460
  %v1599 = vpop.f32.mrf.mxu0
  %v1600 = vadd.f32 0.0, %v1599
  %1601 = vdwg.mxu0
  %1602 = vmatpush.msra.mxu0 0.0
  %1603 = vmatpush.msra.mxu0 0.0
  %1604 = vmatpush.msra.mxu0 0.0
  %1605 = vmatpush.msra.mxu0 0.0
  %1606 = vmatpush.msra.mxu0 0.0
  %1607 = vmatpush.msra.mxu0 0.0
  %1608 = vmatpush.msra.mxu0 0.0
  %1609 = vmatpush.msra.mxu0 0.0
  %1610 = vmatpush.msra.mxu0 0.0
  %1611 = vmatpush.msra.mxu0 0.0
  %1612 = vmatpush.msra.mxu0 0.0
  %1613 = vmatpush.msra.mxu0 %v482
  %1614 = vmatpush.msra.mxu0 %v371
  %1615 = vmatpush.msra.mxu0 %v260
  %1616 = vmatpush.msra.mxu0 %v149
  %1617 = vmatpush.msra.mxu0 %v36
  %1618 = vmatmul.f32.gmra.mxu0 %v1460
  %v1619 = vpop.f32.mrf.mxu0
  %v1620 = vadd.f32 0.0, %v1619
  %1621 = vdwg.mxu0
  %1622 = vmatpush.msra.mxu0 0.0
  %1623 = vmatpush.msra.mxu0 0.0
  %1624 = vmatpush.msra.mxu0 0.0
  %1625 = vmatpush.msra.mxu0 0.0
  %1626 = vmatpush.msra.mxu0 0.0
  %1627 = vmatpush.msra.mxu0 0.0
  %1628 = vmatpush.msra.mxu0 0.0
  %1629 = vmatpush.msra.mxu0 0.0
  %1630 = vmatpush.msra.mxu0 0.0
  %1631 = vmatpush.msra.mxu0 0.0
  %1632 = vmatpush.msra.mxu0 0.0
  %1633 = vmatpush.msra.mxu0 %v483
  %1634 = vmatpush.msra.mxu0 %v372
  %1635 = vmatpush.msra.mxu0 %v261
  %1636 = vmatpush.msra.mxu0 %v150
  %1637 = vmatpush.msra.mxu0 %v37
  %1638 = vmatmul.f32.gmra.mxu0 %v1460
  %v1639 = vpop.f32.mrf.mxu0
  %v1640 = vadd.f32 0.0, %v1639
  %1641 = vdwg.mxu0
  %1642 = vmatpush.msra.mxu0 0.0
  %1643 = vmatpush.msra.mxu0 0.0
  %1644 = vmatpush.msra.mxu0 0.0
  %1645 = vmatpush.msra.mxu0 0.0
  %1646 = vmatpush.msra.mxu0 0.0
  %1647 = vmatpush.msra.mxu0 0.0
  %1648 = vmatpush.msra.mxu0 0.0
  %1649 = vmatpush.msra.mxu0 0.0
  %1650 = vmatpush.msra.mxu0 0.0
  %1651 = vmatpush.msra.mxu0 0.0
  %1652 = vmatpush.msra.mxu0 0.0
  %1653 = vmatpush.msra.mxu0 %v484
  %1654 = vmatpush.msra.mxu0 %v373
  %1655 = vmatpush.msra.mxu0 %v262
  %1656 = vmatpush.msra.mxu0 %v151
  %1657 = vmatpush.msra.mxu0 %v38
  %1658 = vmatmul.f32.gmra.mxu0 %v1460
  %v1659 = vpop.f32.mrf.mxu0
  %v1660 = vadd.f32 0.0, %v1659
  %1661 = vdwg.mxu0
  %1662 = vmatpush.msra.mxu0 0.0
  %1663 = vmatpush.msra.mxu0 0.0
  %1664 = vmatpush.msra.mxu0 0.0
  %1665 = vmatpush.msra.mxu0 0.0
  %1666 = vmatpush.msra.mxu0 0.0
  %1667 = vmatpush.msra.mxu0 0.0
  %1668 = vmatpush.msra.mxu0 0.0
  %1669 = vmatpush.msra.mxu0 0.0
  %1670 = vmatpush.msra.mxu0 0.0
  %1671 = vmatpush.msra.mxu0 0.0
  %1672 = vmatpush.msra.mxu0 0.0
  %1673 = vmatpush.msra.mxu0 %v485
  %1674 = vmatpush.msra.mxu0 %v374
  %1675 = vmatpush.msra.mxu0 %v263
  %1676 = vmatpush.msra.mxu0 %v152
  %1677 = vmatpush.msra.mxu0 %v39
  %1678 = vmatmul.f32.gmra.mxu0 %v1460
  %v1679 = vpop.f32.mrf.mxu0
  %v1680 = vadd.f32 0.0, %v1679
  %1681 = vdwg.mxu0
  %1682 = vmatpush.msra.mxu0 0.0
  %1683 = vmatpush.msra.mxu0 0.0
  %1684 = vmatpush.msra.mxu0 0.0
  %1685 = vmatpush.msra.mxu0 0.0
  %1686 = vmatpush.msra.mxu0 0.0
  %1687 = vmatpush.msra.mxu0 0.0
  %1688 = vmatpush.msra.mxu0 0.0
  %1689 = vmatpush.msra.mxu0 0.0
  %1690 = vmatpush.msra.mxu0 0.0
  %1691 = vmatpush.msra.mxu0 0.0
  %1692 = vmatpush.msra.mxu0 0.0
  %1693 = vmatpush.msra.mxu0 %v486
  %1694 = vmatpush.msra.mxu0 %v375
  %1695 = vmatpush.msra.mxu0 %v264
  %1696 = vmatpush.msra.mxu0 %v153
  %1697 = vmatpush.msra.mxu0 %v40
  %1698 = vmatmul.f32.gmra.mxu0 %v1460
  %v1699 = vpop.f32.mrf.mxu0
  %v1700 = vadd.f32 0.0, %v1699
  %1701 = vdwg.mxu0
  %1702 = vmatpush.msra.mxu0 0.0
  %1703 = vmatpush.msra.mxu0 0.0
  %1704 = vmatpush.msra.mxu0 0.0
  %1705 = vmatpush.msra.mxu0 0.0
  %1706 = vmatpush.msra.mxu0 0.0
  %1707 = vmatpush.msra.mxu0 0.0
  %1708 = vmatpush.msra.mxu0 0.0
  %1709 = vmatpush.msra.mxu0 0.0
  %1710 = vmatpush.msra.mxu0 0.0
  %1711 = vmatpush.msra.mxu0 0.0
  %1712 = vmatpush.msra.mxu0 0.0
  %1713 = vmatpush.msra.mxu0 %v487
  %1714 = vmatpush.msra.mxu0 %v376
  %1715 = vmatpush.msra.mxu0 %v265
  %1716 = vmatpush.msra.mxu0 %v154
  %1717 = vmatpush.msra.mxu0 %v41
  %1718 = vmatmul.f32.gmra.mxu0 %v1460
  %v1719 = vpop.f32.mrf.mxu0
  %v1720 = vadd.f32 0.0, %v1719
  %1721 = vdwg.mxu0
  %1722 = vmatpush.msra.mxu0 0.0
  %1723 = vmatpush.msra.mxu0 0.0
  %1724 = vmatpush.msra.mxu0 0.0
  %1725 = vmatpush.msra.mxu0 0.0
  %1726 = vmatpush.msra.mxu0 0.0
  %1727 = vmatpush.msra.mxu0 0.0
  %1728 = vmatpush.msra.mxu0 0.0
  %1729 = vmatpush.msra.mxu0 0.0
  %1730 = vmatpush.msra.mxu0 0.0
  %1731 = vmatpush.msra.mxu0 0.0
  %1732 = vmatpush.msra.mxu0 0.0
  %1733 = vmatpush.msra.mxu0 %v488
  %1734 = vmatpush.msra.mxu0 %v377
  %1735 = vmatpush.msra.mxu0 %v266
  %1736 = vmatpush.msra.mxu0 %v155
  %1737 = vmatpush.msra.mxu0 %v42
  %1738 = vmatmul.f32.gmra.mxu0 %v1460
  %v1739 = vpop.f32.mrf.mxu0
  %v1740 = vadd.f32 0.0, %v1739
  %1741 = vdwg.mxu0
  %1742 = vmatpush.msra.mxu0 0.0
  %1743 = vmatpush.msra.mxu0 0.0
  %1744 = vmatpush.msra.mxu0 0.0
  %1745 = vmatpush.msra.mxu0 0.0
  %1746 = vmatpush.msra.mxu0 0.0
  %1747 = vmatpush.msra.mxu0 0.0
  %1748 = vmatpush.msra.mxu0 0.0
  %1749 = vmatpush.msra.mxu0 0.0
  %1750 = vmatpush.msra.mxu0 0.0
  %1751 = vmatpush.msra.mxu0 0.0
  %1752 = vmatpush.msra.mxu0 0.0
  %1753 = vmatpush.msra.mxu0 %v489
  %1754 = vmatpush.msra.mxu0 %v378
  %1755 = vmatpush.msra.mxu0 %v267
  %1756 = vmatpush.msra.mxu0 %v156
  %1757 = vmatpush.msra.mxu0 %v43
  %1758 = vmatmul.f32.gmra.mxu0 %v1460
  %v1759 = vpop.f32.mrf.mxu0
  %v1760 = vadd.f32 0.0, %v1759
  %1761 = vdwg.mxu0
  %1762 = vmatpush.msra.mxu0 0.0
  %1763 = vmatpush.msra.mxu0 0.0
  %1764 = vmatpush.msra.mxu0 0.0
  %1765 = vmatpush.msra.mxu0 0.0
  %1766 = vmatpush.msra.mxu0 0.0
  %1767 = vmatpush.msra.mxu0 0.0
  %1768 = vmatpush.msra.mxu0 0.0
  %1769 = vmatpush.msra.mxu0 0.0
  %1770 = vmatpush.msra.mxu0 0.0
  %1771 = vmatpush.msra.mxu0 0.0
  %1772 = vmatpush.msra.mxu0 0.0
  %1773 = vmatpush.msra.mxu0 %v490
  %1774 = vmatpush.msra.mxu0 %v379
  %1775 = vmatpush.msra.mxu0 %v268
  %1776 = vmatpush.msra.mxu0 %v157
  %1777 = vmatpush.msra.mxu0 %v44
  %1778 = vmatmul.f32.gmra.mxu0 %v1460
  %v1779 = vpop.f32.mrf.mxu0
  %v1780 = vadd.f32 0.0, %v1779
  %1781 = vdwg.mxu0
  %1782 = vmatpush.msra.mxu0 0.0
  %1783 = vmatpush.msra.mxu0 0.0
  %1784 = vmatpush.msra.mxu0 0.0
  %1785 = vmatpush.msra.mxu0 0.0
  %1786 = vmatpush.msra.mxu0 0.0
  %1787 = vmatpush.msra.mxu0 0.0
  %1788 = vmatpush.msra.mxu0 0.0
  %1789 = vmatpush.msra.mxu0 0.0
  %1790 = vmatpush.msra.mxu0 0.0
  %1791 = vmatpush.msra.mxu0 0.0
  %1792 = vmatpush.msra.mxu0 0.0
  %1793 = vmatpush.msra.mxu0 %v491
  %1794 = vmatpush.msra.mxu0 %v380
  %1795 = vmatpush.msra.mxu0 %v269
  %1796 = vmatpush.msra.mxu0 %v158
  %1797 = vmatpush.msra.mxu0 %v45
  %1798 = vmatmul.f32.gmra.mxu0 %v1460
  %v1799 = vpop.f32.mrf.mxu0
  %v1800 = vadd.f32 0.0, %v1799
  %1801 = vdwg.mxu0
  %1802 = vmatpush.msra.mxu0 0.0
  %1803 = vmatpush.msra.mxu0 0.0
  %1804 = vmatpush.msra.mxu0 0.0
  %1805 = vmatpush.msra.mxu0 0.0
  %1806 = vmatpush.msra.mxu0 0.0
  %1807 = vmatpush.msra.mxu0 0.0
  %1808 = vmatpush.msra.mxu0 0.0
  %1809 = vmatpush.msra.mxu0 0.0
  %1810 = vmatpush.msra.mxu0 0.0
  %1811 = vmatpush.msra.mxu0 0.0
  %1812 = vmatpush.msra.mxu0 0.0
  %1813 = vmatpush.msra.mxu0 %v492
  %1814 = vmatpush.msra.mxu0 %v381
  %1815 = vmatpush.msra.mxu0 %v270
  %1816 = vmatpush.msra.mxu0 %v159
  %1817 = vmatpush.msra.mxu0 %v46
  %1818 = vmatmul.f32.gmra.mxu0 %v1460
  %v1819 = vpop.f32.mrf.mxu0
  %v1820 = vadd.f32 0.0, %v1819
  %1821 = vdwg.mxu0
  %1822 = vmatpush.msra.mxu0 0.0
  %1823 = vmatpush.msra.mxu0 0.0
  %1824 = vmatpush.msra.mxu0 0.0
  %1825 = vmatpush.msra.mxu0 0.0
  %1826 = vmatpush.msra.mxu0 0.0
  %1827 = vmatpush.msra.mxu0 0.0
  %1828 = vmatpush.msra.mxu0 0.0
  %1829 = vmatpush.msra.mxu0 0.0
  %1830 = vmatpush.msra.mxu0 0.0
  %1831 = vmatpush.msra.mxu0 0.0
  %1832 = vmatpush.msra.mxu0 0.0
  %1833 = vmatpush.msra.mxu0 %v493
  %1834 = vmatpush.msra.mxu0 %v382
  %1835 = vmatpush.msra.mxu0 %v271
  %1836 = vmatpush.msra.mxu0 %v160
  %1837 = vmatpush.msra.mxu0 %v47
  %1838 = vmatmul.f32.gmra.mxu0 %v1460
  %v1839 = vpop.f32.mrf.mxu0
  %v1840 = vadd.f32 0.0, %v1839
  %1841 = vdwg.mxu0
  %1842 = vmatpush.msra.mxu0 0.0
  %1843 = vmatpush.msra.mxu0 0.0
  %1844 = vmatpush.msra.mxu0 0.0
  %1845 = vmatpush.msra.mxu0 0.0
  %1846 = vmatpush.msra.mxu0 0.0
  %1847 = vmatpush.msra.mxu0 0.0
  %1848 = vmatpush.msra.mxu0 0.0
  %1849 = vmatpush.msra.mxu0 0.0
  %1850 = vmatpush.msra.mxu0 0.0
  %1851 = vmatpush.msra.mxu0 0.0
  %1852 = vmatpush.msra.mxu0 0.0
  %1853 = vmatpush.msra.mxu0 %v494
  %1854 = vmatpush.msra.mxu0 %v383
  %1855 = vmatpush.msra.mxu0 %v272
  %1856 = vmatpush.msra.mxu0 %v161
  %1857 = vmatpush.msra.mxu0 %v48
  %1858 = vmatmul.f32.gmra.mxu0 %v1460
  %v1859 = vpop.f32.mrf.mxu0
  %v1860 = vadd.f32 0.0, %v1859
  %1861 = vdwg.mxu0
  %1862 = vmatpush.msra.mxu0 0.0
  %1863 = vmatpush.msra.mxu0 0.0
  %1864 = vmatpush.msra.mxu0 0.0
  %1865 = vmatpush.msra.mxu0 0.0
  %1866 = vmatpush.msra.mxu0 0.0
  %1867 = vmatpush.msra.mxu0 0.0
  %1868 = vmatpush.msra.mxu0 0.0
  %1869 = vmatpush.msra.mxu0 0.0
  %1870 = vmatpush.msra.mxu0 0.0
  %1871 = vmatpush.msra.mxu0 0.0
  %1872 = vmatpush.msra.mxu0 0.0
  %1873 = vmatpush.msra.mxu0 %v495
  %1874 = vmatpush.msra.mxu0 %v384
  %1875 = vmatpush.msra.mxu0 %v273
  %1876 = vmatpush.msra.mxu0 %v162
  %1877 = vmatpush.msra.mxu0 %v49
  %1878 = vmatmul.f32.gmra.mxu0 %v1460
  %v1879 = vpop.f32.mrf.mxu0
  %v1880 = vadd.f32 0.0, %v1879
  %1881 = vdwg.mxu0
  %1882 = vmatpush.msra.mxu0 0.0
  %1883 = vmatpush.msra.mxu0 0.0
  %1884 = vmatpush.msra.mxu0 0.0
  %1885 = vmatpush.msra.mxu0 0.0
  %1886 = vmatpush.msra.mxu0 0.0
  %1887 = vmatpush.msra.mxu0 0.0
  %1888 = vmatpush.msra.mxu0 0.0
  %1889 = vmatpush.msra.mxu0 0.0
  %1890 = vmatpush.msra.mxu0 0.0
  %1891 = vmatpush.msra.mxu0 0.0
  %1892 = vmatpush.msra.mxu0 0.0
  %1893 = vmatpush.msra.mxu0 %v496
  %1894 = vmatpush.msra.mxu0 %v385
  %1895 = vmatpush.msra.mxu0 %v274
  %1896 = vmatpush.msra.mxu0 %v163
  %1897 = vmatpush.msra.mxu0 %v50
  %1898 = vmatmul.f32.gmra.mxu0 %v1460
  %v1899 = vpop.f32.mrf.mxu0
  %v1900 = vadd.f32 0.0, %v1899
  %1901 = vdwg.mxu0
  %1902 = vmatpush.msra.mxu0 0.0
  %1903 = vmatpush.msra.mxu0 0.0
  %1904 = vmatpush.msra.mxu0 0.0
  %1905 = vmatpush.msra.mxu0 0.0
  %1906 = vmatpush.msra.mxu0 0.0
  %1907 = vmatpush.msra.mxu0 0.0
  %1908 = vmatpush.msra.mxu0 0.0
  %1909 = vmatpush.msra.mxu0 0.0
  %1910 = vmatpush.msra.mxu0 0.0
  %1911 = vmatpush.msra.mxu0 0.0
  %1912 = vmatpush.msra.mxu0 0.0
  %1913 = vmatpush.msra.mxu0 %v497
  %1914 = vmatpush.msra.mxu0 %v386
  %1915 = vmatpush.msra.mxu0 %v275
  %1916 = vmatpush.msra.mxu0 %v164
  %1917 = vmatpush.msra.mxu0 %v51
  %1918 = vmatmul.f32.gmra.mxu0 %v1460
  %v1919 = vpop.f32.mrf.mxu0
  %v1920 = vadd.f32 0.0, %v1919
  %1921 = vdwg.mxu0
  %v1922 = vadd.f32 %v1015, %v1480
  %v1923 = vadd.f32 %v1035, %v1500
  %v1924 = vadd.f32 %v1055, %v1520
  %v1925 = vadd.f32 %v1075, %v1540
  %v1926 = vadd.f32 %v1095, %v1560
  %v1927 = vadd.f32 %v1115, %v1580
  %v1928 = vadd.f32 %v1135, %v1600
  %v1929 = vadd.f32 %v1155, %v1620
  %v1930 = vadd.f32 %v1175, %v1640
  %v1931 = vadd.f32 %v1195, %v1660
  %v1932 = vadd.f32 %v1215, %v1680
  %v1933 = vadd.f32 %v1235, %v1700
  %v1934 = vadd.f32 %v1255, %v1720
  %v1935 = vadd.f32 %v1275, %v1740
  %v1936 = vadd.f32 %v1295, %v1760
  %v1937 = vadd.f32 %v1315, %v1780
  %v1938 = vadd.f32 %v1335, %v1800
  %v1939 = vadd.f32 %v1355, %v1820
  %v1940 = vadd.f32 %v1375, %v1840
  %v1941 = vadd.f32 %v1395, %v1860
  %v1942 = vadd.f32 %v1415, %v1880
  %v1943 = vadd.f32 %v1435, %v1900
  %v1944 = vadd.f32 %v1455, %v1920
  %s1945 = scalar_lea.vmem %s1, 24
  %v1946 = vld [vmem:[%s1945] sm:$0xff]
  %v1948 = vsel %vm530, %v1946, 0
  %1950 = vmatpush.msra.mxu0 0.0
  %1951 = vmatpush.msra.mxu0 0.0
  %1952 = vmatpush.msra.mxu0 0.0
  %1953 = vmatpush.msra.mxu0 0.0
  %1954 = vmatpush.msra.mxu0 0.0
  %1955 = vmatpush.msra.mxu0 0.0
  %1956 = vmatpush.msra.mxu0 0.0
  %1957 = vmatpush.msra.mxu0 0.0
  %1958 = vmatpush.msra.mxu0 0.0
  %1959 = vmatpush.msra.mxu0 0.0
  %1960 = vmatpush.msra.mxu0 0.0
  %1961 = vmatpush.msra.mxu0 %v476
  %1962 = vmatpush.msra.mxu0 %v365
  %1963 = vmatpush.msra.mxu0 %v254
  %1964 = vmatpush.msra.mxu0 %v143
  %1965 = vmatpush.msra.mxu0 %v30
  %1966 = vmatmul.f32.gmra.mxu0 %v1948
  %v1967 = vpop.f32.mrf.mxu0
  %v1968 = vadd.f32 0.0, %v1967
  %1969 = vdwg.mxu0
  %1970 = vmatpush.msra.mxu0 0.0
  %1971 = vmatpush.msra.mxu0 0.0
  %1972 = vmatpush.msra.mxu0 0.0
  %1973 = vmatpush.msra.mxu0 0.0
  %1974 = vmatpush.msra.mxu0 0.0
  %1975 = vmatpush.msra.mxu0 0.0
  %1976 = vmatpush.msra.mxu0 0.0
  %1977 = vmatpush.msra.mxu0 0.0
  %1978 = vmatpush.msra.mxu0 0.0
  %1979 = vmatpush.msra.mxu0 0.0
  %1980 = vmatpush.msra.mxu0 0.0
  %1981 = vmatpush.msra.mxu0 %v477
  %1982 = vmatpush.msra.mxu0 %v366
  %1983 = vmatpush.msra.mxu0 %v255
  %1984 = vmatpush.msra.mxu0 %v144
  %1985 = vmatpush.msra.mxu0 %v31
  %1986 = vmatmul.f32.gmra.mxu0 %v1948
  %v1987 = vpop.f32.mrf.mxu0
  %v1988 = vadd.f32 0.0, %v1987
  %1989 = vdwg.mxu0
  %1990 = vmatpush.msra.mxu0 0.0
  %1991 = vmatpush.msra.mxu0 0.0
  %1992 = vmatpush.msra.mxu0 0.0
  %1993 = vmatpush.msra.mxu0 0.0
  %1994 = vmatpush.msra.mxu0 0.0
  %1995 = vmatpush.msra.mxu0 0.0
  %1996 = vmatpush.msra.mxu0 0.0
  %1997 = vmatpush.msra.mxu0 0.0
  %1998 = vmatpush.msra.mxu0 0.0
  %1999 = vmatpush.msra.mxu0 0.0
  %2000 = vmatpush.msra.mxu0 0.0
  %2001 = vmatpush.msra.mxu0 %v478
  %2002 = vmatpush.msra.mxu0 %v367
  %2003 = vmatpush.msra.mxu0 %v256
  %2004 = vmatpush.msra.mxu0 %v145
  %2005 = vmatpush.msra.mxu0 %v32
  %2006 = vmatmul.f32.gmra.mxu0 %v1948
  %v2007 = vpop.f32.mrf.mxu0
  %v2008 = vadd.f32 0.0, %v2007
  %2009 = vdwg.mxu0
  %2010 = vmatpush.msra.mxu0 0.0
  %2011 = vmatpush.msra.mxu0 0.0
  %2012 = vmatpush.msra.mxu0 0.0
  %2013 = vmatpush.msra.mxu0 0.0
  %2014 = vmatpush.msra.mxu0 0.0
  %2015 = vmatpush.msra.mxu0 0.0
  %2016 = vmatpush.msra.mxu0 0.0
  %2017 = vmatpush.msra.mxu0 0.0
  %2018 = vmatpush.msra.mxu0 0.0
  %2019 = vmatpush.msra.mxu0 0.0
  %2020 = vmatpush.msra.mxu0 0.0
  %2021 = vmatpush.msra.mxu0 %v479
  %2022 = vmatpush.msra.mxu0 %v368
  %2023 = vmatpush.msra.mxu0 %v257
  %2024 = vmatpush.msra.mxu0 %v146
  %2025 = vmatpush.msra.mxu0 %v33
  %2026 = vmatmul.f32.gmra.mxu0 %v1948
  %v2027 = vpop.f32.mrf.mxu0
  %v2028 = vadd.f32 0.0, %v2027
  %2029 = vdwg.mxu0
  %2030 = vmatpush.msra.mxu0 0.0
  %2031 = vmatpush.msra.mxu0 0.0
  %2032 = vmatpush.msra.mxu0 0.0
  %2033 = vmatpush.msra.mxu0 0.0
  %2034 = vmatpush.msra.mxu0 0.0
  %2035 = vmatpush.msra.mxu0 0.0
  %2036 = vmatpush.msra.mxu0 0.0
  %2037 = vmatpush.msra.mxu0 0.0
  %2038 = vmatpush.msra.mxu0 0.0
  %2039 = vmatpush.msra.mxu0 0.0
  %2040 = vmatpush.msra.mxu0 0.0
  %2041 = vmatpush.msra.mxu0 %v480
  %2042 = vmatpush.msra.mxu0 %v369
  %2043 = vmatpush.msra.mxu0 %v258
  %2044 = vmatpush.msra.mxu0 %v147
  %2045 = vmatpush.msra.mxu0 %v34
  %2046 = vmatmul.f32.gmra.mxu0 %v1948
  %v2047 = vpop.f32.mrf.mxu0
  %v2048 = vadd.f32 0.0, %v2047
  %2049 = vdwg.mxu0
  %2050 = vmatpush.msra.mxu0 0.0
  %2051 = vmatpush.msra.mxu0 0.0
  %2052 = vmatpush.msra.mxu0 0.0
  %2053 = vmatpush.msra.mxu0 0.0
  %2054 = vmatpush.msra.mxu0 0.0
  %2055 = vmatpush.msra.mxu0 0.0
  %2056 = vmatpush.msra.mxu0 0.0
  %2057 = vmatpush.msra.mxu0 0.0
  %2058 = vmatpush.msra.mxu0 0.0
  %2059 = vmatpush.msra.mxu0 0.0
  %2060 = vmatpush.msra.mxu0 0.0
  %2061 = vmatpush.msra.mxu0 %v481
  %2062 = vmatpush.msra.mxu0 %v370
  %2063 = vmatpush.msra.mxu0 %v259
  %2064 = vmatpush.msra.mxu0 %v148
  %2065 = vmatpush.msra.mxu0 %v35
  %2066 = vmatmul.f32.gmra.mxu0 %v1948
  %v2067 = vpop.f32.mrf.mxu0
  %v2068 = vadd.f32 0.0, %v2067
  %2069 = vdwg.mxu0
  %2070 = vmatpush.msra.mxu0 0.0
  %2071 = vmatpush.msra.mxu0 0.0
  %2072 = vmatpush.msra.mxu0 0.0
  %2073 = vmatpush.msra.mxu0 0.0
  %2074 = vmatpush.msra.mxu0 0.0
  %2075 = vmatpush.msra.mxu0 0.0
  %2076 = vmatpush.msra.mxu0 0.0
  %2077 = vmatpush.msra.mxu0 0.0
  %2078 = vmatpush.msra.mxu0 0.0
  %2079 = vmatpush.msra.mxu0 0.0
  %2080 = vmatpush.msra.mxu0 0.0
  %2081 = vmatpush.msra.mxu0 %v482
  %2082 = vmatpush.msra.mxu0 %v371
  %2083 = vmatpush.msra.mxu0 %v260
  %2084 = vmatpush.msra.mxu0 %v149
  %2085 = vmatpush.msra.mxu0 %v36
  %2086 = vmatmul.f32.gmra.mxu0 %v1948
  %v2087 = vpop.f32.mrf.mxu0
  %v2088 = vadd.f32 0.0, %v2087
  %2089 = vdwg.mxu0
  %2090 = vmatpush.msra.mxu0 0.0
  %2091 = vmatpush.msra.mxu0 0.0
  %2092 = vmatpush.msra.mxu0 0.0
  %2093 = vmatpush.msra.mxu0 0.0
  %2094 = vmatpush.msra.mxu0 0.0
  %2095 = vmatpush.msra.mxu0 0.0
  %2096 = vmatpush.msra.mxu0 0.0
  %2097 = vmatpush.msra.mxu0 0.0
  %2098 = vmatpush.msra.mxu0 0.0
  %2099 = vmatpush.msra.mxu0 0.0
  %2100 = vmatpush.msra.mxu0 0.0
  %2101 = vmatpush.msra.mxu0 %v483
  %2102 = vmatpush.msra.mxu0 %v372
  %2103 = vmatpush.msra.mxu0 %v261
  %2104 = vmatpush.msra.mxu0 %v150
  %2105 = vmatpush.msra.mxu0 %v37
  %2106 = vmatmul.f32.gmra.mxu0 %v1948
  %v2107 = vpop.f32.mrf.mxu0
  %v2108 = vadd.f32 0.0, %v2107
  %2109 = vdwg.mxu0
  %2110 = vmatpush.msra.mxu0 0.0
  %2111 = vmatpush.msra.mxu0 0.0
  %2112 = vmatpush.msra.mxu0 0.0
  %2113 = vmatpush.msra.mxu0 0.0
  %2114 = vmatpush.msra.mxu0 0.0
  %2115 = vmatpush.msra.mxu0 0.0
  %2116 = vmatpush.msra.mxu0 0.0
  %2117 = vmatpush.msra.mxu0 0.0
  %2118 = vmatpush.msra.mxu0 0.0
  %2119 = vmatpush.msra.mxu0 0.0
  %2120 = vmatpush.msra.mxu0 0.0
  %2121 = vmatpush.msra.mxu0 %v484
  %2122 = vmatpush.msra.mxu0 %v373
  %2123 = vmatpush.msra.mxu0 %v262
  %2124 = vmatpush.msra.mxu0 %v151
  %2125 = vmatpush.msra.mxu0 %v38
  %2126 = vmatmul.f32.gmra.mxu0 %v1948
  %v2127 = vpop.f32.mrf.mxu0
  %v2128 = vadd.f32 0.0, %v2127
  %2129 = vdwg.mxu0
  %2130 = vmatpush.msra.mxu0 0.0
  %2131 = vmatpush.msra.mxu0 0.0
  %2132 = vmatpush.msra.mxu0 0.0
  %2133 = vmatpush.msra.mxu0 0.0
  %2134 = vmatpush.msra.mxu0 0.0
  %2135 = vmatpush.msra.mxu0 0.0
  %2136 = vmatpush.msra.mxu0 0.0
  %2137 = vmatpush.msra.mxu0 0.0
  %2138 = vmatpush.msra.mxu0 0.0
  %2139 = vmatpush.msra.mxu0 0.0
  %2140 = vmatpush.msra.mxu0 0.0
  %2141 = vmatpush.msra.mxu0 %v485
  %2142 = vmatpush.msra.mxu0 %v374
  %2143 = vmatpush.msra.mxu0 %v263
  %2144 = vmatpush.msra.mxu0 %v152
  %2145 = vmatpush.msra.mxu0 %v39
  %2146 = vmatmul.f32.gmra.mxu0 %v1948
  %v2147 = vpop.f32.mrf.mxu0
  %v2148 = vadd.f32 0.0, %v2147
  %2149 = vdwg.mxu0
  %2150 = vmatpush.msra.mxu0 0.0
  %2151 = vmatpush.msra.mxu0 0.0
  %2152 = vmatpush.msra.mxu0 0.0
  %2153 = vmatpush.msra.mxu0 0.0
  %2154 = vmatpush.msra.mxu0 0.0
  %2155 = vmatpush.msra.mxu0 0.0
  %2156 = vmatpush.msra.mxu0 0.0
  %2157 = vmatpush.msra.mxu0 0.0
  %2158 = vmatpush.msra.mxu0 0.0
  %2159 = vmatpush.msra.mxu0 0.0
  %2160 = vmatpush.msra.mxu0 0.0
  %2161 = vmatpush.msra.mxu0 %v486
  %2162 = vmatpush.msra.mxu0 %v375
  %2163 = vmatpush.msra.mxu0 %v264
  %2164 = vmatpush.msra.mxu0 %v153
  %2165 = vmatpush.msra.mxu0 %v40
  %2166 = vmatmul.f32.gmra.mxu0 %v1948
  %v2167 = vpop.f32.mrf.mxu0
  %v2168 = vadd.f32 0.0, %v2167
  %2169 = vdwg.mxu0
  %2170 = vmatpush.msra.mxu0 0.0
  %2171 = vmatpush.msra.mxu0 0.0
  %2172 = vmatpush.msra.mxu0 0.0
  %2173 = vmatpush.msra.mxu0 0.0
  %2174 = vmatpush.msra.mxu0 0.0
  %2175 = vmatpush.msra.mxu0 0.0
  %2176 = vmatpush.msra.mxu0 0.0
  %2177 = vmatpush.msra.mxu0 0.0
  %2178 = vmatpush.msra.mxu0 0.0
  %2179 = vmatpush.msra.mxu0 0.0
  %2180 = vmatpush.msra.mxu0 0.0
  %2181 = vmatpush.msra.mxu0 %v487
  %2182 = vmatpush.msra.mxu0 %v376
  %2183 = vmatpush.msra.mxu0 %v265
  %2184 = vmatpush.msra.mxu0 %v154
  %2185 = vmatpush.msra.mxu0 %v41
  %2186 = vmatmul.f32.gmra.mxu0 %v1948
  %v2187 = vpop.f32.mrf.mxu0
  %v2188 = vadd.f32 0.0, %v2187
  %2189 = vdwg.mxu0
  %2190 = vmatpush.msra.mxu0 0.0
  %2191 = vmatpush.msra.mxu0 0.0
  %2192 = vmatpush.msra.mxu0 0.0
  %2193 = vmatpush.msra.mxu0 0.0
  %2194 = vmatpush.msra.mxu0 0.0
  %2195 = vmatpush.msra.mxu0 0.0
  %2196 = vmatpush.msra.mxu0 0.0
  %2197 = vmatpush.msra.mxu0 0.0
  %2198 = vmatpush.msra.mxu0 0.0
  %2199 = vmatpush.msra.mxu0 0.0
  %2200 = vmatpush.msra.mxu0 0.0
  %2201 = vmatpush.msra.mxu0 %v488
  %2202 = vmatpush.msra.mxu0 %v377
  %2203 = vmatpush.msra.mxu0 %v266
  %2204 = vmatpush.msra.mxu0 %v155
  %2205 = vmatpush.msra.mxu0 %v42
  %2206 = vmatmul.f32.gmra.mxu0 %v1948
  %v2207 = vpop.f32.mrf.mxu0
  %v2208 = vadd.f32 0.0, %v2207
  %2209 = vdwg.mxu0
  %2210 = vmatpush.msra.mxu0 0.0
  %2211 = vmatpush.msra.mxu0 0.0
  %2212 = vmatpush.msra.mxu0 0.0
  %2213 = vmatpush.msra.mxu0 0.0
  %2214 = vmatpush.msra.mxu0 0.0
  %2215 = vmatpush.msra.mxu0 0.0
  %2216 = vmatpush.msra.mxu0 0.0
  %2217 = vmatpush.msra.mxu0 0.0
  %2218 = vmatpush.msra.mxu0 0.0
  %2219 = vmatpush.msra.mxu0 0.0
  %2220 = vmatpush.msra.mxu0 0.0
  %2221 = vmatpush.msra.mxu0 %v489
  %2222 = vmatpush.msra.mxu0 %v378
  %2223 = vmatpush.msra.mxu0 %v267
  %2224 = vmatpush.msra.mxu0 %v156
  %2225 = vmatpush.msra.mxu0 %v43
  %2226 = vmatmul.f32.gmra.mxu0 %v1948
  %v2227 = vpop.f32.mrf.mxu0
  %v2228 = vadd.f32 0.0, %v2227
  %2229 = vdwg.mxu0
  %2230 = vmatpush.msra.mxu0 0.0
  %2231 = vmatpush.msra.mxu0 0.0
  %2232 = vmatpush.msra.mxu0 0.0
  %2233 = vmatpush.msra.mxu0 0.0
  %2234 = vmatpush.msra.mxu0 0.0
  %2235 = vmatpush.msra.mxu0 0.0
  %2236 = vmatpush.msra.mxu0 0.0
  %2237 = vmatpush.msra.mxu0 0.0
  %2238 = vmatpush.msra.mxu0 0.0
  %2239 = vmatpush.msra.mxu0 0.0
  %2240 = vmatpush.msra.mxu0 0.0
  %2241 = vmatpush.msra.mxu0 %v490
  %2242 = vmatpush.msra.mxu0 %v379
  %2243 = vmatpush.msra.mxu0 %v268
  %2244 = vmatpush.msra.mxu0 %v157
  %2245 = vmatpush.msra.mxu0 %v44
  %2246 = vmatmul.f32.gmra.mxu0 %v1948
  %v2247 = vpop.f32.mrf.mxu0
  %v2248 = vadd.f32 0.0, %v2247
  %2249 = vdwg.mxu0
  %2250 = vmatpush.msra.mxu0 0.0
  %2251 = vmatpush.msra.mxu0 0.0
  %2252 = vmatpush.msra.mxu0 0.0
  %2253 = vmatpush.msra.mxu0 0.0
  %2254 = vmatpush.msra.mxu0 0.0
  %2255 = vmatpush.msra.mxu0 0.0
  %2256 = vmatpush.msra.mxu0 0.0
  %2257 = vmatpush.msra.mxu0 0.0
  %2258 = vmatpush.msra.mxu0 0.0
  %2259 = vmatpush.msra.mxu0 0.0
  %2260 = vmatpush.msra.mxu0 0.0
  %2261 = vmatpush.msra.mxu0 %v491
  %2262 = vmatpush.msra.mxu0 %v380
  %2263 = vmatpush.msra.mxu0 %v269
  %2264 = vmatpush.msra.mxu0 %v158
  %2265 = vmatpush.msra.mxu0 %v45
  %2266 = vmatmul.f32.gmra.mxu0 %v1948
  %v2267 = vpop.f32.mrf.mxu0
  %v2268 = vadd.f32 0.0, %v2267
  %2269 = vdwg.mxu0
  %2270 = vmatpush.msra.mxu0 0.0
  %2271 = vmatpush.msra.mxu0 0.0
  %2272 = vmatpush.msra.mxu0 0.0
  %2273 = vmatpush.msra.mxu0 0.0
  %2274 = vmatpush.msra.mxu0 0.0
  %2275 = vmatpush.msra.mxu0 0.0
  %2276 = vmatpush.msra.mxu0 0.0
  %2277 = vmatpush.msra.mxu0 0.0
  %2278 = vmatpush.msra.mxu0 0.0
  %2279 = vmatpush.msra.mxu0 0.0
  %2280 = vmatpush.msra.mxu0 0.0
  %2281 = vmatpush.msra.mxu0 %v492
  %2282 = vmatpush.msra.mxu0 %v381
  %2283 = vmatpush.msra.mxu0 %v270
  %2284 = vmatpush.msra.mxu0 %v159
  %2285 = vmatpush.msra.mxu0 %v46
  %2286 = vmatmul.f32.gmra.mxu0 %v1948
  %v2287 = vpop.f32.mrf.mxu0
  %v2288 = vadd.f32 0.0, %v2287
  %2289 = vdwg.mxu0
  %2290 = vmatpush.msra.mxu0 0.0
  %2291 = vmatpush.msra.mxu0 0.0
  %2292 = vmatpush.msra.mxu0 0.0
  %2293 = vmatpush.msra.mxu0 0.0
  %2294 = vmatpush.msra.mxu0 0.0
  %2295 = vmatpush.msra.mxu0 0.0
  %2296 = vmatpush.msra.mxu0 0.0
  %2297 = vmatpush.msra.mxu0 0.0
  %2298 = vmatpush.msra.mxu0 0.0
  %2299 = vmatpush.msra.mxu0 0.0
  %2300 = vmatpush.msra.mxu0 0.0
  %2301 = vmatpush.msra.mxu0 %v493
  %2302 = vmatpush.msra.mxu0 %v382
  %2303 = vmatpush.msra.mxu0 %v271
  %2304 = vmatpush.msra.mxu0 %v160
  %2305 = vmatpush.msra.mxu0 %v47
  %2306 = vmatmul.f32.gmra.mxu0 %v1948
  %v2307 = vpop.f32.mrf.mxu0
  %v2308 = vadd.f32 0.0, %v2307
  %2309 = vdwg.mxu0
  %2310 = vmatpush.msra.mxu0 0.0
  %2311 = vmatpush.msra.mxu0 0.0
  %2312 = vmatpush.msra.mxu0 0.0
  %2313 = vmatpush.msra.mxu0 0.0
  %2314 = vmatpush.msra.mxu0 0.0
  %2315 = vmatpush.msra.mxu0 0.0
  %2316 = vmatpush.msra.mxu0 0.0
  %2317 = vmatpush.msra.mxu0 0.0
  %2318 = vmatpush.msra.mxu0 0.0
  %2319 = vmatpush.msra.mxu0 0.0
  %2320 = vmatpush.msra.mxu0 0.0
  %2321 = vmatpush.msra.mxu0 %v494
  %2322 = vmatpush.msra.mxu0 %v383
  %2323 = vmatpush.msra.mxu0 %v272
  %2324 = vmatpush.msra.mxu0 %v161
  %2325 = vmatpush.msra.mxu0 %v48
  %2326 = vmatmul.f32.gmra.mxu0 %v1948
  %v2327 = vpop.f32.mrf.mxu0
  %v2328 = vadd.f32 0.0, %v2327
  %2329 = vdwg.mxu0
  %2330 = vmatpush.msra.mxu0 0.0
  %2331 = vmatpush.msra.mxu0 0.0
  %2332 = vmatpush.msra.mxu0 0.0
  %2333 = vmatpush.msra.mxu0 0.0
  %2334 = vmatpush.msra.mxu0 0.0
  %2335 = vmatpush.msra.mxu0 0.0
  %2336 = vmatpush.msra.mxu0 0.0
  %2337 = vmatpush.msra.mxu0 0.0
  %2338 = vmatpush.msra.mxu0 0.0
  %2339 = vmatpush.msra.mxu0 0.0
  %2340 = vmatpush.msra.mxu0 0.0
  %2341 = vmatpush.msra.mxu0 %v495
  %2342 = vmatpush.msra.mxu0 %v384
  %2343 = vmatpush.msra.mxu0 %v273
  %2344 = vmatpush.msra.mxu0 %v162
  %2345 = vmatpush.msra.mxu0 %v49
  %2346 = vmatmul.f32.gmra.mxu0 %v1948
  %v2347 = vpop.f32.mrf.mxu0
  %v2348 = vadd.f32 0.0, %v2347
  %2349 = vdwg.mxu0
  %2350 = vmatpush.msra.mxu0 0.0
  %2351 = vmatpush.msra.mxu0 0.0
  %2352 = vmatpush.msra.mxu0 0.0
  %2353 = vmatpush.msra.mxu0 0.0
  %2354 = vmatpush.msra.mxu0 0.0
  %2355 = vmatpush.msra.mxu0 0.0
  %2356 = vmatpush.msra.mxu0 0.0
  %2357 = vmatpush.msra.mxu0 0.0
  %2358 = vmatpush.msra.mxu0 0.0
  %2359 = vmatpush.msra.mxu0 0.0
  %2360 = vmatpush.msra.mxu0 0.0
  %2361 = vmatpush.msra.mxu0 %v496
  %2362 = vmatpush.msra.mxu0 %v385
  %2363 = vmatpush.msra.mxu0 %v274
  %2364 = vmatpush.msra.mxu0 %v163
  %2365 = vmatpush.msra.mxu0 %v50
  %2366 = vmatmul.f32.gmra.mxu0 %v1948
  %v2367 = vpop.f32.mrf.mxu0
  %v2368 = vadd.f32 0.0, %v2367
  %2369 = vdwg.mxu0
  %2370 = vmatpush.msra.mxu0 0.0
  %2371 = vmatpush.msra.mxu0 0.0
  %2372 = vmatpush.msra.mxu0 0.0
  %2373 = vmatpush.msra.mxu0 0.0
  %2374 = vmatpush.msra.mxu0 0.0
  %2375 = vmatpush.msra.mxu0 0.0
  %2376 = vmatpush.msra.mxu0 0.0
  %2377 = vmatpush.msra.mxu0 0.0
  %2378 = vmatpush.msra.mxu0 0.0
  %2379 = vmatpush.msra.mxu0 0.0
  %2380 = vmatpush.msra.mxu0 0.0
  %2381 = vmatpush.msra.mxu0 %v497
  %2382 = vmatpush.msra.mxu0 %v386
  %2383 = vmatpush.msra.mxu0 %v275
  %2384 = vmatpush.msra.mxu0 %v164
  %2385 = vmatpush.msra.mxu0 %v51
  %2386 = vmatmul.f32.gmra.mxu0 %v1948
  %v2387 = vpop.f32.mrf.mxu0
  %v2388 = vadd.f32 0.0, %v2387
  %2389 = vdwg.mxu0
  %2390 = vmatpush.msra.mxu0 0.0
  %2391 = vmatpush.msra.mxu0 0.0
  %2392 = vmatpush.msra.mxu0 0.0
  %2393 = vmatpush.msra.mxu0 0.0
  %2394 = vmatpush.msra.mxu0 0.0
  %2395 = vmatpush.msra.mxu0 0.0
  %2396 = vmatpush.msra.mxu0 0.0
  %2397 = vmatpush.msra.mxu0 0.0
  %2398 = vmatpush.msra.mxu0 0.0
  %2399 = vmatpush.msra.mxu0 0.0
  %2400 = vmatpush.msra.mxu0 0.0
  %2401 = vmatpush.msra.mxu0 %v498
  %2402 = vmatpush.msra.mxu0 %v387
  %2403 = vmatpush.msra.mxu0 %v276
  %2404 = vmatpush.msra.mxu0 %v165
  %2405 = vmatpush.msra.mxu0 %v52
  %2406 = vmatmul.f32.gmra.mxu0 %v1948
  %v2407 = vpop.f32.mrf.mxu0
  %v2408 = vadd.f32 0.0, %v2407
  %2409 = vdwg.mxu0
  %v2410 = vadd.f32 %v1922, %v1968
  %v2411 = vadd.f32 %v1923, %v1988
  %v2412 = vadd.f32 %v1924, %v2008
  %v2413 = vadd.f32 %v1925, %v2028
  %v2414 = vadd.f32 %v1926, %v2048
  %v2415 = vadd.f32 %v1927, %v2068
  %v2416 = vadd.f32 %v1928, %v2088
  %v2417 = vadd.f32 %v1929, %v2108
  %v2418 = vadd.f32 %v1930, %v2128
  %v2419 = vadd.f32 %v1931, %v2148
  %v2420 = vadd.f32 %v1932, %v2168
  %v2421 = vadd.f32 %v1933, %v2188
  %v2422 = vadd.f32 %v1934, %v2208
  %v2423 = vadd.f32 %v1935, %v2228
  %v2424 = vadd.f32 %v1936, %v2248
  %v2425 = vadd.f32 %v1937, %v2268
  %v2426 = vadd.f32 %v1938, %v2288
  %v2427 = vadd.f32 %v1939, %v2308
  %v2428 = vadd.f32 %v1940, %v2328
  %v2429 = vadd.f32 %v1941, %v2348
  %v2430 = vadd.f32 %v1942, %v2368
  %v2431 = vadd.f32 %v1943, %v2388
  %v2432 = vadd.f32 %v1944, %v2408
  %s2433 = scalar_lea.vmem %s1, 32
  %v2434 = vld [vmem:[%s2433] sm:$0xff]
  %v2436 = vsel %vm530, %v2434, 0
  %2438 = vmatpush.msra.mxu0 0.0
  %2439 = vmatpush.msra.mxu0 0.0
  %2440 = vmatpush.msra.mxu0 0.0
  %2441 = vmatpush.msra.mxu0 0.0
  %2442 = vmatpush.msra.mxu0 0.0
  %2443 = vmatpush.msra.mxu0 0.0
  %2444 = vmatpush.msra.mxu0 0.0
  %2445 = vmatpush.msra.mxu0 0.0
  %2446 = vmatpush.msra.mxu0 0.0
  %2447 = vmatpush.msra.mxu0 0.0
  %2448 = vmatpush.msra.mxu0 0.0
  %2449 = vmatpush.msra.mxu0 %v477
  %2450 = vmatpush.msra.mxu0 %v366
  %2451 = vmatpush.msra.mxu0 %v255
  %2452 = vmatpush.msra.mxu0 %v144
  %2453 = vmatpush.msra.mxu0 %v31
  %2454 = vmatmul.f32.gmra.mxu0 %v2436
  %v2455 = vpop.f32.mrf.mxu0
  %v2456 = vadd.f32 0.0, %v2455
  %2457 = vdwg.mxu0
  %2458 = vmatpush.msra.mxu0 0.0
  %2459 = vmatpush.msra.mxu0 0.0
  %2460 = vmatpush.msra.mxu0 0.0
  %2461 = vmatpush.msra.mxu0 0.0
  %2462 = vmatpush.msra.mxu0 0.0
  %2463 = vmatpush.msra.mxu0 0.0
  %2464 = vmatpush.msra.mxu0 0.0
  %2465 = vmatpush.msra.mxu0 0.0
  %2466 = vmatpush.msra.mxu0 0.0
  %2467 = vmatpush.msra.mxu0 0.0
  %2468 = vmatpush.msra.mxu0 0.0
  %2469 = vmatpush.msra.mxu0 %v478
  %2470 = vmatpush.msra.mxu0 %v367
  %2471 = vmatpush.msra.mxu0 %v256
  %2472 = vmatpush.msra.mxu0 %v145
  %2473 = vmatpush.msra.mxu0 %v32
  %2474 = vmatmul.f32.gmra.mxu0 %v2436
  %v2475 = vpop.f32.mrf.mxu0
  %v2476 = vadd.f32 0.0, %v2475
  %2477 = vdwg.mxu0
  %2478 = vmatpush.msra.mxu0 0.0
  %2479 = vmatpush.msra.mxu0 0.0
  %2480 = vmatpush.msra.mxu0 0.0
  %2481 = vmatpush.msra.mxu0 0.0
  %2482 = vmatpush.msra.mxu0 0.0
  %2483 = vmatpush.msra.mxu0 0.0
  %2484 = vmatpush.msra.mxu0 0.0
  %2485 = vmatpush.msra.mxu0 0.0
  %2486 = vmatpush.msra.mxu0 0.0
  %2487 = vmatpush.msra.mxu0 0.0
  %2488 = vmatpush.msra.mxu0 0.0
  %2489 = vmatpush.msra.mxu0 %v479
  %2490 = vmatpush.msra.mxu0 %v368
  %2491 = vmatpush.msra.mxu0 %v257
  %2492 = vmatpush.msra.mxu0 %v146
  %2493 = vmatpush.msra.mxu0 %v33
  %2494 = vmatmul.f32.gmra.mxu0 %v2436
  %v2495 = vpop.f32.mrf.mxu0
  %v2496 = vadd.f32 0.0, %v2495
  %2497 = vdwg.mxu0
  %2498 = vmatpush.msra.mxu0 0.0
  %2499 = vmatpush.msra.mxu0 0.0
  %2500 = vmatpush.msra.mxu0 0.0
  %2501 = vmatpush.msra.mxu0 0.0
  %2502 = vmatpush.msra.mxu0 0.0
  %2503 = vmatpush.msra.mxu0 0.0
  %2504 = vmatpush.msra.mxu0 0.0
  %2505 = vmatpush.msra.mxu0 0.0
  %2506 = vmatpush.msra.mxu0 0.0
  %2507 = vmatpush.msra.mxu0 0.0
  %2508 = vmatpush.msra.mxu0 0.0
  %2509 = vmatpush.msra.mxu0 %v480
  %2510 = vmatpush.msra.mxu0 %v369
  %2511 = vmatpush.msra.mxu0 %v258
  %2512 = vmatpush.msra.mxu0 %v147
  %2513 = vmatpush.msra.mxu0 %v34
  %2514 = vmatmul.f32.gmra.mxu0 %v2436
  %v2515 = vpop.f32.mrf.mxu0
  %v2516 = vadd.f32 0.0, %v2515
  %2517 = vdwg.mxu0
  %2518 = vmatpush.msra.mxu0 0.0
  %2519 = vmatpush.msra.mxu0 0.0
  %2520 = vmatpush.msra.mxu0 0.0
  %2521 = vmatpush.msra.mxu0 0.0
  %2522 = vmatpush.msra.mxu0 0.0
  %2523 = vmatpush.msra.mxu0 0.0
  %2524 = vmatpush.msra.mxu0 0.0
  %2525 = vmatpush.msra.mxu0 0.0
  %2526 = vmatpush.msra.mxu0 0.0
  %2527 = vmatpush.msra.mxu0 0.0
  %2528 = vmatpush.msra.mxu0 0.0
  %2529 = vmatpush.msra.mxu0 %v481
  %2530 = vmatpush.msra.mxu0 %v370
  %2531 = vmatpush.msra.mxu0 %v259
  %2532 = vmatpush.msra.mxu0 %v148
  %2533 = vmatpush.msra.mxu0 %v35
  %2534 = vmatmul.f32.gmra.mxu0 %v2436
  %v2535 = vpop.f32.mrf.mxu0
  %v2536 = vadd.f32 0.0, %v2535
  %2537 = vdwg.mxu0
  %2538 = vmatpush.msra.mxu0 0.0
  %2539 = vmatpush.msra.mxu0 0.0
  %2540 = vmatpush.msra.mxu0 0.0
  %2541 = vmatpush.msra.mxu0 0.0
  %2542 = vmatpush.msra.mxu0 0.0
  %2543 = vmatpush.msra.mxu0 0.0
  %2544 = vmatpush.msra.mxu0 0.0
  %2545 = vmatpush.msra.mxu0 0.0
  %2546 = vmatpush.msra.mxu0 0.0
  %2547 = vmatpush.msra.mxu0 0.0
  %2548 = vmatpush.msra.mxu0 0.0
  %2549 = vmatpush.msra.mxu0 %v482
  %2550 = vmatpush.msra.mxu0 %v371
  %2551 = vmatpush.msra.mxu0 %v260
  %2552 = vmatpush.msra.mxu0 %v149
  %2553 = vmatpush.msra.mxu0 %v36
  %2554 = vmatmul.f32.gmra.mxu0 %v2436
  %v2555 = vpop.f32.mrf.mxu0
  %v2556 = vadd.f32 0.0, %v2555
  %2557 = vdwg.mxu0
  %2558 = vmatpush.msra.mxu0 0.0
  %2559 = vmatpush.msra.mxu0 0.0
  %2560 = vmatpush.msra.mxu0 0.0
  %2561 = vmatpush.msra.mxu0 0.0
  %2562 = vmatpush.msra.mxu0 0.0
  %2563 = vmatpush.msra.mxu0 0.0
  %2564 = vmatpush.msra.mxu0 0.0
  %2565 = vmatpush.msra.mxu0 0.0
  %2566 = vmatpush.msra.mxu0 0.0
  %2567 = vmatpush.msra.mxu0 0.0
  %2568 = vmatpush.msra.mxu0 0.0
  %2569 = vmatpush.msra.mxu0 %v483
  %2570 = vmatpush.msra.mxu0 %v372
  %2571 = vmatpush.msra.mxu0 %v261
  %2572 = vmatpush.msra.mxu0 %v150
  %2573 = vmatpush.msra.mxu0 %v37
  %2574 = vmatmul.f32.gmra.mxu0 %v2436
  %v2575 = vpop.f32.mrf.mxu0
  %v2576 = vadd.f32 0.0, %v2575
  %2577 = vdwg.mxu0
  %2578 = vmatpush.msra.mxu0 0.0
  %2579 = vmatpush.msra.mxu0 0.0
  %2580 = vmatpush.msra.mxu0 0.0
  %2581 = vmatpush.msra.mxu0 0.0
  %2582 = vmatpush.msra.mxu0 0.0
  %2583 = vmatpush.msra.mxu0 0.0
  %2584 = vmatpush.msra.mxu0 0.0
  %2585 = vmatpush.msra.mxu0 0.0
  %2586 = vmatpush.msra.mxu0 0.0
  %2587 = vmatpush.msra.mxu0 0.0
  %2588 = vmatpush.msra.mxu0 0.0
  %2589 = vmatpush.msra.mxu0 %v484
  %2590 = vmatpush.msra.mxu0 %v373
  %2591 = vmatpush.msra.mxu0 %v262
  %2592 = vmatpush.msra.mxu0 %v151
  %2593 = vmatpush.msra.mxu0 %v38
  %2594 = vmatmul.f32.gmra.mxu0 %v2436
  %v2595 = vpop.f32.mrf.mxu0
  %v2596 = vadd.f32 0.0, %v2595
  %2597 = vdwg.mxu0
  %2598 = vmatpush.msra.mxu0 0.0
  %2599 = vmatpush.msra.mxu0 0.0
  %2600 = vmatpush.msra.mxu0 0.0
  %2601 = vmatpush.msra.mxu0 0.0
  %2602 = vmatpush.msra.mxu0 0.0
  %2603 = vmatpush.msra.mxu0 0.0
  %2604 = vmatpush.msra.mxu0 0.0
  %2605 = vmatpush.msra.mxu0 0.0
  %2606 = vmatpush.msra.mxu0 0.0
  %2607 = vmatpush.msra.mxu0 0.0
  %2608 = vmatpush.msra.mxu0 0.0
  %2609 = vmatpush.msra.mxu0 %v485
  %2610 = vmatpush.msra.mxu0 %v374
  %2611 = vmatpush.msra.mxu0 %v263
  %2612 = vmatpush.msra.mxu0 %v152
  %2613 = vmatpush.msra.mxu0 %v39
  %2614 = vmatmul.f32.gmra.mxu0 %v2436
  %v2615 = vpop.f32.mrf.mxu0
  %v2616 = vadd.f32 0.0, %v2615
  %2617 = vdwg.mxu0
  %2618 = vmatpush.msra.mxu0 0.0
  %2619 = vmatpush.msra.mxu0 0.0
  %2620 = vmatpush.msra.mxu0 0.0
  %2621 = vmatpush.msra.mxu0 0.0
  %2622 = vmatpush.msra.mxu0 0.0
  %2623 = vmatpush.msra.mxu0 0.0
  %2624 = vmatpush.msra.mxu0 0.0
  %2625 = vmatpush.msra.mxu0 0.0
  %2626 = vmatpush.msra.mxu0 0.0
  %2627 = vmatpush.msra.mxu0 0.0
  %2628 = vmatpush.msra.mxu0 0.0
  %2629 = vmatpush.msra.mxu0 %v486
  %2630 = vmatpush.msra.mxu0 %v375
  %2631 = vmatpush.msra.mxu0 %v264
  %2632 = vmatpush.msra.mxu0 %v153
  %2633 = vmatpush.msra.mxu0 %v40
  %2634 = vmatmul.f32.gmra.mxu0 %v2436
  %v2635 = vpop.f32.mrf.mxu0
  %v2636 = vadd.f32 0.0, %v2635
  %2637 = vdwg.mxu0
  %2638 = vmatpush.msra.mxu0 0.0
  %2639 = vmatpush.msra.mxu0 0.0
  %2640 = vmatpush.msra.mxu0 0.0
  %2641 = vmatpush.msra.mxu0 0.0
  %2642 = vmatpush.msra.mxu0 0.0
  %2643 = vmatpush.msra.mxu0 0.0
  %2644 = vmatpush.msra.mxu0 0.0
  %2645 = vmatpush.msra.mxu0 0.0
  %2646 = vmatpush.msra.mxu0 0.0
  %2647 = vmatpush.msra.mxu0 0.0
  %2648 = vmatpush.msra.mxu0 0.0
  %2649 = vmatpush.msra.mxu0 %v487
  %2650 = vmatpush.msra.mxu0 %v376
  %2651 = vmatpush.msra.mxu0 %v265
  %2652 = vmatpush.msra.mxu0 %v154
  %2653 = vmatpush.msra.mxu0 %v41
  %2654 = vmatmul.f32.gmra.mxu0 %v2436
  %v2655 = vpop.f32.mrf.mxu0
  %v2656 = vadd.f32 0.0, %v2655
  %2657 = vdwg.mxu0
  %2658 = vmatpush.msra.mxu0 0.0
  %2659 = vmatpush.msra.mxu0 0.0
  %2660 = vmatpush.msra.mxu0 0.0
  %2661 = vmatpush.msra.mxu0 0.0
  %2662 = vmatpush.msra.mxu0 0.0
  %2663 = vmatpush.msra.mxu0 0.0
  %2664 = vmatpush.msra.mxu0 0.0
  %2665 = vmatpush.msra.mxu0 0.0
  %2666 = vmatpush.msra.mxu0 0.0
  %2667 = vmatpush.msra.mxu0 0.0
  %2668 = vmatpush.msra.mxu0 0.0
  %2669 = vmatpush.msra.mxu0 %v488
  %2670 = vmatpush.msra.mxu0 %v377
  %2671 = vmatpush.msra.mxu0 %v266
  %2672 = vmatpush.msra.mxu0 %v155
  %2673 = vmatpush.msra.mxu0 %v42
  %2674 = vmatmul.f32.gmra.mxu0 %v2436
  %v2675 = vpop.f32.mrf.mxu0
  %v2676 = vadd.f32 0.0, %v2675
  %2677 = vdwg.mxu0
  %2678 = vmatpush.msra.mxu0 0.0
  %2679 = vmatpush.msra.mxu0 0.0
  %2680 = vmatpush.msra.mxu0 0.0
  %2681 = vmatpush.msra.mxu0 0.0
  %2682 = vmatpush.msra.mxu0 0.0
  %2683 = vmatpush.msra.mxu0 0.0
  %2684 = vmatpush.msra.mxu0 0.0
  %2685 = vmatpush.msra.mxu0 0.0
  %2686 = vmatpush.msra.mxu0 0.0
  %2687 = vmatpush.msra.mxu0 0.0
  %2688 = vmatpush.msra.mxu0 0.0
  %2689 = vmatpush.msra.mxu0 %v489
  %2690 = vmatpush.msra.mxu0 %v378
  %2691 = vmatpush.msra.mxu0 %v267
  %2692 = vmatpush.msra.mxu0 %v156
  %2693 = vmatpush.msra.mxu0 %v43
  %2694 = vmatmul.f32.gmra.mxu0 %v2436
  %v2695 = vpop.f32.mrf.mxu0
  %v2696 = vadd.f32 0.0, %v2695
  %2697 = vdwg.mxu0
  %2698 = vmatpush.msra.mxu0 0.0
  %2699 = vmatpush.msra.mxu0 0.0
  %2700 = vmatpush.msra.mxu0 0.0
  %2701 = vmatpush.msra.mxu0 0.0
  %2702 = vmatpush.msra.mxu0 0.0
  %2703 = vmatpush.msra.mxu0 0.0
  %2704 = vmatpush.msra.mxu0 0.0
  %2705 = vmatpush.msra.mxu0 0.0
  %2706 = vmatpush.msra.mxu0 0.0
  %2707 = vmatpush.msra.mxu0 0.0
  %2708 = vmatpush.msra.mxu0 0.0
  %2709 = vmatpush.msra.mxu0 %v490
  %2710 = vmatpush.msra.mxu0 %v379
  %2711 = vmatpush.msra.mxu0 %v268
  %2712 = vmatpush.msra.mxu0 %v157
  %2713 = vmatpush.msra.mxu0 %v44
  %2714 = vmatmul.f32.gmra.mxu0 %v2436
  %v2715 = vpop.f32.mrf.mxu0
  %v2716 = vadd.f32 0.0, %v2715
  %2717 = vdwg.mxu0
  %2718 = vmatpush.msra.mxu0 0.0
  %2719 = vmatpush.msra.mxu0 0.0
  %2720 = vmatpush.msra.mxu0 0.0
  %2721 = vmatpush.msra.mxu0 0.0
  %2722 = vmatpush.msra.mxu0 0.0
  %2723 = vmatpush.msra.mxu0 0.0
  %2724 = vmatpush.msra.mxu0 0.0
  %2725 = vmatpush.msra.mxu0 0.0
  %2726 = vmatpush.msra.mxu0 0.0
  %2727 = vmatpush.msra.mxu0 0.0
  %2728 = vmatpush.msra.mxu0 0.0
  %2729 = vmatpush.msra.mxu0 %v491
  %2730 = vmatpush.msra.mxu0 %v380
  %2731 = vmatpush.msra.mxu0 %v269
  %2732 = vmatpush.msra.mxu0 %v158
  %2733 = vmatpush.msra.mxu0 %v45
  %2734 = vmatmul.f32.gmra.mxu0 %v2436
  %v2735 = vpop.f32.mrf.mxu0
  %v2736 = vadd.f32 0.0, %v2735
  %2737 = vdwg.mxu0
  %2738 = vmatpush.msra.mxu0 0.0
  %2739 = vmatpush.msra.mxu0 0.0
  %2740 = vmatpush.msra.mxu0 0.0
  %2741 = vmatpush.msra.mxu0 0.0
  %2742 = vmatpush.msra.mxu0 0.0
  %2743 = vmatpush.msra.mxu0 0.0
  %2744 = vmatpush.msra.mxu0 0.0
  %2745 = vmatpush.msra.mxu0 0.0
  %2746 = vmatpush.msra.mxu0 0.0
  %2747 = vmatpush.msra.mxu0 0.0
  %2748 = vmatpush.msra.mxu0 0.0
  %2749 = vmatpush.msra.mxu0 %v492
  %2750 = vmatpush.msra.mxu0 %v381
  %2751 = vmatpush.msra.mxu0 %v270
  %2752 = vmatpush.msra.mxu0 %v159
  %2753 = vmatpush.msra.mxu0 %v46
  %2754 = vmatmul.f32.gmra.mxu0 %v2436
  %v2755 = vpop.f32.mrf.mxu0
  %v2756 = vadd.f32 0.0, %v2755
  %2757 = vdwg.mxu0
  %2758 = vmatpush.msra.mxu0 0.0
  %2759 = vmatpush.msra.mxu0 0.0
  %2760 = vmatpush.msra.mxu0 0.0
  %2761 = vmatpush.msra.mxu0 0.0
  %2762 = vmatpush.msra.mxu0 0.0
  %2763 = vmatpush.msra.mxu0 0.0
  %2764 = vmatpush.msra.mxu0 0.0
  %2765 = vmatpush.msra.mxu0 0.0
  %2766 = vmatpush.msra.mxu0 0.0
  %2767 = vmatpush.msra.mxu0 0.0
  %2768 = vmatpush.msra.mxu0 0.0
  %2769 = vmatpush.msra.mxu0 %v493
  %2770 = vmatpush.msra.mxu0 %v382
  %2771 = vmatpush.msra.mxu0 %v271
  %2772 = vmatpush.msra.mxu0 %v160
  %2773 = vmatpush.msra.mxu0 %v47
  %2774 = vmatmul.f32.gmra.mxu0 %v2436
  %v2775 = vpop.f32.mrf.mxu0
  %v2776 = vadd.f32 0.0, %v2775
  %2777 = vdwg.mxu0
  %2778 = vmatpush.msra.mxu0 0.0
  %2779 = vmatpush.msra.mxu0 0.0
  %2780 = vmatpush.msra.mxu0 0.0
  %2781 = vmatpush.msra.mxu0 0.0
  %2782 = vmatpush.msra.mxu0 0.0
  %2783 = vmatpush.msra.mxu0 0.0
  %2784 = vmatpush.msra.mxu0 0.0
  %2785 = vmatpush.msra.mxu0 0.0
  %2786 = vmatpush.msra.mxu0 0.0
  %2787 = vmatpush.msra.mxu0 0.0
  %2788 = vmatpush.msra.mxu0 0.0
  %2789 = vmatpush.msra.mxu0 %v494
  %2790 = vmatpush.msra.mxu0 %v383
  %2791 = vmatpush.msra.mxu0 %v272
  %2792 = vmatpush.msra.mxu0 %v161
  %2793 = vmatpush.msra.mxu0 %v48
  %2794 = vmatmul.f32.gmra.mxu0 %v2436
  %v2795 = vpop.f32.mrf.mxu0
  %v2796 = vadd.f32 0.0, %v2795
  %2797 = vdwg.mxu0
  %2798 = vmatpush.msra.mxu0 0.0
  %2799 = vmatpush.msra.mxu0 0.0
  %2800 = vmatpush.msra.mxu0 0.0
  %2801 = vmatpush.msra.mxu0 0.0
  %2802 = vmatpush.msra.mxu0 0.0
  %2803 = vmatpush.msra.mxu0 0.0
  %2804 = vmatpush.msra.mxu0 0.0
  %2805 = vmatpush.msra.mxu0 0.0
  %2806 = vmatpush.msra.mxu0 0.0
  %2807 = vmatpush.msra.mxu0 0.0
  %2808 = vmatpush.msra.mxu0 0.0
  %2809 = vmatpush.msra.mxu0 %v495
  %2810 = vmatpush.msra.mxu0 %v384
  %2811 = vmatpush.msra.mxu0 %v273
  %2812 = vmatpush.msra.mxu0 %v162
  %2813 = vmatpush.msra.mxu0 %v49
  %2814 = vmatmul.f32.gmra.mxu0 %v2436
  %v2815 = vpop.f32.mrf.mxu0
  %v2816 = vadd.f32 0.0, %v2815
  %2817 = vdwg.mxu0
  %2818 = vmatpush.msra.mxu0 0.0
  %2819 = vmatpush.msra.mxu0 0.0
  %2820 = vmatpush.msra.mxu0 0.0
  %2821 = vmatpush.msra.mxu0 0.0
  %2822 = vmatpush.msra.mxu0 0.0
  %2823 = vmatpush.msra.mxu0 0.0
  %2824 = vmatpush.msra.mxu0 0.0
  %2825 = vmatpush.msra.mxu0 0.0
  %2826 = vmatpush.msra.mxu0 0.0
  %2827 = vmatpush.msra.mxu0 0.0
  %2828 = vmatpush.msra.mxu0 0.0
  %2829 = vmatpush.msra.mxu0 %v496
  %2830 = vmatpush.msra.mxu0 %v385
  %2831 = vmatpush.msra.mxu0 %v274
  %2832 = vmatpush.msra.mxu0 %v163
  %2833 = vmatpush.msra.mxu0 %v50
  %2834 = vmatmul.f32.gmra.mxu0 %v2436
  %v2835 = vpop.f32.mrf.mxu0
  %v2836 = vadd.f32 0.0, %v2835
  %2837 = vdwg.mxu0
  %2838 = vmatpush.msra.mxu0 0.0
  %2839 = vmatpush.msra.mxu0 0.0
  %2840 = vmatpush.msra.mxu0 0.0
  %2841 = vmatpush.msra.mxu0 0.0
  %2842 = vmatpush.msra.mxu0 0.0
  %2843 = vmatpush.msra.mxu0 0.0
  %2844 = vmatpush.msra.mxu0 0.0
  %2845 = vmatpush.msra.mxu0 0.0
  %2846 = vmatpush.msra.mxu0 0.0
  %2847 = vmatpush.msra.mxu0 0.0
  %2848 = vmatpush.msra.mxu0 0.0
  %2849 = vmatpush.msra.mxu0 %v497
  %2850 = vmatpush.msra.mxu0 %v386
  %2851 = vmatpush.msra.mxu0 %v275
  %2852 = vmatpush.msra.mxu0 %v164
  %2853 = vmatpush.msra.mxu0 %v51
  %2854 = vmatmul.f32.gmra.mxu0 %v2436
  %v2855 = vpop.f32.mrf.mxu0
  %v2856 = vadd.f32 0.0, %v2855
  %2857 = vdwg.mxu0
  %2858 = vmatpush.msra.mxu0 0.0
  %2859 = vmatpush.msra.mxu0 0.0
  %2860 = vmatpush.msra.mxu0 0.0
  %2861 = vmatpush.msra.mxu0 0.0
  %2862 = vmatpush.msra.mxu0 0.0
  %2863 = vmatpush.msra.mxu0 0.0
  %2864 = vmatpush.msra.mxu0 0.0
  %2865 = vmatpush.msra.mxu0 0.0
  %2866 = vmatpush.msra.mxu0 0.0
  %2867 = vmatpush.msra.mxu0 0.0
  %2868 = vmatpush.msra.mxu0 0.0
  %2869 = vmatpush.msra.mxu0 %v498
  %2870 = vmatpush.msra.mxu0 %v387
  %2871 = vmatpush.msra.mxu0 %v276
  %2872 = vmatpush.msra.mxu0 %v165
  %2873 = vmatpush.msra.mxu0 %v52
  %2874 = vmatmul.f32.gmra.mxu0 %v2436
  %v2875 = vpop.f32.mrf.mxu0
  %v2876 = vadd.f32 0.0, %v2875
  %2877 = vdwg.mxu0
  %2878 = vmatpush.msra.mxu0 0.0
  %2879 = vmatpush.msra.mxu0 0.0
  %2880 = vmatpush.msra.mxu0 0.0
  %2881 = vmatpush.msra.mxu0 0.0
  %2882 = vmatpush.msra.mxu0 0.0
  %2883 = vmatpush.msra.mxu0 0.0
  %2884 = vmatpush.msra.mxu0 0.0
  %2885 = vmatpush.msra.mxu0 0.0
  %2886 = vmatpush.msra.mxu0 0.0
  %2887 = vmatpush.msra.mxu0 0.0
  %2888 = vmatpush.msra.mxu0 0.0
  %2889 = vmatpush.msra.mxu0 %v499
  %2890 = vmatpush.msra.mxu0 %v388
  %2891 = vmatpush.msra.mxu0 %v277
  %2892 = vmatpush.msra.mxu0 %v166
  %2893 = vmatpush.msra.mxu0 %v53
  %2894 = vmatmul.f32.gmra.mxu0 %v2436
  %v2895 = vpop.f32.mrf.mxu0
  %v2896 = vadd.f32 0.0, %v2895
  %2897 = vdwg.mxu0
  %v2898 = vadd.f32 %v2410, %v2456
  %v2899 = vadd.f32 %v2411, %v2476
  %v2900 = vadd.f32 %v2412, %v2496
  %v2901 = vadd.f32 %v2413, %v2516
  %v2902 = vadd.f32 %v2414, %v2536
  %v2903 = vadd.f32 %v2415, %v2556
  %v2904 = vadd.f32 %v2416, %v2576
  %v2905 = vadd.f32 %v2417, %v2596
  %v2906 = vadd.f32 %v2418, %v2616
  %v2907 = vadd.f32 %v2419, %v2636
  %v2908 = vadd.f32 %v2420, %v2656
  %v2909 = vadd.f32 %v2421, %v2676
  %v2910 = vadd.f32 %v2422, %v2696
  %v2911 = vadd.f32 %v2423, %v2716
  %v2912 = vadd.f32 %v2424, %v2736
  %v2913 = vadd.f32 %v2425, %v2756
  %v2914 = vadd.f32 %v2426, %v2776
  %v2915 = vadd.f32 %v2427, %v2796
  %v2916 = vadd.f32 %v2428, %v2816
  %v2917 = vadd.f32 %v2429, %v2836
  %v2918 = vadd.f32 %v2430, %v2856
  %v2919 = vadd.f32 %v2431, %v2876
  %v2920 = vadd.f32 %v2432, %v2896
  %2922 = vset.pattern.permute.xlu0 0
  %2923 = vperm.xlu0 %2922, %v23
  %v2924 = vpop.permute.xlu0 %2923
  %v2926 = vadd.f32 %v2898, %v2924
  %v2927 = vadd.f32 %v2899, %v2924
  %v2928 = vadd.f32 %v2900, %v2924
  %v2929 = vadd.f32 %v2901, %v2924
  %v2930 = vadd.f32 %v2902, %v2924
  %v2931 = vadd.f32 %v2903, %v2924
  %v2932 = vadd.f32 %v2904, %v2924
  %v2933 = vadd.f32 %v2905, %v2924
  %v2934 = vadd.f32 %v2906, %v2924
  %v2935 = vadd.f32 %v2907, %v2924
  %v2936 = vadd.f32 %v2908, %v2924
  %v2937 = vadd.f32 %v2909, %v2924
  %v2938 = vadd.f32 %v2910, %v2924
  %v2939 = vadd.f32 %v2911, %v2924
  %v2940 = vadd.f32 %v2912, %v2924
  %v2941 = vadd.f32 %v2913, %v2924
  %v2942 = vadd.f32 %v2914, %v2924
  %v2943 = vadd.f32 %v2915, %v2924
  %v2944 = vadd.f32 %v2916, %v2924
  %v2945 = vadd.f32 %v2917, %v2924
  %v2946 = vadd.f32 %v2918, %v2924
  %v2947 = vadd.f32 %v2919, %v2924
  %v2948 = vadd.f32 %v2920, %v2924
  %v2949 = vmax.f32 %v2926, 0.0
  %v2950 = vmax.f32 %v2927, 0.0
  %v2951 = vmax.f32 %v2928, 0.0
  %v2952 = vmax.f32 %v2929, 0.0
  %v2953 = vmax.f32 %v2930, 0.0
  %v2954 = vmax.f32 %v2931, 0.0
  %v2955 = vmax.f32 %v2932, 0.0
  %v2956 = vmax.f32 %v2933, 0.0
  %v2957 = vmax.f32 %v2934, 0.0
  %v2958 = vmax.f32 %v2935, 0.0
  %v2959 = vmax.f32 %v2936, 0.0
  %v2960 = vmax.f32 %v2937, 0.0
  %v2961 = vmax.f32 %v2938, 0.0
  %v2962 = vmax.f32 %v2939, 0.0
  %v2963 = vmax.f32 %v2940, 0.0
  %v2964 = vmax.f32 %v2941, 0.0
  %v2965 = vmax.f32 %v2942, 0.0
  %v2966 = vmax.f32 %v2943, 0.0
  %v2967 = vmax.f32 %v2944, 0.0
  %v2968 = vmax.f32 %v2945, 0.0
  %v2969 = vmax.f32 %v2946, 0.0
  %v2970 = vmax.f32 %v2947, 0.0
  %v2971 = vmax.f32 %v2948, 0.0
  %2995 = vrot.lane.b32.xlu0 %v2949, 127
  %v2996 = vpop.permute.xlu0 %2995
  %2997 = vrot.lane.b32.xlu0 %v2950, 127
  %v2998 = vpop.permute.xlu0 %2997
  %2999 = vrot.lane.b32.xlu0 %v2951, 127
  %v3000 = vpop.permute.xlu0 %2999
  %3001 = vrot.lane.b32.xlu0 %v2952, 127
  %v3002 = vpop.permute.xlu0 %3001
  %3003 = vrot.lane.b32.xlu0 %v2953, 127
  %v3004 = vpop.permute.xlu0 %3003
  %3005 = vrot.lane.b32.xlu0 %v2954, 127
  %v3006 = vpop.permute.xlu0 %3005
  %3007 = vrot.lane.b32.xlu0 %v2955, 127
  %v3008 = vpop.permute.xlu0 %3007
  %3009 = vrot.lane.b32.xlu0 %v2956, 127
  %v3010 = vpop.permute.xlu0 %3009
  %3011 = vrot.lane.b32.xlu0 %v2957, 127
  %v3012 = vpop.permute.xlu0 %3011
  %3013 = vrot.lane.b32.xlu0 %v2958, 127
  %v3014 = vpop.permute.xlu0 %3013
  %3015 = vrot.lane.b32.xlu0 %v2959, 127
  %v3016 = vpop.permute.xlu0 %3015
  %3017 = vrot.lane.b32.xlu0 %v2960, 127
  %v3018 = vpop.permute.xlu0 %3017
  %3019 = vrot.lane.b32.xlu0 %v2961, 127
  %v3020 = vpop.permute.xlu0 %3019
  %3021 = vrot.lane.b32.xlu0 %v2962, 127
  %v3022 = vpop.permute.xlu0 %3021
  %3023 = vrot.lane.b32.xlu0 %v2963, 127
  %v3024 = vpop.permute.xlu0 %3023
  %3025 = vrot.lane.b32.xlu0 %v2964, 127
  %v3026 = vpop.permute.xlu0 %3025
  %3027 = vrot.lane.b32.xlu0 %v2965, 127
  %v3028 = vpop.permute.xlu0 %3027
  %3029 = vrot.lane.b32.xlu0 %v2966, 127
  %v3030 = vpop.permute.xlu0 %3029
  %3031 = vrot.lane.b32.xlu0 %v2967, 127
  %v3032 = vpop.permute.xlu0 %3031
  %3033 = vrot.lane.b32.xlu0 %v2968, 127
  %v3034 = vpop.permute.xlu0 %3033
  %3035 = vrot.lane.b32.xlu0 %v2969, 127
  %v3036 = vpop.permute.xlu0 %3035
  %3037 = vrot.lane.b32.xlu0 %v2970, 127
  %v3038 = vpop.permute.xlu0 %3037
  %3039 = vrot.lane.b32.xlu0 %v2971, 127
  %v3040 = vpop.permute.xlu0 %3039
  %v3041 = vsel %vm139, %v2996, %v2998
  %v3042 = vsel %vm139, %v2998, %v3000
  %v3043 = vsel %vm139, %v3000, %v3002
  %v3044 = vsel %vm139, %v3002, %v3004
  %v3045 = vsel %vm139, %v3004, %v3006
  %v3046 = vsel %vm139, %v3006, %v3008
  %v3047 = vsel %vm139, %v3008, %v3010
  %v3048 = vsel %vm139, %v3010, %v3012
  %v3049 = vsel %vm139, %v3012, %v3014
  %v3050 = vsel %vm139, %v3014, %v3016
  %v3051 = vsel %vm139, %v3016, %v3018
  %v3052 = vsel %vm139, %v3018, %v3020
  %v3053 = vsel %vm139, %v3020, %v3022
  %v3054 = vsel %vm139, %v3022, %v3024
  %v3055 = vsel %vm139, %v3024, %v3026
  %v3056 = vsel %vm139, %v3026, %v3028
  %v3057 = vsel %vm139, %v3028, %v3030
  %v3058 = vsel %vm139, %v3030, %v3032
  %v3059 = vsel %vm139, %v3032, %v3034
  %v3060 = vsel %vm139, %v3034, %v3036
  %v3061 = vsel %vm139, %v3036, %v3038
  %v3062 = vsel %vm139, %v3038, %v3040
  %3085 = vrot.lane.b32.xlu0 %v2949, 126
  %v3086 = vpop.permute.xlu0 %3085
  %3087 = vrot.lane.b32.xlu0 %v2950, 126
  %v3088 = vpop.permute.xlu0 %3087
  %3089 = vrot.lane.b32.xlu0 %v2951, 126
  %v3090 = vpop.permute.xlu0 %3089
  %3091 = vrot.lane.b32.xlu0 %v2952, 126
  %v3092 = vpop.permute.xlu0 %3091
  %3093 = vrot.lane.b32.xlu0 %v2953, 126
  %v3094 = vpop.permute.xlu0 %3093
  %3095 = vrot.lane.b32.xlu0 %v2954, 126
  %v3096 = vpop.permute.xlu0 %3095
  %3097 = vrot.lane.b32.xlu0 %v2955, 126
  %v3098 = vpop.permute.xlu0 %3097
  %3099 = vrot.lane.b32.xlu0 %v2956, 126
  %v3100 = vpop.permute.xlu0 %3099
  %3101 = vrot.lane.b32.xlu0 %v2957, 126
  %v3102 = vpop.permute.xlu0 %3101
  %3103 = vrot.lane.b32.xlu0 %v2958, 126
  %v3104 = vpop.permute.xlu0 %3103
  %3105 = vrot.lane.b32.xlu0 %v2959, 126
  %v3106 = vpop.permute.xlu0 %3105
  %3107 = vrot.lane.b32.xlu0 %v2960, 126
  %v3108 = vpop.permute.xlu0 %3107
  %3109 = vrot.lane.b32.xlu0 %v2961, 126
  %v3110 = vpop.permute.xlu0 %3109
  %3111 = vrot.lane.b32.xlu0 %v2962, 126
  %v3112 = vpop.permute.xlu0 %3111
  %3113 = vrot.lane.b32.xlu0 %v2963, 126
  %v3114 = vpop.permute.xlu0 %3113
  %3115 = vrot.lane.b32.xlu0 %v2964, 126
  %v3116 = vpop.permute.xlu0 %3115
  %3117 = vrot.lane.b32.xlu0 %v2965, 126
  %v3118 = vpop.permute.xlu0 %3117
  %3119 = vrot.lane.b32.xlu0 %v2966, 126
  %v3120 = vpop.permute.xlu0 %3119
  %3121 = vrot.lane.b32.xlu0 %v2967, 126
  %v3122 = vpop.permute.xlu0 %3121
  %3123 = vrot.lane.b32.xlu0 %v2968, 126
  %v3124 = vpop.permute.xlu0 %3123
  %3125 = vrot.lane.b32.xlu0 %v2969, 126
  %v3126 = vpop.permute.xlu0 %3125
  %3127 = vrot.lane.b32.xlu0 %v2970, 126
  %v3128 = vpop.permute.xlu0 %3127
  %3129 = vrot.lane.b32.xlu0 %v2971, 126
  %v3130 = vpop.permute.xlu0 %3129
  %v3131 = vsel %vm250, %v3086, %v3088
  %v3132 = vsel %vm250, %v3088, %v3090
  %v3133 = vsel %vm250, %v3090, %v3092
  %v3134 = vsel %vm250, %v3092, %v3094
  %v3135 = vsel %vm250, %v3094, %v3096
  %v3136 = vsel %vm250, %v3096, %v3098
  %v3137 = vsel %vm250, %v3098, %v3100
  %v3138 = vsel %vm250, %v3100, %v3102
  %v3139 = vsel %vm250, %v3102, %v3104
  %v3140 = vsel %vm250, %v3104, %v3106
  %v3141 = vsel %vm250, %v3106, %v3108
  %v3142 = vsel %vm250, %v3108, %v3110
  %v3143 = vsel %vm250, %v3110, %v3112
  %v3144 = vsel %vm250, %v3112, %v3114
  %v3145 = vsel %vm250, %v3114, %v3116
  %v3146 = vsel %vm250, %v3116, %v3118
  %v3147 = vsel %vm250, %v3118, %v3120
  %v3148 = vsel %vm250, %v3120, %v3122
  %v3149 = vsel %vm250, %v3122, %v3124
  %v3150 = vsel %vm250, %v3124, %v3126
  %v3151 = vsel %vm250, %v3126, %v3128
  %v3152 = vsel %vm250, %v3128, %v3130
  %3175 = vrot.lane.b32.xlu0 %v2949, 125
  %v3176 = vpop.permute.xlu0 %3175
  %3177 = vrot.lane.b32.xlu0 %v2950, 125
  %v3178 = vpop.permute.xlu0 %3177
  %3179 = vrot.lane.b32.xlu0 %v2951, 125
  %v3180 = vpop.permute.xlu0 %3179
  %3181 = vrot.lane.b32.xlu0 %v2952, 125
  %v3182 = vpop.permute.xlu0 %3181
  %3183 = vrot.lane.b32.xlu0 %v2953, 125
  %v3184 = vpop.permute.xlu0 %3183
  %3185 = vrot.lane.b32.xlu0 %v2954, 125
  %v3186 = vpop.permute.xlu0 %3185
  %3187 = vrot.lane.b32.xlu0 %v2955, 125
  %v3188 = vpop.permute.xlu0 %3187
  %3189 = vrot.lane.b32.xlu0 %v2956, 125
  %v3190 = vpop.permute.xlu0 %3189
  %3191 = vrot.lane.b32.xlu0 %v2957, 125
  %v3192 = vpop.permute.xlu0 %3191
  %3193 = vrot.lane.b32.xlu0 %v2958, 125
  %v3194 = vpop.permute.xlu0 %3193
  %3195 = vrot.lane.b32.xlu0 %v2959, 125
  %v3196 = vpop.permute.xlu0 %3195
  %3197 = vrot.lane.b32.xlu0 %v2960, 125
  %v3198 = vpop.permute.xlu0 %3197
  %3199 = vrot.lane.b32.xlu0 %v2961, 125
  %v3200 = vpop.permute.xlu0 %3199
  %3201 = vrot.lane.b32.xlu0 %v2962, 125
  %v3202 = vpop.permute.xlu0 %3201
  %3203 = vrot.lane.b32.xlu0 %v2963, 125
  %v3204 = vpop.permute.xlu0 %3203
  %3205 = vrot.lane.b32.xlu0 %v2964, 125
  %v3206 = vpop.permute.xlu0 %3205
  %3207 = vrot.lane.b32.xlu0 %v2965, 125
  %v3208 = vpop.permute.xlu0 %3207
  %3209 = vrot.lane.b32.xlu0 %v2966, 125
  %v3210 = vpop.permute.xlu0 %3209
  %3211 = vrot.lane.b32.xlu0 %v2967, 125
  %v3212 = vpop.permute.xlu0 %3211
  %3213 = vrot.lane.b32.xlu0 %v2968, 125
  %v3214 = vpop.permute.xlu0 %3213
  %3215 = vrot.lane.b32.xlu0 %v2969, 125
  %v3216 = vpop.permute.xlu0 %3215
  %3217 = vrot.lane.b32.xlu0 %v2970, 125
  %v3218 = vpop.permute.xlu0 %3217
  %3219 = vrot.lane.b32.xlu0 %v2971, 125
  %v3220 = vpop.permute.xlu0 %3219
  %v3221 = vsel %vm361, %v3176, %v3178
  %v3222 = vsel %vm361, %v3178, %v3180
  %v3223 = vsel %vm361, %v3180, %v3182
  %v3224 = vsel %vm361, %v3182, %v3184
  %v3225 = vsel %vm361, %v3184, %v3186
  %v3226 = vsel %vm361, %v3186, %v3188
  %v3227 = vsel %vm361, %v3188, %v3190
  %v3228 = vsel %vm361, %v3190, %v3192
  %v3229 = vsel %vm361, %v3192, %v3194
  %v3230 = vsel %vm361, %v3194, %v3196
  %v3231 = vsel %vm361, %v3196, %v3198
  %v3232 = vsel %vm361, %v3198, %v3200
  %v3233 = vsel %vm361, %v3200, %v3202
  %v3234 = vsel %vm361, %v3202, %v3204
  %v3235 = vsel %vm361, %v3204, %v3206
  %v3236 = vsel %vm361, %v3206, %v3208
  %v3237 = vsel %vm361, %v3208, %v3210
  %v3238 = vsel %vm361, %v3210, %v3212
  %v3239 = vsel %vm361, %v3212, %v3214
  %v3240 = vsel %vm361, %v3214, %v3216
  %v3241 = vsel %vm361, %v3216, %v3218
  %v3242 = vsel %vm361, %v3218, %v3220
  %3265 = vrot.lane.b32.xlu0 %v2949, 124
  %v3266 = vpop.permute.xlu0 %3265
  %3267 = vrot.lane.b32.xlu0 %v2950, 124
  %v3268 = vpop.permute.xlu0 %3267
  %3269 = vrot.lane.b32.xlu0 %v2951, 124
  %v3270 = vpop.permute.xlu0 %3269
  %3271 = vrot.lane.b32.xlu0 %v2952, 124
  %v3272 = vpop.permute.xlu0 %3271
  %3273 = vrot.lane.b32.xlu0 %v2953, 124
  %v3274 = vpop.permute.xlu0 %3273
  %3275 = vrot.lane.b32.xlu0 %v2954, 124
  %v3276 = vpop.permute.xlu0 %3275
  %3277 = vrot.lane.b32.xlu0 %v2955, 124
  %v3278 = vpop.permute.xlu0 %3277
  %3279 = vrot.lane.b32.xlu0 %v2956, 124
  %v3280 = vpop.permute.xlu0 %3279
  %3281 = vrot.lane.b32.xlu0 %v2957, 124
  %v3282 = vpop.permute.xlu0 %3281
  %3283 = vrot.lane.b32.xlu0 %v2958, 124
  %v3284 = vpop.permute.xlu0 %3283
  %3285 = vrot.lane.b32.xlu0 %v2959, 124
  %v3286 = vpop.permute.xlu0 %3285
  %3287 = vrot.lane.b32.xlu0 %v2960, 124
  %v3288 = vpop.permute.xlu0 %3287
  %3289 = vrot.lane.b32.xlu0 %v2961, 124
  %v3290 = vpop.permute.xlu0 %3289
  %3291 = vrot.lane.b32.xlu0 %v2962, 124
  %v3292 = vpop.permute.xlu0 %3291
  %3293 = vrot.lane.b32.xlu0 %v2963, 124
  %v3294 = vpop.permute.xlu0 %3293
  %3295 = vrot.lane.b32.xlu0 %v2964, 124
  %v3296 = vpop.permute.xlu0 %3295
  %3297 = vrot.lane.b32.xlu0 %v2965, 124
  %v3298 = vpop.permute.xlu0 %3297
  %3299 = vrot.lane.b32.xlu0 %v2966, 124
  %v3300 = vpop.permute.xlu0 %3299
  %3301 = vrot.lane.b32.xlu0 %v2967, 124
  %v3302 = vpop.permute.xlu0 %3301
  %3303 = vrot.lane.b32.xlu0 %v2968, 124
  %v3304 = vpop.permute.xlu0 %3303
  %3305 = vrot.lane.b32.xlu0 %v2969, 124
  %v3306 = vpop.permute.xlu0 %3305
  %3307 = vrot.lane.b32.xlu0 %v2970, 124
  %v3308 = vpop.permute.xlu0 %3307
  %3309 = vrot.lane.b32.xlu0 %v2971, 124
  %v3310 = vpop.permute.xlu0 %3309
  %v3311 = vsel %vm472, %v3266, %v3268
  %v3312 = vsel %vm472, %v3268, %v3270
  %v3313 = vsel %vm472, %v3270, %v3272
  %v3314 = vsel %vm472, %v3272, %v3274
  %v3315 = vsel %vm472, %v3274, %v3276
  %v3316 = vsel %vm472, %v3276, %v3278
  %v3317 = vsel %vm472, %v3278, %v3280
  %v3318 = vsel %vm472, %v3280, %v3282
  %v3319 = vsel %vm472, %v3282, %v3284
  %v3320 = vsel %vm472, %v3284, %v3286
  %v3321 = vsel %vm472, %v3286, %v3288
  %v3322 = vsel %vm472, %v3288, %v3290
  %v3323 = vsel %vm472, %v3290, %v3292
  %v3324 = vsel %vm472, %v3292, %v3294
  %v3325 = vsel %vm472, %v3294, %v3296
  %v3326 = vsel %vm472, %v3296, %v3298
  %v3327 = vsel %vm472, %v3298, %v3300
  %v3328 = vsel %vm472, %v3300, %v3302
  %v3329 = vsel %vm472, %v3302, %v3304
  %v3330 = vsel %vm472, %v3304, %v3306
  %v3331 = vsel %vm472, %v3306, %v3308
  %v3332 = vsel %vm472, %v3308, %v3310
  %v3355 = vld [vmem:[%s2] sm:$0xff]
  %v3356 = vld [vmem:[%s2 + $0x8] sm:$0xff]
  %s3357 = scalar_lea.vmem %s2, 16
  %v3358 = vld [vmem:[%s3357] sm:$0xff]
  %v3359 = vld [vmem:[%s3357 + $0x8] sm:$0xff]
  %v3361 = vsel %vm530, %v3358, 0
  %v3364 = vsel %vm530, %v3359, 0
  %3366 = vmatpush.msra.mxu0 0.0
  %3367 = vmatpush.msra.mxu0 0.0
  %3368 = vmatpush.msra.mxu0 0.0
  %3369 = vmatpush.msra.mxu0 0.0
  %3370 = vmatpush.msra.mxu0 0.0
  %3371 = vmatpush.msra.mxu0 0.0
  %3372 = vmatpush.msra.mxu0 0.0
  %3373 = vmatpush.msra.mxu0 0.0
  %3374 = vmatpush.msra.mxu0 0.0
  %3375 = vmatpush.msra.mxu0 0.0
  %3376 = vmatpush.msra.mxu0 0.0
  %3377 = vmatpush.msra.mxu0 %v3312
  %3378 = vmatpush.msra.mxu0 %v3222
  %3379 = vmatpush.msra.mxu0 %v3132
  %3380 = vmatpush.msra.mxu0 %v3042
  %3381 = vmatpush.msra.mxu0 %v2950
  %3382 = vmatmul.f32.gmra.mxu0 %v3361
  %v3383 = vpop.f32.mrf.mxu0
  %v3384 = vadd.f32 0.0, %v3383
  %3385 = vmatmul.f32.gmra.mxu0 %v3364
  %v3386 = vpop.f32.mrf.mxu0
  %v3387 = vadd.f32 0.0, %v3386
  %3388 = vdwg.mxu0
  %3389 = vmatpush.msra.mxu0 0.0
  %3390 = vmatpush.msra.mxu0 0.0
  %3391 = vmatpush.msra.mxu0 0.0
  %3392 = vmatpush.msra.mxu0 0.0
  %3393 = vmatpush.msra.mxu0 0.0
  %3394 = vmatpush.msra.mxu0 0.0
  %3395 = vmatpush.msra.mxu0 0.0
  %3396 = vmatpush.msra.mxu0 0.0
  %3397 = vmatpush.msra.mxu0 0.0
  %3398 = vmatpush.msra.mxu0 0.0
  %3399 = vmatpush.msra.mxu0 0.0
  %3400 = vmatpush.msra.mxu0 %v3313
  %3401 = vmatpush.msra.mxu0 %v3223
  %3402 = vmatpush.msra.mxu0 %v3133
  %3403 = vmatpush.msra.mxu0 %v3043
  %3404 = vmatpush.msra.mxu0 %v2951
  %3405 = vmatmul.f32.gmra.mxu0 %v3361
  %v3406 = vpop.f32.mrf.mxu0
  %v3407 = vadd.f32 0.0, %v3406
  %3408 = vmatmul.f32.gmra.mxu0 %v3364
  %v3409 = vpop.f32.mrf.mxu0
  %v3410 = vadd.f32 0.0, %v3409
  %3411 = vdwg.mxu0
  %3412 = vmatpush.msra.mxu0 0.0
  %3413 = vmatpush.msra.mxu0 0.0
  %3414 = vmatpush.msra.mxu0 0.0
  %3415 = vmatpush.msra.mxu0 0.0
  %3416 = vmatpush.msra.mxu0 0.0
  %3417 = vmatpush.msra.mxu0 0.0
  %3418 = vmatpush.msra.mxu0 0.0
  %3419 = vmatpush.msra.mxu0 0.0
  %3420 = vmatpush.msra.mxu0 0.0
  %3421 = vmatpush.msra.mxu0 0.0
  %3422 = vmatpush.msra.mxu0 0.0
  %3423 = vmatpush.msra.mxu0 %v3314
  %3424 = vmatpush.msra.mxu0 %v3224
  %3425 = vmatpush.msra.mxu0 %v3134
  %3426 = vmatpush.msra.mxu0 %v3044
  %3427 = vmatpush.msra.mxu0 %v2952
  %3428 = vmatmul.f32.gmra.mxu0 %v3361
  %v3429 = vpop.f32.mrf.mxu0
  %v3430 = vadd.f32 0.0, %v3429
  %3431 = vmatmul.f32.gmra.mxu0 %v3364
  %v3432 = vpop.f32.mrf.mxu0
  %v3433 = vadd.f32 0.0, %v3432
  %3434 = vdwg.mxu0
  %3435 = vmatpush.msra.mxu0 0.0
  %3436 = vmatpush.msra.mxu0 0.0
  %3437 = vmatpush.msra.mxu0 0.0
  %3438 = vmatpush.msra.mxu0 0.0
  %3439 = vmatpush.msra.mxu0 0.0
  %3440 = vmatpush.msra.mxu0 0.0
  %3441 = vmatpush.msra.mxu0 0.0
  %3442 = vmatpush.msra.mxu0 0.0
  %3443 = vmatpush.msra.mxu0 0.0
  %3444 = vmatpush.msra.mxu0 0.0
  %3445 = vmatpush.msra.mxu0 0.0
  %3446 = vmatpush.msra.mxu0 %v3315
  %3447 = vmatpush.msra.mxu0 %v3225
  %3448 = vmatpush.msra.mxu0 %v3135
  %3449 = vmatpush.msra.mxu0 %v3045
  %3450 = vmatpush.msra.mxu0 %v2953
  %3451 = vmatmul.f32.gmra.mxu0 %v3361
  %v3452 = vpop.f32.mrf.mxu0
  %v3453 = vadd.f32 0.0, %v3452
  %3454 = vmatmul.f32.gmra.mxu0 %v3364
  %v3455 = vpop.f32.mrf.mxu0
  %v3456 = vadd.f32 0.0, %v3455
  %3457 = vdwg.mxu0
  %3458 = vmatpush.msra.mxu0 0.0
  %3459 = vmatpush.msra.mxu0 0.0
  %3460 = vmatpush.msra.mxu0 0.0
  %3461 = vmatpush.msra.mxu0 0.0
  %3462 = vmatpush.msra.mxu0 0.0
  %3463 = vmatpush.msra.mxu0 0.0
  %3464 = vmatpush.msra.mxu0 0.0
  %3465 = vmatpush.msra.mxu0 0.0
  %3466 = vmatpush.msra.mxu0 0.0
  %3467 = vmatpush.msra.mxu0 0.0
  %3468 = vmatpush.msra.mxu0 0.0
  %3469 = vmatpush.msra.mxu0 %v3316
  %3470 = vmatpush.msra.mxu0 %v3226
  %3471 = vmatpush.msra.mxu0 %v3136
  %3472 = vmatpush.msra.mxu0 %v3046
  %3473 = vmatpush.msra.mxu0 %v2954
  %3474 = vmatmul.f32.gmra.mxu0 %v3361
  %v3475 = vpop.f32.mrf.mxu0
  %v3476 = vadd.f32 0.0, %v3475
  %3477 = vmatmul.f32.gmra.mxu0 %v3364
  %v3478 = vpop.f32.mrf.mxu0
  %v3479 = vadd.f32 0.0, %v3478
  %3480 = vdwg.mxu0
  %3481 = vmatpush.msra.mxu0 0.0
  %3482 = vmatpush.msra.mxu0 0.0
  %3483 = vmatpush.msra.mxu0 0.0
  %3484 = vmatpush.msra.mxu0 0.0
  %3485 = vmatpush.msra.mxu0 0.0
  %3486 = vmatpush.msra.mxu0 0.0
  %3487 = vmatpush.msra.mxu0 0.0
  %3488 = vmatpush.msra.mxu0 0.0
  %3489 = vmatpush.msra.mxu0 0.0
  %3490 = vmatpush.msra.mxu0 0.0
  %3491 = vmatpush.msra.mxu0 0.0
  %3492 = vmatpush.msra.mxu0 %v3317
  %3493 = vmatpush.msra.mxu0 %v3227
  %3494 = vmatpush.msra.mxu0 %v3137
  %3495 = vmatpush.msra.mxu0 %v3047
  %3496 = vmatpush.msra.mxu0 %v2955
  %3497 = vmatmul.f32.gmra.mxu0 %v3361
  %v3498 = vpop.f32.mrf.mxu0
  %v3499 = vadd.f32 0.0, %v3498
  %3500 = vmatmul.f32.gmra.mxu0 %v3364
  %v3501 = vpop.f32.mrf.mxu0
  %v3502 = vadd.f32 0.0, %v3501
  %3503 = vdwg.mxu0
  %3504 = vmatpush.msra.mxu0 0.0
  %3505 = vmatpush.msra.mxu0 0.0
  %3506 = vmatpush.msra.mxu0 0.0
  %3507 = vmatpush.msra.mxu0 0.0
  %3508 = vmatpush.msra.mxu0 0.0
  %3509 = vmatpush.msra.mxu0 0.0
  %3510 = vmatpush.msra.mxu0 0.0
  %3511 = vmatpush.msra.mxu0 0.0
  %3512 = vmatpush.msra.mxu0 0.0
  %3513 = vmatpush.msra.mxu0 0.0
  %3514 = vmatpush.msra.mxu0 0.0
  %3515 = vmatpush.msra.mxu0 %v3318
  %3516 = vmatpush.msra.mxu0 %v3228
  %3517 = vmatpush.msra.mxu0 %v3138
  %3518 = vmatpush.msra.mxu0 %v3048
  %3519 = vmatpush.msra.mxu0 %v2956
  %3520 = vmatmul.f32.gmra.mxu0 %v3361
  %v3521 = vpop.f32.mrf.mxu0
  %v3522 = vadd.f32 0.0, %v3521
  %3523 = vmatmul.f32.gmra.mxu0 %v3364
  %v3524 = vpop.f32.mrf.mxu0
  %v3525 = vadd.f32 0.0, %v3524
  %3526 = vdwg.mxu0
  %3527 = vmatpush.msra.mxu0 0.0
  %3528 = vmatpush.msra.mxu0 0.0
  %3529 = vmatpush.msra.mxu0 0.0
  %3530 = vmatpush.msra.mxu0 0.0
  %3531 = vmatpush.msra.mxu0 0.0
  %3532 = vmatpush.msra.mxu0 0.0
  %3533 = vmatpush.msra.mxu0 0.0
  %3534 = vmatpush.msra.mxu0 0.0
  %3535 = vmatpush.msra.mxu0 0.0
  %3536 = vmatpush.msra.mxu0 0.0
  %3537 = vmatpush.msra.mxu0 0.0
  %3538 = vmatpush.msra.mxu0 %v3319
  %3539 = vmatpush.msra.mxu0 %v3229
  %3540 = vmatpush.msra.mxu0 %v3139
  %3541 = vmatpush.msra.mxu0 %v3049
  %3542 = vmatpush.msra.mxu0 %v2957
  %3543 = vmatmul.f32.gmra.mxu0 %v3361
  %v3544 = vpop.f32.mrf.mxu0
  %v3545 = vadd.f32 0.0, %v3544
  %3546 = vmatmul.f32.gmra.mxu0 %v3364
  %v3547 = vpop.f32.mrf.mxu0
  %v3548 = vadd.f32 0.0, %v3547
  %3549 = vdwg.mxu0
  %3550 = vmatpush.msra.mxu0 0.0
  %3551 = vmatpush.msra.mxu0 0.0
  %3552 = vmatpush.msra.mxu0 0.0
  %3553 = vmatpush.msra.mxu0 0.0
  %3554 = vmatpush.msra.mxu0 0.0
  %3555 = vmatpush.msra.mxu0 0.0
  %3556 = vmatpush.msra.mxu0 0.0
  %3557 = vmatpush.msra.mxu0 0.0
  %3558 = vmatpush.msra.mxu0 0.0
  %3559 = vmatpush.msra.mxu0 0.0
  %3560 = vmatpush.msra.mxu0 0.0
  %3561 = vmatpush.msra.mxu0 %v3320
  %3562 = vmatpush.msra.mxu0 %v3230
  %3563 = vmatpush.msra.mxu0 %v3140
  %3564 = vmatpush.msra.mxu0 %v3050
  %3565 = vmatpush.msra.mxu0 %v2958
  %3566 = vmatmul.f32.gmra.mxu0 %v3361
  %v3567 = vpop.f32.mrf.mxu0
  %v3568 = vadd.f32 0.0, %v3567
  %3569 = vmatmul.f32.gmra.mxu0 %v3364
  %v3570 = vpop.f32.mrf.mxu0
  %v3571 = vadd.f32 0.0, %v3570
  %3572 = vdwg.mxu0
  %3573 = vmatpush.msra.mxu0 0.0
  %3574 = vmatpush.msra.mxu0 0.0
  %3575 = vmatpush.msra.mxu0 0.0
  %3576 = vmatpush.msra.mxu0 0.0
  %3577 = vmatpush.msra.mxu0 0.0
  %3578 = vmatpush.msra.mxu0 0.0
  %3579 = vmatpush.msra.mxu0 0.0
  %3580 = vmatpush.msra.mxu0 0.0
  %3581 = vmatpush.msra.mxu0 0.0
  %3582 = vmatpush.msra.mxu0 0.0
  %3583 = vmatpush.msra.mxu0 0.0
  %3584 = vmatpush.msra.mxu0 %v3321
  %3585 = vmatpush.msra.mxu0 %v3231
  %3586 = vmatpush.msra.mxu0 %v3141
  %3587 = vmatpush.msra.mxu0 %v3051
  %3588 = vmatpush.msra.mxu0 %v2959
  %3589 = vmatmul.f32.gmra.mxu0 %v3361
  %v3590 = vpop.f32.mrf.mxu0
  %v3591 = vadd.f32 0.0, %v3590
  %3592 = vmatmul.f32.gmra.mxu0 %v3364
  %v3593 = vpop.f32.mrf.mxu0
  %v3594 = vadd.f32 0.0, %v3593
  %3595 = vdwg.mxu0
  %3596 = vmatpush.msra.mxu0 0.0
  %3597 = vmatpush.msra.mxu0 0.0
  %3598 = vmatpush.msra.mxu0 0.0
  %3599 = vmatpush.msra.mxu0 0.0
  %3600 = vmatpush.msra.mxu0 0.0
  %3601 = vmatpush.msra.mxu0 0.0
  %3602 = vmatpush.msra.mxu0 0.0
  %3603 = vmatpush.msra.mxu0 0.0
  %3604 = vmatpush.msra.mxu0 0.0
  %3605 = vmatpush.msra.mxu0 0.0
  %3606 = vmatpush.msra.mxu0 0.0
  %3607 = vmatpush.msra.mxu0 %v3322
  %3608 = vmatpush.msra.mxu0 %v3232
  %3609 = vmatpush.msra.mxu0 %v3142
  %3610 = vmatpush.msra.mxu0 %v3052
  %3611 = vmatpush.msra.mxu0 %v2960
  %3612 = vmatmul.f32.gmra.mxu0 %v3361
  %v3613 = vpop.f32.mrf.mxu0
  %v3614 = vadd.f32 0.0, %v3613
  %3615 = vmatmul.f32.gmra.mxu0 %v3364
  %v3616 = vpop.f32.mrf.mxu0
  %v3617 = vadd.f32 0.0, %v3616
  %3618 = vdwg.mxu0
  %3619 = vmatpush.msra.mxu0 0.0
  %3620 = vmatpush.msra.mxu0 0.0
  %3621 = vmatpush.msra.mxu0 0.0
  %3622 = vmatpush.msra.mxu0 0.0
  %3623 = vmatpush.msra.mxu0 0.0
  %3624 = vmatpush.msra.mxu0 0.0
  %3625 = vmatpush.msra.mxu0 0.0
  %3626 = vmatpush.msra.mxu0 0.0
  %3627 = vmatpush.msra.mxu0 0.0
  %3628 = vmatpush.msra.mxu0 0.0
  %3629 = vmatpush.msra.mxu0 0.0
  %3630 = vmatpush.msra.mxu0 %v3323
  %3631 = vmatpush.msra.mxu0 %v3233
  %3632 = vmatpush.msra.mxu0 %v3143
  %3633 = vmatpush.msra.mxu0 %v3053
  %3634 = vmatpush.msra.mxu0 %v2961
  %3635 = vmatmul.f32.gmra.mxu0 %v3361
  %v3636 = vpop.f32.mrf.mxu0
  %v3637 = vadd.f32 0.0, %v3636
  %3638 = vmatmul.f32.gmra.mxu0 %v3364
  %v3639 = vpop.f32.mrf.mxu0
  %v3640 = vadd.f32 0.0, %v3639
  %3641 = vdwg.mxu0
  %3642 = vmatpush.msra.mxu0 0.0
  %3643 = vmatpush.msra.mxu0 0.0
  %3644 = vmatpush.msra.mxu0 0.0
  %3645 = vmatpush.msra.mxu0 0.0
  %3646 = vmatpush.msra.mxu0 0.0
  %3647 = vmatpush.msra.mxu0 0.0
  %3648 = vmatpush.msra.mxu0 0.0
  %3649 = vmatpush.msra.mxu0 0.0
  %3650 = vmatpush.msra.mxu0 0.0
  %3651 = vmatpush.msra.mxu0 0.0
  %3652 = vmatpush.msra.mxu0 0.0
  %3653 = vmatpush.msra.mxu0 %v3324
  %3654 = vmatpush.msra.mxu0 %v3234
  %3655 = vmatpush.msra.mxu0 %v3144
  %3656 = vmatpush.msra.mxu0 %v3054
  %3657 = vmatpush.msra.mxu0 %v2962
  %3658 = vmatmul.f32.gmra.mxu0 %v3361
  %v3659 = vpop.f32.mrf.mxu0
  %v3660 = vadd.f32 0.0, %v3659
  %3661 = vmatmul.f32.gmra.mxu0 %v3364
  %v3662 = vpop.f32.mrf.mxu0
  %v3663 = vadd.f32 0.0, %v3662
  %3664 = vdwg.mxu0
  %3665 = vmatpush.msra.mxu0 0.0
  %3666 = vmatpush.msra.mxu0 0.0
  %3667 = vmatpush.msra.mxu0 0.0
  %3668 = vmatpush.msra.mxu0 0.0
  %3669 = vmatpush.msra.mxu0 0.0
  %3670 = vmatpush.msra.mxu0 0.0
  %3671 = vmatpush.msra.mxu0 0.0
  %3672 = vmatpush.msra.mxu0 0.0
  %3673 = vmatpush.msra.mxu0 0.0
  %3674 = vmatpush.msra.mxu0 0.0
  %3675 = vmatpush.msra.mxu0 0.0
  %3676 = vmatpush.msra.mxu0 %v3325
  %3677 = vmatpush.msra.mxu0 %v3235
  %3678 = vmatpush.msra.mxu0 %v3145
  %3679 = vmatpush.msra.mxu0 %v3055
  %3680 = vmatpush.msra.mxu0 %v2963
  %3681 = vmatmul.f32.gmra.mxu0 %v3361
  %v3682 = vpop.f32.mrf.mxu0
  %v3683 = vadd.f32 0.0, %v3682
  %3684 = vmatmul.f32.gmra.mxu0 %v3364
  %v3685 = vpop.f32.mrf.mxu0
  %v3686 = vadd.f32 0.0, %v3685
  %3687 = vdwg.mxu0
  %3688 = vmatpush.msra.mxu0 0.0
  %3689 = vmatpush.msra.mxu0 0.0
  %3690 = vmatpush.msra.mxu0 0.0
  %3691 = vmatpush.msra.mxu0 0.0
  %3692 = vmatpush.msra.mxu0 0.0
  %3693 = vmatpush.msra.mxu0 0.0
  %3694 = vmatpush.msra.mxu0 0.0
  %3695 = vmatpush.msra.mxu0 0.0
  %3696 = vmatpush.msra.mxu0 0.0
  %3697 = vmatpush.msra.mxu0 0.0
  %3698 = vmatpush.msra.mxu0 0.0
  %3699 = vmatpush.msra.mxu0 %v3326
  %3700 = vmatpush.msra.mxu0 %v3236
  %3701 = vmatpush.msra.mxu0 %v3146
  %3702 = vmatpush.msra.mxu0 %v3056
  %3703 = vmatpush.msra.mxu0 %v2964
  %3704 = vmatmul.f32.gmra.mxu0 %v3361
  %v3705 = vpop.f32.mrf.mxu0
  %v3706 = vadd.f32 0.0, %v3705
  %3707 = vmatmul.f32.gmra.mxu0 %v3364
  %v3708 = vpop.f32.mrf.mxu0
  %v3709 = vadd.f32 0.0, %v3708
  %3710 = vdwg.mxu0
  %3711 = vmatpush.msra.mxu0 0.0
  %3712 = vmatpush.msra.mxu0 0.0
  %3713 = vmatpush.msra.mxu0 0.0
  %3714 = vmatpush.msra.mxu0 0.0
  %3715 = vmatpush.msra.mxu0 0.0
  %3716 = vmatpush.msra.mxu0 0.0
  %3717 = vmatpush.msra.mxu0 0.0
  %3718 = vmatpush.msra.mxu0 0.0
  %3719 = vmatpush.msra.mxu0 0.0
  %3720 = vmatpush.msra.mxu0 0.0
  %3721 = vmatpush.msra.mxu0 0.0
  %3722 = vmatpush.msra.mxu0 %v3327
  %3723 = vmatpush.msra.mxu0 %v3237
  %3724 = vmatpush.msra.mxu0 %v3147
  %3725 = vmatpush.msra.mxu0 %v3057
  %3726 = vmatpush.msra.mxu0 %v2965
  %3727 = vmatmul.f32.gmra.mxu0 %v3361
  %v3728 = vpop.f32.mrf.mxu0
  %v3729 = vadd.f32 0.0, %v3728
  %3730 = vmatmul.f32.gmra.mxu0 %v3364
  %v3731 = vpop.f32.mrf.mxu0
  %v3732 = vadd.f32 0.0, %v3731
  %3733 = vdwg.mxu0
  %3734 = vmatpush.msra.mxu0 0.0
  %3735 = vmatpush.msra.mxu0 0.0
  %3736 = vmatpush.msra.mxu0 0.0
  %3737 = vmatpush.msra.mxu0 0.0
  %3738 = vmatpush.msra.mxu0 0.0
  %3739 = vmatpush.msra.mxu0 0.0
  %3740 = vmatpush.msra.mxu0 0.0
  %3741 = vmatpush.msra.mxu0 0.0
  %3742 = vmatpush.msra.mxu0 0.0
  %3743 = vmatpush.msra.mxu0 0.0
  %3744 = vmatpush.msra.mxu0 0.0
  %3745 = vmatpush.msra.mxu0 %v3328
  %3746 = vmatpush.msra.mxu0 %v3238
  %3747 = vmatpush.msra.mxu0 %v3148
  %3748 = vmatpush.msra.mxu0 %v3058
  %3749 = vmatpush.msra.mxu0 %v2966
  %3750 = vmatmul.f32.gmra.mxu0 %v3361
  %v3751 = vpop.f32.mrf.mxu0
  %v3752 = vadd.f32 0.0, %v3751
  %3753 = vmatmul.f32.gmra.mxu0 %v3364
  %v3754 = vpop.f32.mrf.mxu0
  %v3755 = vadd.f32 0.0, %v3754
  %3756 = vdwg.mxu0
  %3757 = vmatpush.msra.mxu0 0.0
  %3758 = vmatpush.msra.mxu0 0.0
  %3759 = vmatpush.msra.mxu0 0.0
  %3760 = vmatpush.msra.mxu0 0.0
  %3761 = vmatpush.msra.mxu0 0.0
  %3762 = vmatpush.msra.mxu0 0.0
  %3763 = vmatpush.msra.mxu0 0.0
  %3764 = vmatpush.msra.mxu0 0.0
  %3765 = vmatpush.msra.mxu0 0.0
  %3766 = vmatpush.msra.mxu0 0.0
  %3767 = vmatpush.msra.mxu0 0.0
  %3768 = vmatpush.msra.mxu0 %v3329
  %3769 = vmatpush.msra.mxu0 %v3239
  %3770 = vmatpush.msra.mxu0 %v3149
  %3771 = vmatpush.msra.mxu0 %v3059
  %3772 = vmatpush.msra.mxu0 %v2967
  %3773 = vmatmul.f32.gmra.mxu0 %v3361
  %v3774 = vpop.f32.mrf.mxu0
  %v3775 = vadd.f32 0.0, %v3774
  %3776 = vmatmul.f32.gmra.mxu0 %v3364
  %v3777 = vpop.f32.mrf.mxu0
  %v3778 = vadd.f32 0.0, %v3777
  %3779 = vdwg.mxu0
  %v3781 = vsel %vm530, %v3355, 0
  %v3784 = vsel %vm530, %v3356, 0
  %3786 = vmatpush.msra.mxu0 0.0
  %3787 = vmatpush.msra.mxu0 0.0
  %3788 = vmatpush.msra.mxu0 0.0
  %3789 = vmatpush.msra.mxu0 0.0
  %3790 = vmatpush.msra.mxu0 0.0
  %3791 = vmatpush.msra.mxu0 0.0
  %3792 = vmatpush.msra.mxu0 0.0
  %3793 = vmatpush.msra.mxu0 0.0
  %3794 = vmatpush.msra.mxu0 0.0
  %3795 = vmatpush.msra.mxu0 0.0
  %3796 = vmatpush.msra.mxu0 0.0
  %3797 = vmatpush.msra.mxu0 %v3311
  %3798 = vmatpush.msra.mxu0 %v3221
  %3799 = vmatpush.msra.mxu0 %v3131
  %3800 = vmatpush.msra.mxu0 %v3041
  %3801 = vmatpush.msra.mxu0 %v2949
  %3802 = vmatmul.f32.gmra.mxu0 %v3781
  %v3803 = vpop.f32.mrf.mxu0
  %v3804 = vadd.f32 %v3384, %v3803
  %3805 = vmatmul.f32.gmra.mxu0 %v3784
  %v3806 = vpop.f32.mrf.mxu0
  %v3807 = vadd.f32 %v3387, %v3806
  %3808 = vdwg.mxu0
  %3809 = vmatpush.msra.mxu0 0.0
  %3810 = vmatpush.msra.mxu0 0.0
  %3811 = vmatpush.msra.mxu0 0.0
  %3812 = vmatpush.msra.mxu0 0.0
  %3813 = vmatpush.msra.mxu0 0.0
  %3814 = vmatpush.msra.mxu0 0.0
  %3815 = vmatpush.msra.mxu0 0.0
  %3816 = vmatpush.msra.mxu0 0.0
  %3817 = vmatpush.msra.mxu0 0.0
  %3818 = vmatpush.msra.mxu0 0.0
  %3819 = vmatpush.msra.mxu0 0.0
  %3820 = vmatpush.msra.mxu0 %v3312
  %3821 = vmatpush.msra.mxu0 %v3222
  %3822 = vmatpush.msra.mxu0 %v3132
  %3823 = vmatpush.msra.mxu0 %v3042
  %3824 = vmatpush.msra.mxu0 %v2950
  %3825 = vmatmul.f32.gmra.mxu0 %v3781
  %v3826 = vpop.f32.mrf.mxu0
  %v3827 = vadd.f32 %v3407, %v3826
  %3828 = vmatmul.f32.gmra.mxu0 %v3784
  %v3829 = vpop.f32.mrf.mxu0
  %v3830 = vadd.f32 %v3410, %v3829
  %3831 = vdwg.mxu0
  %3832 = vmatpush.msra.mxu0 0.0
  %3833 = vmatpush.msra.mxu0 0.0
  %3834 = vmatpush.msra.mxu0 0.0
  %3835 = vmatpush.msra.mxu0 0.0
  %3836 = vmatpush.msra.mxu0 0.0
  %3837 = vmatpush.msra.mxu0 0.0
  %3838 = vmatpush.msra.mxu0 0.0
  %3839 = vmatpush.msra.mxu0 0.0
  %3840 = vmatpush.msra.mxu0 0.0
  %3841 = vmatpush.msra.mxu0 0.0
  %3842 = vmatpush.msra.mxu0 0.0
  %3843 = vmatpush.msra.mxu0 %v3313
  %3844 = vmatpush.msra.mxu0 %v3223
  %3845 = vmatpush.msra.mxu0 %v3133
  %3846 = vmatpush.msra.mxu0 %v3043
  %3847 = vmatpush.msra.mxu0 %v2951
  %3848 = vmatmul.f32.gmra.mxu0 %v3781
  %v3849 = vpop.f32.mrf.mxu0
  %v3850 = vadd.f32 %v3430, %v3849
  %3851 = vmatmul.f32.gmra.mxu0 %v3784
  %v3852 = vpop.f32.mrf.mxu0
  %v3853 = vadd.f32 %v3433, %v3852
  %3854 = vdwg.mxu0
  %3855 = vmatpush.msra.mxu0 0.0
  %3856 = vmatpush.msra.mxu0 0.0
  %3857 = vmatpush.msra.mxu0 0.0
  %3858 = vmatpush.msra.mxu0 0.0
  %3859 = vmatpush.msra.mxu0 0.0
  %3860 = vmatpush.msra.mxu0 0.0
  %3861 = vmatpush.msra.mxu0 0.0
  %3862 = vmatpush.msra.mxu0 0.0
  %3863 = vmatpush.msra.mxu0 0.0
  %3864 = vmatpush.msra.mxu0 0.0
  %3865 = vmatpush.msra.mxu0 0.0
  %3866 = vmatpush.msra.mxu0 %v3314
  %3867 = vmatpush.msra.mxu0 %v3224
  %3868 = vmatpush.msra.mxu0 %v3134
  %3869 = vmatpush.msra.mxu0 %v3044
  %3870 = vmatpush.msra.mxu0 %v2952
  %3871 = vmatmul.f32.gmra.mxu0 %v3781
  %v3872 = vpop.f32.mrf.mxu0
  %v3873 = vadd.f32 %v3453, %v3872
  %3874 = vmatmul.f32.gmra.mxu0 %v3784
  %v3875 = vpop.f32.mrf.mxu0
  %v3876 = vadd.f32 %v3456, %v3875
  %3877 = vdwg.mxu0
  %3878 = vmatpush.msra.mxu0 0.0
  %3879 = vmatpush.msra.mxu0 0.0
  %3880 = vmatpush.msra.mxu0 0.0
  %3881 = vmatpush.msra.mxu0 0.0
  %3882 = vmatpush.msra.mxu0 0.0
  %3883 = vmatpush.msra.mxu0 0.0
  %3884 = vmatpush.msra.mxu0 0.0
  %3885 = vmatpush.msra.mxu0 0.0
  %3886 = vmatpush.msra.mxu0 0.0
  %3887 = vmatpush.msra.mxu0 0.0
  %3888 = vmatpush.msra.mxu0 0.0
  %3889 = vmatpush.msra.mxu0 %v3315
  %3890 = vmatpush.msra.mxu0 %v3225
  %3891 = vmatpush.msra.mxu0 %v3135
  %3892 = vmatpush.msra.mxu0 %v3045
  %3893 = vmatpush.msra.mxu0 %v2953
  %3894 = vmatmul.f32.gmra.mxu0 %v3781
  %v3895 = vpop.f32.mrf.mxu0
  %v3896 = vadd.f32 %v3476, %v3895
  %3897 = vmatmul.f32.gmra.mxu0 %v3784
  %v3898 = vpop.f32.mrf.mxu0
  %v3899 = vadd.f32 %v3479, %v3898
  %3900 = vdwg.mxu0
  %3901 = vmatpush.msra.mxu0 0.0
  %3902 = vmatpush.msra.mxu0 0.0
  %3903 = vmatpush.msra.mxu0 0.0
  %3904 = vmatpush.msra.mxu0 0.0
  %3905 = vmatpush.msra.mxu0 0.0
  %3906 = vmatpush.msra.mxu0 0.0
  %3907 = vmatpush.msra.mxu0 0.0
  %3908 = vmatpush.msra.mxu0 0.0
  %3909 = vmatpush.msra.mxu0 0.0
  %3910 = vmatpush.msra.mxu0 0.0
  %3911 = vmatpush.msra.mxu0 0.0
  %3912 = vmatpush.msra.mxu0 %v3316
  %3913 = vmatpush.msra.mxu0 %v3226
  %3914 = vmatpush.msra.mxu0 %v3136
  %3915 = vmatpush.msra.mxu0 %v3046
  %3916 = vmatpush.msra.mxu0 %v2954
  %3917 = vmatmul.f32.gmra.mxu0 %v3781
  %v3918 = vpop.f32.mrf.mxu0
  %v3919 = vadd.f32 %v3499, %v3918
  %3920 = vmatmul.f32.gmra.mxu0 %v3784
  %v3921 = vpop.f32.mrf.mxu0
  %v3922 = vadd.f32 %v3502, %v3921
  %3923 = vdwg.mxu0
  %3924 = vmatpush.msra.mxu0 0.0
  %3925 = vmatpush.msra.mxu0 0.0
  %3926 = vmatpush.msra.mxu0 0.0
  %3927 = vmatpush.msra.mxu0 0.0
  %3928 = vmatpush.msra.mxu0 0.0
  %3929 = vmatpush.msra.mxu0 0.0
  %3930 = vmatpush.msra.mxu0 0.0
  %3931 = vmatpush.msra.mxu0 0.0
  %3932 = vmatpush.msra.mxu0 0.0
  %3933 = vmatpush.msra.mxu0 0.0
  %3934 = vmatpush.msra.mxu0 0.0
  %3935 = vmatpush.msra.mxu0 %v3317
  %3936 = vmatpush.msra.mxu0 %v3227
  %3937 = vmatpush.msra.mxu0 %v3137
  %3938 = vmatpush.msra.mxu0 %v3047
  %3939 = vmatpush.msra.mxu0 %v2955
  %3940 = vmatmul.f32.gmra.mxu0 %v3781
  %v3941 = vpop.f32.mrf.mxu0
  %v3942 = vadd.f32 %v3522, %v3941
  %3943 = vmatmul.f32.gmra.mxu0 %v3784
  %v3944 = vpop.f32.mrf.mxu0
  %v3945 = vadd.f32 %v3525, %v3944
  %3946 = vdwg.mxu0
  %3947 = vmatpush.msra.mxu0 0.0
  %3948 = vmatpush.msra.mxu0 0.0
  %3949 = vmatpush.msra.mxu0 0.0
  %3950 = vmatpush.msra.mxu0 0.0
  %3951 = vmatpush.msra.mxu0 0.0
  %3952 = vmatpush.msra.mxu0 0.0
  %3953 = vmatpush.msra.mxu0 0.0
  %3954 = vmatpush.msra.mxu0 0.0
  %3955 = vmatpush.msra.mxu0 0.0
  %3956 = vmatpush.msra.mxu0 0.0
  %3957 = vmatpush.msra.mxu0 0.0
  %3958 = vmatpush.msra.mxu0 %v3318
  %3959 = vmatpush.msra.mxu0 %v3228
  %3960 = vmatpush.msra.mxu0 %v3138
  %3961 = vmatpush.msra.mxu0 %v3048
  %3962 = vmatpush.msra.mxu0 %v2956
  %3963 = vmatmul.f32.gmra.mxu0 %v3781
  %v3964 = vpop.f32.mrf.mxu0
  %v3965 = vadd.f32 %v3545, %v3964
  %3966 = vmatmul.f32.gmra.mxu0 %v3784
  %v3967 = vpop.f32.mrf.mxu0
  %v3968 = vadd.f32 %v3548, %v3967
  %3969 = vdwg.mxu0
  %3970 = vmatpush.msra.mxu0 0.0
  %3971 = vmatpush.msra.mxu0 0.0
  %3972 = vmatpush.msra.mxu0 0.0
  %3973 = vmatpush.msra.mxu0 0.0
  %3974 = vmatpush.msra.mxu0 0.0
  %3975 = vmatpush.msra.mxu0 0.0
  %3976 = vmatpush.msra.mxu0 0.0
  %3977 = vmatpush.msra.mxu0 0.0
  %3978 = vmatpush.msra.mxu0 0.0
  %3979 = vmatpush.msra.mxu0 0.0
  %3980 = vmatpush.msra.mxu0 0.0
  %3981 = vmatpush.msra.mxu0 %v3319
  %3982 = vmatpush.msra.mxu0 %v3229
  %3983 = vmatpush.msra.mxu0 %v3139
  %3984 = vmatpush.msra.mxu0 %v3049
  %3985 = vmatpush.msra.mxu0 %v2957
  %3986 = vmatmul.f32.gmra.mxu0 %v3781
  %v3987 = vpop.f32.mrf.mxu0
  %v3988 = vadd.f32 %v3568, %v3987
  %3989 = vmatmul.f32.gmra.mxu0 %v3784
  %v3990 = vpop.f32.mrf.mxu0
  %v3991 = vadd.f32 %v3571, %v3990
  %3992 = vdwg.mxu0
  %3993 = vmatpush.msra.mxu0 0.0
  %3994 = vmatpush.msra.mxu0 0.0
  %3995 = vmatpush.msra.mxu0 0.0
  %3996 = vmatpush.msra.mxu0 0.0
  %3997 = vmatpush.msra.mxu0 0.0
  %3998 = vmatpush.msra.mxu0 0.0
  %3999 = vmatpush.msra.mxu0 0.0
  %4000 = vmatpush.msra.mxu0 0.0
  %4001 = vmatpush.msra.mxu0 0.0
  %4002 = vmatpush.msra.mxu0 0.0
  %4003 = vmatpush.msra.mxu0 0.0
  %4004 = vmatpush.msra.mxu0 %v3320
  %4005 = vmatpush.msra.mxu0 %v3230
  %4006 = vmatpush.msra.mxu0 %v3140
  %4007 = vmatpush.msra.mxu0 %v3050
  %4008 = vmatpush.msra.mxu0 %v2958
  %4009 = vmatmul.f32.gmra.mxu0 %v3781
  %v4010 = vpop.f32.mrf.mxu0
  %v4011 = vadd.f32 %v3591, %v4010
  %4012 = vmatmul.f32.gmra.mxu0 %v3784
  %v4013 = vpop.f32.mrf.mxu0
  %v4014 = vadd.f32 %v3594, %v4013
  %4015 = vdwg.mxu0
  %4016 = vmatpush.msra.mxu0 0.0
  %4017 = vmatpush.msra.mxu0 0.0
  %4018 = vmatpush.msra.mxu0 0.0
  %4019 = vmatpush.msra.mxu0 0.0
  %4020 = vmatpush.msra.mxu0 0.0
  %4021 = vmatpush.msra.mxu0 0.0
  %4022 = vmatpush.msra.mxu0 0.0
  %4023 = vmatpush.msra.mxu0 0.0
  %4024 = vmatpush.msra.mxu0 0.0
  %4025 = vmatpush.msra.mxu0 0.0
  %4026 = vmatpush.msra.mxu0 0.0
  %4027 = vmatpush.msra.mxu0 %v3321
  %4028 = vmatpush.msra.mxu0 %v3231
  %4029 = vmatpush.msra.mxu0 %v3141
  %4030 = vmatpush.msra.mxu0 %v3051
  %4031 = vmatpush.msra.mxu0 %v2959
  %4032 = vmatmul.f32.gmra.mxu0 %v3781
  %v4033 = vpop.f32.mrf.mxu0
  %v4034 = vadd.f32 %v3614, %v4033
  %4035 = vmatmul.f32.gmra.mxu0 %v3784
  %v4036 = vpop.f32.mrf.mxu0
  %v4037 = vadd.f32 %v3617, %v4036
  %4038 = vdwg.mxu0
  %4039 = vmatpush.msra.mxu0 0.0
  %4040 = vmatpush.msra.mxu0 0.0
  %4041 = vmatpush.msra.mxu0 0.0
  %4042 = vmatpush.msra.mxu0 0.0
  %4043 = vmatpush.msra.mxu0 0.0
  %4044 = vmatpush.msra.mxu0 0.0
  %4045 = vmatpush.msra.mxu0 0.0
  %4046 = vmatpush.msra.mxu0 0.0
  %4047 = vmatpush.msra.mxu0 0.0
  %4048 = vmatpush.msra.mxu0 0.0
  %4049 = vmatpush.msra.mxu0 0.0
  %4050 = vmatpush.msra.mxu0 %v3322
  %4051 = vmatpush.msra.mxu0 %v3232
  %4052 = vmatpush.msra.mxu0 %v3142
  %4053 = vmatpush.msra.mxu0 %v3052
  %4054 = vmatpush.msra.mxu0 %v2960
  %4055 = vmatmul.f32.gmra.mxu0 %v3781
  %v4056 = vpop.f32.mrf.mxu0
  %v4057 = vadd.f32 %v3637, %v4056
  %4058 = vmatmul.f32.gmra.mxu0 %v3784
  %v4059 = vpop.f32.mrf.mxu0
  %v4060 = vadd.f32 %v3640, %v4059
  %4061 = vdwg.mxu0
  %4062 = vmatpush.msra.mxu0 0.0
  %4063 = vmatpush.msra.mxu0 0.0
  %4064 = vmatpush.msra.mxu0 0.0
  %4065 = vmatpush.msra.mxu0 0.0
  %4066 = vmatpush.msra.mxu0 0.0
  %4067 = vmatpush.msra.mxu0 0.0
  %4068 = vmatpush.msra.mxu0 0.0
  %4069 = vmatpush.msra.mxu0 0.0
  %4070 = vmatpush.msra.mxu0 0.0
  %4071 = vmatpush.msra.mxu0 0.0
  %4072 = vmatpush.msra.mxu0 0.0
  %4073 = vmatpush.msra.mxu0 %v3323
  %4074 = vmatpush.msra.mxu0 %v3233
  %4075 = vmatpush.msra.mxu0 %v3143
  %4076 = vmatpush.msra.mxu0 %v3053
  %4077 = vmatpush.msra.mxu0 %v2961
  %4078 = vmatmul.f32.gmra.mxu0 %v3781
  %v4079 = vpop.f32.mrf.mxu0
  %v4080 = vadd.f32 %v3660, %v4079
  %4081 = vmatmul.f32.gmra.mxu0 %v3784
  %v4082 = vpop.f32.mrf.mxu0
  %v4083 = vadd.f32 %v3663, %v4082
  %4084 = vdwg.mxu0
  %4085 = vmatpush.msra.mxu0 0.0
  %4086 = vmatpush.msra.mxu0 0.0
  %4087 = vmatpush.msra.mxu0 0.0
  %4088 = vmatpush.msra.mxu0 0.0
  %4089 = vmatpush.msra.mxu0 0.0
  %4090 = vmatpush.msra.mxu0 0.0
  %4091 = vmatpush.msra.mxu0 0.0
  %4092 = vmatpush.msra.mxu0 0.0
  %4093 = vmatpush.msra.mxu0 0.0
  %4094 = vmatpush.msra.mxu0 0.0
  %4095 = vmatpush.msra.mxu0 0.0
  %4096 = vmatpush.msra.mxu0 %v3324
  %4097 = vmatpush.msra.mxu0 %v3234
  %4098 = vmatpush.msra.mxu0 %v3144
  %4099 = vmatpush.msra.mxu0 %v3054
  %4100 = vmatpush.msra.mxu0 %v2962
  %4101 = vmatmul.f32.gmra.mxu0 %v3781
  %v4102 = vpop.f32.mrf.mxu0
  %v4103 = vadd.f32 %v3683, %v4102
  %4104 = vmatmul.f32.gmra.mxu0 %v3784
  %v4105 = vpop.f32.mrf.mxu0
  %v4106 = vadd.f32 %v3686, %v4105
  %4107 = vdwg.mxu0
  %4108 = vmatpush.msra.mxu0 0.0
  %4109 = vmatpush.msra.mxu0 0.0
  %4110 = vmatpush.msra.mxu0 0.0
  %4111 = vmatpush.msra.mxu0 0.0
  %4112 = vmatpush.msra.mxu0 0.0
  %4113 = vmatpush.msra.mxu0 0.0
  %4114 = vmatpush.msra.mxu0 0.0
  %4115 = vmatpush.msra.mxu0 0.0
  %4116 = vmatpush.msra.mxu0 0.0
  %4117 = vmatpush.msra.mxu0 0.0
  %4118 = vmatpush.msra.mxu0 0.0
  %4119 = vmatpush.msra.mxu0 %v3325
  %4120 = vmatpush.msra.mxu0 %v3235
  %4121 = vmatpush.msra.mxu0 %v3145
  %4122 = vmatpush.msra.mxu0 %v3055
  %4123 = vmatpush.msra.mxu0 %v2963
  %4124 = vmatmul.f32.gmra.mxu0 %v3781
  %v4125 = vpop.f32.mrf.mxu0
  %v4126 = vadd.f32 %v3706, %v4125
  %4127 = vmatmul.f32.gmra.mxu0 %v3784
  %v4128 = vpop.f32.mrf.mxu0
  %v4129 = vadd.f32 %v3709, %v4128
  %4130 = vdwg.mxu0
  %4131 = vmatpush.msra.mxu0 0.0
  %4132 = vmatpush.msra.mxu0 0.0
  %4133 = vmatpush.msra.mxu0 0.0
  %4134 = vmatpush.msra.mxu0 0.0
  %4135 = vmatpush.msra.mxu0 0.0
  %4136 = vmatpush.msra.mxu0 0.0
  %4137 = vmatpush.msra.mxu0 0.0
  %4138 = vmatpush.msra.mxu0 0.0
  %4139 = vmatpush.msra.mxu0 0.0
  %4140 = vmatpush.msra.mxu0 0.0
  %4141 = vmatpush.msra.mxu0 0.0
  %4142 = vmatpush.msra.mxu0 %v3326
  %4143 = vmatpush.msra.mxu0 %v3236
  %4144 = vmatpush.msra.mxu0 %v3146
  %4145 = vmatpush.msra.mxu0 %v3056
  %4146 = vmatpush.msra.mxu0 %v2964
  %4147 = vmatmul.f32.gmra.mxu0 %v3781
  %v4148 = vpop.f32.mrf.mxu0
  %v4149 = vadd.f32 %v3729, %v4148
  %4150 = vmatmul.f32.gmra.mxu0 %v3784
  %v4151 = vpop.f32.mrf.mxu0
  %v4152 = vadd.f32 %v3732, %v4151
  %4153 = vdwg.mxu0
  %4154 = vmatpush.msra.mxu0 0.0
  %4155 = vmatpush.msra.mxu0 0.0
  %4156 = vmatpush.msra.mxu0 0.0
  %4157 = vmatpush.msra.mxu0 0.0
  %4158 = vmatpush.msra.mxu0 0.0
  %4159 = vmatpush.msra.mxu0 0.0
  %4160 = vmatpush.msra.mxu0 0.0
  %4161 = vmatpush.msra.mxu0 0.0
  %4162 = vmatpush.msra.mxu0 0.0
  %4163 = vmatpush.msra.mxu0 0.0
  %4164 = vmatpush.msra.mxu0 0.0
  %4165 = vmatpush.msra.mxu0 %v3327
  %4166 = vmatpush.msra.mxu0 %v3237
  %4167 = vmatpush.msra.mxu0 %v3147
  %4168 = vmatpush.msra.mxu0 %v3057
  %4169 = vmatpush.msra.mxu0 %v2965
  %4170 = vmatmul.f32.gmra.mxu0 %v3781
  %v4171 = vpop.f32.mrf.mxu0
  %v4172 = vadd.f32 %v3752, %v4171
  %4173 = vmatmul.f32.gmra.mxu0 %v3784
  %v4174 = vpop.f32.mrf.mxu0
  %v4175 = vadd.f32 %v3755, %v4174
  %4176 = vdwg.mxu0
  %4177 = vmatpush.msra.mxu0 0.0
  %4178 = vmatpush.msra.mxu0 0.0
  %4179 = vmatpush.msra.mxu0 0.0
  %4180 = vmatpush.msra.mxu0 0.0
  %4181 = vmatpush.msra.mxu0 0.0
  %4182 = vmatpush.msra.mxu0 0.0
  %4183 = vmatpush.msra.mxu0 0.0
  %4184 = vmatpush.msra.mxu0 0.0
  %4185 = vmatpush.msra.mxu0 0.0
  %4186 = vmatpush.msra.mxu0 0.0
  %4187 = vmatpush.msra.mxu0 0.0
  %4188 = vmatpush.msra.mxu0 %v3328
  %4189 = vmatpush.msra.mxu0 %v3238
  %4190 = vmatpush.msra.mxu0 %v3148
  %4191 = vmatpush.msra.mxu0 %v3058
  %4192 = vmatpush.msra.mxu0 %v2966
  %4193 = vmatmul.f32.gmra.mxu0 %v3781
  %v4194 = vpop.f32.mrf.mxu0
  %v4195 = vadd.f32 %v3775, %v4194
  %4196 = vmatmul.f32.gmra.mxu0 %v3784
  %v4197 = vpop.f32.mrf.mxu0
  %v4198 = vadd.f32 %v3778, %v4197
  %4199 = vdwg.mxu0
  %s4200 = scalar_lea.vmem %s2, 32
  %v4201 = vld [vmem:[%s4200] sm:$0xff]
  %v4202 = vld [vmem:[%s4200 + $0x8] sm:$0xff]
  %v4204 = vsel %vm530, %v4201, 0
  %v4207 = vsel %vm530, %v4202, 0
  %4209 = vmatpush.msra.mxu0 0.0
  %4210 = vmatpush.msra.mxu0 0.0
  %4211 = vmatpush.msra.mxu0 0.0
  %4212 = vmatpush.msra.mxu0 0.0
  %4213 = vmatpush.msra.mxu0 0.0
  %4214 = vmatpush.msra.mxu0 0.0
  %4215 = vmatpush.msra.mxu0 0.0
  %4216 = vmatpush.msra.mxu0 0.0
  %4217 = vmatpush.msra.mxu0 0.0
  %4218 = vmatpush.msra.mxu0 0.0
  %4219 = vmatpush.msra.mxu0 0.0
  %4220 = vmatpush.msra.mxu0 %v3313
  %4221 = vmatpush.msra.mxu0 %v3223
  %4222 = vmatpush.msra.mxu0 %v3133
  %4223 = vmatpush.msra.mxu0 %v3043
  %4224 = vmatpush.msra.mxu0 %v2951
  %4225 = vmatmul.f32.gmra.mxu0 %v4204
  %v4226 = vpop.f32.mrf.mxu0
  %v4227 = vadd.f32 0.0, %v4226
  %4228 = vmatmul.f32.gmra.mxu0 %v4207
  %v4229 = vpop.f32.mrf.mxu0
  %v4230 = vadd.f32 0.0, %v4229
  %4231 = vdwg.mxu0
  %4232 = vmatpush.msra.mxu0 0.0
  %4233 = vmatpush.msra.mxu0 0.0
  %4234 = vmatpush.msra.mxu0 0.0
  %4235 = vmatpush.msra.mxu0 0.0
  %4236 = vmatpush.msra.mxu0 0.0
  %4237 = vmatpush.msra.mxu0 0.0
  %4238 = vmatpush.msra.mxu0 0.0
  %4239 = vmatpush.msra.mxu0 0.0
  %4240 = vmatpush.msra.mxu0 0.0
  %4241 = vmatpush.msra.mxu0 0.0
  %4242 = vmatpush.msra.mxu0 0.0
  %4243 = vmatpush.msra.mxu0 %v3314
  %4244 = vmatpush.msra.mxu0 %v3224
  %4245 = vmatpush.msra.mxu0 %v3134
  %4246 = vmatpush.msra.mxu0 %v3044
  %4247 = vmatpush.msra.mxu0 %v2952
  %4248 = vmatmul.f32.gmra.mxu0 %v4204
  %v4249 = vpop.f32.mrf.mxu0
  %v4250 = vadd.f32 0.0, %v4249
  %4251 = vmatmul.f32.gmra.mxu0 %v4207
  %v4252 = vpop.f32.mrf.mxu0
  %v4253 = vadd.f32 0.0, %v4252
  %4254 = vdwg.mxu0
  %4255 = vmatpush.msra.mxu0 0.0
  %4256 = vmatpush.msra.mxu0 0.0
  %4257 = vmatpush.msra.mxu0 0.0
  %4258 = vmatpush.msra.mxu0 0.0
  %4259 = vmatpush.msra.mxu0 0.0
  %4260 = vmatpush.msra.mxu0 0.0
  %4261 = vmatpush.msra.mxu0 0.0
  %4262 = vmatpush.msra.mxu0 0.0
  %4263 = vmatpush.msra.mxu0 0.0
  %4264 = vmatpush.msra.mxu0 0.0
  %4265 = vmatpush.msra.mxu0 0.0
  %4266 = vmatpush.msra.mxu0 %v3315
  %4267 = vmatpush.msra.mxu0 %v3225
  %4268 = vmatpush.msra.mxu0 %v3135
  %4269 = vmatpush.msra.mxu0 %v3045
  %4270 = vmatpush.msra.mxu0 %v2953
  %4271 = vmatmul.f32.gmra.mxu0 %v4204
  %v4272 = vpop.f32.mrf.mxu0
  %v4273 = vadd.f32 0.0, %v4272
  %4274 = vmatmul.f32.gmra.mxu0 %v4207
  %v4275 = vpop.f32.mrf.mxu0
  %v4276 = vadd.f32 0.0, %v4275
  %4277 = vdwg.mxu0
  %4278 = vmatpush.msra.mxu0 0.0
  %4279 = vmatpush.msra.mxu0 0.0
  %4280 = vmatpush.msra.mxu0 0.0
  %4281 = vmatpush.msra.mxu0 0.0
  %4282 = vmatpush.msra.mxu0 0.0
  %4283 = vmatpush.msra.mxu0 0.0
  %4284 = vmatpush.msra.mxu0 0.0
  %4285 = vmatpush.msra.mxu0 0.0
  %4286 = vmatpush.msra.mxu0 0.0
  %4287 = vmatpush.msra.mxu0 0.0
  %4288 = vmatpush.msra.mxu0 0.0
  %4289 = vmatpush.msra.mxu0 %v3316
  %4290 = vmatpush.msra.mxu0 %v3226
  %4291 = vmatpush.msra.mxu0 %v3136
  %4292 = vmatpush.msra.mxu0 %v3046
  %4293 = vmatpush.msra.mxu0 %v2954
  %4294 = vmatmul.f32.gmra.mxu0 %v4204
  %v4295 = vpop.f32.mrf.mxu0
  %v4296 = vadd.f32 0.0, %v4295
  %4297 = vmatmul.f32.gmra.mxu0 %v4207
  %v4298 = vpop.f32.mrf.mxu0
  %v4299 = vadd.f32 0.0, %v4298
  %4300 = vdwg.mxu0
  %4301 = vmatpush.msra.mxu0 0.0
  %4302 = vmatpush.msra.mxu0 0.0
  %4303 = vmatpush.msra.mxu0 0.0
  %4304 = vmatpush.msra.mxu0 0.0
  %4305 = vmatpush.msra.mxu0 0.0
  %4306 = vmatpush.msra.mxu0 0.0
  %4307 = vmatpush.msra.mxu0 0.0
  %4308 = vmatpush.msra.mxu0 0.0
  %4309 = vmatpush.msra.mxu0 0.0
  %4310 = vmatpush.msra.mxu0 0.0
  %4311 = vmatpush.msra.mxu0 0.0
  %4312 = vmatpush.msra.mxu0 %v3317
  %4313 = vmatpush.msra.mxu0 %v3227
  %4314 = vmatpush.msra.mxu0 %v3137
  %4315 = vmatpush.msra.mxu0 %v3047
  %4316 = vmatpush.msra.mxu0 %v2955
  %4317 = vmatmul.f32.gmra.mxu0 %v4204
  %v4318 = vpop.f32.mrf.mxu0
  %v4319 = vadd.f32 0.0, %v4318
  %4320 = vmatmul.f32.gmra.mxu0 %v4207
  %v4321 = vpop.f32.mrf.mxu0
  %v4322 = vadd.f32 0.0, %v4321
  %4323 = vdwg.mxu0
  %4324 = vmatpush.msra.mxu0 0.0
  %4325 = vmatpush.msra.mxu0 0.0
  %4326 = vmatpush.msra.mxu0 0.0
  %4327 = vmatpush.msra.mxu0 0.0
  %4328 = vmatpush.msra.mxu0 0.0
  %4329 = vmatpush.msra.mxu0 0.0
  %4330 = vmatpush.msra.mxu0 0.0
  %4331 = vmatpush.msra.mxu0 0.0
  %4332 = vmatpush.msra.mxu0 0.0
  %4333 = vmatpush.msra.mxu0 0.0
  %4334 = vmatpush.msra.mxu0 0.0
  %4335 = vmatpush.msra.mxu0 %v3318
  %4336 = vmatpush.msra.mxu0 %v3228
  %4337 = vmatpush.msra.mxu0 %v3138
  %4338 = vmatpush.msra.mxu0 %v3048
  %4339 = vmatpush.msra.mxu0 %v2956
  %4340 = vmatmul.f32.gmra.mxu0 %v4204
  %v4341 = vpop.f32.mrf.mxu0
  %v4342 = vadd.f32 0.0, %v4341
  %4343 = vmatmul.f32.gmra.mxu0 %v4207
  %v4344 = vpop.f32.mrf.mxu0
  %v4345 = vadd.f32 0.0, %v4344
  %4346 = vdwg.mxu0
  %4347 = vmatpush.msra.mxu0 0.0
  %4348 = vmatpush.msra.mxu0 0.0
  %4349 = vmatpush.msra.mxu0 0.0
  %4350 = vmatpush.msra.mxu0 0.0
  %4351 = vmatpush.msra.mxu0 0.0
  %4352 = vmatpush.msra.mxu0 0.0
  %4353 = vmatpush.msra.mxu0 0.0
  %4354 = vmatpush.msra.mxu0 0.0
  %4355 = vmatpush.msra.mxu0 0.0
  %4356 = vmatpush.msra.mxu0 0.0
  %4357 = vmatpush.msra.mxu0 0.0
  %4358 = vmatpush.msra.mxu0 %v3319
  %4359 = vmatpush.msra.mxu0 %v3229
  %4360 = vmatpush.msra.mxu0 %v3139
  %4361 = vmatpush.msra.mxu0 %v3049
  %4362 = vmatpush.msra.mxu0 %v2957
  %4363 = vmatmul.f32.gmra.mxu0 %v4204
  %v4364 = vpop.f32.mrf.mxu0
  %v4365 = vadd.f32 0.0, %v4364
  %4366 = vmatmul.f32.gmra.mxu0 %v4207
  %v4367 = vpop.f32.mrf.mxu0
  %v4368 = vadd.f32 0.0, %v4367
  %4369 = vdwg.mxu0
  %4370 = vmatpush.msra.mxu0 0.0
  %4371 = vmatpush.msra.mxu0 0.0
  %4372 = vmatpush.msra.mxu0 0.0
  %4373 = vmatpush.msra.mxu0 0.0
  %4374 = vmatpush.msra.mxu0 0.0
  %4375 = vmatpush.msra.mxu0 0.0
  %4376 = vmatpush.msra.mxu0 0.0
  %4377 = vmatpush.msra.mxu0 0.0
  %4378 = vmatpush.msra.mxu0 0.0
  %4379 = vmatpush.msra.mxu0 0.0
  %4380 = vmatpush.msra.mxu0 0.0
  %4381 = vmatpush.msra.mxu0 %v3320
  %4382 = vmatpush.msra.mxu0 %v3230
  %4383 = vmatpush.msra.mxu0 %v3140
  %4384 = vmatpush.msra.mxu0 %v3050
  %4385 = vmatpush.msra.mxu0 %v2958
  %4386 = vmatmul.f32.gmra.mxu0 %v4204
  %v4387 = vpop.f32.mrf.mxu0
  %v4388 = vadd.f32 0.0, %v4387
  %4389 = vmatmul.f32.gmra.mxu0 %v4207
  %v4390 = vpop.f32.mrf.mxu0
  %v4391 = vadd.f32 0.0, %v4390
  %4392 = vdwg.mxu0
  %4393 = vmatpush.msra.mxu0 0.0
  %4394 = vmatpush.msra.mxu0 0.0
  %4395 = vmatpush.msra.mxu0 0.0
  %4396 = vmatpush.msra.mxu0 0.0
  %4397 = vmatpush.msra.mxu0 0.0
  %4398 = vmatpush.msra.mxu0 0.0
  %4399 = vmatpush.msra.mxu0 0.0
  %4400 = vmatpush.msra.mxu0 0.0
  %4401 = vmatpush.msra.mxu0 0.0
  %4402 = vmatpush.msra.mxu0 0.0
  %4403 = vmatpush.msra.mxu0 0.0
  %4404 = vmatpush.msra.mxu0 %v3321
  %4405 = vmatpush.msra.mxu0 %v3231
  %4406 = vmatpush.msra.mxu0 %v3141
  %4407 = vmatpush.msra.mxu0 %v3051
  %4408 = vmatpush.msra.mxu0 %v2959
  %4409 = vmatmul.f32.gmra.mxu0 %v4204
  %v4410 = vpop.f32.mrf.mxu0
  %v4411 = vadd.f32 0.0, %v4410
  %4412 = vmatmul.f32.gmra.mxu0 %v4207
  %v4413 = vpop.f32.mrf.mxu0
  %v4414 = vadd.f32 0.0, %v4413
  %4415 = vdwg.mxu0
  %4416 = vmatpush.msra.mxu0 0.0
  %4417 = vmatpush.msra.mxu0 0.0
  %4418 = vmatpush.msra.mxu0 0.0
  %4419 = vmatpush.msra.mxu0 0.0
  %4420 = vmatpush.msra.mxu0 0.0
  %4421 = vmatpush.msra.mxu0 0.0
  %4422 = vmatpush.msra.mxu0 0.0
  %4423 = vmatpush.msra.mxu0 0.0
  %4424 = vmatpush.msra.mxu0 0.0
  %4425 = vmatpush.msra.mxu0 0.0
  %4426 = vmatpush.msra.mxu0 0.0
  %4427 = vmatpush.msra.mxu0 %v3322
  %4428 = vmatpush.msra.mxu0 %v3232
  %4429 = vmatpush.msra.mxu0 %v3142
  %4430 = vmatpush.msra.mxu0 %v3052
  %4431 = vmatpush.msra.mxu0 %v2960
  %4432 = vmatmul.f32.gmra.mxu0 %v4204
  %v4433 = vpop.f32.mrf.mxu0
  %v4434 = vadd.f32 0.0, %v4433
  %4435 = vmatmul.f32.gmra.mxu0 %v4207
  %v4436 = vpop.f32.mrf.mxu0
  %v4437 = vadd.f32 0.0, %v4436
  %4438 = vdwg.mxu0
  %4439 = vmatpush.msra.mxu0 0.0
  %4440 = vmatpush.msra.mxu0 0.0
  %4441 = vmatpush.msra.mxu0 0.0
  %4442 = vmatpush.msra.mxu0 0.0
  %4443 = vmatpush.msra.mxu0 0.0
  %4444 = vmatpush.msra.mxu0 0.0
  %4445 = vmatpush.msra.mxu0 0.0
  %4446 = vmatpush.msra.mxu0 0.0
  %4447 = vmatpush.msra.mxu0 0.0
  %4448 = vmatpush.msra.mxu0 0.0
  %4449 = vmatpush.msra.mxu0 0.0
  %4450 = vmatpush.msra.mxu0 %v3323
  %4451 = vmatpush.msra.mxu0 %v3233
  %4452 = vmatpush.msra.mxu0 %v3143
  %4453 = vmatpush.msra.mxu0 %v3053
  %4454 = vmatpush.msra.mxu0 %v2961
  %4455 = vmatmul.f32.gmra.mxu0 %v4204
  %v4456 = vpop.f32.mrf.mxu0
  %v4457 = vadd.f32 0.0, %v4456
  %4458 = vmatmul.f32.gmra.mxu0 %v4207
  %v4459 = vpop.f32.mrf.mxu0
  %v4460 = vadd.f32 0.0, %v4459
  %4461 = vdwg.mxu0
  %4462 = vmatpush.msra.mxu0 0.0
  %4463 = vmatpush.msra.mxu0 0.0
  %4464 = vmatpush.msra.mxu0 0.0
  %4465 = vmatpush.msra.mxu0 0.0
  %4466 = vmatpush.msra.mxu0 0.0
  %4467 = vmatpush.msra.mxu0 0.0
  %4468 = vmatpush.msra.mxu0 0.0
  %4469 = vmatpush.msra.mxu0 0.0
  %4470 = vmatpush.msra.mxu0 0.0
  %4471 = vmatpush.msra.mxu0 0.0
  %4472 = vmatpush.msra.mxu0 0.0
  %4473 = vmatpush.msra.mxu0 %v3324
  %4474 = vmatpush.msra.mxu0 %v3234
  %4475 = vmatpush.msra.mxu0 %v3144
  %4476 = vmatpush.msra.mxu0 %v3054
  %4477 = vmatpush.msra.mxu0 %v2962
  %4478 = vmatmul.f32.gmra.mxu0 %v4204
  %v4479 = vpop.f32.mrf.mxu0
  %v4480 = vadd.f32 0.0, %v4479
  %4481 = vmatmul.f32.gmra.mxu0 %v4207
  %v4482 = vpop.f32.mrf.mxu0
  %v4483 = vadd.f32 0.0, %v4482
  %4484 = vdwg.mxu0
  %4485 = vmatpush.msra.mxu0 0.0
  %4486 = vmatpush.msra.mxu0 0.0
  %4487 = vmatpush.msra.mxu0 0.0
  %4488 = vmatpush.msra.mxu0 0.0
  %4489 = vmatpush.msra.mxu0 0.0
  %4490 = vmatpush.msra.mxu0 0.0
  %4491 = vmatpush.msra.mxu0 0.0
  %4492 = vmatpush.msra.mxu0 0.0
  %4493 = vmatpush.msra.mxu0 0.0
  %4494 = vmatpush.msra.mxu0 0.0
  %4495 = vmatpush.msra.mxu0 0.0
  %4496 = vmatpush.msra.mxu0 %v3325
  %4497 = vmatpush.msra.mxu0 %v3235
  %4498 = vmatpush.msra.mxu0 %v3145
  %4499 = vmatpush.msra.mxu0 %v3055
  %4500 = vmatpush.msra.mxu0 %v2963
  %4501 = vmatmul.f32.gmra.mxu0 %v4204
  %v4502 = vpop.f32.mrf.mxu0
  %v4503 = vadd.f32 0.0, %v4502
  %4504 = vmatmul.f32.gmra.mxu0 %v4207
  %v4505 = vpop.f32.mrf.mxu0
  %v4506 = vadd.f32 0.0, %v4505
  %4507 = vdwg.mxu0
  %4508 = vmatpush.msra.mxu0 0.0
  %4509 = vmatpush.msra.mxu0 0.0
  %4510 = vmatpush.msra.mxu0 0.0
  %4511 = vmatpush.msra.mxu0 0.0
  %4512 = vmatpush.msra.mxu0 0.0
  %4513 = vmatpush.msra.mxu0 0.0
  %4514 = vmatpush.msra.mxu0 0.0
  %4515 = vmatpush.msra.mxu0 0.0
  %4516 = vmatpush.msra.mxu0 0.0
  %4517 = vmatpush.msra.mxu0 0.0
  %4518 = vmatpush.msra.mxu0 0.0
  %4519 = vmatpush.msra.mxu0 %v3326
  %4520 = vmatpush.msra.mxu0 %v3236
  %4521 = vmatpush.msra.mxu0 %v3146
  %4522 = vmatpush.msra.mxu0 %v3056
  %4523 = vmatpush.msra.mxu0 %v2964
  %4524 = vmatmul.f32.gmra.mxu0 %v4204
  %v4525 = vpop.f32.mrf.mxu0
  %v4526 = vadd.f32 0.0, %v4525
  %4527 = vmatmul.f32.gmra.mxu0 %v4207
  %v4528 = vpop.f32.mrf.mxu0
  %v4529 = vadd.f32 0.0, %v4528
  %4530 = vdwg.mxu0
  %4531 = vmatpush.msra.mxu0 0.0
  %4532 = vmatpush.msra.mxu0 0.0
  %4533 = vmatpush.msra.mxu0 0.0
  %4534 = vmatpush.msra.mxu0 0.0
  %4535 = vmatpush.msra.mxu0 0.0
  %4536 = vmatpush.msra.mxu0 0.0
  %4537 = vmatpush.msra.mxu0 0.0
  %4538 = vmatpush.msra.mxu0 0.0
  %4539 = vmatpush.msra.mxu0 0.0
  %4540 = vmatpush.msra.mxu0 0.0
  %4541 = vmatpush.msra.mxu0 0.0
  %4542 = vmatpush.msra.mxu0 %v3327
  %4543 = vmatpush.msra.mxu0 %v3237
  %4544 = vmatpush.msra.mxu0 %v3147
  %4545 = vmatpush.msra.mxu0 %v3057
  %4546 = vmatpush.msra.mxu0 %v2965
  %4547 = vmatmul.f32.gmra.mxu0 %v4204
  %v4548 = vpop.f32.mrf.mxu0
  %v4549 = vadd.f32 0.0, %v4548
  %4550 = vmatmul.f32.gmra.mxu0 %v4207
  %v4551 = vpop.f32.mrf.mxu0
  %v4552 = vadd.f32 0.0, %v4551
  %4553 = vdwg.mxu0
  %4554 = vmatpush.msra.mxu0 0.0
  %4555 = vmatpush.msra.mxu0 0.0
  %4556 = vmatpush.msra.mxu0 0.0
  %4557 = vmatpush.msra.mxu0 0.0
  %4558 = vmatpush.msra.mxu0 0.0
  %4559 = vmatpush.msra.mxu0 0.0
  %4560 = vmatpush.msra.mxu0 0.0
  %4561 = vmatpush.msra.mxu0 0.0
  %4562 = vmatpush.msra.mxu0 0.0
  %4563 = vmatpush.msra.mxu0 0.0
  %4564 = vmatpush.msra.mxu0 0.0
  %4565 = vmatpush.msra.mxu0 %v3328
  %4566 = vmatpush.msra.mxu0 %v3238
  %4567 = vmatpush.msra.mxu0 %v3148
  %4568 = vmatpush.msra.mxu0 %v3058
  %4569 = vmatpush.msra.mxu0 %v2966
  %4570 = vmatmul.f32.gmra.mxu0 %v4204
  %v4571 = vpop.f32.mrf.mxu0
  %v4572 = vadd.f32 0.0, %v4571
  %4573 = vmatmul.f32.gmra.mxu0 %v4207
  %v4574 = vpop.f32.mrf.mxu0
  %v4575 = vadd.f32 0.0, %v4574
  %4576 = vdwg.mxu0
  %4577 = vmatpush.msra.mxu0 0.0
  %4578 = vmatpush.msra.mxu0 0.0
  %4579 = vmatpush.msra.mxu0 0.0
  %4580 = vmatpush.msra.mxu0 0.0
  %4581 = vmatpush.msra.mxu0 0.0
  %4582 = vmatpush.msra.mxu0 0.0
  %4583 = vmatpush.msra.mxu0 0.0
  %4584 = vmatpush.msra.mxu0 0.0
  %4585 = vmatpush.msra.mxu0 0.0
  %4586 = vmatpush.msra.mxu0 0.0
  %4587 = vmatpush.msra.mxu0 0.0
  %4588 = vmatpush.msra.mxu0 %v3329
  %4589 = vmatpush.msra.mxu0 %v3239
  %4590 = vmatpush.msra.mxu0 %v3149
  %4591 = vmatpush.msra.mxu0 %v3059
  %4592 = vmatpush.msra.mxu0 %v2967
  %4593 = vmatmul.f32.gmra.mxu0 %v4204
  %v4594 = vpop.f32.mrf.mxu0
  %v4595 = vadd.f32 0.0, %v4594
  %4596 = vmatmul.f32.gmra.mxu0 %v4207
  %v4597 = vpop.f32.mrf.mxu0
  %v4598 = vadd.f32 0.0, %v4597
  %4599 = vdwg.mxu0
  %4600 = vmatpush.msra.mxu0 0.0
  %4601 = vmatpush.msra.mxu0 0.0
  %4602 = vmatpush.msra.mxu0 0.0
  %4603 = vmatpush.msra.mxu0 0.0
  %4604 = vmatpush.msra.mxu0 0.0
  %4605 = vmatpush.msra.mxu0 0.0
  %4606 = vmatpush.msra.mxu0 0.0
  %4607 = vmatpush.msra.mxu0 0.0
  %4608 = vmatpush.msra.mxu0 0.0
  %4609 = vmatpush.msra.mxu0 0.0
  %4610 = vmatpush.msra.mxu0 0.0
  %4611 = vmatpush.msra.mxu0 %v3330
  %4612 = vmatpush.msra.mxu0 %v3240
  %4613 = vmatpush.msra.mxu0 %v3150
  %4614 = vmatpush.msra.mxu0 %v3060
  %4615 = vmatpush.msra.mxu0 %v2968
  %4616 = vmatmul.f32.gmra.mxu0 %v4204
  %v4617 = vpop.f32.mrf.mxu0
  %v4618 = vadd.f32 0.0, %v4617
  %4619 = vmatmul.f32.gmra.mxu0 %v4207
  %v4620 = vpop.f32.mrf.mxu0
  %v4621 = vadd.f32 0.0, %v4620
  %4622 = vdwg.mxu0
  %v4623 = vadd.f32 %v3804, %v4227
  %v4624 = vadd.f32 %v3827, %v4250
  %v4625 = vadd.f32 %v3850, %v4273
  %v4626 = vadd.f32 %v3873, %v4296
  %v4627 = vadd.f32 %v3896, %v4319
  %v4628 = vadd.f32 %v3919, %v4342
  %v4629 = vadd.f32 %v3942, %v4365
  %v4630 = vadd.f32 %v3965, %v4388
  %v4631 = vadd.f32 %v3988, %v4411
  %v4632 = vadd.f32 %v4011, %v4434
  %v4633 = vadd.f32 %v4034, %v4457
  %v4634 = vadd.f32 %v4057, %v4480
  %v4635 = vadd.f32 %v4080, %v4503
  %v4636 = vadd.f32 %v4103, %v4526
  %v4637 = vadd.f32 %v4126, %v4549
  %v4638 = vadd.f32 %v4149, %v4572
  %v4639 = vadd.f32 %v4172, %v4595
  %v4640 = vadd.f32 %v4195, %v4618
  %v4641 = vadd.f32 %v3807, %v4230
  %v4642 = vadd.f32 %v3830, %v4253
  %v4643 = vadd.f32 %v3853, %v4276
  %v4644 = vadd.f32 %v3876, %v4299
  %v4645 = vadd.f32 %v3899, %v4322
  %v4646 = vadd.f32 %v3922, %v4345
  %v4647 = vadd.f32 %v3945, %v4368
  %v4648 = vadd.f32 %v3968, %v4391
  %v4649 = vadd.f32 %v3991, %v4414
  %v4650 = vadd.f32 %v4014, %v4437
  %v4651 = vadd.f32 %v4037, %v4460
  %v4652 = vadd.f32 %v4060, %v4483
  %v4653 = vadd.f32 %v4083, %v4506
  %v4654 = vadd.f32 %v4106, %v4529
  %v4655 = vadd.f32 %v4129, %v4552
  %v4656 = vadd.f32 %v4152, %v4575
  %v4657 = vadd.f32 %v4175, %v4598
  %v4658 = vadd.f32 %v4198, %v4621
  %s4659 = scalar_lea.vmem %s2, 48
  %v4660 = vld [vmem:[%s4659] sm:$0xff]
  %v4661 = vld [vmem:[%s4659 + $0x8] sm:$0xff]
  %v4663 = vsel %vm530, %v4660, 0
  %v4666 = vsel %vm530, %v4661, 0
  %4668 = vmatpush.msra.mxu0 0.0
  %4669 = vmatpush.msra.mxu0 0.0
  %4670 = vmatpush.msra.mxu0 0.0
  %4671 = vmatpush.msra.mxu0 0.0
  %4672 = vmatpush.msra.mxu0 0.0
  %4673 = vmatpush.msra.mxu0 0.0
  %4674 = vmatpush.msra.mxu0 0.0
  %4675 = vmatpush.msra.mxu0 0.0
  %4676 = vmatpush.msra.mxu0 0.0
  %4677 = vmatpush.msra.mxu0 0.0
  %4678 = vmatpush.msra.mxu0 0.0
  %4679 = vmatpush.msra.mxu0 %v3314
  %4680 = vmatpush.msra.mxu0 %v3224
  %4681 = vmatpush.msra.mxu0 %v3134
  %4682 = vmatpush.msra.mxu0 %v3044
  %4683 = vmatpush.msra.mxu0 %v2952
  %4684 = vmatmul.f32.gmra.mxu0 %v4663
  %v4685 = vpop.f32.mrf.mxu0
  %v4686 = vadd.f32 0.0, %v4685
  %4687 = vmatmul.f32.gmra.mxu0 %v4666
  %v4688 = vpop.f32.mrf.mxu0
  %v4689 = vadd.f32 0.0, %v4688
  %4690 = vdwg.mxu0
  %4691 = vmatpush.msra.mxu0 0.0
  %4692 = vmatpush.msra.mxu0 0.0
  %4693 = vmatpush.msra.mxu0 0.0
  %4694 = vmatpush.msra.mxu0 0.0
  %4695 = vmatpush.msra.mxu0 0.0
  %4696 = vmatpush.msra.mxu0 0.0
  %4697 = vmatpush.msra.mxu0 0.0
  %4698 = vmatpush.msra.mxu0 0.0
  %4699 = vmatpush.msra.mxu0 0.0
  %4700 = vmatpush.msra.mxu0 0.0
  %4701 = vmatpush.msra.mxu0 0.0
  %4702 = vmatpush.msra.mxu0 %v3315
  %4703 = vmatpush.msra.mxu0 %v3225
  %4704 = vmatpush.msra.mxu0 %v3135
  %4705 = vmatpush.msra.mxu0 %v3045
  %4706 = vmatpush.msra.mxu0 %v2953
  %4707 = vmatmul.f32.gmra.mxu0 %v4663
  %v4708 = vpop.f32.mrf.mxu0
  %v4709 = vadd.f32 0.0, %v4708
  %4710 = vmatmul.f32.gmra.mxu0 %v4666
  %v4711 = vpop.f32.mrf.mxu0
  %v4712 = vadd.f32 0.0, %v4711
  %4713 = vdwg.mxu0
  %4714 = vmatpush.msra.mxu0 0.0
  %4715 = vmatpush.msra.mxu0 0.0
  %4716 = vmatpush.msra.mxu0 0.0
  %4717 = vmatpush.msra.mxu0 0.0
  %4718 = vmatpush.msra.mxu0 0.0
  %4719 = vmatpush.msra.mxu0 0.0
  %4720 = vmatpush.msra.mxu0 0.0
  %4721 = vmatpush.msra.mxu0 0.0
  %4722 = vmatpush.msra.mxu0 0.0
  %4723 = vmatpush.msra.mxu0 0.0
  %4724 = vmatpush.msra.mxu0 0.0
  %4725 = vmatpush.msra.mxu0 %v3316
  %4726 = vmatpush.msra.mxu0 %v3226
  %4727 = vmatpush.msra.mxu0 %v3136
  %4728 = vmatpush.msra.mxu0 %v3046
  %4729 = vmatpush.msra.mxu0 %v2954
  %4730 = vmatmul.f32.gmra.mxu0 %v4663
  %v4731 = vpop.f32.mrf.mxu0
  %v4732 = vadd.f32 0.0, %v4731
  %4733 = vmatmul.f32.gmra.mxu0 %v4666
  %v4734 = vpop.f32.mrf.mxu0
  %v4735 = vadd.f32 0.0, %v4734
  %4736 = vdwg.mxu0
  %4737 = vmatpush.msra.mxu0 0.0
  %4738 = vmatpush.msra.mxu0 0.0
  %4739 = vmatpush.msra.mxu0 0.0
  %4740 = vmatpush.msra.mxu0 0.0
  %4741 = vmatpush.msra.mxu0 0.0
  %4742 = vmatpush.msra.mxu0 0.0
  %4743 = vmatpush.msra.mxu0 0.0
  %4744 = vmatpush.msra.mxu0 0.0
  %4745 = vmatpush.msra.mxu0 0.0
  %4746 = vmatpush.msra.mxu0 0.0
  %4747 = vmatpush.msra.mxu0 0.0
  %4748 = vmatpush.msra.mxu0 %v3317
  %4749 = vmatpush.msra.mxu0 %v3227
  %4750 = vmatpush.msra.mxu0 %v3137
  %4751 = vmatpush.msra.mxu0 %v3047
  %4752 = vmatpush.msra.mxu0 %v2955
  %4753 = vmatmul.f32.gmra.mxu0 %v4663
  %v4754 = vpop.f32.mrf.mxu0
  %v4755 = vadd.f32 0.0, %v4754
  %4756 = vmatmul.f32.gmra.mxu0 %v4666
  %v4757 = vpop.f32.mrf.mxu0
  %v4758 = vadd.f32 0.0, %v4757
  %4759 = vdwg.mxu0
  %4760 = vmatpush.msra.mxu0 0.0
  %4761 = vmatpush.msra.mxu0 0.0
  %4762 = vmatpush.msra.mxu0 0.0
  %4763 = vmatpush.msra.mxu0 0.0
  %4764 = vmatpush.msra.mxu0 0.0
  %4765 = vmatpush.msra.mxu0 0.0
  %4766 = vmatpush.msra.mxu0 0.0
  %4767 = vmatpush.msra.mxu0 0.0
  %4768 = vmatpush.msra.mxu0 0.0
  %4769 = vmatpush.msra.mxu0 0.0
  %4770 = vmatpush.msra.mxu0 0.0
  %4771 = vmatpush.msra.mxu0 %v3318
  %4772 = vmatpush.msra.mxu0 %v3228
  %4773 = vmatpush.msra.mxu0 %v3138
  %4774 = vmatpush.msra.mxu0 %v3048
  %4775 = vmatpush.msra.mxu0 %v2956
  %4776 = vmatmul.f32.gmra.mxu0 %v4663
  %v4777 = vpop.f32.mrf.mxu0
  %v4778 = vadd.f32 0.0, %v4777
  %4779 = vmatmul.f32.gmra.mxu0 %v4666
  %v4780 = vpop.f32.mrf.mxu0
  %v4781 = vadd.f32 0.0, %v4780
  %4782 = vdwg.mxu0
  %4783 = vmatpush.msra.mxu0 0.0
  %4784 = vmatpush.msra.mxu0 0.0
  %4785 = vmatpush.msra.mxu0 0.0
  %4786 = vmatpush.msra.mxu0 0.0
  %4787 = vmatpush.msra.mxu0 0.0
  %4788 = vmatpush.msra.mxu0 0.0
  %4789 = vmatpush.msra.mxu0 0.0
  %4790 = vmatpush.msra.mxu0 0.0
  %4791 = vmatpush.msra.mxu0 0.0
  %4792 = vmatpush.msra.mxu0 0.0
  %4793 = vmatpush.msra.mxu0 0.0
  %4794 = vmatpush.msra.mxu0 %v3319
  %4795 = vmatpush.msra.mxu0 %v3229
  %4796 = vmatpush.msra.mxu0 %v3139
  %4797 = vmatpush.msra.mxu0 %v3049
  %4798 = vmatpush.msra.mxu0 %v2957
  %4799 = vmatmul.f32.gmra.mxu0 %v4663
  %v4800 = vpop.f32.mrf.mxu0
  %v4801 = vadd.f32 0.0, %v4800
  %4802 = vmatmul.f32.gmra.mxu0 %v4666
  %v4803 = vpop.f32.mrf.mxu0
  %v4804 = vadd.f32 0.0, %v4803
  %4805 = vdwg.mxu0
  %4806 = vmatpush.msra.mxu0 0.0
  %4807 = vmatpush.msra.mxu0 0.0
  %4808 = vmatpush.msra.mxu0 0.0
  %4809 = vmatpush.msra.mxu0 0.0
  %4810 = vmatpush.msra.mxu0 0.0
  %4811 = vmatpush.msra.mxu0 0.0
  %4812 = vmatpush.msra.mxu0 0.0
  %4813 = vmatpush.msra.mxu0 0.0
  %4814 = vmatpush.msra.mxu0 0.0
  %4815 = vmatpush.msra.mxu0 0.0
  %4816 = vmatpush.msra.mxu0 0.0
  %4817 = vmatpush.msra.mxu0 %v3320
  %4818 = vmatpush.msra.mxu0 %v3230
  %4819 = vmatpush.msra.mxu0 %v3140
  %4820 = vmatpush.msra.mxu0 %v3050
  %4821 = vmatpush.msra.mxu0 %v2958
  %4822 = vmatmul.f32.gmra.mxu0 %v4663
  %v4823 = vpop.f32.mrf.mxu0
  %v4824 = vadd.f32 0.0, %v4823
  %4825 = vmatmul.f32.gmra.mxu0 %v4666
  %v4826 = vpop.f32.mrf.mxu0
  %v4827 = vadd.f32 0.0, %v4826
  %4828 = vdwg.mxu0
  %4829 = vmatpush.msra.mxu0 0.0
  %4830 = vmatpush.msra.mxu0 0.0
  %4831 = vmatpush.msra.mxu0 0.0
  %4832 = vmatpush.msra.mxu0 0.0
  %4833 = vmatpush.msra.mxu0 0.0
  %4834 = vmatpush.msra.mxu0 0.0
  %4835 = vmatpush.msra.mxu0 0.0
  %4836 = vmatpush.msra.mxu0 0.0
  %4837 = vmatpush.msra.mxu0 0.0
  %4838 = vmatpush.msra.mxu0 0.0
  %4839 = vmatpush.msra.mxu0 0.0
  %4840 = vmatpush.msra.mxu0 %v3321
  %4841 = vmatpush.msra.mxu0 %v3231
  %4842 = vmatpush.msra.mxu0 %v3141
  %4843 = vmatpush.msra.mxu0 %v3051
  %4844 = vmatpush.msra.mxu0 %v2959
  %4845 = vmatmul.f32.gmra.mxu0 %v4663
  %v4846 = vpop.f32.mrf.mxu0
  %v4847 = vadd.f32 0.0, %v4846
  %4848 = vmatmul.f32.gmra.mxu0 %v4666
  %v4849 = vpop.f32.mrf.mxu0
  %v4850 = vadd.f32 0.0, %v4849
  %4851 = vdwg.mxu0
  %4852 = vmatpush.msra.mxu0 0.0
  %4853 = vmatpush.msra.mxu0 0.0
  %4854 = vmatpush.msra.mxu0 0.0
  %4855 = vmatpush.msra.mxu0 0.0
  %4856 = vmatpush.msra.mxu0 0.0
  %4857 = vmatpush.msra.mxu0 0.0
  %4858 = vmatpush.msra.mxu0 0.0
  %4859 = vmatpush.msra.mxu0 0.0
  %4860 = vmatpush.msra.mxu0 0.0
  %4861 = vmatpush.msra.mxu0 0.0
  %4862 = vmatpush.msra.mxu0 0.0
  %4863 = vmatpush.msra.mxu0 %v3322
  %4864 = vmatpush.msra.mxu0 %v3232
  %4865 = vmatpush.msra.mxu0 %v3142
  %4866 = vmatpush.msra.mxu0 %v3052
  %4867 = vmatpush.msra.mxu0 %v2960
  %4868 = vmatmul.f32.gmra.mxu0 %v4663
  %v4869 = vpop.f32.mrf.mxu0
  %v4870 = vadd.f32 0.0, %v4869
  %4871 = vmatmul.f32.gmra.mxu0 %v4666
  %v4872 = vpop.f32.mrf.mxu0
  %v4873 = vadd.f32 0.0, %v4872
  %4874 = vdwg.mxu0
  %4875 = vmatpush.msra.mxu0 0.0
  %4876 = vmatpush.msra.mxu0 0.0
  %4877 = vmatpush.msra.mxu0 0.0
  %4878 = vmatpush.msra.mxu0 0.0
  %4879 = vmatpush.msra.mxu0 0.0
  %4880 = vmatpush.msra.mxu0 0.0
  %4881 = vmatpush.msra.mxu0 0.0
  %4882 = vmatpush.msra.mxu0 0.0
  %4883 = vmatpush.msra.mxu0 0.0
  %4884 = vmatpush.msra.mxu0 0.0
  %4885 = vmatpush.msra.mxu0 0.0
  %4886 = vmatpush.msra.mxu0 %v3323
  %4887 = vmatpush.msra.mxu0 %v3233
  %4888 = vmatpush.msra.mxu0 %v3143
  %4889 = vmatpush.msra.mxu0 %v3053
  %4890 = vmatpush.msra.mxu0 %v2961
  %4891 = vmatmul.f32.gmra.mxu0 %v4663
  %v4892 = vpop.f32.mrf.mxu0
  %v4893 = vadd.f32 0.0, %v4892
  %4894 = vmatmul.f32.gmra.mxu0 %v4666
  %v4895 = vpop.f32.mrf.mxu0
  %v4896 = vadd.f32 0.0, %v4895
  %4897 = vdwg.mxu0
  %4898 = vmatpush.msra.mxu0 0.0
  %4899 = vmatpush.msra.mxu0 0.0
  %4900 = vmatpush.msra.mxu0 0.0
  %4901 = vmatpush.msra.mxu0 0.0
  %4902 = vmatpush.msra.mxu0 0.0
  %4903 = vmatpush.msra.mxu0 0.0
  %4904 = vmatpush.msra.mxu0 0.0
  %4905 = vmatpush.msra.mxu0 0.0
  %4906 = vmatpush.msra.mxu0 0.0
  %4907 = vmatpush.msra.mxu0 0.0
  %4908 = vmatpush.msra.mxu0 0.0
  %4909 = vmatpush.msra.mxu0 %v3324
  %4910 = vmatpush.msra.mxu0 %v3234
  %4911 = vmatpush.msra.mxu0 %v3144
  %4912 = vmatpush.msra.mxu0 %v3054
  %4913 = vmatpush.msra.mxu0 %v2962
  %4914 = vmatmul.f32.gmra.mxu0 %v4663
  %v4915 = vpop.f32.mrf.mxu0
  %v4916 = vadd.f32 0.0, %v4915
  %4917 = vmatmul.f32.gmra.mxu0 %v4666
  %v4918 = vpop.f32.mrf.mxu0
  %v4919 = vadd.f32 0.0, %v4918
  %4920 = vdwg.mxu0
  %4921 = vmatpush.msra.mxu0 0.0
  %4922 = vmatpush.msra.mxu0 0.0
  %4923 = vmatpush.msra.mxu0 0.0
  %4924 = vmatpush.msra.mxu0 0.0
  %4925 = vmatpush.msra.mxu0 0.0
  %4926 = vmatpush.msra.mxu0 0.0
  %4927 = vmatpush.msra.mxu0 0.0
  %4928 = vmatpush.msra.mxu0 0.0
  %4929 = vmatpush.msra.mxu0 0.0
  %4930 = vmatpush.msra.mxu0 0.0
  %4931 = vmatpush.msra.mxu0 0.0
  %4932 = vmatpush.msra.mxu0 %v3325
  %4933 = vmatpush.msra.mxu0 %v3235
  %4934 = vmatpush.msra.mxu0 %v3145
  %4935 = vmatpush.msra.mxu0 %v3055
  %4936 = vmatpush.msra.mxu0 %v2963
  %4937 = vmatmul.f32.gmra.mxu0 %v4663
  %v4938 = vpop.f32.mrf.mxu0
  %v4939 = vadd.f32 0.0, %v4938
  %4940 = vmatmul.f32.gmra.mxu0 %v4666
  %v4941 = vpop.f32.mrf.mxu0
  %v4942 = vadd.f32 0.0, %v4941
  %4943 = vdwg.mxu0
  %4944 = vmatpush.msra.mxu0 0.0
  %4945 = vmatpush.msra.mxu0 0.0
  %4946 = vmatpush.msra.mxu0 0.0
  %4947 = vmatpush.msra.mxu0 0.0
  %4948 = vmatpush.msra.mxu0 0.0
  %4949 = vmatpush.msra.mxu0 0.0
  %4950 = vmatpush.msra.mxu0 0.0
  %4951 = vmatpush.msra.mxu0 0.0
  %4952 = vmatpush.msra.mxu0 0.0
  %4953 = vmatpush.msra.mxu0 0.0
  %4954 = vmatpush.msra.mxu0 0.0
  %4955 = vmatpush.msra.mxu0 %v3326
  %4956 = vmatpush.msra.mxu0 %v3236
  %4957 = vmatpush.msra.mxu0 %v3146
  %4958 = vmatpush.msra.mxu0 %v3056
  %4959 = vmatpush.msra.mxu0 %v2964
  %4960 = vmatmul.f32.gmra.mxu0 %v4663
  %v4961 = vpop.f32.mrf.mxu0
  %v4962 = vadd.f32 0.0, %v4961
  %4963 = vmatmul.f32.gmra.mxu0 %v4666
  %v4964 = vpop.f32.mrf.mxu0
  %v4965 = vadd.f32 0.0, %v4964
  %4966 = vdwg.mxu0
  %4967 = vmatpush.msra.mxu0 0.0
  %4968 = vmatpush.msra.mxu0 0.0
  %4969 = vmatpush.msra.mxu0 0.0
  %4970 = vmatpush.msra.mxu0 0.0
  %4971 = vmatpush.msra.mxu0 0.0
  %4972 = vmatpush.msra.mxu0 0.0
  %4973 = vmatpush.msra.mxu0 0.0
  %4974 = vmatpush.msra.mxu0 0.0
  %4975 = vmatpush.msra.mxu0 0.0
  %4976 = vmatpush.msra.mxu0 0.0
  %4977 = vmatpush.msra.mxu0 0.0
  %4978 = vmatpush.msra.mxu0 %v3327
  %4979 = vmatpush.msra.mxu0 %v3237
  %4980 = vmatpush.msra.mxu0 %v3147
  %4981 = vmatpush.msra.mxu0 %v3057
  %4982 = vmatpush.msra.mxu0 %v2965
  %4983 = vmatmul.f32.gmra.mxu0 %v4663
  %v4984 = vpop.f32.mrf.mxu0
  %v4985 = vadd.f32 0.0, %v4984
  %4986 = vmatmul.f32.gmra.mxu0 %v4666
  %v4987 = vpop.f32.mrf.mxu0
  %v4988 = vadd.f32 0.0, %v4987
  %4989 = vdwg.mxu0
  %4990 = vmatpush.msra.mxu0 0.0
  %4991 = vmatpush.msra.mxu0 0.0
  %4992 = vmatpush.msra.mxu0 0.0
  %4993 = vmatpush.msra.mxu0 0.0
  %4994 = vmatpush.msra.mxu0 0.0
  %4995 = vmatpush.msra.mxu0 0.0
  %4996 = vmatpush.msra.mxu0 0.0
  %4997 = vmatpush.msra.mxu0 0.0
  %4998 = vmatpush.msra.mxu0 0.0
  %4999 = vmatpush.msra.mxu0 0.0
  %5000 = vmatpush.msra.mxu0 0.0
  %5001 = vmatpush.msra.mxu0 %v3328
  %5002 = vmatpush.msra.mxu0 %v3238
  %5003 = vmatpush.msra.mxu0 %v3148
  %5004 = vmatpush.msra.mxu0 %v3058
  %5005 = vmatpush.msra.mxu0 %v2966
  %5006 = vmatmul.f32.gmra.mxu0 %v4663
  %v5007 = vpop.f32.mrf.mxu0
  %v5008 = vadd.f32 0.0, %v5007
  %5009 = vmatmul.f32.gmra.mxu0 %v4666
  %v5010 = vpop.f32.mrf.mxu0
  %v5011 = vadd.f32 0.0, %v5010
  %5012 = vdwg.mxu0
  %5013 = vmatpush.msra.mxu0 0.0
  %5014 = vmatpush.msra.mxu0 0.0
  %5015 = vmatpush.msra.mxu0 0.0
  %5016 = vmatpush.msra.mxu0 0.0
  %5017 = vmatpush.msra.mxu0 0.0
  %5018 = vmatpush.msra.mxu0 0.0
  %5019 = vmatpush.msra.mxu0 0.0
  %5020 = vmatpush.msra.mxu0 0.0
  %5021 = vmatpush.msra.mxu0 0.0
  %5022 = vmatpush.msra.mxu0 0.0
  %5023 = vmatpush.msra.mxu0 0.0
  %5024 = vmatpush.msra.mxu0 %v3329
  %5025 = vmatpush.msra.mxu0 %v3239
  %5026 = vmatpush.msra.mxu0 %v3149
  %5027 = vmatpush.msra.mxu0 %v3059
  %5028 = vmatpush.msra.mxu0 %v2967
  %5029 = vmatmul.f32.gmra.mxu0 %v4663
  %v5030 = vpop.f32.mrf.mxu0
  %v5031 = vadd.f32 0.0, %v5030
  %5032 = vmatmul.f32.gmra.mxu0 %v4666
  %v5033 = vpop.f32.mrf.mxu0
  %v5034 = vadd.f32 0.0, %v5033
  %5035 = vdwg.mxu0
  %5036 = vmatpush.msra.mxu0 0.0
  %5037 = vmatpush.msra.mxu0 0.0
  %5038 = vmatpush.msra.mxu0 0.0
  %5039 = vmatpush.msra.mxu0 0.0
  %5040 = vmatpush.msra.mxu0 0.0
  %5041 = vmatpush.msra.mxu0 0.0
  %5042 = vmatpush.msra.mxu0 0.0
  %5043 = vmatpush.msra.mxu0 0.0
  %5044 = vmatpush.msra.mxu0 0.0
  %5045 = vmatpush.msra.mxu0 0.0
  %5046 = vmatpush.msra.mxu0 0.0
  %5047 = vmatpush.msra.mxu0 %v3330
  %5048 = vmatpush.msra.mxu0 %v3240
  %5049 = vmatpush.msra.mxu0 %v3150
  %5050 = vmatpush.msra.mxu0 %v3060
  %5051 = vmatpush.msra.mxu0 %v2968
  %5052 = vmatmul.f32.gmra.mxu0 %v4663
  %v5053 = vpop.f32.mrf.mxu0
  %v5054 = vadd.f32 0.0, %v5053
  %5055 = vmatmul.f32.gmra.mxu0 %v4666
  %v5056 = vpop.f32.mrf.mxu0
  %v5057 = vadd.f32 0.0, %v5056
  %5058 = vdwg.mxu0
  %5059 = vmatpush.msra.mxu0 0.0
  %5060 = vmatpush.msra.mxu0 0.0
  %5061 = vmatpush.msra.mxu0 0.0
  %5062 = vmatpush.msra.mxu0 0.0
  %5063 = vmatpush.msra.mxu0 0.0
  %5064 = vmatpush.msra.mxu0 0.0
  %5065 = vmatpush.msra.mxu0 0.0
  %5066 = vmatpush.msra.mxu0 0.0
  %5067 = vmatpush.msra.mxu0 0.0
  %5068 = vmatpush.msra.mxu0 0.0
  %5069 = vmatpush.msra.mxu0 0.0
  %5070 = vmatpush.msra.mxu0 %v3331
  %5071 = vmatpush.msra.mxu0 %v3241
  %5072 = vmatpush.msra.mxu0 %v3151
  %5073 = vmatpush.msra.mxu0 %v3061
  %5074 = vmatpush.msra.mxu0 %v2969
  %5075 = vmatmul.f32.gmra.mxu0 %v4663
  %v5076 = vpop.f32.mrf.mxu0
  %v5077 = vadd.f32 0.0, %v5076
  %5078 = vmatmul.f32.gmra.mxu0 %v4666
  %v5079 = vpop.f32.mrf.mxu0
  %v5080 = vadd.f32 0.0, %v5079
  %5081 = vdwg.mxu0
  %v5082 = vadd.f32 %v4623, %v4686
  %v5083 = vadd.f32 %v4624, %v4709
  %v5084 = vadd.f32 %v4625, %v4732
  %v5085 = vadd.f32 %v4626, %v4755
  %v5086 = vadd.f32 %v4627, %v4778
  %v5087 = vadd.f32 %v4628, %v4801
  %v5088 = vadd.f32 %v4629, %v4824
  %v5089 = vadd.f32 %v4630, %v4847
  %v5090 = vadd.f32 %v4631, %v4870
  %v5091 = vadd.f32 %v4632, %v4893
  %v5092 = vadd.f32 %v4633, %v4916
  %v5093 = vadd.f32 %v4634, %v4939
  %v5094 = vadd.f32 %v4635, %v4962
  %v5095 = vadd.f32 %v4636, %v4985
  %v5096 = vadd.f32 %v4637, %v5008
  %v5097 = vadd.f32 %v4638, %v5031
  %v5098 = vadd.f32 %v4639, %v5054
  %v5099 = vadd.f32 %v4640, %v5077
  %v5100 = vadd.f32 %v4641, %v4689
  %v5101 = vadd.f32 %v4642, %v4712
  %v5102 = vadd.f32 %v4643, %v4735
  %v5103 = vadd.f32 %v4644, %v4758
  %v5104 = vadd.f32 %v4645, %v4781
  %v5105 = vadd.f32 %v4646, %v4804
  %v5106 = vadd.f32 %v4647, %v4827
  %v5107 = vadd.f32 %v4648, %v4850
  %v5108 = vadd.f32 %v4649, %v4873
  %v5109 = vadd.f32 %v4650, %v4896
  %v5110 = vadd.f32 %v4651, %v4919
  %v5111 = vadd.f32 %v4652, %v4942
  %v5112 = vadd.f32 %v4653, %v4965
  %v5113 = vadd.f32 %v4654, %v4988
  %v5114 = vadd.f32 %v4655, %v5011
  %v5115 = vadd.f32 %v4656, %v5034
  %v5116 = vadd.f32 %v4657, %v5057
  %v5117 = vadd.f32 %v4658, %v5080
  %s5118 = scalar_lea.vmem %s2, 64
  %v5119 = vld [vmem:[%s5118] sm:$0xff]
  %v5120 = vld [vmem:[%s5118 + $0x8] sm:$0xff]
  %v5122 = vsel %vm530, %v5119, 0
  %v5125 = vsel %vm530, %v5120, 0
  %5127 = vmatpush.msra.mxu0 0.0
  %5128 = vmatpush.msra.mxu0 0.0
  %5129 = vmatpush.msra.mxu0 0.0
  %5130 = vmatpush.msra.mxu0 0.0
  %5131 = vmatpush.msra.mxu0 0.0
  %5132 = vmatpush.msra.mxu0 0.0
  %5133 = vmatpush.msra.mxu0 0.0
  %5134 = vmatpush.msra.mxu0 0.0
  %5135 = vmatpush.msra.mxu0 0.0
  %5136 = vmatpush.msra.mxu0 0.0
  %5137 = vmatpush.msra.mxu0 0.0
  %5138 = vmatpush.msra.mxu0 %v3315
  %5139 = vmatpush.msra.mxu0 %v3225
  %5140 = vmatpush.msra.mxu0 %v3135
  %5141 = vmatpush.msra.mxu0 %v3045
  %5142 = vmatpush.msra.mxu0 %v2953
  %5143 = vmatmul.f32.gmra.mxu0 %v5122
  %v5144 = vpop.f32.mrf.mxu0
  %v5145 = vadd.f32 0.0, %v5144
  %5146 = vmatmul.f32.gmra.mxu0 %v5125
  %v5147 = vpop.f32.mrf.mxu0
  %v5148 = vadd.f32 0.0, %v5147
  %5149 = vdwg.mxu0
  %5150 = vmatpush.msra.mxu0 0.0
  %5151 = vmatpush.msra.mxu0 0.0
  %5152 = vmatpush.msra.mxu0 0.0
  %5153 = vmatpush.msra.mxu0 0.0
  %5154 = vmatpush.msra.mxu0 0.0
  %5155 = vmatpush.msra.mxu0 0.0
  %5156 = vmatpush.msra.mxu0 0.0
  %5157 = vmatpush.msra.mxu0 0.0
  %5158 = vmatpush.msra.mxu0 0.0
  %5159 = vmatpush.msra.mxu0 0.0
  %5160 = vmatpush.msra.mxu0 0.0
  %5161 = vmatpush.msra.mxu0 %v3316
  %5162 = vmatpush.msra.mxu0 %v3226
  %5163 = vmatpush.msra.mxu0 %v3136
  %5164 = vmatpush.msra.mxu0 %v3046
  %5165 = vmatpush.msra.mxu0 %v2954
  %5166 = vmatmul.f32.gmra.mxu0 %v5122
  %v5167 = vpop.f32.mrf.mxu0
  %v5168 = vadd.f32 0.0, %v5167
  %5169 = vmatmul.f32.gmra.mxu0 %v5125
  %v5170 = vpop.f32.mrf.mxu0
  %v5171 = vadd.f32 0.0, %v5170
  %5172 = vdwg.mxu0
  %5173 = vmatpush.msra.mxu0 0.0
  %5174 = vmatpush.msra.mxu0 0.0
  %5175 = vmatpush.msra.mxu0 0.0
  %5176 = vmatpush.msra.mxu0 0.0
  %5177 = vmatpush.msra.mxu0 0.0
  %5178 = vmatpush.msra.mxu0 0.0
  %5179 = vmatpush.msra.mxu0 0.0
  %5180 = vmatpush.msra.mxu0 0.0
  %5181 = vmatpush.msra.mxu0 0.0
  %5182 = vmatpush.msra.mxu0 0.0
  %5183 = vmatpush.msra.mxu0 0.0
  %5184 = vmatpush.msra.mxu0 %v3317
  %5185 = vmatpush.msra.mxu0 %v3227
  %5186 = vmatpush.msra.mxu0 %v3137
  %5187 = vmatpush.msra.mxu0 %v3047
  %5188 = vmatpush.msra.mxu0 %v2955
  %5189 = vmatmul.f32.gmra.mxu0 %v5122
  %v5190 = vpop.f32.mrf.mxu0
  %v5191 = vadd.f32 0.0, %v5190
  %5192 = vmatmul.f32.gmra.mxu0 %v5125
  %v5193 = vpop.f32.mrf.mxu0
  %v5194 = vadd.f32 0.0, %v5193
  %5195 = vdwg.mxu0
  %5196 = vmatpush.msra.mxu0 0.0
  %5197 = vmatpush.msra.mxu0 0.0
  %5198 = vmatpush.msra.mxu0 0.0
  %5199 = vmatpush.msra.mxu0 0.0
  %5200 = vmatpush.msra.mxu0 0.0
  %5201 = vmatpush.msra.mxu0 0.0
  %5202 = vmatpush.msra.mxu0 0.0
  %5203 = vmatpush.msra.mxu0 0.0
  %5204 = vmatpush.msra.mxu0 0.0
  %5205 = vmatpush.msra.mxu0 0.0
  %5206 = vmatpush.msra.mxu0 0.0
  %5207 = vmatpush.msra.mxu0 %v3318
  %5208 = vmatpush.msra.mxu0 %v3228
  %5209 = vmatpush.msra.mxu0 %v3138
  %5210 = vmatpush.msra.mxu0 %v3048
  %5211 = vmatpush.msra.mxu0 %v2956
  %5212 = vmatmul.f32.gmra.mxu0 %v5122
  %v5213 = vpop.f32.mrf.mxu0
  %v5214 = vadd.f32 0.0, %v5213
  %5215 = vmatmul.f32.gmra.mxu0 %v5125
  %v5216 = vpop.f32.mrf.mxu0
  %v5217 = vadd.f32 0.0, %v5216
  %5218 = vdwg.mxu0
  %5219 = vmatpush.msra.mxu0 0.0
  %5220 = vmatpush.msra.mxu0 0.0
  %5221 = vmatpush.msra.mxu0 0.0
  %5222 = vmatpush.msra.mxu0 0.0
  %5223 = vmatpush.msra.mxu0 0.0
  %5224 = vmatpush.msra.mxu0 0.0
  %5225 = vmatpush.msra.mxu0 0.0
  %5226 = vmatpush.msra.mxu0 0.0
  %5227 = vmatpush.msra.mxu0 0.0
  %5228 = vmatpush.msra.mxu0 0.0
  %5229 = vmatpush.msra.mxu0 0.0
  %5230 = vmatpush.msra.mxu0 %v3319
  %5231 = vmatpush.msra.mxu0 %v3229
  %5232 = vmatpush.msra.mxu0 %v3139
  %5233 = vmatpush.msra.mxu0 %v3049
  %5234 = vmatpush.msra.mxu0 %v2957
  %5235 = vmatmul.f32.gmra.mxu0 %v5122
  %v5236 = vpop.f32.mrf.mxu0
  %v5237 = vadd.f32 0.0, %v5236
  %5238 = vmatmul.f32.gmra.mxu0 %v5125
  %v5239 = vpop.f32.mrf.mxu0
  %v5240 = vadd.f32 0.0, %v5239
  %5241 = vdwg.mxu0
  %5242 = vmatpush.msra.mxu0 0.0
  %5243 = vmatpush.msra.mxu0 0.0
  %5244 = vmatpush.msra.mxu0 0.0
  %5245 = vmatpush.msra.mxu0 0.0
  %5246 = vmatpush.msra.mxu0 0.0
  %5247 = vmatpush.msra.mxu0 0.0
  %5248 = vmatpush.msra.mxu0 0.0
  %5249 = vmatpush.msra.mxu0 0.0
  %5250 = vmatpush.msra.mxu0 0.0
  %5251 = vmatpush.msra.mxu0 0.0
  %5252 = vmatpush.msra.mxu0 0.0
  %5253 = vmatpush.msra.mxu0 %v3320
  %5254 = vmatpush.msra.mxu0 %v3230
  %5255 = vmatpush.msra.mxu0 %v3140
  %5256 = vmatpush.msra.mxu0 %v3050
  %5257 = vmatpush.msra.mxu0 %v2958
  %5258 = vmatmul.f32.gmra.mxu0 %v5122
  %v5259 = vpop.f32.mrf.mxu0
  %v5260 = vadd.f32 0.0, %v5259
  %5261 = vmatmul.f32.gmra.mxu0 %v5125
  %v5262 = vpop.f32.mrf.mxu0
  %v5263 = vadd.f32 0.0, %v5262
  %5264 = vdwg.mxu0
  %5265 = vmatpush.msra.mxu0 0.0
  %5266 = vmatpush.msra.mxu0 0.0
  %5267 = vmatpush.msra.mxu0 0.0
  %5268 = vmatpush.msra.mxu0 0.0
  %5269 = vmatpush.msra.mxu0 0.0
  %5270 = vmatpush.msra.mxu0 0.0
  %5271 = vmatpush.msra.mxu0 0.0
  %5272 = vmatpush.msra.mxu0 0.0
  %5273 = vmatpush.msra.mxu0 0.0
  %5274 = vmatpush.msra.mxu0 0.0
  %5275 = vmatpush.msra.mxu0 0.0
  %5276 = vmatpush.msra.mxu0 %v3321
  %5277 = vmatpush.msra.mxu0 %v3231
  %5278 = vmatpush.msra.mxu0 %v3141
  %5279 = vmatpush.msra.mxu0 %v3051
  %5280 = vmatpush.msra.mxu0 %v2959
  %5281 = vmatmul.f32.gmra.mxu0 %v5122
  %v5282 = vpop.f32.mrf.mxu0
  %v5283 = vadd.f32 0.0, %v5282
  %5284 = vmatmul.f32.gmra.mxu0 %v5125
  %v5285 = vpop.f32.mrf.mxu0
  %v5286 = vadd.f32 0.0, %v5285
  %5287 = vdwg.mxu0
  %5288 = vmatpush.msra.mxu0 0.0
  %5289 = vmatpush.msra.mxu0 0.0
  %5290 = vmatpush.msra.mxu0 0.0
  %5291 = vmatpush.msra.mxu0 0.0
  %5292 = vmatpush.msra.mxu0 0.0
  %5293 = vmatpush.msra.mxu0 0.0
  %5294 = vmatpush.msra.mxu0 0.0
  %5295 = vmatpush.msra.mxu0 0.0
  %5296 = vmatpush.msra.mxu0 0.0
  %5297 = vmatpush.msra.mxu0 0.0
  %5298 = vmatpush.msra.mxu0 0.0
  %5299 = vmatpush.msra.mxu0 %v3322
  %5300 = vmatpush.msra.mxu0 %v3232
  %5301 = vmatpush.msra.mxu0 %v3142
  %5302 = vmatpush.msra.mxu0 %v3052
  %5303 = vmatpush.msra.mxu0 %v2960
  %5304 = vmatmul.f32.gmra.mxu0 %v5122
  %v5305 = vpop.f32.mrf.mxu0
  %v5306 = vadd.f32 0.0, %v5305
  %5307 = vmatmul.f32.gmra.mxu0 %v5125
  %v5308 = vpop.f32.mrf.mxu0
  %v5309 = vadd.f32 0.0, %v5308
  %5310 = vdwg.mxu0
  %5311 = vmatpush.msra.mxu0 0.0
  %5312 = vmatpush.msra.mxu0 0.0
  %5313 = vmatpush.msra.mxu0 0.0
  %5314 = vmatpush.msra.mxu0 0.0
  %5315 = vmatpush.msra.mxu0 0.0
  %5316 = vmatpush.msra.mxu0 0.0
  %5317 = vmatpush.msra.mxu0 0.0
  %5318 = vmatpush.msra.mxu0 0.0
  %5319 = vmatpush.msra.mxu0 0.0
  %5320 = vmatpush.msra.mxu0 0.0
  %5321 = vmatpush.msra.mxu0 0.0
  %5322 = vmatpush.msra.mxu0 %v3323
  %5323 = vmatpush.msra.mxu0 %v3233
  %5324 = vmatpush.msra.mxu0 %v3143
  %5325 = vmatpush.msra.mxu0 %v3053
  %5326 = vmatpush.msra.mxu0 %v2961
  %5327 = vmatmul.f32.gmra.mxu0 %v5122
  %v5328 = vpop.f32.mrf.mxu0
  %v5329 = vadd.f32 0.0, %v5328
  %5330 = vmatmul.f32.gmra.mxu0 %v5125
  %v5331 = vpop.f32.mrf.mxu0
  %v5332 = vadd.f32 0.0, %v5331
  %5333 = vdwg.mxu0
  %5334 = vmatpush.msra.mxu0 0.0
  %5335 = vmatpush.msra.mxu0 0.0
  %5336 = vmatpush.msra.mxu0 0.0
  %5337 = vmatpush.msra.mxu0 0.0
  %5338 = vmatpush.msra.mxu0 0.0
  %5339 = vmatpush.msra.mxu0 0.0
  %5340 = vmatpush.msra.mxu0 0.0
  %5341 = vmatpush.msra.mxu0 0.0
  %5342 = vmatpush.msra.mxu0 0.0
  %5343 = vmatpush.msra.mxu0 0.0
  %5344 = vmatpush.msra.mxu0 0.0
  %5345 = vmatpush.msra.mxu0 %v3324
  %5346 = vmatpush.msra.mxu0 %v3234
  %5347 = vmatpush.msra.mxu0 %v3144
  %5348 = vmatpush.msra.mxu0 %v3054
  %5349 = vmatpush.msra.mxu0 %v2962
  %5350 = vmatmul.f32.gmra.mxu0 %v5122
  %v5351 = vpop.f32.mrf.mxu0
  %v5352 = vadd.f32 0.0, %v5351
  %5353 = vmatmul.f32.gmra.mxu0 %v5125
  %v5354 = vpop.f32.mrf.mxu0
  %v5355 = vadd.f32 0.0, %v5354
  %5356 = vdwg.mxu0
  %5357 = vmatpush.msra.mxu0 0.0
  %5358 = vmatpush.msra.mxu0 0.0
  %5359 = vmatpush.msra.mxu0 0.0
  %5360 = vmatpush.msra.mxu0 0.0
  %5361 = vmatpush.msra.mxu0 0.0
  %5362 = vmatpush.msra.mxu0 0.0
  %5363 = vmatpush.msra.mxu0 0.0
  %5364 = vmatpush.msra.mxu0 0.0
  %5365 = vmatpush.msra.mxu0 0.0
  %5366 = vmatpush.msra.mxu0 0.0
  %5367 = vmatpush.msra.mxu0 0.0
  %5368 = vmatpush.msra.mxu0 %v3325
  %5369 = vmatpush.msra.mxu0 %v3235
  %5370 = vmatpush.msra.mxu0 %v3145
  %5371 = vmatpush.msra.mxu0 %v3055
  %5372 = vmatpush.msra.mxu0 %v2963
  %5373 = vmatmul.f32.gmra.mxu0 %v5122
  %v5374 = vpop.f32.mrf.mxu0
  %v5375 = vadd.f32 0.0, %v5374
  %5376 = vmatmul.f32.gmra.mxu0 %v5125
  %v5377 = vpop.f32.mrf.mxu0
  %v5378 = vadd.f32 0.0, %v5377
  %5379 = vdwg.mxu0
  %5380 = vmatpush.msra.mxu0 0.0
  %5381 = vmatpush.msra.mxu0 0.0
  %5382 = vmatpush.msra.mxu0 0.0
  %5383 = vmatpush.msra.mxu0 0.0
  %5384 = vmatpush.msra.mxu0 0.0
  %5385 = vmatpush.msra.mxu0 0.0
  %5386 = vmatpush.msra.mxu0 0.0
  %5387 = vmatpush.msra.mxu0 0.0
  %5388 = vmatpush.msra.mxu0 0.0
  %5389 = vmatpush.msra.mxu0 0.0
  %5390 = vmatpush.msra.mxu0 0.0
  %5391 = vmatpush.msra.mxu0 %v3326
  %5392 = vmatpush.msra.mxu0 %v3236
  %5393 = vmatpush.msra.mxu0 %v3146
  %5394 = vmatpush.msra.mxu0 %v3056
  %5395 = vmatpush.msra.mxu0 %v2964
  %5396 = vmatmul.f32.gmra.mxu0 %v5122
  %v5397 = vpop.f32.mrf.mxu0
  %v5398 = vadd.f32 0.0, %v5397
  %5399 = vmatmul.f32.gmra.mxu0 %v5125
  %v5400 = vpop.f32.mrf.mxu0
  %v5401 = vadd.f32 0.0, %v5400
  %5402 = vdwg.mxu0
  %5403 = vmatpush.msra.mxu0 0.0
  %5404 = vmatpush.msra.mxu0 0.0
  %5405 = vmatpush.msra.mxu0 0.0
  %5406 = vmatpush.msra.mxu0 0.0
  %5407 = vmatpush.msra.mxu0 0.0
  %5408 = vmatpush.msra.mxu0 0.0
  %5409 = vmatpush.msra.mxu0 0.0
  %5410 = vmatpush.msra.mxu0 0.0
  %5411 = vmatpush.msra.mxu0 0.0
  %5412 = vmatpush.msra.mxu0 0.0
  %5413 = vmatpush.msra.mxu0 0.0
  %5414 = vmatpush.msra.mxu0 %v3327
  %5415 = vmatpush.msra.mxu0 %v3237
  %5416 = vmatpush.msra.mxu0 %v3147
  %5417 = vmatpush.msra.mxu0 %v3057
  %5418 = vmatpush.msra.mxu0 %v2965
  %5419 = vmatmul.f32.gmra.mxu0 %v5122
  %v5420 = vpop.f32.mrf.mxu0
  %v5421 = vadd.f32 0.0, %v5420
  %5422 = vmatmul.f32.gmra.mxu0 %v5125
  %v5423 = vpop.f32.mrf.mxu0
  %v5424 = vadd.f32 0.0, %v5423
  %5425 = vdwg.mxu0
  %5426 = vmatpush.msra.mxu0 0.0
  %5427 = vmatpush.msra.mxu0 0.0
  %5428 = vmatpush.msra.mxu0 0.0
  %5429 = vmatpush.msra.mxu0 0.0
  %5430 = vmatpush.msra.mxu0 0.0
  %5431 = vmatpush.msra.mxu0 0.0
  %5432 = vmatpush.msra.mxu0 0.0
  %5433 = vmatpush.msra.mxu0 0.0
  %5434 = vmatpush.msra.mxu0 0.0
  %5435 = vmatpush.msra.mxu0 0.0
  %5436 = vmatpush.msra.mxu0 0.0
  %5437 = vmatpush.msra.mxu0 %v3328
  %5438 = vmatpush.msra.mxu0 %v3238
  %5439 = vmatpush.msra.mxu0 %v3148
  %5440 = vmatpush.msra.mxu0 %v3058
  %5441 = vmatpush.msra.mxu0 %v2966
  %5442 = vmatmul.f32.gmra.mxu0 %v5122
  %v5443 = vpop.f32.mrf.mxu0
  %v5444 = vadd.f32 0.0, %v5443
  %5445 = vmatmul.f32.gmra.mxu0 %v5125
  %v5446 = vpop.f32.mrf.mxu0
  %v5447 = vadd.f32 0.0, %v5446
  %5448 = vdwg.mxu0
  %5449 = vmatpush.msra.mxu0 0.0
  %5450 = vmatpush.msra.mxu0 0.0
  %5451 = vmatpush.msra.mxu0 0.0
  %5452 = vmatpush.msra.mxu0 0.0
  %5453 = vmatpush.msra.mxu0 0.0
  %5454 = vmatpush.msra.mxu0 0.0
  %5455 = vmatpush.msra.mxu0 0.0
  %5456 = vmatpush.msra.mxu0 0.0
  %5457 = vmatpush.msra.mxu0 0.0
  %5458 = vmatpush.msra.mxu0 0.0
  %5459 = vmatpush.msra.mxu0 0.0
  %5460 = vmatpush.msra.mxu0 %v3329
  %5461 = vmatpush.msra.mxu0 %v3239
  %5462 = vmatpush.msra.mxu0 %v3149
  %5463 = vmatpush.msra.mxu0 %v3059
  %5464 = vmatpush.msra.mxu0 %v2967
  %5465 = vmatmul.f32.gmra.mxu0 %v5122
  %v5466 = vpop.f32.mrf.mxu0
  %v5467 = vadd.f32 0.0, %v5466
  %5468 = vmatmul.f32.gmra.mxu0 %v5125
  %v5469 = vpop.f32.mrf.mxu0
  %v5470 = vadd.f32 0.0, %v5469
  %5471 = vdwg.mxu0
  %5472 = vmatpush.msra.mxu0 0.0
  %5473 = vmatpush.msra.mxu0 0.0
  %5474 = vmatpush.msra.mxu0 0.0
  %5475 = vmatpush.msra.mxu0 0.0
  %5476 = vmatpush.msra.mxu0 0.0
  %5477 = vmatpush.msra.mxu0 0.0
  %5478 = vmatpush.msra.mxu0 0.0
  %5479 = vmatpush.msra.mxu0 0.0
  %5480 = vmatpush.msra.mxu0 0.0
  %5481 = vmatpush.msra.mxu0 0.0
  %5482 = vmatpush.msra.mxu0 0.0
  %5483 = vmatpush.msra.mxu0 %v3330
  %5484 = vmatpush.msra.mxu0 %v3240
  %5485 = vmatpush.msra.mxu0 %v3150
  %5486 = vmatpush.msra.mxu0 %v3060
  %5487 = vmatpush.msra.mxu0 %v2968
  %5488 = vmatmul.f32.gmra.mxu0 %v5122
  %v5489 = vpop.f32.mrf.mxu0
  %v5490 = vadd.f32 0.0, %v5489
  %5491 = vmatmul.f32.gmra.mxu0 %v5125
  %v5492 = vpop.f32.mrf.mxu0
  %v5493 = vadd.f32 0.0, %v5492
  %5494 = vdwg.mxu0
  %5495 = vmatpush.msra.mxu0 0.0
  %5496 = vmatpush.msra.mxu0 0.0
  %5497 = vmatpush.msra.mxu0 0.0
  %5498 = vmatpush.msra.mxu0 0.0
  %5499 = vmatpush.msra.mxu0 0.0
  %5500 = vmatpush.msra.mxu0 0.0
  %5501 = vmatpush.msra.mxu0 0.0
  %5502 = vmatpush.msra.mxu0 0.0
  %5503 = vmatpush.msra.mxu0 0.0
  %5504 = vmatpush.msra.mxu0 0.0
  %5505 = vmatpush.msra.mxu0 0.0
  %5506 = vmatpush.msra.mxu0 %v3331
  %5507 = vmatpush.msra.mxu0 %v3241
  %5508 = vmatpush.msra.mxu0 %v3151
  %5509 = vmatpush.msra.mxu0 %v3061
  %5510 = vmatpush.msra.mxu0 %v2969
  %5511 = vmatmul.f32.gmra.mxu0 %v5122
  %v5512 = vpop.f32.mrf.mxu0
  %v5513 = vadd.f32 0.0, %v5512
  %5514 = vmatmul.f32.gmra.mxu0 %v5125
  %v5515 = vpop.f32.mrf.mxu0
  %v5516 = vadd.f32 0.0, %v5515
  %5517 = vdwg.mxu0
  %5518 = vmatpush.msra.mxu0 0.0
  %5519 = vmatpush.msra.mxu0 0.0
  %5520 = vmatpush.msra.mxu0 0.0
  %5521 = vmatpush.msra.mxu0 0.0
  %5522 = vmatpush.msra.mxu0 0.0
  %5523 = vmatpush.msra.mxu0 0.0
  %5524 = vmatpush.msra.mxu0 0.0
  %5525 = vmatpush.msra.mxu0 0.0
  %5526 = vmatpush.msra.mxu0 0.0
  %5527 = vmatpush.msra.mxu0 0.0
  %5528 = vmatpush.msra.mxu0 0.0
  %5529 = vmatpush.msra.mxu0 %v3332
  %5530 = vmatpush.msra.mxu0 %v3242
  %5531 = vmatpush.msra.mxu0 %v3152
  %5532 = vmatpush.msra.mxu0 %v3062
  %5533 = vmatpush.msra.mxu0 %v2970
  %5534 = vmatmul.f32.gmra.mxu0 %v5122
  %v5535 = vpop.f32.mrf.mxu0
  %v5536 = vadd.f32 0.0, %v5535
  %5537 = vmatmul.f32.gmra.mxu0 %v5125
  %v5538 = vpop.f32.mrf.mxu0
  %v5539 = vadd.f32 0.0, %v5538
  %5540 = vdwg.mxu0
  %v5541 = vadd.f32 %v5082, %v5145
  %v5542 = vadd.f32 %v5083, %v5168
  %v5543 = vadd.f32 %v5084, %v5191
  %v5544 = vadd.f32 %v5085, %v5214
  %v5545 = vadd.f32 %v5086, %v5237
  %v5546 = vadd.f32 %v5087, %v5260
  %v5547 = vadd.f32 %v5088, %v5283
  %v5548 = vadd.f32 %v5089, %v5306
  %v5549 = vadd.f32 %v5090, %v5329
  %v5550 = vadd.f32 %v5091, %v5352
  %v5551 = vadd.f32 %v5092, %v5375
  %v5552 = vadd.f32 %v5093, %v5398
  %v5553 = vadd.f32 %v5094, %v5421
  %v5554 = vadd.f32 %v5095, %v5444
  %v5555 = vadd.f32 %v5096, %v5467
  %v5556 = vadd.f32 %v5097, %v5490
  %v5557 = vadd.f32 %v5098, %v5513
  %v5558 = vadd.f32 %v5099, %v5536
  %v5559 = vadd.f32 %v5100, %v5148
  %v5560 = vadd.f32 %v5101, %v5171
  %v5561 = vadd.f32 %v5102, %v5194
  %v5562 = vadd.f32 %v5103, %v5217
  %v5563 = vadd.f32 %v5104, %v5240
  %v5564 = vadd.f32 %v5105, %v5263
  %v5565 = vadd.f32 %v5106, %v5286
  %v5566 = vadd.f32 %v5107, %v5309
  %v5567 = vadd.f32 %v5108, %v5332
  %v5568 = vadd.f32 %v5109, %v5355
  %v5569 = vadd.f32 %v5110, %v5378
  %v5570 = vadd.f32 %v5111, %v5401
  %v5571 = vadd.f32 %v5112, %v5424
  %v5572 = vadd.f32 %v5113, %v5447
  %v5573 = vadd.f32 %v5114, %v5470
  %v5574 = vadd.f32 %v5115, %v5493
  %v5575 = vadd.f32 %v5116, %v5516
  %v5576 = vadd.f32 %v5117, %v5539
  %5577 = vset.pattern.permute.xlu0 1
  %5578 = vperm.xlu0 %5577, %v23
  %v5579 = vpop.permute.xlu0 %5578
  %5582 = vset.pattern.permute.xlu0 1
  %5583 = vperm.xlu0 %5582, %v24
  %v5584 = vpop.permute.xlu0 %5583
  %v5586 = vadd.f32 %v5541, %v5579
  %v5587 = vadd.f32 %v5542, %v5579
  %v5588 = vadd.f32 %v5543, %v5579
  %v5589 = vadd.f32 %v5544, %v5579
  %v5590 = vadd.f32 %v5545, %v5579
  %v5591 = vadd.f32 %v5546, %v5579
  %v5592 = vadd.f32 %v5547, %v5579
  %v5593 = vadd.f32 %v5548, %v5579
  %v5594 = vadd.f32 %v5549, %v5579
  %v5595 = vadd.f32 %v5550, %v5579
  %v5596 = vadd.f32 %v5551, %v5579
  %v5597 = vadd.f32 %v5552, %v5579
  %v5598 = vadd.f32 %v5553, %v5579
  %v5599 = vadd.f32 %v5554, %v5579
  %v5600 = vadd.f32 %v5555, %v5579
  %v5601 = vadd.f32 %v5556, %v5579
  %v5602 = vadd.f32 %v5557, %v5579
  %v5603 = vadd.f32 %v5558, %v5579
  %v5604 = vadd.f32 %v5559, %v5584
  %v5605 = vadd.f32 %v5560, %v5584
  %v5606 = vadd.f32 %v5561, %v5584
  %v5607 = vadd.f32 %v5562, %v5584
  %v5608 = vadd.f32 %v5563, %v5584
  %v5609 = vadd.f32 %v5564, %v5584
  %v5610 = vadd.f32 %v5565, %v5584
  %v5611 = vadd.f32 %v5566, %v5584
  %v5612 = vadd.f32 %v5567, %v5584
  %v5613 = vadd.f32 %v5568, %v5584
  %v5614 = vadd.f32 %v5569, %v5584
  %v5615 = vadd.f32 %v5570, %v5584
  %v5616 = vadd.f32 %v5571, %v5584
  %v5617 = vadd.f32 %v5572, %v5584
  %v5618 = vadd.f32 %v5573, %v5584
  %v5619 = vadd.f32 %v5574, %v5584
  %v5620 = vadd.f32 %v5575, %v5584
  %v5621 = vadd.f32 %v5576, %v5584
  %v5622 = vmax.f32 %v5586, 0.0
  %v5623 = vmax.f32 %v5587, 0.0
  %v5624 = vmax.f32 %v5588, 0.0
  %v5625 = vmax.f32 %v5589, 0.0
  %v5626 = vmax.f32 %v5590, 0.0
  %v5627 = vmax.f32 %v5591, 0.0
  %v5628 = vmax.f32 %v5592, 0.0
  %v5629 = vmax.f32 %v5593, 0.0
  %v5630 = vmax.f32 %v5594, 0.0
  %v5631 = vmax.f32 %v5595, 0.0
  %v5632 = vmax.f32 %v5596, 0.0
  %v5633 = vmax.f32 %v5597, 0.0
  %v5634 = vmax.f32 %v5598, 0.0
  %v5635 = vmax.f32 %v5599, 0.0
  %v5636 = vmax.f32 %v5600, 0.0
  %v5637 = vmax.f32 %v5601, 0.0
  %v5638 = vmax.f32 %v5602, 0.0
  %v5639 = vmax.f32 %v5603, 0.0
  %v5640 = vmax.f32 %v5604, 0.0
  %v5641 = vmax.f32 %v5605, 0.0
  %v5642 = vmax.f32 %v5606, 0.0
  %v5643 = vmax.f32 %v5607, 0.0
  %v5644 = vmax.f32 %v5608, 0.0
  %v5645 = vmax.f32 %v5609, 0.0
  %v5646 = vmax.f32 %v5610, 0.0
  %v5647 = vmax.f32 %v5611, 0.0
  %v5648 = vmax.f32 %v5612, 0.0
  %v5649 = vmax.f32 %v5613, 0.0
  %v5650 = vmax.f32 %v5614, 0.0
  %v5651 = vmax.f32 %v5615, 0.0
  %v5652 = vmax.f32 %v5616, 0.0
  %v5653 = vmax.f32 %v5617, 0.0
  %v5654 = vmax.f32 %v5618, 0.0
  %v5655 = vmax.f32 %v5619, 0.0
  %v5656 = vmax.f32 %v5620, 0.0
  %v5657 = vmax.f32 %v5621, 0.0
  %5694 = vrot.lane.b32.xlu0 %v5622, 127
  %v5695 = vpop.permute.xlu0 %5694
  %5696 = vrot.lane.b32.xlu0 %v5623, 127
  %v5697 = vpop.permute.xlu0 %5696
  %5698 = vrot.lane.b32.xlu0 %v5624, 127
  %v5699 = vpop.permute.xlu0 %5698
  %5700 = vrot.lane.b32.xlu0 %v5625, 127
  %v5701 = vpop.permute.xlu0 %5700
  %5702 = vrot.lane.b32.xlu0 %v5626, 127
  %v5703 = vpop.permute.xlu0 %5702
  %5704 = vrot.lane.b32.xlu0 %v5627, 127
  %v5705 = vpop.permute.xlu0 %5704
  %5706 = vrot.lane.b32.xlu0 %v5628, 127
  %v5707 = vpop.permute.xlu0 %5706
  %5708 = vrot.lane.b32.xlu0 %v5629, 127
  %v5709 = vpop.permute.xlu0 %5708
  %5710 = vrot.lane.b32.xlu0 %v5630, 127
  %v5711 = vpop.permute.xlu0 %5710
  %5712 = vrot.lane.b32.xlu0 %v5631, 127
  %v5713 = vpop.permute.xlu0 %5712
  %5714 = vrot.lane.b32.xlu0 %v5632, 127
  %v5715 = vpop.permute.xlu0 %5714
  %5716 = vrot.lane.b32.xlu0 %v5633, 127
  %v5717 = vpop.permute.xlu0 %5716
  %5718 = vrot.lane.b32.xlu0 %v5634, 127
  %v5719 = vpop.permute.xlu0 %5718
  %5720 = vrot.lane.b32.xlu0 %v5635, 127
  %v5721 = vpop.permute.xlu0 %5720
  %5722 = vrot.lane.b32.xlu0 %v5636, 127
  %v5723 = vpop.permute.xlu0 %5722
  %5724 = vrot.lane.b32.xlu0 %v5637, 127
  %v5725 = vpop.permute.xlu0 %5724
  %5726 = vrot.lane.b32.xlu0 %v5638, 127
  %v5727 = vpop.permute.xlu0 %5726
  %5728 = vrot.lane.b32.xlu0 %v5639, 127
  %v5729 = vpop.permute.xlu0 %5728
  %5730 = vrot.lane.b32.xlu0 %v5640, 127
  %v5731 = vpop.permute.xlu0 %5730
  %5732 = vrot.lane.b32.xlu0 %v5641, 127
  %v5733 = vpop.permute.xlu0 %5732
  %5734 = vrot.lane.b32.xlu0 %v5642, 127
  %v5735 = vpop.permute.xlu0 %5734
  %5736 = vrot.lane.b32.xlu0 %v5643, 127
  %v5737 = vpop.permute.xlu0 %5736
  %5738 = vrot.lane.b32.xlu0 %v5644, 127
  %v5739 = vpop.permute.xlu0 %5738
  %5740 = vrot.lane.b32.xlu0 %v5645, 127
  %v5741 = vpop.permute.xlu0 %5740
  %5742 = vrot.lane.b32.xlu0 %v5646, 127
  %v5743 = vpop.permute.xlu0 %5742
  %5744 = vrot.lane.b32.xlu0 %v5647, 127
  %v5745 = vpop.permute.xlu0 %5744
  %5746 = vrot.lane.b32.xlu0 %v5648, 127
  %v5747 = vpop.permute.xlu0 %5746
  %5748 = vrot.lane.b32.xlu0 %v5649, 127
  %v5749 = vpop.permute.xlu0 %5748
  %5750 = vrot.lane.b32.xlu0 %v5650, 127
  %v5751 = vpop.permute.xlu0 %5750
  %5752 = vrot.lane.b32.xlu0 %v5651, 127
  %v5753 = vpop.permute.xlu0 %5752
  %5754 = vrot.lane.b32.xlu0 %v5652, 127
  %v5755 = vpop.permute.xlu0 %5754
  %5756 = vrot.lane.b32.xlu0 %v5653, 127
  %v5757 = vpop.permute.xlu0 %5756
  %5758 = vrot.lane.b32.xlu0 %v5654, 127
  %v5759 = vpop.permute.xlu0 %5758
  %5760 = vrot.lane.b32.xlu0 %v5655, 127
  %v5761 = vpop.permute.xlu0 %5760
  %5762 = vrot.lane.b32.xlu0 %v5656, 127
  %v5763 = vpop.permute.xlu0 %5762
  %5764 = vrot.lane.b32.xlu0 %v5657, 127
  %v5765 = vpop.permute.xlu0 %5764
  %v5766 = vsel %vm139, %v5695, %v5697
  %v5767 = vsel %vm139, %v5697, %v5699
  %v5768 = vsel %vm139, %v5699, %v5701
  %v5769 = vsel %vm139, %v5701, %v5703
  %v5770 = vsel %vm139, %v5703, %v5705
  %v5771 = vsel %vm139, %v5705, %v5707
  %v5772 = vsel %vm139, %v5707, %v5709
  %v5773 = vsel %vm139, %v5709, %v5711
  %v5774 = vsel %vm139, %v5711, %v5713
  %v5775 = vsel %vm139, %v5713, %v5715
  %v5776 = vsel %vm139, %v5715, %v5717
  %v5777 = vsel %vm139, %v5717, %v5719
  %v5778 = vsel %vm139, %v5719, %v5721
  %v5779 = vsel %vm139, %v5721, %v5723
  %v5780 = vsel %vm139, %v5723, %v5725
  %v5781 = vsel %vm139, %v5725, %v5727
  %v5782 = vsel %vm139, %v5727, %v5729
  %v5783 = vsel %vm139, %v5731, %v5733
  %v5784 = vsel %vm139, %v5733, %v5735
  %v5785 = vsel %vm139, %v5735, %v5737
  %v5786 = vsel %vm139, %v5737, %v5739
  %v5787 = vsel %vm139, %v5739, %v5741
  %v5788 = vsel %vm139, %v5741, %v5743
  %v5789 = vsel %vm139, %v5743, %v5745
  %v5790 = vsel %vm139, %v5745, %v5747
  %v5791 = vsel %vm139, %v5747, %v5749
  %v5792 = vsel %vm139, %v5749, %v5751
  %v5793 = vsel %vm139, %v5751, %v5753
  %v5794 = vsel %vm139, %v5753, %v5755
  %v5795 = vsel %vm139, %v5755, %v5757
  %v5796 = vsel %vm139, %v5757, %v5759
  %v5797 = vsel %vm139, %v5759, %v5761
  %v5798 = vsel %vm139, %v5761, %v5763
  %v5799 = vsel %vm139, %v5763, %v5765
  %5834 = vrot.lane.b32.xlu0 %v5622, 126
  %v5835 = vpop.permute.xlu0 %5834
  %5836 = vrot.lane.b32.xlu0 %v5623, 126
  %v5837 = vpop.permute.xlu0 %5836
  %5838 = vrot.lane.b32.xlu0 %v5624, 126
  %v5839 = vpop.permute.xlu0 %5838
  %5840 = vrot.lane.b32.xlu0 %v5625, 126
  %v5841 = vpop.permute.xlu0 %5840
  %5842 = vrot.lane.b32.xlu0 %v5626, 126
  %v5843 = vpop.permute.xlu0 %5842
  %5844 = vrot.lane.b32.xlu0 %v5627, 126
  %v5845 = vpop.permute.xlu0 %5844
  %5846 = vrot.lane.b32.xlu0 %v5628, 126
  %v5847 = vpop.permute.xlu0 %5846
  %5848 = vrot.lane.b32.xlu0 %v5629, 126
  %v5849 = vpop.permute.xlu0 %5848
  %5850 = vrot.lane.b32.xlu0 %v5630, 126
  %v5851 = vpop.permute.xlu0 %5850
  %5852 = vrot.lane.b32.xlu0 %v5631, 126
  %v5853 = vpop.permute.xlu0 %5852
  %5854 = vrot.lane.b32.xlu0 %v5632, 126
  %v5855 = vpop.permute.xlu0 %5854
  %5856 = vrot.lane.b32.xlu0 %v5633, 126
  %v5857 = vpop.permute.xlu0 %5856
  %5858 = vrot.lane.b32.xlu0 %v5634, 126
  %v5859 = vpop.permute.xlu0 %5858
  %5860 = vrot.lane.b32.xlu0 %v5635, 126
  %v5861 = vpop.permute.xlu0 %5860
  %5862 = vrot.lane.b32.xlu0 %v5636, 126
  %v5863 = vpop.permute.xlu0 %5862
  %5864 = vrot.lane.b32.xlu0 %v5637, 126
  %v5865 = vpop.permute.xlu0 %5864
  %5866 = vrot.lane.b32.xlu0 %v5638, 126
  %v5867 = vpop.permute.xlu0 %5866
  %5868 = vrot.lane.b32.xlu0 %v5639, 126
  %v5869 = vpop.permute.xlu0 %5868
  %5870 = vrot.lane.b32.xlu0 %v5640, 126
  %v5871 = vpop.permute.xlu0 %5870
  %5872 = vrot.lane.b32.xlu0 %v5641, 126
  %v5873 = vpop.permute.xlu0 %5872
  %5874 = vrot.lane.b32.xlu0 %v5642, 126
  %v5875 = vpop.permute.xlu0 %5874
  %5876 = vrot.lane.b32.xlu0 %v5643, 126
  %v5877 = vpop.permute.xlu0 %5876
  %5878 = vrot.lane.b32.xlu0 %v5644, 126
  %v5879 = vpop.permute.xlu0 %5878
  %5880 = vrot.lane.b32.xlu0 %v5645, 126
  %v5881 = vpop.permute.xlu0 %5880
  %5882 = vrot.lane.b32.xlu0 %v5646, 126
  %v5883 = vpop.permute.xlu0 %5882
  %5884 = vrot.lane.b32.xlu0 %v5647, 126
  %v5885 = vpop.permute.xlu0 %5884
  %5886 = vrot.lane.b32.xlu0 %v5648, 126
  %v5887 = vpop.permute.xlu0 %5886
  %5888 = vrot.lane.b32.xlu0 %v5649, 126
  %v5889 = vpop.permute.xlu0 %5888
  %5890 = vrot.lane.b32.xlu0 %v5650, 126
  %v5891 = vpop.permute.xlu0 %5890
  %5892 = vrot.lane.b32.xlu0 %v5651, 126
  %v5893 = vpop.permute.xlu0 %5892
  %5894 = vrot.lane.b32.xlu0 %v5652, 126
  %v5895 = vpop.permute.xlu0 %5894
  %5896 = vrot.lane.b32.xlu0 %v5653, 126
  %v5897 = vpop.permute.xlu0 %5896
  %5898 = vrot.lane.b32.xlu0 %v5654, 126
  %v5899 = vpop.permute.xlu0 %5898
  %5900 = vrot.lane.b32.xlu0 %v5655, 126
  %v5901 = vpop.permute.xlu0 %5900
  %5902 = vrot.lane.b32.xlu0 %v5656, 126
  %v5903 = vpop.permute.xlu0 %5902
  %5904 = vrot.lane.b32.xlu0 %v5657, 126
  %v5905 = vpop.permute.xlu0 %5904
  %v5906 = vsel %vm250, %v5835, %v5837
  %v5907 = vsel %vm250, %v5837, %v5839
  %v5908 = vsel %vm250, %v5839, %v5841
  %v5909 = vsel %vm250, %v5841, %v5843
  %v5910 = vsel %vm250, %v5843, %v5845
  %v5911 = vsel %vm250, %v5845, %v5847
  %v5912 = vsel %vm250, %v5847, %v5849
  %v5913 = vsel %vm250, %v5849, %v5851
  %v5914 = vsel %vm250, %v5851, %v5853
  %v5915 = vsel %vm250, %v5853, %v5855
  %v5916 = vsel %vm250, %v5855, %v5857
  %v5917 = vsel %vm250, %v5857, %v5859
  %v5918 = vsel %vm250, %v5859, %v5861
  %v5919 = vsel %vm250, %v5861, %v5863
  %v5920 = vsel %vm250, %v5863, %v5865
  %v5921 = vsel %vm250, %v5865, %v5867
  %v5922 = vsel %vm250, %v5867, %v5869
  %v5923 = vsel %vm250, %v5871, %v5873
  %v5924 = vsel %vm250, %v5873, %v5875
  %v5925 = vsel %vm250, %v5875, %v5877
  %v5926 = vsel %vm250, %v5877, %v5879
  %v5927 = vsel %vm250, %v5879, %v5881
  %v5928 = vsel %vm250, %v5881, %v5883
  %v5929 = vsel %vm250, %v5883, %v5885
  %v5930 = vsel %vm250, %v5885, %v5887
  %v5931 = vsel %vm250, %v5887, %v5889
  %v5932 = vsel %vm250, %v5889, %v5891
  %v5933 = vsel %vm250, %v5891, %v5893
  %v5934 = vsel %vm250, %v5893, %v5895
  %v5935 = vsel %vm250, %v5895, %v5897
  %v5936 = vsel %vm250, %v5897, %v5899
  %v5937 = vsel %vm250, %v5899, %v5901
  %v5938 = vsel %vm250, %v5901, %v5903
  %v5939 = vsel %vm250, %v5903, %v5905
  %5974 = vrot.lane.b32.xlu0 %v5622, 125
  %v5975 = vpop.permute.xlu0 %5974
  %5976 = vrot.lane.b32.xlu0 %v5623, 125
  %v5977 = vpop.permute.xlu0 %5976
  %5978 = vrot.lane.b32.xlu0 %v5624, 125
  %v5979 = vpop.permute.xlu0 %5978
  %5980 = vrot.lane.b32.xlu0 %v5625, 125
  %v5981 = vpop.permute.xlu0 %5980
  %5982 = vrot.lane.b32.xlu0 %v5626, 125
  %v5983 = vpop.permute.xlu0 %5982
  %5984 = vrot.lane.b32.xlu0 %v5627, 125
  %v5985 = vpop.permute.xlu0 %5984
  %5986 = vrot.lane.b32.xlu0 %v5628, 125
  %v5987 = vpop.permute.xlu0 %5986
  %5988 = vrot.lane.b32.xlu0 %v5629, 125
  %v5989 = vpop.permute.xlu0 %5988
  %5990 = vrot.lane.b32.xlu0 %v5630, 125
  %v5991 = vpop.permute.xlu0 %5990
  %5992 = vrot.lane.b32.xlu0 %v5631, 125
  %v5993 = vpop.permute.xlu0 %5992
  %5994 = vrot.lane.b32.xlu0 %v5632, 125
  %v5995 = vpop.permute.xlu0 %5994
  %5996 = vrot.lane.b32.xlu0 %v5633, 125
  %v5997 = vpop.permute.xlu0 %5996
  %5998 = vrot.lane.b32.xlu0 %v5634, 125
  %v5999 = vpop.permute.xlu0 %5998
  %6000 = vrot.lane.b32.xlu0 %v5635, 125
  %v6001 = vpop.permute.xlu0 %6000
  %6002 = vrot.lane.b32.xlu0 %v5636, 125
  %v6003 = vpop.permute.xlu0 %6002
  %6004 = vrot.lane.b32.xlu0 %v5637, 125
  %v6005 = vpop.permute.xlu0 %6004
  %6006 = vrot.lane.b32.xlu0 %v5638, 125
  %v6007 = vpop.permute.xlu0 %6006
  %6008 = vrot.lane.b32.xlu0 %v5639, 125
  %v6009 = vpop.permute.xlu0 %6008
  %6010 = vrot.lane.b32.xlu0 %v5640, 125
  %v6011 = vpop.permute.xlu0 %6010
  %6012 = vrot.lane.b32.xlu0 %v5641, 125
  %v6013 = vpop.permute.xlu0 %6012
  %6014 = vrot.lane.b32.xlu0 %v5642, 125
  %v6015 = vpop.permute.xlu0 %6014
  %6016 = vrot.lane.b32.xlu0 %v5643, 125
  %v6017 = vpop.permute.xlu0 %6016
  %6018 = vrot.lane.b32.xlu0 %v5644, 125
  %v6019 = vpop.permute.xlu0 %6018
  %6020 = vrot.lane.b32.xlu0 %v5645, 125
  %v6021 = vpop.permute.xlu0 %6020
  %6022 = vrot.lane.b32.xlu0 %v5646, 125
  %v6023 = vpop.permute.xlu0 %6022
  %6024 = vrot.lane.b32.xlu0 %v5647, 125
  %v6025 = vpop.permute.xlu0 %6024
  %6026 = vrot.lane.b32.xlu0 %v5648, 125
  %v6027 = vpop.permute.xlu0 %6026
  %6028 = vrot.lane.b32.xlu0 %v5649, 125
  %v6029 = vpop.permute.xlu0 %6028
  %6030 = vrot.lane.b32.xlu0 %v5650, 125
  %v6031 = vpop.permute.xlu0 %6030
  %6032 = vrot.lane.b32.xlu0 %v5651, 125
  %v6033 = vpop.permute.xlu0 %6032
  %6034 = vrot.lane.b32.xlu0 %v5652, 125
  %v6035 = vpop.permute.xlu0 %6034
  %6036 = vrot.lane.b32.xlu0 %v5653, 125
  %v6037 = vpop.permute.xlu0 %6036
  %6038 = vrot.lane.b32.xlu0 %v5654, 125
  %v6039 = vpop.permute.xlu0 %6038
  %6040 = vrot.lane.b32.xlu0 %v5655, 125
  %v6041 = vpop.permute.xlu0 %6040
  %6042 = vrot.lane.b32.xlu0 %v5656, 125
  %v6043 = vpop.permute.xlu0 %6042
  %6044 = vrot.lane.b32.xlu0 %v5657, 125
  %v6045 = vpop.permute.xlu0 %6044
  %v6046 = vsel %vm361, %v5975, %v5977
  %v6047 = vsel %vm361, %v5977, %v5979
  %v6048 = vsel %vm361, %v5979, %v5981
  %v6049 = vsel %vm361, %v5981, %v5983
  %v6050 = vsel %vm361, %v5983, %v5985
  %v6051 = vsel %vm361, %v5985, %v5987
  %v6052 = vsel %vm361, %v5987, %v5989
  %v6053 = vsel %vm361, %v5989, %v5991
  %v6054 = vsel %vm361, %v5991, %v5993
  %v6055 = vsel %vm361, %v5993, %v5995
  %v6056 = vsel %vm361, %v5995, %v5997
  %v6057 = vsel %vm361, %v5997, %v5999
  %v6058 = vsel %vm361, %v5999, %v6001
  %v6059 = vsel %vm361, %v6001, %v6003
  %v6060 = vsel %vm361, %v6003, %v6005
  %v6061 = vsel %vm361, %v6005, %v6007
  %v6062 = vsel %vm361, %v6007, %v6009
  %v6063 = vsel %vm361, %v6011, %v6013
  %v6064 = vsel %vm361, %v6013, %v6015
  %v6065 = vsel %vm361, %v6015, %v6017
  %v6066 = vsel %vm361, %v6017, %v6019
  %v6067 = vsel %vm361, %v6019, %v6021
  %v6068 = vsel %vm361, %v6021, %v6023
  %v6069 = vsel %vm361, %v6023, %v6025
  %v6070 = vsel %vm361, %v6025, %v6027
  %v6071 = vsel %vm361, %v6027, %v6029
  %v6072 = vsel %vm361, %v6029, %v6031
  %v6073 = vsel %vm361, %v6031, %v6033
  %v6074 = vsel %vm361, %v6033, %v6035
  %v6075 = vsel %vm361, %v6035, %v6037
  %v6076 = vsel %vm361, %v6037, %v6039
  %v6077 = vsel %vm361, %v6039, %v6041
  %v6078 = vsel %vm361, %v6041, %v6043
  %v6079 = vsel %vm361, %v6043, %v6045
  %6114 = vrot.lane.b32.xlu0 %v5622, 124
  %v6115 = vpop.permute.xlu0 %6114
  %6116 = vrot.lane.b32.xlu0 %v5623, 124
  %v6117 = vpop.permute.xlu0 %6116
  %6118 = vrot.lane.b32.xlu0 %v5624, 124
  %v6119 = vpop.permute.xlu0 %6118
  %6120 = vrot.lane.b32.xlu0 %v5625, 124
  %v6121 = vpop.permute.xlu0 %6120
  %6122 = vrot.lane.b32.xlu0 %v5626, 124
  %v6123 = vpop.permute.xlu0 %6122
  %6124 = vrot.lane.b32.xlu0 %v5627, 124
  %v6125 = vpop.permute.xlu0 %6124
  %6126 = vrot.lane.b32.xlu0 %v5628, 124
  %v6127 = vpop.permute.xlu0 %6126
  %6128 = vrot.lane.b32.xlu0 %v5629, 124
  %v6129 = vpop.permute.xlu0 %6128
  %6130 = vrot.lane.b32.xlu0 %v5630, 124
  %v6131 = vpop.permute.xlu0 %6130
  %6132 = vrot.lane.b32.xlu0 %v5631, 124
  %v6133 = vpop.permute.xlu0 %6132
  %6134 = vrot.lane.b32.xlu0 %v5632, 124
  %v6135 = vpop.permute.xlu0 %6134
  %6136 = vrot.lane.b32.xlu0 %v5633, 124
  %v6137 = vpop.permute.xlu0 %6136
  %6138 = vrot.lane.b32.xlu0 %v5634, 124
  %v6139 = vpop.permute.xlu0 %6138
  %6140 = vrot.lane.b32.xlu0 %v5635, 124
  %v6141 = vpop.permute.xlu0 %6140
  %6142 = vrot.lane.b32.xlu0 %v5636, 124
  %v6143 = vpop.permute.xlu0 %6142
  %6144 = vrot.lane.b32.xlu0 %v5637, 124
  %v6145 = vpop.permute.xlu0 %6144
  %6146 = vrot.lane.b32.xlu0 %v5638, 124
  %v6147 = vpop.permute.xlu0 %6146
  %6148 = vrot.lane.b32.xlu0 %v5639, 124
  %v6149 = vpop.permute.xlu0 %6148
  %6150 = vrot.lane.b32.xlu0 %v5640, 124
  %v6151 = vpop.permute.xlu0 %6150
  %6152 = vrot.lane.b32.xlu0 %v5641, 124
  %v6153 = vpop.permute.xlu0 %6152
  %6154 = vrot.lane.b32.xlu0 %v5642, 124
  %v6155 = vpop.permute.xlu0 %6154
  %6156 = vrot.lane.b32.xlu0 %v5643, 124
  %v6157 = vpop.permute.xlu0 %6156
  %6158 = vrot.lane.b32.xlu0 %v5644, 124
  %v6159 = vpop.permute.xlu0 %6158
  %6160 = vrot.lane.b32.xlu0 %v5645, 124
  %v6161 = vpop.permute.xlu0 %6160
  %6162 = vrot.lane.b32.xlu0 %v5646, 124
  %v6163 = vpop.permute.xlu0 %6162
  %6164 = vrot.lane.b32.xlu0 %v5647, 124
  %v6165 = vpop.permute.xlu0 %6164
  %6166 = vrot.lane.b32.xlu0 %v5648, 124
  %v6167 = vpop.permute.xlu0 %6166
  %6168 = vrot.lane.b32.xlu0 %v5649, 124
  %v6169 = vpop.permute.xlu0 %6168
  %6170 = vrot.lane.b32.xlu0 %v5650, 124
  %v6171 = vpop.permute.xlu0 %6170
  %6172 = vrot.lane.b32.xlu0 %v5651, 124
  %v6173 = vpop.permute.xlu0 %6172
  %6174 = vrot.lane.b32.xlu0 %v5652, 124
  %v6175 = vpop.permute.xlu0 %6174
  %6176 = vrot.lane.b32.xlu0 %v5653, 124
  %v6177 = vpop.permute.xlu0 %6176
  %6178 = vrot.lane.b32.xlu0 %v5654, 124
  %v6179 = vpop.permute.xlu0 %6178
  %6180 = vrot.lane.b32.xlu0 %v5655, 124
  %v6181 = vpop.permute.xlu0 %6180
  %6182 = vrot.lane.b32.xlu0 %v5656, 124
  %v6183 = vpop.permute.xlu0 %6182
  %6184 = vrot.lane.b32.xlu0 %v5657, 124
  %v6185 = vpop.permute.xlu0 %6184
  %v6186 = vsel %vm472, %v6115, %v6117
  %v6187 = vsel %vm472, %v6117, %v6119
  %v6188 = vsel %vm472, %v6119, %v6121
  %v6189 = vsel %vm472, %v6121, %v6123
  %v6190 = vsel %vm472, %v6123, %v6125
  %v6191 = vsel %vm472, %v6125, %v6127
  %v6192 = vsel %vm472, %v6127, %v6129
  %v6193 = vsel %vm472, %v6129, %v6131
  %v6194 = vsel %vm472, %v6131, %v6133
  %v6195 = vsel %vm472, %v6133, %v6135
  %v6196 = vsel %vm472, %v6135, %v6137
  %v6197 = vsel %vm472, %v6137, %v6139
  %v6198 = vsel %vm472, %v6139, %v6141
  %v6199 = vsel %vm472, %v6141, %v6143
  %v6200 = vsel %vm472, %v6143, %v6145
  %v6201 = vsel %vm472, %v6145, %v6147
  %v6202 = vsel %vm472, %v6147, %v6149
  %v6203 = vsel %vm472, %v6151, %v6153
  %v6204 = vsel %vm472, %v6153, %v6155
  %v6205 = vsel %vm472, %v6155, %v6157
  %v6206 = vsel %vm472, %v6157, %v6159
  %v6207 = vsel %vm472, %v6159, %v6161
  %v6208 = vsel %vm472, %v6161, %v6163
  %v6209 = vsel %vm472, %v6163, %v6165
  %v6210 = vsel %vm472, %v6165, %v6167
  %v6211 = vsel %vm472, %v6167, %v6169
  %v6212 = vsel %vm472, %v6169, %v6171
  %v6213 = vsel %vm472, %v6171, %v6173
  %v6214 = vsel %vm472, %v6173, %v6175
  %v6215 = vsel %vm472, %v6175, %v6177
  %v6216 = vsel %vm472, %v6177, %v6179
  %v6217 = vsel %vm472, %v6179, %v6181
  %v6218 = vsel %vm472, %v6181, %v6183
  %v6219 = vsel %vm472, %v6183, %v6185
  %v6254 = vld [vmem:[%s3] sm:$0xff]
  %v6255 = vld [vmem:[%s3 + $0x8] sm:$0xff]
  %v6256 = vld [vmem:[%s3 + $0x10] sm:$0xff]
  %v6257 = vld [vmem:[%s3 + $0x18] sm:$0xff]
  %s6258 = scalar_lea.vmem %s3, 32
  %v6259 = vld [vmem:[%s6258] sm:$0xff]
  %v6260 = vld [vmem:[%s6258 + $0x8] sm:$0xff]
  %v6261 = vld [vmem:[%s6258 + $0x10] sm:$0xff]
  %v6262 = vld [vmem:[%s6258 + $0x18] sm:$0xff]
  %vm6263 = vcmask 654336
  %v6265 = vsel %vm6263, %v6259, 0
  %v6268 = vsel %vm6263, %v6260, 0
  %v6271 = vsel %vm6263, %v6261, 0
  %v6274 = vsel %vm6263, %v6262, 0
  %6276 = vmatpush.msra.mxu0 0.0
  %6277 = vmatpush.msra.mxu0 0.0
  %6278 = vmatpush.msra.mxu0 0.0
  %6279 = vmatpush.msra.mxu0 0.0
  %6280 = vmatpush.msra.mxu0 0.0
  %6281 = vmatpush.msra.mxu0 0.0
  %6282 = vmatpush.msra.mxu0 %v6204
  %6283 = vmatpush.msra.mxu0 %v6187
  %6284 = vmatpush.msra.mxu0 %v6064
  %6285 = vmatpush.msra.mxu0 %v6047
  %6286 = vmatpush.msra.mxu0 %v5924
  %6287 = vmatpush.msra.mxu0 %v5907
  %6288 = vmatpush.msra.mxu0 %v5784
  %6289 = vmatpush.msra.mxu0 %v5767
  %6290 = vmatpush.msra.mxu0 %v5641
  %6291 = vmatpush.msra.mxu0 %v5623
  %6292 = vmatmul.f32.gmra.mxu0 %v6265
  %v6293 = vpop.f32.mrf.mxu0
  %v6294 = vadd.f32 0.0, %v6293
  %6295 = vmatmul.f32.gmra.mxu0 %v6268
  %v6296 = vpop.f32.mrf.mxu0
  %v6297 = vadd.f32 0.0, %v6296
  %6298 = vmatmul.f32.gmra.mxu0 %v6271
  %v6299 = vpop.f32.mrf.mxu0
  %v6300 = vadd.f32 0.0, %v6299
  %6301 = vmatmul.f32.gmra.mxu0 %v6274
  %v6302 = vpop.f32.mrf.mxu0
  %v6303 = vadd.f32 0.0, %v6302
  %6304 = vdwg.mxu0
  %6305 = vmatpush.msra.mxu0 0.0
  %6306 = vmatpush.msra.mxu0 0.0
  %6307 = vmatpush.msra.mxu0 0.0
  %6308 = vmatpush.msra.mxu0 0.0
  %6309 = vmatpush.msra.mxu0 0.0
  %6310 = vmatpush.msra.mxu0 0.0
  %6311 = vmatpush.msra.mxu0 %v6205
  %6312 = vmatpush.msra.mxu0 %v6188
  %6313 = vmatpush.msra.mxu0 %v6065
  %6314 = vmatpush.msra.mxu0 %v6048
  %6315 = vmatpush.msra.mxu0 %v5925
  %6316 = vmatpush.msra.mxu0 %v5908
  %6317 = vmatpush.msra.mxu0 %v5785
  %6318 = vmatpush.msra.mxu0 %v5768
  %6319 = vmatpush.msra.mxu0 %v5642
  %6320 = vmatpush.msra.mxu0 %v5624
  %6321 = vmatmul.f32.gmra.mxu0 %v6265
  %v6322 = vpop.f32.mrf.mxu0
  %v6323 = vadd.f32 0.0, %v6322
  %6324 = vmatmul.f32.gmra.mxu0 %v6268
  %v6325 = vpop.f32.mrf.mxu0
  %v6326 = vadd.f32 0.0, %v6325
  %6327 = vmatmul.f32.gmra.mxu0 %v6271
  %v6328 = vpop.f32.mrf.mxu0
  %v6329 = vadd.f32 0.0, %v6328
  %6330 = vmatmul.f32.gmra.mxu0 %v6274
  %v6331 = vpop.f32.mrf.mxu0
  %v6332 = vadd.f32 0.0, %v6331
  %6333 = vdwg.mxu0
  %6334 = vmatpush.msra.mxu0 0.0
  %6335 = vmatpush.msra.mxu0 0.0
  %6336 = vmatpush.msra.mxu0 0.0
  %6337 = vmatpush.msra.mxu0 0.0
  %6338 = vmatpush.msra.mxu0 0.0
  %6339 = vmatpush.msra.mxu0 0.0
  %6340 = vmatpush.msra.mxu0 %v6206
  %6341 = vmatpush.msra.mxu0 %v6189
  %6342 = vmatpush.msra.mxu0 %v6066
  %6343 = vmatpush.msra.mxu0 %v6049
  %6344 = vmatpush.msra.mxu0 %v5926
  %6345 = vmatpush.msra.mxu0 %v5909
  %6346 = vmatpush.msra.mxu0 %v5786
  %6347 = vmatpush.msra.mxu0 %v5769
  %6348 = vmatpush.msra.mxu0 %v5643
  %6349 = vmatpush.msra.mxu0 %v5625
  %6350 = vmatmul.f32.gmra.mxu0 %v6265
  %v6351 = vpop.f32.mrf.mxu0
  %v6352 = vadd.f32 0.0, %v6351
  %6353 = vmatmul.f32.gmra.mxu0 %v6268
  %v6354 = vpop.f32.mrf.mxu0
  %v6355 = vadd.f32 0.0, %v6354
  %6356 = vmatmul.f32.gmra.mxu0 %v6271
  %v6357 = vpop.f32.mrf.mxu0
  %v6358 = vadd.f32 0.0, %v6357
  %6359 = vmatmul.f32.gmra.mxu0 %v6274
  %v6360 = vpop.f32.mrf.mxu0
  %v6361 = vadd.f32 0.0, %v6360
  %6362 = vdwg.mxu0
  %6363 = vmatpush.msra.mxu0 0.0
  %6364 = vmatpush.msra.mxu0 0.0
  %6365 = vmatpush.msra.mxu0 0.0
  %6366 = vmatpush.msra.mxu0 0.0
  %6367 = vmatpush.msra.mxu0 0.0
  %6368 = vmatpush.msra.mxu0 0.0
  %6369 = vmatpush.msra.mxu0 %v6207
  %6370 = vmatpush.msra.mxu0 %v6190
  %6371 = vmatpush.msra.mxu0 %v6067
  %6372 = vmatpush.msra.mxu0 %v6050
  %6373 = vmatpush.msra.mxu0 %v5927
  %6374 = vmatpush.msra.mxu0 %v5910
  %6375 = vmatpush.msra.mxu0 %v5787
  %6376 = vmatpush.msra.mxu0 %v5770
  %6377 = vmatpush.msra.mxu0 %v5644
  %6378 = vmatpush.msra.mxu0 %v5626
  %6379 = vmatmul.f32.gmra.mxu0 %v6265
  %v6380 = vpop.f32.mrf.mxu0
  %v6381 = vadd.f32 0.0, %v6380
  %6382 = vmatmul.f32.gmra.mxu0 %v6268
  %v6383 = vpop.f32.mrf.mxu0
  %v6384 = vadd.f32 0.0, %v6383
  %6385 = vmatmul.f32.gmra.mxu0 %v6271
  %v6386 = vpop.f32.mrf.mxu0
  %v6387 = vadd.f32 0.0, %v6386
  %6388 = vmatmul.f32.gmra.mxu0 %v6274
  %v6389 = vpop.f32.mrf.mxu0
  %v6390 = vadd.f32 0.0, %v6389
  %6391 = vdwg.mxu0
  %6392 = vmatpush.msra.mxu0 0.0
  %6393 = vmatpush.msra.mxu0 0.0
  %6394 = vmatpush.msra.mxu0 0.0
  %6395 = vmatpush.msra.mxu0 0.0
  %6396 = vmatpush.msra.mxu0 0.0
  %6397 = vmatpush.msra.mxu0 0.0
  %6398 = vmatpush.msra.mxu0 %v6208
  %6399 = vmatpush.msra.mxu0 %v6191
  %6400 = vmatpush.msra.mxu0 %v6068
  %6401 = vmatpush.msra.mxu0 %v6051
  %6402 = vmatpush.msra.mxu0 %v5928
  %6403 = vmatpush.msra.mxu0 %v5911
  %6404 = vmatpush.msra.mxu0 %v5788
  %6405 = vmatpush.msra.mxu0 %v5771
  %6406 = vmatpush.msra.mxu0 %v5645
  %6407 = vmatpush.msra.mxu0 %v5627
  %6408 = vmatmul.f32.gmra.mxu0 %v6265
  %v6409 = vpop.f32.mrf.mxu0
  %v6410 = vadd.f32 0.0, %v6409
  %6411 = vmatmul.f32.gmra.mxu0 %v6268
  %v6412 = vpop.f32.mrf.mxu0
  %v6413 = vadd.f32 0.0, %v6412
  %6414 = vmatmul.f32.gmra.mxu0 %v6271
  %v6415 = vpop.f32.mrf.mxu0
  %v6416 = vadd.f32 0.0, %v6415
  %6417 = vmatmul.f32.gmra.mxu0 %v6274
  %v6418 = vpop.f32.mrf.mxu0
  %v6419 = vadd.f32 0.0, %v6418
  %6420 = vdwg.mxu0
  %6421 = vmatpush.msra.mxu0 0.0
  %6422 = vmatpush.msra.mxu0 0.0
  %6423 = vmatpush.msra.mxu0 0.0
  %6424 = vmatpush.msra.mxu0 0.0
  %6425 = vmatpush.msra.mxu0 0.0
  %6426 = vmatpush.msra.mxu0 0.0
  %6427 = vmatpush.msra.mxu0 %v6209
  %6428 = vmatpush.msra.mxu0 %v6192
  %6429 = vmatpush.msra.mxu0 %v6069
  %6430 = vmatpush.msra.mxu0 %v6052
  %6431 = vmatpush.msra.mxu0 %v5929
  %6432 = vmatpush.msra.mxu0 %v5912
  %6433 = vmatpush.msra.mxu0 %v5789
  %6434 = vmatpush.msra.mxu0 %v5772
  %6435 = vmatpush.msra.mxu0 %v5646
  %6436 = vmatpush.msra.mxu0 %v5628
  %6437 = vmatmul.f32.gmra.mxu0 %v6265
  %v6438 = vpop.f32.mrf.mxu0
  %v6439 = vadd.f32 0.0, %v6438
  %6440 = vmatmul.f32.gmra.mxu0 %v6268
  %v6441 = vpop.f32.mrf.mxu0
  %v6442 = vadd.f32 0.0, %v6441
  %6443 = vmatmul.f32.gmra.mxu0 %v6271
  %v6444 = vpop.f32.mrf.mxu0
  %v6445 = vadd.f32 0.0, %v6444
  %6446 = vmatmul.f32.gmra.mxu0 %v6274
  %v6447 = vpop.f32.mrf.mxu0
  %v6448 = vadd.f32 0.0, %v6447
  %6449 = vdwg.mxu0
  %6450 = vmatpush.msra.mxu0 0.0
  %6451 = vmatpush.msra.mxu0 0.0
  %6452 = vmatpush.msra.mxu0 0.0
  %6453 = vmatpush.msra.mxu0 0.0
  %6454 = vmatpush.msra.mxu0 0.0
  %6455 = vmatpush.msra.mxu0 0.0
  %6456 = vmatpush.msra.mxu0 %v6210
  %6457 = vmatpush.msra.mxu0 %v6193
  %6458 = vmatpush.msra.mxu0 %v6070
  %6459 = vmatpush.msra.mxu0 %v6053
  %6460 = vmatpush.msra.mxu0 %v5930
  %6461 = vmatpush.msra.mxu0 %v5913
  %6462 = vmatpush.msra.mxu0 %v5790
  %6463 = vmatpush.msra.mxu0 %v5773
  %6464 = vmatpush.msra.mxu0 %v5647
  %6465 = vmatpush.msra.mxu0 %v5629
  %6466 = vmatmul.f32.gmra.mxu0 %v6265
  %v6467 = vpop.f32.mrf.mxu0
  %v6468 = vadd.f32 0.0, %v6467
  %6469 = vmatmul.f32.gmra.mxu0 %v6268
  %v6470 = vpop.f32.mrf.mxu0
  %v6471 = vadd.f32 0.0, %v6470
  %6472 = vmatmul.f32.gmra.mxu0 %v6271
  %v6473 = vpop.f32.mrf.mxu0
  %v6474 = vadd.f32 0.0, %v6473
  %6475 = vmatmul.f32.gmra.mxu0 %v6274
  %v6476 = vpop.f32.mrf.mxu0
  %v6477 = vadd.f32 0.0, %v6476
  %6478 = vdwg.mxu0
  %6479 = vmatpush.msra.mxu0 0.0
  %6480 = vmatpush.msra.mxu0 0.0
  %6481 = vmatpush.msra.mxu0 0.0
  %6482 = vmatpush.msra.mxu0 0.0
  %6483 = vmatpush.msra.mxu0 0.0
  %6484 = vmatpush.msra.mxu0 0.0
  %6485 = vmatpush.msra.mxu0 %v6211
  %6486 = vmatpush.msra.mxu0 %v6194
  %6487 = vmatpush.msra.mxu0 %v6071
  %6488 = vmatpush.msra.mxu0 %v6054
  %6489 = vmatpush.msra.mxu0 %v5931
  %6490 = vmatpush.msra.mxu0 %v5914
  %6491 = vmatpush.msra.mxu0 %v5791
  %6492 = vmatpush.msra.mxu0 %v5774
  %6493 = vmatpush.msra.mxu0 %v5648
  %6494 = vmatpush.msra.mxu0 %v5630
  %6495 = vmatmul.f32.gmra.mxu0 %v6265
  %v6496 = vpop.f32.mrf.mxu0
  %v6497 = vadd.f32 0.0, %v6496
  %6498 = vmatmul.f32.gmra.mxu0 %v6268
  %v6499 = vpop.f32.mrf.mxu0
  %v6500 = vadd.f32 0.0, %v6499
  %6501 = vmatmul.f32.gmra.mxu0 %v6271
  %v6502 = vpop.f32.mrf.mxu0
  %v6503 = vadd.f32 0.0, %v6502
  %6504 = vmatmul.f32.gmra.mxu0 %v6274
  %v6505 = vpop.f32.mrf.mxu0
  %v6506 = vadd.f32 0.0, %v6505
  %6507 = vdwg.mxu0
  %6508 = vmatpush.msra.mxu0 0.0
  %6509 = vmatpush.msra.mxu0 0.0
  %6510 = vmatpush.msra.mxu0 0.0
  %6511 = vmatpush.msra.mxu0 0.0
  %6512 = vmatpush.msra.mxu0 0.0
  %6513 = vmatpush.msra.mxu0 0.0
  %6514 = vmatpush.msra.mxu0 %v6212
  %6515 = vmatpush.msra.mxu0 %v6195
  %6516 = vmatpush.msra.mxu0 %v6072
  %6517 = vmatpush.msra.mxu0 %v6055
  %6518 = vmatpush.msra.mxu0 %v5932
  %6519 = vmatpush.msra.mxu0 %v5915
  %6520 = vmatpush.msra.mxu0 %v5792
  %6521 = vmatpush.msra.mxu0 %v5775
  %6522 = vmatpush.msra.mxu0 %v5649
  %6523 = vmatpush.msra.mxu0 %v5631
  %6524 = vmatmul.f32.gmra.mxu0 %v6265
  %v6525 = vpop.f32.mrf.mxu0
  %v6526 = vadd.f32 0.0, %v6525
  %6527 = vmatmul.f32.gmra.mxu0 %v6268
  %v6528 = vpop.f32.mrf.mxu0
  %v6529 = vadd.f32 0.0, %v6528
  %6530 = vmatmul.f32.gmra.mxu0 %v6271
  %v6531 = vpop.f32.mrf.mxu0
  %v6532 = vadd.f32 0.0, %v6531
  %6533 = vmatmul.f32.gmra.mxu0 %v6274
  %v6534 = vpop.f32.mrf.mxu0
  %v6535 = vadd.f32 0.0, %v6534
  %6536 = vdwg.mxu0
  %6537 = vmatpush.msra.mxu0 0.0
  %6538 = vmatpush.msra.mxu0 0.0
  %6539 = vmatpush.msra.mxu0 0.0
  %6540 = vmatpush.msra.mxu0 0.0
  %6541 = vmatpush.msra.mxu0 0.0
  %6542 = vmatpush.msra.mxu0 0.0
  %6543 = vmatpush.msra.mxu0 %v6213
  %6544 = vmatpush.msra.mxu0 %v6196
  %6545 = vmatpush.msra.mxu0 %v6073
  %6546 = vmatpush.msra.mxu0 %v6056
  %6547 = vmatpush.msra.mxu0 %v5933
  %6548 = vmatpush.msra.mxu0 %v5916
  %6549 = vmatpush.msra.mxu0 %v5793
  %6550 = vmatpush.msra.mxu0 %v5776
  %6551 = vmatpush.msra.mxu0 %v5650
  %6552 = vmatpush.msra.mxu0 %v5632
  %6553 = vmatmul.f32.gmra.mxu0 %v6265
  %v6554 = vpop.f32.mrf.mxu0
  %v6555 = vadd.f32 0.0, %v6554
  %6556 = vmatmul.f32.gmra.mxu0 %v6268
  %v6557 = vpop.f32.mrf.mxu0
  %v6558 = vadd.f32 0.0, %v6557
  %6559 = vmatmul.f32.gmra.mxu0 %v6271
  %v6560 = vpop.f32.mrf.mxu0
  %v6561 = vadd.f32 0.0, %v6560
  %6562 = vmatmul.f32.gmra.mxu0 %v6274
  %v6563 = vpop.f32.mrf.mxu0
  %v6564 = vadd.f32 0.0, %v6563
  %6565 = vdwg.mxu0
  %6566 = vmatpush.msra.mxu0 0.0
  %6567 = vmatpush.msra.mxu0 0.0
  %6568 = vmatpush.msra.mxu0 0.0
  %6569 = vmatpush.msra.mxu0 0.0
  %6570 = vmatpush.msra.mxu0 0.0
  %6571 = vmatpush.msra.mxu0 0.0
  %6572 = vmatpush.msra.mxu0 %v6214
  %6573 = vmatpush.msra.mxu0 %v6197
  %6574 = vmatpush.msra.mxu0 %v6074
  %6575 = vmatpush.msra.mxu0 %v6057
  %6576 = vmatpush.msra.mxu0 %v5934
  %6577 = vmatpush.msra.mxu0 %v5917
  %6578 = vmatpush.msra.mxu0 %v5794
  %6579 = vmatpush.msra.mxu0 %v5777
  %6580 = vmatpush.msra.mxu0 %v5651
  %6581 = vmatpush.msra.mxu0 %v5633
  %6582 = vmatmul.f32.gmra.mxu0 %v6265
  %v6583 = vpop.f32.mrf.mxu0
  %v6584 = vadd.f32 0.0, %v6583
  %6585 = vmatmul.f32.gmra.mxu0 %v6268
  %v6586 = vpop.f32.mrf.mxu0
  %v6587 = vadd.f32 0.0, %v6586
  %6588 = vmatmul.f32.gmra.mxu0 %v6271
  %v6589 = vpop.f32.mrf.mxu0
  %v6590 = vadd.f32 0.0, %v6589
  %6591 = vmatmul.f32.gmra.mxu0 %v6274
  %v6592 = vpop.f32.mrf.mxu0
  %v6593 = vadd.f32 0.0, %v6592
  %6594 = vdwg.mxu0
  %6595 = vmatpush.msra.mxu0 0.0
  %6596 = vmatpush.msra.mxu0 0.0
  %6597 = vmatpush.msra.mxu0 0.0
  %6598 = vmatpush.msra.mxu0 0.0
  %6599 = vmatpush.msra.mxu0 0.0
  %6600 = vmatpush.msra.mxu0 0.0
  %6601 = vmatpush.msra.mxu0 %v6215
  %6602 = vmatpush.msra.mxu0 %v6198
  %6603 = vmatpush.msra.mxu0 %v6075
  %6604 = vmatpush.msra.mxu0 %v6058
  %6605 = vmatpush.msra.mxu0 %v5935
  %6606 = vmatpush.msra.mxu0 %v5918
  %6607 = vmatpush.msra.mxu0 %v5795
  %6608 = vmatpush.msra.mxu0 %v5778
  %6609 = vmatpush.msra.mxu0 %v5652
  %6610 = vmatpush.msra.mxu0 %v5634
  %6611 = vmatmul.f32.gmra.mxu0 %v6265
  %v6612 = vpop.f32.mrf.mxu0
  %v6613 = vadd.f32 0.0, %v6612
  %6614 = vmatmul.f32.gmra.mxu0 %v6268
  %v6615 = vpop.f32.mrf.mxu0
  %v6616 = vadd.f32 0.0, %v6615
  %6617 = vmatmul.f32.gmra.mxu0 %v6271
  %v6618 = vpop.f32.mrf.mxu0
  %v6619 = vadd.f32 0.0, %v6618
  %6620 = vmatmul.f32.gmra.mxu0 %v6274
  %v6621 = vpop.f32.mrf.mxu0
  %v6622 = vadd.f32 0.0, %v6621
  %6623 = vdwg.mxu0
  %6624 = vmatpush.msra.mxu0 0.0
  %6625 = vmatpush.msra.mxu0 0.0
  %6626 = vmatpush.msra.mxu0 0.0
  %6627 = vmatpush.msra.mxu0 0.0
  %6628 = vmatpush.msra.mxu0 0.0
  %6629 = vmatpush.msra.mxu0 0.0
  %6630 = vmatpush.msra.mxu0 %v6216
  %6631 = vmatpush.msra.mxu0 %v6199
  %6632 = vmatpush.msra.mxu0 %v6076
  %6633 = vmatpush.msra.mxu0 %v6059
  %6634 = vmatpush.msra.mxu0 %v5936
  %6635 = vmatpush.msra.mxu0 %v5919
  %6636 = vmatpush.msra.mxu0 %v5796
  %6637 = vmatpush.msra.mxu0 %v5779
  %6638 = vmatpush.msra.mxu0 %v5653
  %6639 = vmatpush.msra.mxu0 %v5635
  %6640 = vmatmul.f32.gmra.mxu0 %v6265
  %v6641 = vpop.f32.mrf.mxu0
  %v6642 = vadd.f32 0.0, %v6641
  %6643 = vmatmul.f32.gmra.mxu0 %v6268
  %v6644 = vpop.f32.mrf.mxu0
  %v6645 = vadd.f32 0.0, %v6644
  %6646 = vmatmul.f32.gmra.mxu0 %v6271
  %v6647 = vpop.f32.mrf.mxu0
  %v6648 = vadd.f32 0.0, %v6647
  %6649 = vmatmul.f32.gmra.mxu0 %v6274
  %v6650 = vpop.f32.mrf.mxu0
  %v6651 = vadd.f32 0.0, %v6650
  %6652 = vdwg.mxu0
  %v6654 = vsel %vm6263, %v6254, 0
  %v6657 = vsel %vm6263, %v6255, 0
  %v6660 = vsel %vm6263, %v6256, 0
  %v6663 = vsel %vm6263, %v6257, 0
  %6665 = vmatpush.msra.mxu0 0.0
  %6666 = vmatpush.msra.mxu0 0.0
  %6667 = vmatpush.msra.mxu0 0.0
  %6668 = vmatpush.msra.mxu0 0.0
  %6669 = vmatpush.msra.mxu0 0.0
  %6670 = vmatpush.msra.mxu0 0.0
  %6671 = vmatpush.msra.mxu0 %v6203
  %6672 = vmatpush.msra.mxu0 %v6186
  %6673 = vmatpush.msra.mxu0 %v6063
  %6674 = vmatpush.msra.mxu0 %v6046
  %6675 = vmatpush.msra.mxu0 %v5923
  %6676 = vmatpush.msra.mxu0 %v5906
  %6677 = vmatpush.msra.mxu0 %v5783
  %6678 = vmatpush.msra.mxu0 %v5766
  %6679 = vmatpush.msra.mxu0 %v5640
  %6680 = vmatpush.msra.mxu0 %v5622
  %6681 = vmatmul.f32.gmra.mxu0 %v6654
  %v6682 = vpop.f32.mrf.mxu0
  %v6683 = vadd.f32 %v6294, %v6682
  %6684 = vmatmul.f32.gmra.mxu0 %v6657
  %v6685 = vpop.f32.mrf.mxu0
  %v6686 = vadd.f32 %v6297, %v6685
  %6687 = vmatmul.f32.gmra.mxu0 %v6660
  %v6688 = vpop.f32.mrf.mxu0
  %v6689 = vadd.f32 %v6300, %v6688
  %6690 = vmatmul.f32.gmra.mxu0 %v6663
  %v6691 = vpop.f32.mrf.mxu0
  %v6692 = vadd.f32 %v6303, %v6691
  %6693 = vdwg.mxu0
  %6694 = vmatpush.msra.mxu0 0.0
  %6695 = vmatpush.msra.mxu0 0.0
  %6696 = vmatpush.msra.mxu0 0.0
  %6697 = vmatpush.msra.mxu0 0.0
  %6698 = vmatpush.msra.mxu0 0.0
  %6699 = vmatpush.msra.mxu0 0.0
  %6700 = vmatpush.msra.mxu0 %v6204
  %6701 = vmatpush.msra.mxu0 %v6187
  %6702 = vmatpush.msra.mxu0 %v6064
  %6703 = vmatpush.msra.mxu0 %v6047
  %6704 = vmatpush.msra.mxu0 %v5924
  %6705 = vmatpush.msra.mxu0 %v5907
  %6706 = vmatpush.msra.mxu0 %v5784
  %6707 = vmatpush.msra.mxu0 %v5767
  %6708 = vmatpush.msra.mxu0 %v5641
  %6709 = vmatpush.msra.mxu0 %v5623
  %6710 = vmatmul.f32.gmra.mxu0 %v6654
  %v6711 = vpop.f32.mrf.mxu0
  %v6712 = vadd.f32 %v6323, %v6711
  %6713 = vmatmul.f32.gmra.mxu0 %v6657
  %v6714 = vpop.f32.mrf.mxu0
  %v6715 = vadd.f32 %v6326, %v6714
  %6716 = vmatmul.f32.gmra.mxu0 %v6660
  %v6717 = vpop.f32.mrf.mxu0
  %v6718 = vadd.f32 %v6329, %v6717
  %6719 = vmatmul.f32.gmra.mxu0 %v6663
  %v6720 = vpop.f32.mrf.mxu0
  %v6721 = vadd.f32 %v6332, %v6720
  %6722 = vdwg.mxu0
  %6723 = vmatpush.msra.mxu0 0.0
  %6724 = vmatpush.msra.mxu0 0.0
  %6725 = vmatpush.msra.mxu0 0.0
  %6726 = vmatpush.msra.mxu0 0.0
  %6727 = vmatpush.msra.mxu0 0.0
  %6728 = vmatpush.msra.mxu0 0.0
  %6729 = vmatpush.msra.mxu0 %v6205
  %6730 = vmatpush.msra.mxu0 %v6188
  %6731 = vmatpush.msra.mxu0 %v6065
  %6732 = vmatpush.msra.mxu0 %v6048
  %6733 = vmatpush.msra.mxu0 %v5925
  %6734 = vmatpush.msra.mxu0 %v5908
  %6735 = vmatpush.msra.mxu0 %v5785
  %6736 = vmatpush.msra.mxu0 %v5768
  %6737 = vmatpush.msra.mxu0 %v5642
  %6738 = vmatpush.msra.mxu0 %v5624
  %6739 = vmatmul.f32.gmra.mxu0 %v6654
  %v6740 = vpop.f32.mrf.mxu0
  %v6741 = vadd.f32 %v6352, %v6740
  %6742 = vmatmul.f32.gmra.mxu0 %v6657
  %v6743 = vpop.f32.mrf.mxu0
  %v6744 = vadd.f32 %v6355, %v6743
  %6745 = vmatmul.f32.gmra.mxu0 %v6660
  %v6746 = vpop.f32.mrf.mxu0
  %v6747 = vadd.f32 %v6358, %v6746
  %6748 = vmatmul.f32.gmra.mxu0 %v6663
  %v6749 = vpop.f32.mrf.mxu0
  %v6750 = vadd.f32 %v6361, %v6749
  %6751 = vdwg.mxu0
  %6752 = vmatpush.msra.mxu0 0.0
  %6753 = vmatpush.msra.mxu0 0.0
  %6754 = vmatpush.msra.mxu0 0.0
  %6755 = vmatpush.msra.mxu0 0.0
  %6756 = vmatpush.msra.mxu0 0.0
  %6757 = vmatpush.msra.mxu0 0.0
  %6758 = vmatpush.msra.mxu0 %v6206
  %6759 = vmatpush.msra.mxu0 %v6189
  %6760 = vmatpush.msra.mxu0 %v6066
  %6761 = vmatpush.msra.mxu0 %v6049
  %6762 = vmatpush.msra.mxu0 %v5926
  %6763 = vmatpush.msra.mxu0 %v5909
  %6764 = vmatpush.msra.mxu0 %v5786
  %6765 = vmatpush.msra.mxu0 %v5769
  %6766 = vmatpush.msra.mxu0 %v5643
  %6767 = vmatpush.msra.mxu0 %v5625
  %6768 = vmatmul.f32.gmra.mxu0 %v6654
  %v6769 = vpop.f32.mrf.mxu0
  %v6770 = vadd.f32 %v6381, %v6769
  %6771 = vmatmul.f32.gmra.mxu0 %v6657
  %v6772 = vpop.f32.mrf.mxu0
  %v6773 = vadd.f32 %v6384, %v6772
  %6774 = vmatmul.f32.gmra.mxu0 %v6660
  %v6775 = vpop.f32.mrf.mxu0
  %v6776 = vadd.f32 %v6387, %v6775
  %6777 = vmatmul.f32.gmra.mxu0 %v6663
  %v6778 = vpop.f32.mrf.mxu0
  %v6779 = vadd.f32 %v6390, %v6778
  %6780 = vdwg.mxu0
  %6781 = vmatpush.msra.mxu0 0.0
  %6782 = vmatpush.msra.mxu0 0.0
  %6783 = vmatpush.msra.mxu0 0.0
  %6784 = vmatpush.msra.mxu0 0.0
  %6785 = vmatpush.msra.mxu0 0.0
  %6786 = vmatpush.msra.mxu0 0.0
  %6787 = vmatpush.msra.mxu0 %v6207
  %6788 = vmatpush.msra.mxu0 %v6190
  %6789 = vmatpush.msra.mxu0 %v6067
  %6790 = vmatpush.msra.mxu0 %v6050
  %6791 = vmatpush.msra.mxu0 %v5927
  %6792 = vmatpush.msra.mxu0 %v5910
  %6793 = vmatpush.msra.mxu0 %v5787
  %6794 = vmatpush.msra.mxu0 %v5770
  %6795 = vmatpush.msra.mxu0 %v5644
  %6796 = vmatpush.msra.mxu0 %v5626
  %6797 = vmatmul.f32.gmra.mxu0 %v6654
  %v6798 = vpop.f32.mrf.mxu0
  %v6799 = vadd.f32 %v6410, %v6798
  %6800 = vmatmul.f32.gmra.mxu0 %v6657
  %v6801 = vpop.f32.mrf.mxu0
  %v6802 = vadd.f32 %v6413, %v6801
  %6803 = vmatmul.f32.gmra.mxu0 %v6660
  %v6804 = vpop.f32.mrf.mxu0
  %v6805 = vadd.f32 %v6416, %v6804
  %6806 = vmatmul.f32.gmra.mxu0 %v6663
  %v6807 = vpop.f32.mrf.mxu0
  %v6808 = vadd.f32 %v6419, %v6807
  %6809 = vdwg.mxu0
  %6810 = vmatpush.msra.mxu0 0.0
  %6811 = vmatpush.msra.mxu0 0.0
  %6812 = vmatpush.msra.mxu0 0.0
  %6813 = vmatpush.msra.mxu0 0.0
  %6814 = vmatpush.msra.mxu0 0.0
  %6815 = vmatpush.msra.mxu0 0.0
  %6816 = vmatpush.msra.mxu0 %v6208
  %6817 = vmatpush.msra.mxu0 %v6191
  %6818 = vmatpush.msra.mxu0 %v6068
  %6819 = vmatpush.msra.mxu0 %v6051
  %6820 = vmatpush.msra.mxu0 %v5928
  %6821 = vmatpush.msra.mxu0 %v5911
  %6822 = vmatpush.msra.mxu0 %v5788
  %6823 = vmatpush.msra.mxu0 %v5771
  %6824 = vmatpush.msra.mxu0 %v5645
  %6825 = vmatpush.msra.mxu0 %v5627
  %6826 = vmatmul.f32.gmra.mxu0 %v6654
  %v6827 = vpop.f32.mrf.mxu0
  %v6828 = vadd.f32 %v6439, %v6827
  %6829 = vmatmul.f32.gmra.mxu0 %v6657
  %v6830 = vpop.f32.mrf.mxu0
  %v6831 = vadd.f32 %v6442, %v6830
  %6832 = vmatmul.f32.gmra.mxu0 %v6660
  %v6833 = vpop.f32.mrf.mxu0
  %v6834 = vadd.f32 %v6445, %v6833
  %6835 = vmatmul.f32.gmra.mxu0 %v6663
  %v6836 = vpop.f32.mrf.mxu0
  %v6837 = vadd.f32 %v6448, %v6836
  %6838 = vdwg.mxu0
  %6839 = vmatpush.msra.mxu0 0.0
  %6840 = vmatpush.msra.mxu0 0.0
  %6841 = vmatpush.msra.mxu0 0.0
  %6842 = vmatpush.msra.mxu0 0.0
  %6843 = vmatpush.msra.mxu0 0.0
  %6844 = vmatpush.msra.mxu0 0.0
  %6845 = vmatpush.msra.mxu0 %v6209
  %6846 = vmatpush.msra.mxu0 %v6192
  %6847 = vmatpush.msra.mxu0 %v6069
  %6848 = vmatpush.msra.mxu0 %v6052
  %6849 = vmatpush.msra.mxu0 %v5929
  %6850 = vmatpush.msra.mxu0 %v5912
  %6851 = vmatpush.msra.mxu0 %v5789
  %6852 = vmatpush.msra.mxu0 %v5772
  %6853 = vmatpush.msra.mxu0 %v5646
  %6854 = vmatpush.msra.mxu0 %v5628
  %6855 = vmatmul.f32.gmra.mxu0 %v6654
  %v6856 = vpop.f32.mrf.mxu0
  %v6857 = vadd.f32 %v6468, %v6856
  %6858 = vmatmul.f32.gmra.mxu0 %v6657
  %v6859 = vpop.f32.mrf.mxu0
  %v6860 = vadd.f32 %v6471, %v6859
  %6861 = vmatmul.f32.gmra.mxu0 %v6660
  %v6862 = vpop.f32.mrf.mxu0
  %v6863 = vadd.f32 %v6474, %v6862
  %6864 = vmatmul.f32.gmra.mxu0 %v6663
  %v6865 = vpop.f32.mrf.mxu0
  %v6866 = vadd.f32 %v6477, %v6865
  %6867 = vdwg.mxu0
  %6868 = vmatpush.msra.mxu0 0.0
  %6869 = vmatpush.msra.mxu0 0.0
  %6870 = vmatpush.msra.mxu0 0.0
  %6871 = vmatpush.msra.mxu0 0.0
  %6872 = vmatpush.msra.mxu0 0.0
  %6873 = vmatpush.msra.mxu0 0.0
  %6874 = vmatpush.msra.mxu0 %v6210
  %6875 = vmatpush.msra.mxu0 %v6193
  %6876 = vmatpush.msra.mxu0 %v6070
  %6877 = vmatpush.msra.mxu0 %v6053
  %6878 = vmatpush.msra.mxu0 %v5930
  %6879 = vmatpush.msra.mxu0 %v5913
  %6880 = vmatpush.msra.mxu0 %v5790
  %6881 = vmatpush.msra.mxu0 %v5773
  %6882 = vmatpush.msra.mxu0 %v5647
  %6883 = vmatpush.msra.mxu0 %v5629
  %6884 = vmatmul.f32.gmra.mxu0 %v6654
  %v6885 = vpop.f32.mrf.mxu0
  %v6886 = vadd.f32 %v6497, %v6885
  %6887 = vmatmul.f32.gmra.mxu0 %v6657
  %v6888 = vpop.f32.mrf.mxu0
  %v6889 = vadd.f32 %v6500, %v6888
  %6890 = vmatmul.f32.gmra.mxu0 %v6660
  %v6891 = vpop.f32.mrf.mxu0
  %v6892 = vadd.f32 %v6503, %v6891
  %6893 = vmatmul.f32.gmra.mxu0 %v6663
  %v6894 = vpop.f32.mrf.mxu0
  %v6895 = vadd.f32 %v6506, %v6894
  %6896 = vdwg.mxu0
  %6897 = vmatpush.msra.mxu0 0.0
  %6898 = vmatpush.msra.mxu0 0.0
  %6899 = vmatpush.msra.mxu0 0.0
  %6900 = vmatpush.msra.mxu0 0.0
  %6901 = vmatpush.msra.mxu0 0.0
  %6902 = vmatpush.msra.mxu0 0.0
  %6903 = vmatpush.msra.mxu0 %v6211
  %6904 = vmatpush.msra.mxu0 %v6194
  %6905 = vmatpush.msra.mxu0 %v6071
  %6906 = vmatpush.msra.mxu0 %v6054
  %6907 = vmatpush.msra.mxu0 %v5931
  %6908 = vmatpush.msra.mxu0 %v5914
  %6909 = vmatpush.msra.mxu0 %v5791
  %6910 = vmatpush.msra.mxu0 %v5774
  %6911 = vmatpush.msra.mxu0 %v5648
  %6912 = vmatpush.msra.mxu0 %v5630
  %6913 = vmatmul.f32.gmra.mxu0 %v6654
  %v6914 = vpop.f32.mrf.mxu0
  %v6915 = vadd.f32 %v6526, %v6914
  %6916 = vmatmul.f32.gmra.mxu0 %v6657
  %v6917 = vpop.f32.mrf.mxu0
  %v6918 = vadd.f32 %v6529, %v6917
  %6919 = vmatmul.f32.gmra.mxu0 %v6660
  %v6920 = vpop.f32.mrf.mxu0
  %v6921 = vadd.f32 %v6532, %v6920
  %6922 = vmatmul.f32.gmra.mxu0 %v6663
  %v6923 = vpop.f32.mrf.mxu0
  %v6924 = vadd.f32 %v6535, %v6923
  %6925 = vdwg.mxu0
  %6926 = vmatpush.msra.mxu0 0.0
  %6927 = vmatpush.msra.mxu0 0.0
  %6928 = vmatpush.msra.mxu0 0.0
  %6929 = vmatpush.msra.mxu0 0.0
  %6930 = vmatpush.msra.mxu0 0.0
  %6931 = vmatpush.msra.mxu0 0.0
  %6932 = vmatpush.msra.mxu0 %v6212
  %6933 = vmatpush.msra.mxu0 %v6195
  %6934 = vmatpush.msra.mxu0 %v6072
  %6935 = vmatpush.msra.mxu0 %v6055
  %6936 = vmatpush.msra.mxu0 %v5932
  %6937 = vmatpush.msra.mxu0 %v5915
  %6938 = vmatpush.msra.mxu0 %v5792
  %6939 = vmatpush.msra.mxu0 %v5775
  %6940 = vmatpush.msra.mxu0 %v5649
  %6941 = vmatpush.msra.mxu0 %v5631
  %6942 = vmatmul.f32.gmra.mxu0 %v6654
  %v6943 = vpop.f32.mrf.mxu0
  %v6944 = vadd.f32 %v6555, %v6943
  %6945 = vmatmul.f32.gmra.mxu0 %v6657
  %v6946 = vpop.f32.mrf.mxu0
  %v6947 = vadd.f32 %v6558, %v6946
  %6948 = vmatmul.f32.gmra.mxu0 %v6660
  %v6949 = vpop.f32.mrf.mxu0
  %v6950 = vadd.f32 %v6561, %v6949
  %6951 = vmatmul.f32.gmra.mxu0 %v6663
  %v6952 = vpop.f32.mrf.mxu0
  %v6953 = vadd.f32 %v6564, %v6952
  %6954 = vdwg.mxu0
  %6955 = vmatpush.msra.mxu0 0.0
  %6956 = vmatpush.msra.mxu0 0.0
  %6957 = vmatpush.msra.mxu0 0.0
  %6958 = vmatpush.msra.mxu0 0.0
  %6959 = vmatpush.msra.mxu0 0.0
  %6960 = vmatpush.msra.mxu0 0.0
  %6961 = vmatpush.msra.mxu0 %v6213
  %6962 = vmatpush.msra.mxu0 %v6196
  %6963 = vmatpush.msra.mxu0 %v6073
  %6964 = vmatpush.msra.mxu0 %v6056
  %6965 = vmatpush.msra.mxu0 %v5933
  %6966 = vmatpush.msra.mxu0 %v5916
  %6967 = vmatpush.msra.mxu0 %v5793
  %6968 = vmatpush.msra.mxu0 %v5776
  %6969 = vmatpush.msra.mxu0 %v5650
  %6970 = vmatpush.msra.mxu0 %v5632
  %6971 = vmatmul.f32.gmra.mxu0 %v6654
  %v6972 = vpop.f32.mrf.mxu0
  %v6973 = vadd.f32 %v6584, %v6972
  %6974 = vmatmul.f32.gmra.mxu0 %v6657
  %v6975 = vpop.f32.mrf.mxu0
  %v6976 = vadd.f32 %v6587, %v6975
  %6977 = vmatmul.f32.gmra.mxu0 %v6660
  %v6978 = vpop.f32.mrf.mxu0
  %v6979 = vadd.f32 %v6590, %v6978
  %6980 = vmatmul.f32.gmra.mxu0 %v6663
  %v6981 = vpop.f32.mrf.mxu0
  %v6982 = vadd.f32 %v6593, %v6981
  %6983 = vdwg.mxu0
  %6984 = vmatpush.msra.mxu0 0.0
  %6985 = vmatpush.msra.mxu0 0.0
  %6986 = vmatpush.msra.mxu0 0.0
  %6987 = vmatpush.msra.mxu0 0.0
  %6988 = vmatpush.msra.mxu0 0.0
  %6989 = vmatpush.msra.mxu0 0.0
  %6990 = vmatpush.msra.mxu0 %v6214
  %6991 = vmatpush.msra.mxu0 %v6197
  %6992 = vmatpush.msra.mxu0 %v6074
  %6993 = vmatpush.msra.mxu0 %v6057
  %6994 = vmatpush.msra.mxu0 %v5934
  %6995 = vmatpush.msra.mxu0 %v5917
  %6996 = vmatpush.msra.mxu0 %v5794
  %6997 = vmatpush.msra.mxu0 %v5777
  %6998 = vmatpush.msra.mxu0 %v5651
  %6999 = vmatpush.msra.mxu0 %v5633
  %7000 = vmatmul.f32.gmra.mxu0 %v6654
  %v7001 = vpop.f32.mrf.mxu0
  %v7002 = vadd.f32 %v6613, %v7001
  %7003 = vmatmul.f32.gmra.mxu0 %v6657
  %v7004 = vpop.f32.mrf.mxu0
  %v7005 = vadd.f32 %v6616, %v7004
  %7006 = vmatmul.f32.gmra.mxu0 %v6660
  %v7007 = vpop.f32.mrf.mxu0
  %v7008 = vadd.f32 %v6619, %v7007
  %7009 = vmatmul.f32.gmra.mxu0 %v6663
  %v7010 = vpop.f32.mrf.mxu0
  %v7011 = vadd.f32 %v6622, %v7010
  %7012 = vdwg.mxu0
  %7013 = vmatpush.msra.mxu0 0.0
  %7014 = vmatpush.msra.mxu0 0.0
  %7015 = vmatpush.msra.mxu0 0.0
  %7016 = vmatpush.msra.mxu0 0.0
  %7017 = vmatpush.msra.mxu0 0.0
  %7018 = vmatpush.msra.mxu0 0.0
  %7019 = vmatpush.msra.mxu0 %v6215
  %7020 = vmatpush.msra.mxu0 %v6198
  %7021 = vmatpush.msra.mxu0 %v6075
  %7022 = vmatpush.msra.mxu0 %v6058
  %7023 = vmatpush.msra.mxu0 %v5935
  %7024 = vmatpush.msra.mxu0 %v5918
  %7025 = vmatpush.msra.mxu0 %v5795
  %7026 = vmatpush.msra.mxu0 %v5778
  %7027 = vmatpush.msra.mxu0 %v5652
  %7028 = vmatpush.msra.mxu0 %v5634
  %7029 = vmatmul.f32.gmra.mxu0 %v6654
  %v7030 = vpop.f32.mrf.mxu0
  %v7031 = vadd.f32 %v6642, %v7030
  %7032 = vmatmul.f32.gmra.mxu0 %v6657
  %v7033 = vpop.f32.mrf.mxu0
  %v7034 = vadd.f32 %v6645, %v7033
  %7035 = vmatmul.f32.gmra.mxu0 %v6660
  %v7036 = vpop.f32.mrf.mxu0
  %v7037 = vadd.f32 %v6648, %v7036
  %7038 = vmatmul.f32.gmra.mxu0 %v6663
  %v7039 = vpop.f32.mrf.mxu0
  %v7040 = vadd.f32 %v6651, %v7039
  %7041 = vdwg.mxu0
  %s7042 = scalar_lea.vmem %s3, 64
  %v7043 = vld [vmem:[%s7042] sm:$0xff]
  %v7044 = vld [vmem:[%s7042 + $0x8] sm:$0xff]
  %v7045 = vld [vmem:[%s7042 + $0x10] sm:$0xff]
  %v7046 = vld [vmem:[%s7042 + $0x18] sm:$0xff]
  %v7048 = vsel %vm6263, %v7043, 0
  %v7051 = vsel %vm6263, %v7044, 0
  %v7054 = vsel %vm6263, %v7045, 0
  %v7057 = vsel %vm6263, %v7046, 0
  %7059 = vmatpush.msra.mxu0 0.0
  %7060 = vmatpush.msra.mxu0 0.0
  %7061 = vmatpush.msra.mxu0 0.0
  %7062 = vmatpush.msra.mxu0 0.0
  %7063 = vmatpush.msra.mxu0 0.0
  %7064 = vmatpush.msra.mxu0 0.0
  %7065 = vmatpush.msra.mxu0 %v6205
  %7066 = vmatpush.msra.mxu0 %v6188
  %7067 = vmatpush.msra.mxu0 %v6065
  %7068 = vmatpush.msra.mxu0 %v6048
  %7069 = vmatpush.msra.mxu0 %v5925
  %7070 = vmatpush.msra.mxu0 %v5908
  %7071 = vmatpush.msra.mxu0 %v5785
  %7072 = vmatpush.msra.mxu0 %v5768
  %7073 = vmatpush.msra.mxu0 %v5642
  %7074 = vmatpush.msra.mxu0 %v5624
  %7075 = vmatmul.f32.gmra.mxu0 %v7048
  %v7076 = vpop.f32.mrf.mxu0
  %v7077 = vadd.f32 0.0, %v7076
  %7078 = vmatmul.f32.gmra.mxu0 %v7051
  %v7079 = vpop.f32.mrf.mxu0
  %v7080 = vadd.f32 0.0, %v7079
  %7081 = vmatmul.f32.gmra.mxu0 %v7054
  %v7082 = vpop.f32.mrf.mxu0
  %v7083 = vadd.f32 0.0, %v7082
  %7084 = vmatmul.f32.gmra.mxu0 %v7057
  %v7085 = vpop.f32.mrf.mxu0
  %v7086 = vadd.f32 0.0, %v7085
  %7087 = vdwg.mxu0
  %7088 = vmatpush.msra.mxu0 0.0
  %7089 = vmatpush.msra.mxu0 0.0
  %7090 = vmatpush.msra.mxu0 0.0
  %7091 = vmatpush.msra.mxu0 0.0
  %7092 = vmatpush.msra.mxu0 0.0
  %7093 = vmatpush.msra.mxu0 0.0
  %7094 = vmatpush.msra.mxu0 %v6206
  %7095 = vmatpush.msra.mxu0 %v6189
  %7096 = vmatpush.msra.mxu0 %v6066
  %7097 = vmatpush.msra.mxu0 %v6049
  %7098 = vmatpush.msra.mxu0 %v5926
  %7099 = vmatpush.msra.mxu0 %v5909
  %7100 = vmatpush.msra.mxu0 %v5786
  %7101 = vmatpush.msra.mxu0 %v5769
  %7102 = vmatpush.msra.mxu0 %v5643
  %7103 = vmatpush.msra.mxu0 %v5625
  %7104 = vmatmul.f32.gmra.mxu0 %v7048
  %v7105 = vpop.f32.mrf.mxu0
  %v7106 = vadd.f32 0.0, %v7105
  %7107 = vmatmul.f32.gmra.mxu0 %v7051
  %v7108 = vpop.f32.mrf.mxu0
  %v7109 = vadd.f32 0.0, %v7108
  %7110 = vmatmul.f32.gmra.mxu0 %v7054
  %v7111 = vpop.f32.mrf.mxu0
  %v7112 = vadd.f32 0.0, %v7111
  %7113 = vmatmul.f32.gmra.mxu0 %v7057
  %v7114 = vpop.f32.mrf.mxu0
  %v7115 = vadd.f32 0.0, %v7114
  %7116 = vdwg.mxu0
  %7117 = vmatpush.msra.mxu0 0.0
  %7118 = vmatpush.msra.mxu0 0.0
  %7119 = vmatpush.msra.mxu0 0.0
  %7120 = vmatpush.msra.mxu0 0.0
  %7121 = vmatpush.msra.mxu0 0.0
  %7122 = vmatpush.msra.mxu0 0.0
  %7123 = vmatpush.msra.mxu0 %v6207
  %7124 = vmatpush.msra.mxu0 %v6190
  %7125 = vmatpush.msra.mxu0 %v6067
  %7126 = vmatpush.msra.mxu0 %v6050
  %7127 = vmatpush.msra.mxu0 %v5927
  %7128 = vmatpush.msra.mxu0 %v5910
  %7129 = vmatpush.msra.mxu0 %v5787
  %7130 = vmatpush.msra.mxu0 %v5770
  %7131 = vmatpush.msra.mxu0 %v5644
  %7132 = vmatpush.msra.mxu0 %v5626
  %7133 = vmatmul.f32.gmra.mxu0 %v7048
  %v7134 = vpop.f32.mrf.mxu0
  %v7135 = vadd.f32 0.0, %v7134
  %7136 = vmatmul.f32.gmra.mxu0 %v7051
  %v7137 = vpop.f32.mrf.mxu0
  %v7138 = vadd.f32 0.0, %v7137
  %7139 = vmatmul.f32.gmra.mxu0 %v7054
  %v7140 = vpop.f32.mrf.mxu0
  %v7141 = vadd.f32 0.0, %v7140
  %7142 = vmatmul.f32.gmra.mxu0 %v7057
  %v7143 = vpop.f32.mrf.mxu0
  %v7144 = vadd.f32 0.0, %v7143
  %7145 = vdwg.mxu0
  %7146 = vmatpush.msra.mxu0 0.0
  %7147 = vmatpush.msra.mxu0 0.0
  %7148 = vmatpush.msra.mxu0 0.0
  %7149 = vmatpush.msra.mxu0 0.0
  %7150 = vmatpush.msra.mxu0 0.0
  %7151 = vmatpush.msra.mxu0 0.0
  %7152 = vmatpush.msra.mxu0 %v6208
  %7153 = vmatpush.msra.mxu0 %v6191
  %7154 = vmatpush.msra.mxu0 %v6068
  %7155 = vmatpush.msra.mxu0 %v6051
  %7156 = vmatpush.msra.mxu0 %v5928
  %7157 = vmatpush.msra.mxu0 %v5911
  %7158 = vmatpush.msra.mxu0 %v5788
  %7159 = vmatpush.msra.mxu0 %v5771
  %7160 = vmatpush.msra.mxu0 %v5645
  %7161 = vmatpush.msra.mxu0 %v5627
  %7162 = vmatmul.f32.gmra.mxu0 %v7048
  %v7163 = vpop.f32.mrf.mxu0
  %v7164 = vadd.f32 0.0, %v7163
  %7165 = vmatmul.f32.gmra.mxu0 %v7051
  %v7166 = vpop.f32.mrf.mxu0
  %v7167 = vadd.f32 0.0, %v7166
  %7168 = vmatmul.f32.gmra.mxu0 %v7054
  %v7169 = vpop.f32.mrf.mxu0
  %v7170 = vadd.f32 0.0, %v7169
  %7171 = vmatmul.f32.gmra.mxu0 %v7057
  %v7172 = vpop.f32.mrf.mxu0
  %v7173 = vadd.f32 0.0, %v7172
  %7174 = vdwg.mxu0
  %7175 = vmatpush.msra.mxu0 0.0
  %7176 = vmatpush.msra.mxu0 0.0
  %7177 = vmatpush.msra.mxu0 0.0
  %7178 = vmatpush.msra.mxu0 0.0
  %7179 = vmatpush.msra.mxu0 0.0
  %7180 = vmatpush.msra.mxu0 0.0
  %7181 = vmatpush.msra.mxu0 %v6209
  %7182 = vmatpush.msra.mxu0 %v6192
  %7183 = vmatpush.msra.mxu0 %v6069
  %7184 = vmatpush.msra.mxu0 %v6052
  %7185 = vmatpush.msra.mxu0 %v5929
  %7186 = vmatpush.msra.mxu0 %v5912
  %7187 = vmatpush.msra.mxu0 %v5789
  %7188 = vmatpush.msra.mxu0 %v5772
  %7189 = vmatpush.msra.mxu0 %v5646
  %7190 = vmatpush.msra.mxu0 %v5628
  %7191 = vmatmul.f32.gmra.mxu0 %v7048
  %v7192 = vpop.f32.mrf.mxu0
  %v7193 = vadd.f32 0.0, %v7192
  %7194 = vmatmul.f32.gmra.mxu0 %v7051
  %v7195 = vpop.f32.mrf.mxu0
  %v7196 = vadd.f32 0.0, %v7195
  %7197 = vmatmul.f32.gmra.mxu0 %v7054
  %v7198 = vpop.f32.mrf.mxu0
  %v7199 = vadd.f32 0.0, %v7198
  %7200 = vmatmul.f32.gmra.mxu0 %v7057
  %v7201 = vpop.f32.mrf.mxu0
  %v7202 = vadd.f32 0.0, %v7201
  %7203 = vdwg.mxu0
  %7204 = vmatpush.msra.mxu0 0.0
  %7205 = vmatpush.msra.mxu0 0.0
  %7206 = vmatpush.msra.mxu0 0.0
  %7207 = vmatpush.msra.mxu0 0.0
  %7208 = vmatpush.msra.mxu0 0.0
  %7209 = vmatpush.msra.mxu0 0.0
  %7210 = vmatpush.msra.mxu0 %v6210
  %7211 = vmatpush.msra.mxu0 %v6193
  %7212 = vmatpush.msra.mxu0 %v6070
  %7213 = vmatpush.msra.mxu0 %v6053
  %7214 = vmatpush.msra.mxu0 %v5930
  %7215 = vmatpush.msra.mxu0 %v5913
  %7216 = vmatpush.msra.mxu0 %v5790
  %7217 = vmatpush.msra.mxu0 %v5773
  %7218 = vmatpush.msra.mxu0 %v5647
  %7219 = vmatpush.msra.mxu0 %v5629
  %7220 = vmatmul.f32.gmra.mxu0 %v7048
  %v7221 = vpop.f32.mrf.mxu0
  %v7222 = vadd.f32 0.0, %v7221
  %7223 = vmatmul.f32.gmra.mxu0 %v7051
  %v7224 = vpop.f32.mrf.mxu0
  %v7225 = vadd.f32 0.0, %v7224
  %7226 = vmatmul.f32.gmra.mxu0 %v7054
  %v7227 = vpop.f32.mrf.mxu0
  %v7228 = vadd.f32 0.0, %v7227
  %7229 = vmatmul.f32.gmra.mxu0 %v7057
  %v7230 = vpop.f32.mrf.mxu0
  %v7231 = vadd.f32 0.0, %v7230
  %7232 = vdwg.mxu0
  %7233 = vmatpush.msra.mxu0 0.0
  %7234 = vmatpush.msra.mxu0 0.0
  %7235 = vmatpush.msra.mxu0 0.0
  %7236 = vmatpush.msra.mxu0 0.0
  %7237 = vmatpush.msra.mxu0 0.0
  %7238 = vmatpush.msra.mxu0 0.0
  %7239 = vmatpush.msra.mxu0 %v6211
  %7240 = vmatpush.msra.mxu0 %v6194
  %7241 = vmatpush.msra.mxu0 %v6071
  %7242 = vmatpush.msra.mxu0 %v6054
  %7243 = vmatpush.msra.mxu0 %v5931
  %7244 = vmatpush.msra.mxu0 %v5914
  %7245 = vmatpush.msra.mxu0 %v5791
  %7246 = vmatpush.msra.mxu0 %v5774
  %7247 = vmatpush.msra.mxu0 %v5648
  %7248 = vmatpush.msra.mxu0 %v5630
  %7249 = vmatmul.f32.gmra.mxu0 %v7048
  %v7250 = vpop.f32.mrf.mxu0
  %v7251 = vadd.f32 0.0, %v7250
  %7252 = vmatmul.f32.gmra.mxu0 %v7051
  %v7253 = vpop.f32.mrf.mxu0
  %v7254 = vadd.f32 0.0, %v7253
  %7255 = vmatmul.f32.gmra.mxu0 %v7054
  %v7256 = vpop.f32.mrf.mxu0
  %v7257 = vadd.f32 0.0, %v7256
  %7258 = vmatmul.f32.gmra.mxu0 %v7057
  %v7259 = vpop.f32.mrf.mxu0
  %v7260 = vadd.f32 0.0, %v7259
  %7261 = vdwg.mxu0
  %7262 = vmatpush.msra.mxu0 0.0
  %7263 = vmatpush.msra.mxu0 0.0
  %7264 = vmatpush.msra.mxu0 0.0
  %7265 = vmatpush.msra.mxu0 0.0
  %7266 = vmatpush.msra.mxu0 0.0
  %7267 = vmatpush.msra.mxu0 0.0
  %7268 = vmatpush.msra.mxu0 %v6212
  %7269 = vmatpush.msra.mxu0 %v6195
  %7270 = vmatpush.msra.mxu0 %v6072
  %7271 = vmatpush.msra.mxu0 %v6055
  %7272 = vmatpush.msra.mxu0 %v5932
  %7273 = vmatpush.msra.mxu0 %v5915
  %7274 = vmatpush.msra.mxu0 %v5792
  %7275 = vmatpush.msra.mxu0 %v5775
  %7276 = vmatpush.msra.mxu0 %v5649
  %7277 = vmatpush.msra.mxu0 %v5631
  %7278 = vmatmul.f32.gmra.mxu0 %v7048
  %v7279 = vpop.f32.mrf.mxu0
  %v7280 = vadd.f32 0.0, %v7279
  %7281 = vmatmul.f32.gmra.mxu0 %v7051
  %v7282 = vpop.f32.mrf.mxu0
  %v7283 = vadd.f32 0.0, %v7282
  %7284 = vmatmul.f32.gmra.mxu0 %v7054
  %v7285 = vpop.f32.mrf.mxu0
  %v7286 = vadd.f32 0.0, %v7285
  %7287 = vmatmul.f32.gmra.mxu0 %v7057
  %v7288 = vpop.f32.mrf.mxu0
  %v7289 = vadd.f32 0.0, %v7288
  %7290 = vdwg.mxu0
  %7291 = vmatpush.msra.mxu0 0.0
  %7292 = vmatpush.msra.mxu0 0.0
  %7293 = vmatpush.msra.mxu0 0.0
  %7294 = vmatpush.msra.mxu0 0.0
  %7295 = vmatpush.msra.mxu0 0.0
  %7296 = vmatpush.msra.mxu0 0.0
  %7297 = vmatpush.msra.mxu0 %v6213
  %7298 = vmatpush.msra.mxu0 %v6196
  %7299 = vmatpush.msra.mxu0 %v6073
  %7300 = vmatpush.msra.mxu0 %v6056
  %7301 = vmatpush.msra.mxu0 %v5933
  %7302 = vmatpush.msra.mxu0 %v5916
  %7303 = vmatpush.msra.mxu0 %v5793
  %7304 = vmatpush.msra.mxu0 %v5776
  %7305 = vmatpush.msra.mxu0 %v5650
  %7306 = vmatpush.msra.mxu0 %v5632
  %7307 = vmatmul.f32.gmra.mxu0 %v7048
  %v7308 = vpop.f32.mrf.mxu0
  %v7309 = vadd.f32 0.0, %v7308
  %7310 = vmatmul.f32.gmra.mxu0 %v7051
  %v7311 = vpop.f32.mrf.mxu0
  %v7312 = vadd.f32 0.0, %v7311
  %7313 = vmatmul.f32.gmra.mxu0 %v7054
  %v7314 = vpop.f32.mrf.mxu0
  %v7315 = vadd.f32 0.0, %v7314
  %7316 = vmatmul.f32.gmra.mxu0 %v7057
  %v7317 = vpop.f32.mrf.mxu0
  %v7318 = vadd.f32 0.0, %v7317
  %7319 = vdwg.mxu0
  %7320 = vmatpush.msra.mxu0 0.0
  %7321 = vmatpush.msra.mxu0 0.0
  %7322 = vmatpush.msra.mxu0 0.0
  %7323 = vmatpush.msra.mxu0 0.0
  %7324 = vmatpush.msra.mxu0 0.0
  %7325 = vmatpush.msra.mxu0 0.0
  %7326 = vmatpush.msra.mxu0 %v6214
  %7327 = vmatpush.msra.mxu0 %v6197
  %7328 = vmatpush.msra.mxu0 %v6074
  %7329 = vmatpush.msra.mxu0 %v6057
  %7330 = vmatpush.msra.mxu0 %v5934
  %7331 = vmatpush.msra.mxu0 %v5917
  %7332 = vmatpush.msra.mxu0 %v5794
  %7333 = vmatpush.msra.mxu0 %v5777
  %7334 = vmatpush.msra.mxu0 %v5651
  %7335 = vmatpush.msra.mxu0 %v5633
  %7336 = vmatmul.f32.gmra.mxu0 %v7048
  %v7337 = vpop.f32.mrf.mxu0
  %v7338 = vadd.f32 0.0, %v7337
  %7339 = vmatmul.f32.gmra.mxu0 %v7051
  %v7340 = vpop.f32.mrf.mxu0
  %v7341 = vadd.f32 0.0, %v7340
  %7342 = vmatmul.f32.gmra.mxu0 %v7054
  %v7343 = vpop.f32.mrf.mxu0
  %v7344 = vadd.f32 0.0, %v7343
  %7345 = vmatmul.f32.gmra.mxu0 %v7057
  %v7346 = vpop.f32.mrf.mxu0
  %v7347 = vadd.f32 0.0, %v7346
  %7348 = vdwg.mxu0
  %7349 = vmatpush.msra.mxu0 0.0
  %7350 = vmatpush.msra.mxu0 0.0
  %7351 = vmatpush.msra.mxu0 0.0
  %7352 = vmatpush.msra.mxu0 0.0
  %7353 = vmatpush.msra.mxu0 0.0
  %7354 = vmatpush.msra.mxu0 0.0
  %7355 = vmatpush.msra.mxu0 %v6215
  %7356 = vmatpush.msra.mxu0 %v6198
  %7357 = vmatpush.msra.mxu0 %v6075
  %7358 = vmatpush.msra.mxu0 %v6058
  %7359 = vmatpush.msra.mxu0 %v5935
  %7360 = vmatpush.msra.mxu0 %v5918
  %7361 = vmatpush.msra.mxu0 %v5795
  %7362 = vmatpush.msra.mxu0 %v5778
  %7363 = vmatpush.msra.mxu0 %v5652
  %7364 = vmatpush.msra.mxu0 %v5634
  %7365 = vmatmul.f32.gmra.mxu0 %v7048
  %v7366 = vpop.f32.mrf.mxu0
  %v7367 = vadd.f32 0.0, %v7366
  %7368 = vmatmul.f32.gmra.mxu0 %v7051
  %v7369 = vpop.f32.mrf.mxu0
  %v7370 = vadd.f32 0.0, %v7369
  %7371 = vmatmul.f32.gmra.mxu0 %v7054
  %v7372 = vpop.f32.mrf.mxu0
  %v7373 = vadd.f32 0.0, %v7372
  %7374 = vmatmul.f32.gmra.mxu0 %v7057
  %v7375 = vpop.f32.mrf.mxu0
  %v7376 = vadd.f32 0.0, %v7375
  %7377 = vdwg.mxu0
  %7378 = vmatpush.msra.mxu0 0.0
  %7379 = vmatpush.msra.mxu0 0.0
  %7380 = vmatpush.msra.mxu0 0.0
  %7381 = vmatpush.msra.mxu0 0.0
  %7382 = vmatpush.msra.mxu0 0.0
  %7383 = vmatpush.msra.mxu0 0.0
  %7384 = vmatpush.msra.mxu0 %v6216
  %7385 = vmatpush.msra.mxu0 %v6199
  %7386 = vmatpush.msra.mxu0 %v6076
  %7387 = vmatpush.msra.mxu0 %v6059
  %7388 = vmatpush.msra.mxu0 %v5936
  %7389 = vmatpush.msra.mxu0 %v5919
  %7390 = vmatpush.msra.mxu0 %v5796
  %7391 = vmatpush.msra.mxu0 %v5779
  %7392 = vmatpush.msra.mxu0 %v5653
  %7393 = vmatpush.msra.mxu0 %v5635
  %7394 = vmatmul.f32.gmra.mxu0 %v7048
  %v7395 = vpop.f32.mrf.mxu0
  %v7396 = vadd.f32 0.0, %v7395
  %7397 = vmatmul.f32.gmra.mxu0 %v7051
  %v7398 = vpop.f32.mrf.mxu0
  %v7399 = vadd.f32 0.0, %v7398
  %7400 = vmatmul.f32.gmra.mxu0 %v7054
  %v7401 = vpop.f32.mrf.mxu0
  %v7402 = vadd.f32 0.0, %v7401
  %7403 = vmatmul.f32.gmra.mxu0 %v7057
  %v7404 = vpop.f32.mrf.mxu0
  %v7405 = vadd.f32 0.0, %v7404
  %7406 = vdwg.mxu0
  %7407 = vmatpush.msra.mxu0 0.0
  %7408 = vmatpush.msra.mxu0 0.0
  %7409 = vmatpush.msra.mxu0 0.0
  %7410 = vmatpush.msra.mxu0 0.0
  %7411 = vmatpush.msra.mxu0 0.0
  %7412 = vmatpush.msra.mxu0 0.0
  %7413 = vmatpush.msra.mxu0 %v6217
  %7414 = vmatpush.msra.mxu0 %v6200
  %7415 = vmatpush.msra.mxu0 %v6077
  %7416 = vmatpush.msra.mxu0 %v6060
  %7417 = vmatpush.msra.mxu0 %v5937
  %7418 = vmatpush.msra.mxu0 %v5920
  %7419 = vmatpush.msra.mxu0 %v5797
  %7420 = vmatpush.msra.mxu0 %v5780
  %7421 = vmatpush.msra.mxu0 %v5654
  %7422 = vmatpush.msra.mxu0 %v5636
  %7423 = vmatmul.f32.gmra.mxu0 %v7048
  %v7424 = vpop.f32.mrf.mxu0
  %v7425 = vadd.f32 0.0, %v7424
  %7426 = vmatmul.f32.gmra.mxu0 %v7051
  %v7427 = vpop.f32.mrf.mxu0
  %v7428 = vadd.f32 0.0, %v7427
  %7429 = vmatmul.f32.gmra.mxu0 %v7054
  %v7430 = vpop.f32.mrf.mxu0
  %v7431 = vadd.f32 0.0, %v7430
  %7432 = vmatmul.f32.gmra.mxu0 %v7057
  %v7433 = vpop.f32.mrf.mxu0
  %v7434 = vadd.f32 0.0, %v7433
  %7435 = vdwg.mxu0
  %v7436 = vadd.f32 %v6683, %v7077
  %v7437 = vadd.f32 %v6712, %v7106
  %v7438 = vadd.f32 %v6741, %v7135
  %v7439 = vadd.f32 %v6770, %v7164
  %v7440 = vadd.f32 %v6799, %v7193
  %v7441 = vadd.f32 %v6828, %v7222
  %v7442 = vadd.f32 %v6857, %v7251
  %v7443 = vadd.f32 %v6886, %v7280
  %v7444 = vadd.f32 %v6915, %v7309
  %v7445 = vadd.f32 %v6944, %v7338
  %v7446 = vadd.f32 %v6973, %v7367
  %v7447 = vadd.f32 %v7002, %v7396
  %v7448 = vadd.f32 %v7031, %v7425
  %v7449 = vadd.f32 %v6686, %v7080
  %v7450 = vadd.f32 %v6715, %v7109
  %v7451 = vadd.f32 %v6744, %v7138
  %v7452 = vadd.f32 %v6773, %v7167
  %v7453 = vadd.f32 %v6802, %v7196
  %v7454 = vadd.f32 %v6831, %v7225
  %v7455 = vadd.f32 %v6860, %v7254
  %v7456 = vadd.f32 %v6889, %v7283
  %v7457 = vadd.f32 %v6918, %v7312
  %v7458 = vadd.f32 %v6947, %v7341
  %v7459 = vadd.f32 %v6976, %v7370
  %v7460 = vadd.f32 %v7005, %v7399
  %v7461 = vadd.f32 %v7034, %v7428
  %v7462 = vadd.f32 %v6689, %v7083
  %v7463 = vadd.f32 %v6718, %v7112
  %v7464 = vadd.f32 %v6747, %v7141
  %v7465 = vadd.f32 %v6776, %v7170
  %v7466 = vadd.f32 %v6805, %v7199
  %v7467 = vadd.f32 %v6834, %v7228
  %v7468 = vadd.f32 %v6863, %v7257
  %v7469 = vadd.f32 %v6892, %v7286
  %v7470 = vadd.f32 %v6921, %v7315
  %v7471 = vadd.f32 %v6950, %v7344
  %v7472 = vadd.f32 %v6979, %v7373
  %v7473 = vadd.f32 %v7008, %v7402
  %v7474 = vadd.f32 %v7037, %v7431
  %v7475 = vadd.f32 %v6692, %v7086
  %v7476 = vadd.f32 %v6721, %v7115
  %v7477 = vadd.f32 %v6750, %v7144
  %v7478 = vadd.f32 %v6779, %v7173
  %v7479 = vadd.f32 %v6808, %v7202
  %v7480 = vadd.f32 %v6837, %v7231
  %v7481 = vadd.f32 %v6866, %v7260
  %v7482 = vadd.f32 %v6895, %v7289
  %v7483 = vadd.f32 %v6924, %v7318
  %v7484 = vadd.f32 %v6953, %v7347
  %v7485 = vadd.f32 %v6982, %v7376
  %v7486 = vadd.f32 %v7011, %v7405
  %v7487 = vadd.f32 %v7040, %v7434
  %s7488 = scalar_lea.vmem %s3, 96
  %v7489 = vld [vmem:[%s7488] sm:$0xff]
  %v7490 = vld [vmem:[%s7488 + $0x8] sm:$0xff]
  %v7491 = vld [vmem:[%s7488 + $0x10] sm:$0xff]
  %v7492 = vld [vmem:[%s7488 + $0x18] sm:$0xff]
  %v7494 = vsel %vm6263, %v7489, 0
  %v7497 = vsel %vm6263, %v7490, 0
  %v7500 = vsel %vm6263, %v7491, 0
  %v7503 = vsel %vm6263, %v7492, 0
  %7505 = vmatpush.msra.mxu0 0.0
  %7506 = vmatpush.msra.mxu0 0.0
  %7507 = vmatpush.msra.mxu0 0.0
  %7508 = vmatpush.msra.mxu0 0.0
  %7509 = vmatpush.msra.mxu0 0.0
  %7510 = vmatpush.msra.mxu0 0.0
  %7511 = vmatpush.msra.mxu0 %v6206
  %7512 = vmatpush.msra.mxu0 %v6189
  %7513 = vmatpush.msra.mxu0 %v6066
  %7514 = vmatpush.msra.mxu0 %v6049
  %7515 = vmatpush.msra.mxu0 %v5926
  %7516 = vmatpush.msra.mxu0 %v5909
  %7517 = vmatpush.msra.mxu0 %v5786
  %7518 = vmatpush.msra.mxu0 %v5769
  %7519 = vmatpush.msra.mxu0 %v5643
  %7520 = vmatpush.msra.mxu0 %v5625
  %7521 = vmatmul.f32.gmra.mxu0 %v7494
  %v7522 = vpop.f32.mrf.mxu0
  %v7523 = vadd.f32 0.0, %v7522
  %7524 = vmatmul.f32.gmra.mxu0 %v7497
  %v7525 = vpop.f32.mrf.mxu0
  %v7526 = vadd.f32 0.0, %v7525
  %7527 = vmatmul.f32.gmra.mxu0 %v7500
  %v7528 = vpop.f32.mrf.mxu0
  %v7529 = vadd.f32 0.0, %v7528
  %7530 = vmatmul.f32.gmra.mxu0 %v7503
  %v7531 = vpop.f32.mrf.mxu0
  %v7532 = vadd.f32 0.0, %v7531
  %7533 = vdwg.mxu0
  %7534 = vmatpush.msra.mxu0 0.0
  %7535 = vmatpush.msra.mxu0 0.0
  %7536 = vmatpush.msra.mxu0 0.0
  %7537 = vmatpush.msra.mxu0 0.0
  %7538 = vmatpush.msra.mxu0 0.0
  %7539 = vmatpush.msra.mxu0 0.0
  %7540 = vmatpush.msra.mxu0 %v6207
  %7541 = vmatpush.msra.mxu0 %v6190
  %7542 = vmatpush.msra.mxu0 %v6067
  %7543 = vmatpush.msra.mxu0 %v6050
  %7544 = vmatpush.msra.mxu0 %v5927
  %7545 = vmatpush.msra.mxu0 %v5910
  %7546 = vmatpush.msra.mxu0 %v5787
  %7547 = vmatpush.msra.mxu0 %v5770
  %7548 = vmatpush.msra.mxu0 %v5644
  %7549 = vmatpush.msra.mxu0 %v5626
  %7550 = vmatmul.f32.gmra.mxu0 %v7494
  %v7551 = vpop.f32.mrf.mxu0
  %v7552 = vadd.f32 0.0, %v7551
  %7553 = vmatmul.f32.gmra.mxu0 %v7497
  %v7554 = vpop.f32.mrf.mxu0
  %v7555 = vadd.f32 0.0, %v7554
  %7556 = vmatmul.f32.gmra.mxu0 %v7500
  %v7557 = vpop.f32.mrf.mxu0
  %v7558 = vadd.f32 0.0, %v7557
  %7559 = vmatmul.f32.gmra.mxu0 %v7503
  %v7560 = vpop.f32.mrf.mxu0
  %v7561 = vadd.f32 0.0, %v7560
  %7562 = vdwg.mxu0
  %7563 = vmatpush.msra.mxu0 0.0
  %7564 = vmatpush.msra.mxu0 0.0
  %7565 = vmatpush.msra.mxu0 0.0
  %7566 = vmatpush.msra.mxu0 0.0
  %7567 = vmatpush.msra.mxu0 0.0
  %7568 = vmatpush.msra.mxu0 0.0
  %7569 = vmatpush.msra.mxu0 %v6208
  %7570 = vmatpush.msra.mxu0 %v6191
  %7571 = vmatpush.msra.mxu0 %v6068
  %7572 = vmatpush.msra.mxu0 %v6051
  %7573 = vmatpush.msra.mxu0 %v5928
  %7574 = vmatpush.msra.mxu0 %v5911
  %7575 = vmatpush.msra.mxu0 %v5788
  %7576 = vmatpush.msra.mxu0 %v5771
  %7577 = vmatpush.msra.mxu0 %v5645
  %7578 = vmatpush.msra.mxu0 %v5627
  %7579 = vmatmul.f32.gmra.mxu0 %v7494
  %v7580 = vpop.f32.mrf.mxu0
  %v7581 = vadd.f32 0.0, %v7580
  %7582 = vmatmul.f32.gmra.mxu0 %v7497
  %v7583 = vpop.f32.mrf.mxu0
  %v7584 = vadd.f32 0.0, %v7583
  %7585 = vmatmul.f32.gmra.mxu0 %v7500
  %v7586 = vpop.f32.mrf.mxu0
  %v7587 = vadd.f32 0.0, %v7586
  %7588 = vmatmul.f32.gmra.mxu0 %v7503
  %v7589 = vpop.f32.mrf.mxu0
  %v7590 = vadd.f32 0.0, %v7589
  %7591 = vdwg.mxu0
  %7592 = vmatpush.msra.mxu0 0.0
  %7593 = vmatpush.msra.mxu0 0.0
  %7594 = vmatpush.msra.mxu0 0.0
  %7595 = vmatpush.msra.mxu0 0.0
  %7596 = vmatpush.msra.mxu0 0.0
  %7597 = vmatpush.msra.mxu0 0.0
  %7598 = vmatpush.msra.mxu0 %v6209
  %7599 = vmatpush.msra.mxu0 %v6192
  %7600 = vmatpush.msra.mxu0 %v6069
  %7601 = vmatpush.msra.mxu0 %v6052
  %7602 = vmatpush.msra.mxu0 %v5929
  %7603 = vmatpush.msra.mxu0 %v5912
  %7604 = vmatpush.msra.mxu0 %v5789
  %7605 = vmatpush.msra.mxu0 %v5772
  %7606 = vmatpush.msra.mxu0 %v5646
  %7607 = vmatpush.msra.mxu0 %v5628
  %7608 = vmatmul.f32.gmra.mxu0 %v7494
  %v7609 = vpop.f32.mrf.mxu0
  %v7610 = vadd.f32 0.0, %v7609
  %7611 = vmatmul.f32.gmra.mxu0 %v7497
  %v7612 = vpop.f32.mrf.mxu0
  %v7613 = vadd.f32 0.0, %v7612
  %7614 = vmatmul.f32.gmra.mxu0 %v7500
  %v7615 = vpop.f32.mrf.mxu0
  %v7616 = vadd.f32 0.0, %v7615
  %7617 = vmatmul.f32.gmra.mxu0 %v7503
  %v7618 = vpop.f32.mrf.mxu0
  %v7619 = vadd.f32 0.0, %v7618
  %7620 = vdwg.mxu0
  %7621 = vmatpush.msra.mxu0 0.0
  %7622 = vmatpush.msra.mxu0 0.0
  %7623 = vmatpush.msra.mxu0 0.0
  %7624 = vmatpush.msra.mxu0 0.0
  %7625 = vmatpush.msra.mxu0 0.0
  %7626 = vmatpush.msra.mxu0 0.0
  %7627 = vmatpush.msra.mxu0 %v6210
  %7628 = vmatpush.msra.mxu0 %v6193
  %7629 = vmatpush.msra.mxu0 %v6070
  %7630 = vmatpush.msra.mxu0 %v6053
  %7631 = vmatpush.msra.mxu0 %v5930
  %7632 = vmatpush.msra.mxu0 %v5913
  %7633 = vmatpush.msra.mxu0 %v5790
  %7634 = vmatpush.msra.mxu0 %v5773
  %7635 = vmatpush.msra.mxu0 %v5647
  %7636 = vmatpush.msra.mxu0 %v5629
  %7637 = vmatmul.f32.gmra.mxu0 %v7494
  %v7638 = vpop.f32.mrf.mxu0
  %v7639 = vadd.f32 0.0, %v7638
  %7640 = vmatmul.f32.gmra.mxu0 %v7497
  %v7641 = vpop.f32.mrf.mxu0
  %v7642 = vadd.f32 0.0, %v7641
  %7643 = vmatmul.f32.gmra.mxu0 %v7500
  %v7644 = vpop.f32.mrf.mxu0
  %v7645 = vadd.f32 0.0, %v7644
  %7646 = vmatmul.f32.gmra.mxu0 %v7503
  %v7647 = vpop.f32.mrf.mxu0
  %v7648 = vadd.f32 0.0, %v7647
  %7649 = vdwg.mxu0
  %7650 = vmatpush.msra.mxu0 0.0
  %7651 = vmatpush.msra.mxu0 0.0
  %7652 = vmatpush.msra.mxu0 0.0
  %7653 = vmatpush.msra.mxu0 0.0
  %7654 = vmatpush.msra.mxu0 0.0
  %7655 = vmatpush.msra.mxu0 0.0
  %7656 = vmatpush.msra.mxu0 %v6211
  %7657 = vmatpush.msra.mxu0 %v6194
  %7658 = vmatpush.msra.mxu0 %v6071
  %7659 = vmatpush.msra.mxu0 %v6054
  %7660 = vmatpush.msra.mxu0 %v5931
  %7661 = vmatpush.msra.mxu0 %v5914
  %7662 = vmatpush.msra.mxu0 %v5791
  %7663 = vmatpush.msra.mxu0 %v5774
  %7664 = vmatpush.msra.mxu0 %v5648
  %7665 = vmatpush.msra.mxu0 %v5630
  %7666 = vmatmul.f32.gmra.mxu0 %v7494
  %v7667 = vpop.f32.mrf.mxu0
  %v7668 = vadd.f32 0.0, %v7667
  %7669 = vmatmul.f32.gmra.mxu0 %v7497
  %v7670 = vpop.f32.mrf.mxu0
  %v7671 = vadd.f32 0.0, %v7670
  %7672 = vmatmul.f32.gmra.mxu0 %v7500
  %v7673 = vpop.f32.mrf.mxu0
  %v7674 = vadd.f32 0.0, %v7673
  %7675 = vmatmul.f32.gmra.mxu0 %v7503
  %v7676 = vpop.f32.mrf.mxu0
  %v7677 = vadd.f32 0.0, %v7676
  %7678 = vdwg.mxu0
  %7679 = vmatpush.msra.mxu0 0.0
  %7680 = vmatpush.msra.mxu0 0.0
  %7681 = vmatpush.msra.mxu0 0.0
  %7682 = vmatpush.msra.mxu0 0.0
  %7683 = vmatpush.msra.mxu0 0.0
  %7684 = vmatpush.msra.mxu0 0.0
  %7685 = vmatpush.msra.mxu0 %v6212
  %7686 = vmatpush.msra.mxu0 %v6195
  %7687 = vmatpush.msra.mxu0 %v6072
  %7688 = vmatpush.msra.mxu0 %v6055
  %7689 = vmatpush.msra.mxu0 %v5932
  %7690 = vmatpush.msra.mxu0 %v5915
  %7691 = vmatpush.msra.mxu0 %v5792
  %7692 = vmatpush.msra.mxu0 %v5775
  %7693 = vmatpush.msra.mxu0 %v5649
  %7694 = vmatpush.msra.mxu0 %v5631
  %7695 = vmatmul.f32.gmra.mxu0 %v7494
  %v7696 = vpop.f32.mrf.mxu0
  %v7697 = vadd.f32 0.0, %v7696
  %7698 = vmatmul.f32.gmra.mxu0 %v7497
  %v7699 = vpop.f32.mrf.mxu0
  %v7700 = vadd.f32 0.0, %v7699
  %7701 = vmatmul.f32.gmra.mxu0 %v7500
  %v7702 = vpop.f32.mrf.mxu0
  %v7703 = vadd.f32 0.0, %v7702
  %7704 = vmatmul.f32.gmra.mxu0 %v7503
  %v7705 = vpop.f32.mrf.mxu0
  %v7706 = vadd.f32 0.0, %v7705
  %7707 = vdwg.mxu0
  %7708 = vmatpush.msra.mxu0 0.0
  %7709 = vmatpush.msra.mxu0 0.0
  %7710 = vmatpush.msra.mxu0 0.0
  %7711 = vmatpush.msra.mxu0 0.0
  %7712 = vmatpush.msra.mxu0 0.0
  %7713 = vmatpush.msra.mxu0 0.0
  %7714 = vmatpush.msra.mxu0 %v6213
  %7715 = vmatpush.msra.mxu0 %v6196
  %7716 = vmatpush.msra.mxu0 %v6073
  %7717 = vmatpush.msra.mxu0 %v6056
  %7718 = vmatpush.msra.mxu0 %v5933
  %7719 = vmatpush.msra.mxu0 %v5916
  %7720 = vmatpush.msra.mxu0 %v5793
  %7721 = vmatpush.msra.mxu0 %v5776
  %7722 = vmatpush.msra.mxu0 %v5650
  %7723 = vmatpush.msra.mxu0 %v5632
  %7724 = vmatmul.f32.gmra.mxu0 %v7494
  %v7725 = vpop.f32.mrf.mxu0
  %v7726 = vadd.f32 0.0, %v7725
  %7727 = vmatmul.f32.gmra.mxu0 %v7497
  %v7728 = vpop.f32.mrf.mxu0
  %v7729 = vadd.f32 0.0, %v7728
  %7730 = vmatmul.f32.gmra.mxu0 %v7500
  %v7731 = vpop.f32.mrf.mxu0
  %v7732 = vadd.f32 0.0, %v7731
  %7733 = vmatmul.f32.gmra.mxu0 %v7503
  %v7734 = vpop.f32.mrf.mxu0
  %v7735 = vadd.f32 0.0, %v7734
  %7736 = vdwg.mxu0
  %7737 = vmatpush.msra.mxu0 0.0
  %7738 = vmatpush.msra.mxu0 0.0
  %7739 = vmatpush.msra.mxu0 0.0
  %7740 = vmatpush.msra.mxu0 0.0
  %7741 = vmatpush.msra.mxu0 0.0
  %7742 = vmatpush.msra.mxu0 0.0
  %7743 = vmatpush.msra.mxu0 %v6214
  %7744 = vmatpush.msra.mxu0 %v6197
  %7745 = vmatpush.msra.mxu0 %v6074
  %7746 = vmatpush.msra.mxu0 %v6057
  %7747 = vmatpush.msra.mxu0 %v5934
  %7748 = vmatpush.msra.mxu0 %v5917
  %7749 = vmatpush.msra.mxu0 %v5794
  %7750 = vmatpush.msra.mxu0 %v5777
  %7751 = vmatpush.msra.mxu0 %v5651
  %7752 = vmatpush.msra.mxu0 %v5633
  %7753 = vmatmul.f32.gmra.mxu0 %v7494
  %v7754 = vpop.f32.mrf.mxu0
  %v7755 = vadd.f32 0.0, %v7754
  %7756 = vmatmul.f32.gmra.mxu0 %v7497
  %v7757 = vpop.f32.mrf.mxu0
  %v7758 = vadd.f32 0.0, %v7757
  %7759 = vmatmul.f32.gmra.mxu0 %v7500
  %v7760 = vpop.f32.mrf.mxu0
  %v7761 = vadd.f32 0.0, %v7760
  %7762 = vmatmul.f32.gmra.mxu0 %v7503
  %v7763 = vpop.f32.mrf.mxu0
  %v7764 = vadd.f32 0.0, %v7763
  %7765 = vdwg.mxu0
  %7766 = vmatpush.msra.mxu0 0.0
  %7767 = vmatpush.msra.mxu0 0.0
  %7768 = vmatpush.msra.mxu0 0.0
  %7769 = vmatpush.msra.mxu0 0.0
  %7770 = vmatpush.msra.mxu0 0.0
  %7771 = vmatpush.msra.mxu0 0.0
  %7772 = vmatpush.msra.mxu0 %v6215
  %7773 = vmatpush.msra.mxu0 %v6198
  %7774 = vmatpush.msra.mxu0 %v6075
  %7775 = vmatpush.msra.mxu0 %v6058
  %7776 = vmatpush.msra.mxu0 %v5935
  %7777 = vmatpush.msra.mxu0 %v5918
  %7778 = vmatpush.msra.mxu0 %v5795
  %7779 = vmatpush.msra.mxu0 %v5778
  %7780 = vmatpush.msra.mxu0 %v5652
  %7781 = vmatpush.msra.mxu0 %v5634
  %7782 = vmatmul.f32.gmra.mxu0 %v7494
  %v7783 = vpop.f32.mrf.mxu0
  %v7784 = vadd.f32 0.0, %v7783
  %7785 = vmatmul.f32.gmra.mxu0 %v7497
  %v7786 = vpop.f32.mrf.mxu0
  %v7787 = vadd.f32 0.0, %v7786
  %7788 = vmatmul.f32.gmra.mxu0 %v7500
  %v7789 = vpop.f32.mrf.mxu0
  %v7790 = vadd.f32 0.0, %v7789
  %7791 = vmatmul.f32.gmra.mxu0 %v7503
  %v7792 = vpop.f32.mrf.mxu0
  %v7793 = vadd.f32 0.0, %v7792
  %7794 = vdwg.mxu0
  %7795 = vmatpush.msra.mxu0 0.0
  %7796 = vmatpush.msra.mxu0 0.0
  %7797 = vmatpush.msra.mxu0 0.0
  %7798 = vmatpush.msra.mxu0 0.0
  %7799 = vmatpush.msra.mxu0 0.0
  %7800 = vmatpush.msra.mxu0 0.0
  %7801 = vmatpush.msra.mxu0 %v6216
  %7802 = vmatpush.msra.mxu0 %v6199
  %7803 = vmatpush.msra.mxu0 %v6076
  %7804 = vmatpush.msra.mxu0 %v6059
  %7805 = vmatpush.msra.mxu0 %v5936
  %7806 = vmatpush.msra.mxu0 %v5919
  %7807 = vmatpush.msra.mxu0 %v5796
  %7808 = vmatpush.msra.mxu0 %v5779
  %7809 = vmatpush.msra.mxu0 %v5653
  %7810 = vmatpush.msra.mxu0 %v5635
  %7811 = vmatmul.f32.gmra.mxu0 %v7494
  %v7812 = vpop.f32.mrf.mxu0
  %v7813 = vadd.f32 0.0, %v7812
  %7814 = vmatmul.f32.gmra.mxu0 %v7497
  %v7815 = vpop.f32.mrf.mxu0
  %v7816 = vadd.f32 0.0, %v7815
  %7817 = vmatmul.f32.gmra.mxu0 %v7500
  %v7818 = vpop.f32.mrf.mxu0
  %v7819 = vadd.f32 0.0, %v7818
  %7820 = vmatmul.f32.gmra.mxu0 %v7503
  %v7821 = vpop.f32.mrf.mxu0
  %v7822 = vadd.f32 0.0, %v7821
  %7823 = vdwg.mxu0
  %7824 = vmatpush.msra.mxu0 0.0
  %7825 = vmatpush.msra.mxu0 0.0
  %7826 = vmatpush.msra.mxu0 0.0
  %7827 = vmatpush.msra.mxu0 0.0
  %7828 = vmatpush.msra.mxu0 0.0
  %7829 = vmatpush.msra.mxu0 0.0
  %7830 = vmatpush.msra.mxu0 %v6217
  %7831 = vmatpush.msra.mxu0 %v6200
  %7832 = vmatpush.msra.mxu0 %v6077
  %7833 = vmatpush.msra.mxu0 %v6060
  %7834 = vmatpush.msra.mxu0 %v5937
  %7835 = vmatpush.msra.mxu0 %v5920
  %7836 = vmatpush.msra.mxu0 %v5797
  %7837 = vmatpush.msra.mxu0 %v5780
  %7838 = vmatpush.msra.mxu0 %v5654
  %7839 = vmatpush.msra.mxu0 %v5636
  %7840 = vmatmul.f32.gmra.mxu0 %v7494
  %v7841 = vpop.f32.mrf.mxu0
  %v7842 = vadd.f32 0.0, %v7841
  %7843 = vmatmul.f32.gmra.mxu0 %v7497
  %v7844 = vpop.f32.mrf.mxu0
  %v7845 = vadd.f32 0.0, %v7844
  %7846 = vmatmul.f32.gmra.mxu0 %v7500
  %v7847 = vpop.f32.mrf.mxu0
  %v7848 = vadd.f32 0.0, %v7847
  %7849 = vmatmul.f32.gmra.mxu0 %v7503
  %v7850 = vpop.f32.mrf.mxu0
  %v7851 = vadd.f32 0.0, %v7850
  %7852 = vdwg.mxu0
  %7853 = vmatpush.msra.mxu0 0.0
  %7854 = vmatpush.msra.mxu0 0.0
  %7855 = vmatpush.msra.mxu0 0.0
  %7856 = vmatpush.msra.mxu0 0.0
  %7857 = vmatpush.msra.mxu0 0.0
  %7858 = vmatpush.msra.mxu0 0.0
  %7859 = vmatpush.msra.mxu0 %v6218
  %7860 = vmatpush.msra.mxu0 %v6201
  %7861 = vmatpush.msra.mxu0 %v6078
  %7862 = vmatpush.msra.mxu0 %v6061
  %7863 = vmatpush.msra.mxu0 %v5938
  %7864 = vmatpush.msra.mxu0 %v5921
  %7865 = vmatpush.msra.mxu0 %v5798
  %7866 = vmatpush.msra.mxu0 %v5781
  %7867 = vmatpush.msra.mxu0 %v5655
  %7868 = vmatpush.msra.mxu0 %v5637
  %7869 = vmatmul.f32.gmra.mxu0 %v7494
  %v7870 = vpop.f32.mrf.mxu0
  %v7871 = vadd.f32 0.0, %v7870
  %7872 = vmatmul.f32.gmra.mxu0 %v7497
  %v7873 = vpop.f32.mrf.mxu0
  %v7874 = vadd.f32 0.0, %v7873
  %7875 = vmatmul.f32.gmra.mxu0 %v7500
  %v7876 = vpop.f32.mrf.mxu0
  %v7877 = vadd.f32 0.0, %v7876
  %7878 = vmatmul.f32.gmra.mxu0 %v7503
  %v7879 = vpop.f32.mrf.mxu0
  %v7880 = vadd.f32 0.0, %v7879
  %7881 = vdwg.mxu0
  %v7882 = vadd.f32 %v7436, %v7523
  %v7883 = vadd.f32 %v7437, %v7552
  %v7884 = vadd.f32 %v7438, %v7581
  %v7885 = vadd.f32 %v7439, %v7610
  %v7886 = vadd.f32 %v7440, %v7639
  %v7887 = vadd.f32 %v7441, %v7668
  %v7888 = vadd.f32 %v7442, %v7697
  %v7889 = vadd.f32 %v7443, %v7726
  %v7890 = vadd.f32 %v7444, %v7755
  %v7891 = vadd.f32 %v7445, %v7784
  %v7892 = vadd.f32 %v7446, %v7813
  %v7893 = vadd.f32 %v7447, %v7842
  %v7894 = vadd.f32 %v7448, %v7871
  %v7895 = vadd.f32 %v7449, %v7526
  %v7896 = vadd.f32 %v7450, %v7555
  %v7897 = vadd.f32 %v7451, %v7584
  %v7898 = vadd.f32 %v7452, %v7613
  %v7899 = vadd.f32 %v7453, %v7642
  %v7900 = vadd.f32 %v7454, %v7671
  %v7901 = vadd.f32 %v7455, %v7700
  %v7902 = vadd.f32 %v7456, %v7729
  %v7903 = vadd.f32 %v7457, %v7758
  %v7904 = vadd.f32 %v7458, %v7787
  %v7905 = vadd.f32 %v7459, %v7816
  %v7906 = vadd.f32 %v7460, %v7845
  %v7907 = vadd.f32 %v7461, %v7874
  %v7908 = vadd.f32 %v7462, %v7529
  %v7909 = vadd.f32 %v7463, %v7558
  %v7910 = vadd.f32 %v7464, %v7587
  %v7911 = vadd.f32 %v7465, %v7616
  %v7912 = vadd.f32 %v7466, %v7645
  %v7913 = vadd.f32 %v7467, %v7674
  %v7914 = vadd.f32 %v7468, %v7703
  %v7915 = vadd.f32 %v7469, %v7732
  %v7916 = vadd.f32 %v7470, %v7761
  %v7917 = vadd.f32 %v7471, %v7790
  %v7918 = vadd.f32 %v7472, %v7819
  %v7919 = vadd.f32 %v7473, %v7848
  %v7920 = vadd.f32 %v7474, %v7877
  %v7921 = vadd.f32 %v7475, %v7532
  %v7922 = vadd.f32 %v7476, %v7561
  %v7923 = vadd.f32 %v7477, %v7590
  %v7924 = vadd.f32 %v7478, %v7619
  %v7925 = vadd.f32 %v7479, %v7648
  %v7926 = vadd.f32 %v7480, %v7677
  %v7927 = vadd.f32 %v7481, %v7706
  %v7928 = vadd.f32 %v7482, %v7735
  %v7929 = vadd.f32 %v7483, %v7764
  %v7930 = vadd.f32 %v7484, %v7793
  %v7931 = vadd.f32 %v7485, %v7822
  %v7932 = vadd.f32 %v7486, %v7851
  %v7933 = vadd.f32 %v7487, %v7880
  %s7934 = scalar_lea.vmem %s3, 128
  %v7935 = vld [vmem:[%s7934] sm:$0xff]
  %v7936 = vld [vmem:[%s7934 + $0x8] sm:$0xff]
  %v7937 = vld [vmem:[%s7934 + $0x10] sm:$0xff]
  %v7938 = vld [vmem:[%s7934 + $0x18] sm:$0xff]
  %v7940 = vsel %vm6263, %v7935, 0
  %v7943 = vsel %vm6263, %v7936, 0
  %v7946 = vsel %vm6263, %v7937, 0
  %v7949 = vsel %vm6263, %v7938, 0
  %7951 = vmatpush.msra.mxu0 0.0
  %7952 = vmatpush.msra.mxu0 0.0
  %7953 = vmatpush.msra.mxu0 0.0
  %7954 = vmatpush.msra.mxu0 0.0
  %7955 = vmatpush.msra.mxu0 0.0
  %7956 = vmatpush.msra.mxu0 0.0
  %7957 = vmatpush.msra.mxu0 %v6207
  %7958 = vmatpush.msra.mxu0 %v6190
  %7959 = vmatpush.msra.mxu0 %v6067
  %7960 = vmatpush.msra.mxu0 %v6050
  %7961 = vmatpush.msra.mxu0 %v5927
  %7962 = vmatpush.msra.mxu0 %v5910
  %7963 = vmatpush.msra.mxu0 %v5787
  %7964 = vmatpush.msra.mxu0 %v5770
  %7965 = vmatpush.msra.mxu0 %v5644
  %7966 = vmatpush.msra.mxu0 %v5626
  %7967 = vmatmul.f32.gmra.mxu0 %v7940
  %v7968 = vpop.f32.mrf.mxu0
  %v7969 = vadd.f32 0.0, %v7968
  %7970 = vmatmul.f32.gmra.mxu0 %v7943
  %v7971 = vpop.f32.mrf.mxu0
  %v7972 = vadd.f32 0.0, %v7971
  %7973 = vmatmul.f32.gmra.mxu0 %v7946
  %v7974 = vpop.f32.mrf.mxu0
  %v7975 = vadd.f32 0.0, %v7974
  %7976 = vmatmul.f32.gmra.mxu0 %v7949
  %v7977 = vpop.f32.mrf.mxu0
  %v7978 = vadd.f32 0.0, %v7977
  %7979 = vdwg.mxu0
  %7980 = vmatpush.msra.mxu0 0.0
  %7981 = vmatpush.msra.mxu0 0.0
  %7982 = vmatpush.msra.mxu0 0.0
  %7983 = vmatpush.msra.mxu0 0.0
  %7984 = vmatpush.msra.mxu0 0.0
  %7985 = vmatpush.msra.mxu0 0.0
  %7986 = vmatpush.msra.mxu0 %v6208
  %7987 = vmatpush.msra.mxu0 %v6191
  %7988 = vmatpush.msra.mxu0 %v6068
  %7989 = vmatpush.msra.mxu0 %v6051
  %7990 = vmatpush.msra.mxu0 %v5928
  %7991 = vmatpush.msra.mxu0 %v5911
  %7992 = vmatpush.msra.mxu0 %v5788
  %7993 = vmatpush.msra.mxu0 %v5771
  %7994 = vmatpush.msra.mxu0 %v5645
  %7995 = vmatpush.msra.mxu0 %v5627
  %7996 = vmatmul.f32.gmra.mxu0 %v7940
  %v7997 = vpop.f32.mrf.mxu0
  %v7998 = vadd.f32 0.0, %v7997
  %7999 = vmatmul.f32.gmra.mxu0 %v7943
  %v8000 = vpop.f32.mrf.mxu0
  %v8001 = vadd.f32 0.0, %v8000
  %8002 = vmatmul.f32.gmra.mxu0 %v7946
  %v8003 = vpop.f32.mrf.mxu0
  %v8004 = vadd.f32 0.0, %v8003
  %8005 = vmatmul.f32.gmra.mxu0 %v7949
  %v8006 = vpop.f32.mrf.mxu0
  %v8007 = vadd.f32 0.0, %v8006
  %8008 = vdwg.mxu0
  %8009 = vmatpush.msra.mxu0 0.0
  %8010 = vmatpush.msra.mxu0 0.0
  %8011 = vmatpush.msra.mxu0 0.0
  %8012 = vmatpush.msra.mxu0 0.0
  %8013 = vmatpush.msra.mxu0 0.0
  %8014 = vmatpush.msra.mxu0 0.0
  %8015 = vmatpush.msra.mxu0 %v6209
  %8016 = vmatpush.msra.mxu0 %v6192
  %8017 = vmatpush.msra.mxu0 %v6069
  %8018 = vmatpush.msra.mxu0 %v6052
  %8019 = vmatpush.msra.mxu0 %v5929
  %8020 = vmatpush.msra.mxu0 %v5912
  %8021 = vmatpush.msra.mxu0 %v5789
  %8022 = vmatpush.msra.mxu0 %v5772
  %8023 = vmatpush.msra.mxu0 %v5646
  %8024 = vmatpush.msra.mxu0 %v5628
  %8025 = vmatmul.f32.gmra.mxu0 %v7940
  %v8026 = vpop.f32.mrf.mxu0
  %v8027 = vadd.f32 0.0, %v8026
  %8028 = vmatmul.f32.gmra.mxu0 %v7943
  %v8029 = vpop.f32.mrf.mxu0
  %v8030 = vadd.f32 0.0, %v8029
  %8031 = vmatmul.f32.gmra.mxu0 %v7946
  %v8032 = vpop.f32.mrf.mxu0
  %v8033 = vadd.f32 0.0, %v8032
  %8034 = vmatmul.f32.gmra.mxu0 %v7949
  %v8035 = vpop.f32.mrf.mxu0
  %v8036 = vadd.f32 0.0, %v8035
  %8037 = vdwg.mxu0
  %8038 = vmatpush.msra.mxu0 0.0
  %8039 = vmatpush.msra.mxu0 0.0
  %8040 = vmatpush.msra.mxu0 0.0
  %8041 = vmatpush.msra.mxu0 0.0
  %8042 = vmatpush.msra.mxu0 0.0
  %8043 = vmatpush.msra.mxu0 0.0
  %8044 = vmatpush.msra.mxu0 %v6210
  %8045 = vmatpush.msra.mxu0 %v6193
  %8046 = vmatpush.msra.mxu0 %v6070
  %8047 = vmatpush.msra.mxu0 %v6053
  %8048 = vmatpush.msra.mxu0 %v5930
  %8049 = vmatpush.msra.mxu0 %v5913
  %8050 = vmatpush.msra.mxu0 %v5790
  %8051 = vmatpush.msra.mxu0 %v5773
  %8052 = vmatpush.msra.mxu0 %v5647
  %8053 = vmatpush.msra.mxu0 %v5629
  %8054 = vmatmul.f32.gmra.mxu0 %v7940
  %v8055 = vpop.f32.mrf.mxu0
  %v8056 = vadd.f32 0.0, %v8055
  %8057 = vmatmul.f32.gmra.mxu0 %v7943
  %v8058 = vpop.f32.mrf.mxu0
  %v8059 = vadd.f32 0.0, %v8058
  %8060 = vmatmul.f32.gmra.mxu0 %v7946
  %v8061 = vpop.f32.mrf.mxu0
  %v8062 = vadd.f32 0.0, %v8061
  %8063 = vmatmul.f32.gmra.mxu0 %v7949
  %v8064 = vpop.f32.mrf.mxu0
  %v8065 = vadd.f32 0.0, %v8064
  %8066 = vdwg.mxu0
  %8067 = vmatpush.msra.mxu0 0.0
  %8068 = vmatpush.msra.mxu0 0.0
  %8069 = vmatpush.msra.mxu0 0.0
  %8070 = vmatpush.msra.mxu0 0.0
  %8071 = vmatpush.msra.mxu0 0.0
  %8072 = vmatpush.msra.mxu0 0.0
  %8073 = vmatpush.msra.mxu0 %v6211
  %8074 = vmatpush.msra.mxu0 %v6194
  %8075 = vmatpush.msra.mxu0 %v6071
  %8076 = vmatpush.msra.mxu0 %v6054
  %8077 = vmatpush.msra.mxu0 %v5931
  %8078 = vmatpush.msra.mxu0 %v5914
  %8079 = vmatpush.msra.mxu0 %v5791
  %8080 = vmatpush.msra.mxu0 %v5774
  %8081 = vmatpush.msra.mxu0 %v5648
  %8082 = vmatpush.msra.mxu0 %v5630
  %8083 = vmatmul.f32.gmra.mxu0 %v7940
  %v8084 = vpop.f32.mrf.mxu0
  %v8085 = vadd.f32 0.0, %v8084
  %8086 = vmatmul.f32.gmra.mxu0 %v7943
  %v8087 = vpop.f32.mrf.mxu0
  %v8088 = vadd.f32 0.0, %v8087
  %8089 = vmatmul.f32.gmra.mxu0 %v7946
  %v8090 = vpop.f32.mrf.mxu0
  %v8091 = vadd.f32 0.0, %v8090
  %8092 = vmatmul.f32.gmra.mxu0 %v7949
  %v8093 = vpop.f32.mrf.mxu0
  %v8094 = vadd.f32 0.0, %v8093
  %8095 = vdwg.mxu0
  %8096 = vmatpush.msra.mxu0 0.0
  %8097 = vmatpush.msra.mxu0 0.0
  %8098 = vmatpush.msra.mxu0 0.0
  %8099 = vmatpush.msra.mxu0 0.0
  %8100 = vmatpush.msra.mxu0 0.0
  %8101 = vmatpush.msra.mxu0 0.0
  %8102 = vmatpush.msra.mxu0 %v6212
  %8103 = vmatpush.msra.mxu0 %v6195
  %8104 = vmatpush.msra.mxu0 %v6072
  %8105 = vmatpush.msra.mxu0 %v6055
  %8106 = vmatpush.msra.mxu0 %v5932
  %8107 = vmatpush.msra.mxu0 %v5915
  %8108 = vmatpush.msra.mxu0 %v5792
  %8109 = vmatpush.msra.mxu0 %v5775
  %8110 = vmatpush.msra.mxu0 %v5649
  %8111 = vmatpush.msra.mxu0 %v5631
  %8112 = vmatmul.f32.gmra.mxu0 %v7940
  %v8113 = vpop.f32.mrf.mxu0
  %v8114 = vadd.f32 0.0, %v8113
  %8115 = vmatmul.f32.gmra.mxu0 %v7943
  %v8116 = vpop.f32.mrf.mxu0
  %v8117 = vadd.f32 0.0, %v8116
  %8118 = vmatmul.f32.gmra.mxu0 %v7946
  %v8119 = vpop.f32.mrf.mxu0
  %v8120 = vadd.f32 0.0, %v8119
  %8121 = vmatmul.f32.gmra.mxu0 %v7949
  %v8122 = vpop.f32.mrf.mxu0
  %v8123 = vadd.f32 0.0, %v8122
  %8124 = vdwg.mxu0
  %8125 = vmatpush.msra.mxu0 0.0
  %8126 = vmatpush.msra.mxu0 0.0
  %8127 = vmatpush.msra.mxu0 0.0
  %8128 = vmatpush.msra.mxu0 0.0
  %8129 = vmatpush.msra.mxu0 0.0
  %8130 = vmatpush.msra.mxu0 0.0
  %8131 = vmatpush.msra.mxu0 %v6213
  %8132 = vmatpush.msra.mxu0 %v6196
  %8133 = vmatpush.msra.mxu0 %v6073
  %8134 = vmatpush.msra.mxu0 %v6056
  %8135 = vmatpush.msra.mxu0 %v5933
  %8136 = vmatpush.msra.mxu0 %v5916
  %8137 = vmatpush.msra.mxu0 %v5793
  %8138 = vmatpush.msra.mxu0 %v5776
  %8139 = vmatpush.msra.mxu0 %v5650
  %8140 = vmatpush.msra.mxu0 %v5632
  %8141 = vmatmul.f32.gmra.mxu0 %v7940
  %v8142 = vpop.f32.mrf.mxu0
  %v8143 = vadd.f32 0.0, %v8142
  %8144 = vmatmul.f32.gmra.mxu0 %v7943
  %v8145 = vpop.f32.mrf.mxu0
  %v8146 = vadd.f32 0.0, %v8145
  %8147 = vmatmul.f32.gmra.mxu0 %v7946
  %v8148 = vpop.f32.mrf.mxu0
  %v8149 = vadd.f32 0.0, %v8148
  %8150 = vmatmul.f32.gmra.mxu0 %v7949
  %v8151 = vpop.f32.mrf.mxu0
  %v8152 = vadd.f32 0.0, %v8151
  %8153 = vdwg.mxu0
  %8154 = vmatpush.msra.mxu0 0.0
  %8155 = vmatpush.msra.mxu0 0.0
  %8156 = vmatpush.msra.mxu0 0.0
  %8157 = vmatpush.msra.mxu0 0.0
  %8158 = vmatpush.msra.mxu0 0.0
  %8159 = vmatpush.msra.mxu0 0.0
  %8160 = vmatpush.msra.mxu0 %v6214
  %8161 = vmatpush.msra.mxu0 %v6197
  %8162 = vmatpush.msra.mxu0 %v6074
  %8163 = vmatpush.msra.mxu0 %v6057
  %8164 = vmatpush.msra.mxu0 %v5934
  %8165 = vmatpush.msra.mxu0 %v5917
  %8166 = vmatpush.msra.mxu0 %v5794
  %8167 = vmatpush.msra.mxu0 %v5777
  %8168 = vmatpush.msra.mxu0 %v5651
  %8169 = vmatpush.msra.mxu0 %v5633
  %8170 = vmatmul.f32.gmra.mxu0 %v7940
  %v8171 = vpop.f32.mrf.mxu0
  %v8172 = vadd.f32 0.0, %v8171
  %8173 = vmatmul.f32.gmra.mxu0 %v7943
  %v8174 = vpop.f32.mrf.mxu0
  %v8175 = vadd.f32 0.0, %v8174
  %8176 = vmatmul.f32.gmra.mxu0 %v7946
  %v8177 = vpop.f32.mrf.mxu0
  %v8178 = vadd.f32 0.0, %v8177
  %8179 = vmatmul.f32.gmra.mxu0 %v7949
  %v8180 = vpop.f32.mrf.mxu0
  %v8181 = vadd.f32 0.0, %v8180
  %8182 = vdwg.mxu0
  %8183 = vmatpush.msra.mxu0 0.0
  %8184 = vmatpush.msra.mxu0 0.0
  %8185 = vmatpush.msra.mxu0 0.0
  %8186 = vmatpush.msra.mxu0 0.0
  %8187 = vmatpush.msra.mxu0 0.0
  %8188 = vmatpush.msra.mxu0 0.0
  %8189 = vmatpush.msra.mxu0 %v6215
  %8190 = vmatpush.msra.mxu0 %v6198
  %8191 = vmatpush.msra.mxu0 %v6075
  %8192 = vmatpush.msra.mxu0 %v6058
  %8193 = vmatpush.msra.mxu0 %v5935
  %8194 = vmatpush.msra.mxu0 %v5918
  %8195 = vmatpush.msra.mxu0 %v5795
  %8196 = vmatpush.msra.mxu0 %v5778
  %8197 = vmatpush.msra.mxu0 %v5652
  %8198 = vmatpush.msra.mxu0 %v5634
  %8199 = vmatmul.f32.gmra.mxu0 %v7940
  %v8200 = vpop.f32.mrf.mxu0
  %v8201 = vadd.f32 0.0, %v8200
  %8202 = vmatmul.f32.gmra.mxu0 %v7943
  %v8203 = vpop.f32.mrf.mxu0
  %v8204 = vadd.f32 0.0, %v8203
  %8205 = vmatmul.f32.gmra.mxu0 %v7946
  %v8206 = vpop.f32.mrf.mxu0
  %v8207 = vadd.f32 0.0, %v8206
  %8208 = vmatmul.f32.gmra.mxu0 %v7949
  %v8209 = vpop.f32.mrf.mxu0
  %v8210 = vadd.f32 0.0, %v8209
  %8211 = vdwg.mxu0
  %8212 = vmatpush.msra.mxu0 0.0
  %8213 = vmatpush.msra.mxu0 0.0
  %8214 = vmatpush.msra.mxu0 0.0
  %8215 = vmatpush.msra.mxu0 0.0
  %8216 = vmatpush.msra.mxu0 0.0
  %8217 = vmatpush.msra.mxu0 0.0
  %8218 = vmatpush.msra.mxu0 %v6216
  %8219 = vmatpush.msra.mxu0 %v6199
  %8220 = vmatpush.msra.mxu0 %v6076
  %8221 = vmatpush.msra.mxu0 %v6059
  %8222 = vmatpush.msra.mxu0 %v5936
  %8223 = vmatpush.msra.mxu0 %v5919
  %8224 = vmatpush.msra.mxu0 %v5796
  %8225 = vmatpush.msra.mxu0 %v5779
  %8226 = vmatpush.msra.mxu0 %v5653
  %8227 = vmatpush.msra.mxu0 %v5635
  %8228 = vmatmul.f32.gmra.mxu0 %v7940
  %v8229 = vpop.f32.mrf.mxu0
  %v8230 = vadd.f32 0.0, %v8229
  %8231 = vmatmul.f32.gmra.mxu0 %v7943
  %v8232 = vpop.f32.mrf.mxu0
  %v8233 = vadd.f32 0.0, %v8232
  %8234 = vmatmul.f32.gmra.mxu0 %v7946
  %v8235 = vpop.f32.mrf.mxu0
  %v8236 = vadd.f32 0.0, %v8235
  %8237 = vmatmul.f32.gmra.mxu0 %v7949
  %v8238 = vpop.f32.mrf.mxu0
  %v8239 = vadd.f32 0.0, %v8238
  %8240 = vdwg.mxu0
  %8241 = vmatpush.msra.mxu0 0.0
  %8242 = vmatpush.msra.mxu0 0.0
  %8243 = vmatpush.msra.mxu0 0.0
  %8244 = vmatpush.msra.mxu0 0.0
  %8245 = vmatpush.msra.mxu0 0.0
  %8246 = vmatpush.msra.mxu0 0.0
  %8247 = vmatpush.msra.mxu0 %v6217
  %8248 = vmatpush.msra.mxu0 %v6200
  %8249 = vmatpush.msra.mxu0 %v6077
  %8250 = vmatpush.msra.mxu0 %v6060
  %8251 = vmatpush.msra.mxu0 %v5937
  %8252 = vmatpush.msra.mxu0 %v5920
  %8253 = vmatpush.msra.mxu0 %v5797
  %8254 = vmatpush.msra.mxu0 %v5780
  %8255 = vmatpush.msra.mxu0 %v5654
  %8256 = vmatpush.msra.mxu0 %v5636
  %8257 = vmatmul.f32.gmra.mxu0 %v7940
  %v8258 = vpop.f32.mrf.mxu0
  %v8259 = vadd.f32 0.0, %v8258
  %8260 = vmatmul.f32.gmra.mxu0 %v7943
  %v8261 = vpop.f32.mrf.mxu0
  %v8262 = vadd.f32 0.0, %v8261
  %8263 = vmatmul.f32.gmra.mxu0 %v7946
  %v8264 = vpop.f32.mrf.mxu0
  %v8265 = vadd.f32 0.0, %v8264
  %8266 = vmatmul.f32.gmra.mxu0 %v7949
  %v8267 = vpop.f32.mrf.mxu0
  %v8268 = vadd.f32 0.0, %v8267
  %8269 = vdwg.mxu0
  %8270 = vmatpush.msra.mxu0 0.0
  %8271 = vmatpush.msra.mxu0 0.0
  %8272 = vmatpush.msra.mxu0 0.0
  %8273 = vmatpush.msra.mxu0 0.0
  %8274 = vmatpush.msra.mxu0 0.0
  %8275 = vmatpush.msra.mxu0 0.0
  %8276 = vmatpush.msra.mxu0 %v6218
  %8277 = vmatpush.msra.mxu0 %v6201
  %8278 = vmatpush.msra.mxu0 %v6078
  %8279 = vmatpush.msra.mxu0 %v6061
  %8280 = vmatpush.msra.mxu0 %v5938
  %8281 = vmatpush.msra.mxu0 %v5921
  %8282 = vmatpush.msra.mxu0 %v5798
  %8283 = vmatpush.msra.mxu0 %v5781
  %8284 = vmatpush.msra.mxu0 %v5655
  %8285 = vmatpush.msra.mxu0 %v5637
  %8286 = vmatmul.f32.gmra.mxu0 %v7940
  %v8287 = vpop.f32.mrf.mxu0
  %v8288 = vadd.f32 0.0, %v8287
  %8289 = vmatmul.f32.gmra.mxu0 %v7943
  %v8290 = vpop.f32.mrf.mxu0
  %v8291 = vadd.f32 0.0, %v8290
  %8292 = vmatmul.f32.gmra.mxu0 %v7946
  %v8293 = vpop.f32.mrf.mxu0
  %v8294 = vadd.f32 0.0, %v8293
  %8295 = vmatmul.f32.gmra.mxu0 %v7949
  %v8296 = vpop.f32.mrf.mxu0
  %v8297 = vadd.f32 0.0, %v8296
  %8298 = vdwg.mxu0
  %8299 = vmatpush.msra.mxu0 0.0
  %8300 = vmatpush.msra.mxu0 0.0
  %8301 = vmatpush.msra.mxu0 0.0
  %8302 = vmatpush.msra.mxu0 0.0
  %8303 = vmatpush.msra.mxu0 0.0
  %8304 = vmatpush.msra.mxu0 0.0
  %8305 = vmatpush.msra.mxu0 %v6219
  %8306 = vmatpush.msra.mxu0 %v6202
  %8307 = vmatpush.msra.mxu0 %v6079
  %8308 = vmatpush.msra.mxu0 %v6062
  %8309 = vmatpush.msra.mxu0 %v5939
  %8310 = vmatpush.msra.mxu0 %v5922
  %8311 = vmatpush.msra.mxu0 %v5799
  %8312 = vmatpush.msra.mxu0 %v5782
  %8313 = vmatpush.msra.mxu0 %v5656
  %8314 = vmatpush.msra.mxu0 %v5638
  %8315 = vmatmul.f32.gmra.mxu0 %v7940
  %v8316 = vpop.f32.mrf.mxu0
  %v8317 = vadd.f32 0.0, %v8316
  %8318 = vmatmul.f32.gmra.mxu0 %v7943
  %v8319 = vpop.f32.mrf.mxu0
  %v8320 = vadd.f32 0.0, %v8319
  %8321 = vmatmul.f32.gmra.mxu0 %v7946
  %v8322 = vpop.f32.mrf.mxu0
  %v8323 = vadd.f32 0.0, %v8322
  %8324 = vmatmul.f32.gmra.mxu0 %v7949
  %v8325 = vpop.f32.mrf.mxu0
  %v8326 = vadd.f32 0.0, %v8325
  %8327 = vdwg.mxu0
  %v8328 = vadd.f32 %v7882, %v7969
  %v8329 = vadd.f32 %v7883, %v7998
  %v8330 = vadd.f32 %v7884, %v8027
  %v8331 = vadd.f32 %v7885, %v8056
  %v8332 = vadd.f32 %v7886, %v8085
  %v8333 = vadd.f32 %v7887, %v8114
  %v8334 = vadd.f32 %v7888, %v8143
  %v8335 = vadd.f32 %v7889, %v8172
  %v8336 = vadd.f32 %v7890, %v8201
  %v8337 = vadd.f32 %v7891, %v8230
  %v8338 = vadd.f32 %v7892, %v8259
  %v8339 = vadd.f32 %v7893, %v8288
  %v8340 = vadd.f32 %v7894, %v8317
  %v8341 = vadd.f32 %v7895, %v7972
  %v8342 = vadd.f32 %v7896, %v8001
  %v8343 = vadd.f32 %v7897, %v8030
  %v8344 = vadd.f32 %v7898, %v8059
  %v8345 = vadd.f32 %v7899, %v8088
  %v8346 = vadd.f32 %v7900, %v8117
  %v8347 = vadd.f32 %v7901, %v8146
  %v8348 = vadd.f32 %v7902, %v8175
  %v8349 = vadd.f32 %v7903, %v8204
  %v8350 = vadd.f32 %v7904, %v8233
  %v8351 = vadd.f32 %v7905, %v8262
  %v8352 = vadd.f32 %v7906, %v8291
  %v8353 = vadd.f32 %v7907, %v8320
  %v8354 = vadd.f32 %v7908, %v7975
  %v8355 = vadd.f32 %v7909, %v8004
  %v8356 = vadd.f32 %v7910, %v8033
  %v8357 = vadd.f32 %v7911, %v8062
  %v8358 = vadd.f32 %v7912, %v8091
  %v8359 = vadd.f32 %v7913, %v8120
  %v8360 = vadd.f32 %v7914, %v8149
  %v8361 = vadd.f32 %v7915, %v8178
  %v8362 = vadd.f32 %v7916, %v8207
  %v8363 = vadd.f32 %v7917, %v8236
  %v8364 = vadd.f32 %v7918, %v8265
  %v8365 = vadd.f32 %v7919, %v8294
  %v8366 = vadd.f32 %v7920, %v8323
  %v8367 = vadd.f32 %v7921, %v7978
  %v8368 = vadd.f32 %v7922, %v8007
  %v8369 = vadd.f32 %v7923, %v8036
  %v8370 = vadd.f32 %v7924, %v8065
  %v8371 = vadd.f32 %v7925, %v8094
  %v8372 = vadd.f32 %v7926, %v8123
  %v8373 = vadd.f32 %v7927, %v8152
  %v8374 = vadd.f32 %v7928, %v8181
  %v8375 = vadd.f32 %v7929, %v8210
  %v8376 = vadd.f32 %v7930, %v8239
  %v8377 = vadd.f32 %v7931, %v8268
  %v8378 = vadd.f32 %v7932, %v8297
  %v8379 = vadd.f32 %v7933, %v8326
  %8380 = vset.pattern.permute.xlu0 2
  %8381 = vperm.xlu0 %8380, %v23
  %v8382 = vpop.permute.xlu0 %8381
  %8384 = vset.pattern.permute.xlu0 2
  %8385 = vperm.xlu0 %8384, %v24
  %v8386 = vpop.permute.xlu0 %8385
  %8389 = vset.pattern.permute.xlu0 2
  %8390 = vperm.xlu0 %8389, %v25
  %v8391 = vpop.permute.xlu0 %8390
  %8394 = vset.pattern.permute.xlu0 2
  %8395 = vperm.xlu0 %8394, %v26
  %v8396 = vpop.permute.xlu0 %8395
  %v8398 = vadd.f32 %v8328, %v8382
  %v8399 = vadd.f32 %v8329, %v8382
  %v8400 = vadd.f32 %v8330, %v8382
  %v8401 = vadd.f32 %v8331, %v8382
  %v8402 = vadd.f32 %v8332, %v8382
  %v8403 = vadd.f32 %v8333, %v8382
  %v8404 = vadd.f32 %v8334, %v8382
  %v8405 = vadd.f32 %v8335, %v8382
  %v8406 = vadd.f32 %v8336, %v8382
  %v8407 = vadd.f32 %v8337, %v8382
  %v8408 = vadd.f32 %v8338, %v8382
  %v8409 = vadd.f32 %v8339, %v8382
  %v8410 = vadd.f32 %v8340, %v8382
  %v8411 = vadd.f32 %v8341, %v8386
  %v8412 = vadd.f32 %v8342, %v8386
  %v8413 = vadd.f32 %v8343, %v8386
  %v8414 = vadd.f32 %v8344, %v8386
  %v8415 = vadd.f32 %v8345, %v8386
  %v8416 = vadd.f32 %v8346, %v8386
  %v8417 = vadd.f32 %v8347, %v8386
  %v8418 = vadd.f32 %v8348, %v8386
  %v8419 = vadd.f32 %v8349, %v8386
  %v8420 = vadd.f32 %v8350, %v8386
  %v8421 = vadd.f32 %v8351, %v8386
  %v8422 = vadd.f32 %v8352, %v8386
  %v8423 = vadd.f32 %v8353, %v8386
  %v8424 = vadd.f32 %v8354, %v8391
  %v8425 = vadd.f32 %v8355, %v8391
  %v8426 = vadd.f32 %v8356, %v8391
  %v8427 = vadd.f32 %v8357, %v8391
  %v8428 = vadd.f32 %v8358, %v8391
  %v8429 = vadd.f32 %v8359, %v8391
  %v8430 = vadd.f32 %v8360, %v8391
  %v8431 = vadd.f32 %v8361, %v8391
  %v8432 = vadd.f32 %v8362, %v8391
  %v8433 = vadd.f32 %v8363, %v8391
  %v8434 = vadd.f32 %v8364, %v8391
  %v8435 = vadd.f32 %v8365, %v8391
  %v8436 = vadd.f32 %v8366, %v8391
  %v8437 = vadd.f32 %v8367, %v8396
  %v8438 = vadd.f32 %v8368, %v8396
  %v8439 = vadd.f32 %v8369, %v8396
  %v8440 = vadd.f32 %v8370, %v8396
  %v8441 = vadd.f32 %v8371, %v8396
  %v8442 = vadd.f32 %v8372, %v8396
  %v8443 = vadd.f32 %v8373, %v8396
  %v8444 = vadd.f32 %v8374, %v8396
  %v8445 = vadd.f32 %v8375, %v8396
  %v8446 = vadd.f32 %v8376, %v8396
  %v8447 = vadd.f32 %v8377, %v8396
  %v8448 = vadd.f32 %v8378, %v8396
  %v8449 = vadd.f32 %v8379, %v8396
  %v8450 = vmax.f32 %v8398, 0.0
  %v8451 = vmax.f32 %v8399, 0.0
  %v8452 = vmax.f32 %v8400, 0.0
  %v8453 = vmax.f32 %v8401, 0.0
  %v8454 = vmax.f32 %v8402, 0.0
  %v8455 = vmax.f32 %v8403, 0.0
  %v8456 = vmax.f32 %v8404, 0.0
  %v8457 = vmax.f32 %v8405, 0.0
  %v8458 = vmax.f32 %v8406, 0.0
  %v8459 = vmax.f32 %v8407, 0.0
  %v8460 = vmax.f32 %v8408, 0.0
  %v8461 = vmax.f32 %v8409, 0.0
  %v8462 = vmax.f32 %v8410, 0.0
  %v8463 = vmax.f32 %v8411, 0.0
  %v8464 = vmax.f32 %v8412, 0.0
  %v8465 = vmax.f32 %v8413, 0.0
  %v8466 = vmax.f32 %v8414, 0.0
  %v8467 = vmax.f32 %v8415, 0.0
  %v8468 = vmax.f32 %v8416, 0.0
  %v8469 = vmax.f32 %v8417, 0.0
  %v8470 = vmax.f32 %v8418, 0.0
  %v8471 = vmax.f32 %v8419, 0.0
  %v8472 = vmax.f32 %v8420, 0.0
  %v8473 = vmax.f32 %v8421, 0.0
  %v8474 = vmax.f32 %v8422, 0.0
  %v8475 = vmax.f32 %v8423, 0.0
  %v8476 = vmax.f32 %v8424, 0.0
  %v8477 = vmax.f32 %v8425, 0.0
  %v8478 = vmax.f32 %v8426, 0.0
  %v8479 = vmax.f32 %v8427, 0.0
  %v8480 = vmax.f32 %v8428, 0.0
  %v8481 = vmax.f32 %v8429, 0.0
  %v8482 = vmax.f32 %v8430, 0.0
  %v8483 = vmax.f32 %v8431, 0.0
  %v8484 = vmax.f32 %v8432, 0.0
  %v8485 = vmax.f32 %v8433, 0.0
  %v8486 = vmax.f32 %v8434, 0.0
  %v8487 = vmax.f32 %v8435, 0.0
  %v8488 = vmax.f32 %v8436, 0.0
  %v8489 = vmax.f32 %v8437, 0.0
  %v8490 = vmax.f32 %v8438, 0.0
  %v8491 = vmax.f32 %v8439, 0.0
  %v8492 = vmax.f32 %v8440, 0.0
  %v8493 = vmax.f32 %v8441, 0.0
  %v8494 = vmax.f32 %v8442, 0.0
  %v8495 = vmax.f32 %v8443, 0.0
  %v8496 = vmax.f32 %v8444, 0.0
  %v8497 = vmax.f32 %v8445, 0.0
  %v8498 = vmax.f32 %v8446, 0.0
  %v8499 = vmax.f32 %v8447, 0.0
  %v8500 = vmax.f32 %v8448, 0.0
  %v8501 = vmax.f32 %v8449, 0.0
  %8554 = vrot.lane.b32.xlu0 %v8450, 127
  %v8555 = vpop.permute.xlu0 %8554
  %8556 = vrot.lane.b32.xlu0 %v8451, 127
  %v8557 = vpop.permute.xlu0 %8556
  %8558 = vrot.lane.b32.xlu0 %v8452, 127
  %v8559 = vpop.permute.xlu0 %8558
  %8560 = vrot.lane.b32.xlu0 %v8453, 127
  %v8561 = vpop.permute.xlu0 %8560
  %8562 = vrot.lane.b32.xlu0 %v8454, 127
  %v8563 = vpop.permute.xlu0 %8562
  %8564 = vrot.lane.b32.xlu0 %v8455, 127
  %v8565 = vpop.permute.xlu0 %8564
  %8566 = vrot.lane.b32.xlu0 %v8456, 127
  %v8567 = vpop.permute.xlu0 %8566
  %8568 = vrot.lane.b32.xlu0 %v8457, 127
  %v8569 = vpop.permute.xlu0 %8568
  %8570 = vrot.lane.b32.xlu0 %v8458, 127
  %v8571 = vpop.permute.xlu0 %8570
  %8572 = vrot.lane.b32.xlu0 %v8459, 127
  %v8573 = vpop.permute.xlu0 %8572
  %8574 = vrot.lane.b32.xlu0 %v8460, 127
  %v8575 = vpop.permute.xlu0 %8574
  %8576 = vrot.lane.b32.xlu0 %v8461, 127
  %v8577 = vpop.permute.xlu0 %8576
  %8578 = vrot.lane.b32.xlu0 %v8462, 127
  %v8579 = vpop.permute.xlu0 %8578
  %8580 = vrot.lane.b32.xlu0 %v8463, 127
  %v8581 = vpop.permute.xlu0 %8580
  %8582 = vrot.lane.b32.xlu0 %v8464, 127
  %v8583 = vpop.permute.xlu0 %8582
  %8584 = vrot.lane.b32.xlu0 %v8465, 127
  %v8585 = vpop.permute.xlu0 %8584
  %8586 = vrot.lane.b32.xlu0 %v8466, 127
  %v8587 = vpop.permute.xlu0 %8586
  %8588 = vrot.lane.b32.xlu0 %v8467, 127
  %v8589 = vpop.permute.xlu0 %8588
  %8590 = vrot.lane.b32.xlu0 %v8468, 127
  %v8591 = vpop.permute.xlu0 %8590
  %8592 = vrot.lane.b32.xlu0 %v8469, 127
  %v8593 = vpop.permute.xlu0 %8592
  %8594 = vrot.lane.b32.xlu0 %v8470, 127
  %v8595 = vpop.permute.xlu0 %8594
  %8596 = vrot.lane.b32.xlu0 %v8471, 127
  %v8597 = vpop.permute.xlu0 %8596
  %8598 = vrot.lane.b32.xlu0 %v8472, 127
  %v8599 = vpop.permute.xlu0 %8598
  %8600 = vrot.lane.b32.xlu0 %v8473, 127
  %v8601 = vpop.permute.xlu0 %8600
  %8602 = vrot.lane.b32.xlu0 %v8474, 127
  %v8603 = vpop.permute.xlu0 %8602
  %8604 = vrot.lane.b32.xlu0 %v8475, 127
  %v8605 = vpop.permute.xlu0 %8604
  %8606 = vrot.lane.b32.xlu0 %v8476, 127
  %v8607 = vpop.permute.xlu0 %8606
  %8608 = vrot.lane.b32.xlu0 %v8477, 127
  %v8609 = vpop.permute.xlu0 %8608
  %8610 = vrot.lane.b32.xlu0 %v8478, 127
  %v8611 = vpop.permute.xlu0 %8610
  %8612 = vrot.lane.b32.xlu0 %v8479, 127
  %v8613 = vpop.permute.xlu0 %8612
  %8614 = vrot.lane.b32.xlu0 %v8480, 127
  %v8615 = vpop.permute.xlu0 %8614
  %8616 = vrot.lane.b32.xlu0 %v8481, 127
  %v8617 = vpop.permute.xlu0 %8616
  %8618 = vrot.lane.b32.xlu0 %v8482, 127
  %v8619 = vpop.permute.xlu0 %8618
  %8620 = vrot.lane.b32.xlu0 %v8483, 127
  %v8621 = vpop.permute.xlu0 %8620
  %8622 = vrot.lane.b32.xlu0 %v8484, 127
  %v8623 = vpop.permute.xlu0 %8622
  %8624 = vrot.lane.b32.xlu0 %v8485, 127
  %v8625 = vpop.permute.xlu0 %8624
  %8626 = vrot.lane.b32.xlu0 %v8486, 127
  %v8627 = vpop.permute.xlu0 %8626
  %8628 = vrot.lane.b32.xlu0 %v8487, 127
  %v8629 = vpop.permute.xlu0 %8628
  %8630 = vrot.lane.b32.xlu0 %v8488, 127
  %v8631 = vpop.permute.xlu0 %8630
  %8632 = vrot.lane.b32.xlu0 %v8489, 127
  %v8633 = vpop.permute.xlu0 %8632
  %8634 = vrot.lane.b32.xlu0 %v8490, 127
  %v8635 = vpop.permute.xlu0 %8634
  %8636 = vrot.lane.b32.xlu0 %v8491, 127
  %v8637 = vpop.permute.xlu0 %8636
  %8638 = vrot.lane.b32.xlu0 %v8492, 127
  %v8639 = vpop.permute.xlu0 %8638
  %8640 = vrot.lane.b32.xlu0 %v8493, 127
  %v8641 = vpop.permute.xlu0 %8640
  %8642 = vrot.lane.b32.xlu0 %v8494, 127
  %v8643 = vpop.permute.xlu0 %8642
  %8644 = vrot.lane.b32.xlu0 %v8495, 127
  %v8645 = vpop.permute.xlu0 %8644
  %8646 = vrot.lane.b32.xlu0 %v8496, 127
  %v8647 = vpop.permute.xlu0 %8646
  %8648 = vrot.lane.b32.xlu0 %v8497, 127
  %v8649 = vpop.permute.xlu0 %8648
  %8650 = vrot.lane.b32.xlu0 %v8498, 127
  %v8651 = vpop.permute.xlu0 %8650
  %8652 = vrot.lane.b32.xlu0 %v8499, 127
  %v8653 = vpop.permute.xlu0 %8652
  %8654 = vrot.lane.b32.xlu0 %v8500, 127
  %v8655 = vpop.permute.xlu0 %8654
  %8656 = vrot.lane.b32.xlu0 %v8501, 127
  %v8657 = vpop.permute.xlu0 %8656
  %v8658 = vsel %vm139, %v8555, %v8557
  %v8659 = vsel %vm139, %v8557, %v8559
  %v8660 = vsel %vm139, %v8559, %v8561
  %v8661 = vsel %vm139, %v8561, %v8563
  %v8662 = vsel %vm139, %v8563, %v8565
  %v8663 = vsel %vm139, %v8565, %v8567
  %v8664 = vsel %vm139, %v8567, %v8569
  %v8665 = vsel %vm139, %v8569, %v8571
  %v8666 = vsel %vm139, %v8571, %v8573
  %v8667 = vsel %vm139, %v8573, %v8575
  %v8668 = vsel %vm139, %v8575, %v8577
  %v8669 = vsel %vm139, %v8577, %v8579
  %v8670 = vsel %vm139, %v8581, %v8583
  %v8671 = vsel %vm139, %v8583, %v8585
  %v8672 = vsel %vm139, %v8585, %v8587
  %v8673 = vsel %vm139, %v8587, %v8589
  %v8674 = vsel %vm139, %v8589, %v8591
  %v8675 = vsel %vm139, %v8591, %v8593
  %v8676 = vsel %vm139, %v8593, %v8595
  %v8677 = vsel %vm139, %v8595, %v8597
  %v8678 = vsel %vm139, %v8597, %v8599
  %v8679 = vsel %vm139, %v8599, %v8601
  %v8680 = vsel %vm139, %v8601, %v8603
  %v8681 = vsel %vm139, %v8603, %v8605
  %v8682 = vsel %vm139, %v8607, %v8609
  %v8683 = vsel %vm139, %v8609, %v8611
  %v8684 = vsel %vm139, %v8611, %v8613
  %v8685 = vsel %vm139, %v8613, %v8615
  %v8686 = vsel %vm139, %v8615, %v8617
  %v8687 = vsel %vm139, %v8617, %v8619
  %v8688 = vsel %vm139, %v8619, %v8621
  %v8689 = vsel %vm139, %v8621, %v8623
  %v8690 = vsel %vm139, %v8623, %v8625
  %v8691 = vsel %vm139, %v8625, %v8627
  %v8692 = vsel %vm139, %v8627, %v8629
  %v8693 = vsel %vm139, %v8629, %v8631
  %v8694 = vsel %vm139, %v8633, %v8635
  %v8695 = vsel %vm139, %v8635, %v8637
  %v8696 = vsel %vm139, %v8637, %v8639
  %v8697 = vsel %vm139, %v8639, %v8641
  %v8698 = vsel %vm139, %v8641, %v8643
  %v8699 = vsel %vm139, %v8643, %v8645
  %v8700 = vsel %vm139, %v8645, %v8647
  %v8701 = vsel %vm139, %v8647, %v8649
  %v8702 = vsel %vm139, %v8649, %v8651
  %v8703 = vsel %vm139, %v8651, %v8653
  %v8704 = vsel %vm139, %v8653, %v8655
  %v8705 = vsel %vm139, %v8655, %v8657
  %8754 = vrot.lane.b32.xlu0 %v8450, 126
  %v8755 = vpop.permute.xlu0 %8754
  %8756 = vrot.lane.b32.xlu0 %v8451, 126
  %v8757 = vpop.permute.xlu0 %8756
  %8758 = vrot.lane.b32.xlu0 %v8452, 126
  %v8759 = vpop.permute.xlu0 %8758
  %8760 = vrot.lane.b32.xlu0 %v8453, 126
  %v8761 = vpop.permute.xlu0 %8760
  %8762 = vrot.lane.b32.xlu0 %v8454, 126
  %v8763 = vpop.permute.xlu0 %8762
  %8764 = vrot.lane.b32.xlu0 %v8455, 126
  %v8765 = vpop.permute.xlu0 %8764
  %8766 = vrot.lane.b32.xlu0 %v8456, 126
  %v8767 = vpop.permute.xlu0 %8766
  %8768 = vrot.lane.b32.xlu0 %v8457, 126
  %v8769 = vpop.permute.xlu0 %8768
  %8770 = vrot.lane.b32.xlu0 %v8458, 126
  %v8771 = vpop.permute.xlu0 %8770
  %8772 = vrot.lane.b32.xlu0 %v8459, 126
  %v8773 = vpop.permute.xlu0 %8772
  %8774 = vrot.lane.b32.xlu0 %v8460, 126
  %v8775 = vpop.permute.xlu0 %8774
  %8776 = vrot.lane.b32.xlu0 %v8461, 126
  %v8777 = vpop.permute.xlu0 %8776
  %8778 = vrot.lane.b32.xlu0 %v8462, 126
  %v8779 = vpop.permute.xlu0 %8778
  %8780 = vrot.lane.b32.xlu0 %v8463, 126
  %v8781 = vpop.permute.xlu0 %8780
  %8782 = vrot.lane.b32.xlu0 %v8464, 126
  %v8783 = vpop.permute.xlu0 %8782
  %8784 = vrot.lane.b32.xlu0 %v8465, 126
  %v8785 = vpop.permute.xlu0 %8784
  %8786 = vrot.lane.b32.xlu0 %v8466, 126
  %v8787 = vpop.permute.xlu0 %8786
  %8788 = vrot.lane.b32.xlu0 %v8467, 126
  %v8789 = vpop.permute.xlu0 %8788
  %8790 = vrot.lane.b32.xlu0 %v8468, 126
  %v8791 = vpop.permute.xlu0 %8790
  %8792 = vrot.lane.b32.xlu0 %v8469, 126
  %v8793 = vpop.permute.xlu0 %8792
  %8794 = vrot.lane.b32.xlu0 %v8470, 126
  %v8795 = vpop.permute.xlu0 %8794
  %8796 = vrot.lane.b32.xlu0 %v8471, 126
  %v8797 = vpop.permute.xlu0 %8796
  %8798 = vrot.lane.b32.xlu0 %v8472, 126
  %v8799 = vpop.permute.xlu0 %8798
  %8800 = vrot.lane.b32.xlu0 %v8473, 126
  %v8801 = vpop.permute.xlu0 %8800
  %8802 = vrot.lane.b32.xlu0 %v8474, 126
  %v8803 = vpop.permute.xlu0 %8802
  %8804 = vrot.lane.b32.xlu0 %v8475, 126
  %v8805 = vpop.permute.xlu0 %8804
  %8806 = vrot.lane.b32.xlu0 %v8476, 126
  %v8807 = vpop.permute.xlu0 %8806
  %8808 = vrot.lane.b32.xlu0 %v8477, 126
  %v8809 = vpop.permute.xlu0 %8808
  %8810 = vrot.lane.b32.xlu0 %v8478, 126
  %v8811 = vpop.permute.xlu0 %8810
  %8812 = vrot.lane.b32.xlu0 %v8479, 126
  %v8813 = vpop.permute.xlu0 %8812
  %8814 = vrot.lane.b32.xlu0 %v8480, 126
  %v8815 = vpop.permute.xlu0 %8814
  %8816 = vrot.lane.b32.xlu0 %v8481, 126
  %v8817 = vpop.permute.xlu0 %8816
  %8818 = vrot.lane.b32.xlu0 %v8482, 126
  %v8819 = vpop.permute.xlu0 %8818
  %8820 = vrot.lane.b32.xlu0 %v8483, 126
  %v8821 = vpop.permute.xlu0 %8820
  %8822 = vrot.lane.b32.xlu0 %v8484, 126
  %v8823 = vpop.permute.xlu0 %8822
  %8824 = vrot.lane.b32.xlu0 %v8485, 126
  %v8825 = vpop.permute.xlu0 %8824
  %8826 = vrot.lane.b32.xlu0 %v8486, 126
  %v8827 = vpop.permute.xlu0 %8826
  %8828 = vrot.lane.b32.xlu0 %v8487, 126
  %v8829 = vpop.permute.xlu0 %8828
  %8830 = vrot.lane.b32.xlu0 %v8488, 126
  %v8831 = vpop.permute.xlu0 %8830
  %8832 = vrot.lane.b32.xlu0 %v8489, 126
  %v8833 = vpop.permute.xlu0 %8832
  %8834 = vrot.lane.b32.xlu0 %v8490, 126
  %v8835 = vpop.permute.xlu0 %8834
  %8836 = vrot.lane.b32.xlu0 %v8491, 126
  %v8837 = vpop.permute.xlu0 %8836
  %8838 = vrot.lane.b32.xlu0 %v8492, 126
  %v8839 = vpop.permute.xlu0 %8838
  %8840 = vrot.lane.b32.xlu0 %v8493, 126
  %v8841 = vpop.permute.xlu0 %8840
  %8842 = vrot.lane.b32.xlu0 %v8494, 126
  %v8843 = vpop.permute.xlu0 %8842
  %8844 = vrot.lane.b32.xlu0 %v8495, 126
  %v8845 = vpop.permute.xlu0 %8844
  %8846 = vrot.lane.b32.xlu0 %v8496, 126
  %v8847 = vpop.permute.xlu0 %8846
  %8848 = vrot.lane.b32.xlu0 %v8497, 126
  %v8849 = vpop.permute.xlu0 %8848
  %8850 = vrot.lane.b32.xlu0 %v8498, 126
  %v8851 = vpop.permute.xlu0 %8850
  %8852 = vrot.lane.b32.xlu0 %v8499, 126
  %v8853 = vpop.permute.xlu0 %8852
  %8854 = vrot.lane.b32.xlu0 %v8500, 126
  %v8855 = vpop.permute.xlu0 %8854
  %8856 = vrot.lane.b32.xlu0 %v8501, 126
  %v8857 = vpop.permute.xlu0 %8856
  %v8858 = vsel %vm250, %v8755, %v8757
  %v8859 = vsel %vm250, %v8757, %v8759
  %v8860 = vsel %vm250, %v8759, %v8761
  %v8861 = vsel %vm250, %v8761, %v8763
  %v8862 = vsel %vm250, %v8763, %v8765
  %v8863 = vsel %vm250, %v8765, %v8767
  %v8864 = vsel %vm250, %v8767, %v8769
  %v8865 = vsel %vm250, %v8769, %v8771
  %v8866 = vsel %vm250, %v8771, %v8773
  %v8867 = vsel %vm250, %v8773, %v8775
  %v8868 = vsel %vm250, %v8775, %v8777
  %v8869 = vsel %vm250, %v8777, %v8779
  %v8870 = vsel %vm250, %v8781, %v8783
  %v8871 = vsel %vm250, %v8783, %v8785
  %v8872 = vsel %vm250, %v8785, %v8787
  %v8873 = vsel %vm250, %v8787, %v8789
  %v8874 = vsel %vm250, %v8789, %v8791
  %v8875 = vsel %vm250, %v8791, %v8793
  %v8876 = vsel %vm250, %v8793, %v8795
  %v8877 = vsel %vm250, %v8795, %v8797
  %v8878 = vsel %vm250, %v8797, %v8799
  %v8879 = vsel %vm250, %v8799, %v8801
  %v8880 = vsel %vm250, %v8801, %v8803
  %v8881 = vsel %vm250, %v8803, %v8805
  %v8882 = vsel %vm250, %v8807, %v8809
  %v8883 = vsel %vm250, %v8809, %v8811
  %v8884 = vsel %vm250, %v8811, %v8813
  %v8885 = vsel %vm250, %v8813, %v8815
  %v8886 = vsel %vm250, %v8815, %v8817
  %v8887 = vsel %vm250, %v8817, %v8819
  %v8888 = vsel %vm250, %v8819, %v8821
  %v8889 = vsel %vm250, %v8821, %v8823
  %v8890 = vsel %vm250, %v8823, %v8825
  %v8891 = vsel %vm250, %v8825, %v8827
  %v8892 = vsel %vm250, %v8827, %v8829
  %v8893 = vsel %vm250, %v8829, %v8831
  %v8894 = vsel %vm250, %v8833, %v8835
  %v8895 = vsel %vm250, %v8835, %v8837
  %v8896 = vsel %vm250, %v8837, %v8839
  %v8897 = vsel %vm250, %v8839, %v8841
  %v8898 = vsel %vm250, %v8841, %v8843
  %v8899 = vsel %vm250, %v8843, %v8845
  %v8900 = vsel %vm250, %v8845, %v8847
  %v8901 = vsel %vm250, %v8847, %v8849
  %v8902 = vsel %vm250, %v8849, %v8851
  %v8903 = vsel %vm250, %v8851, %v8853
  %v8904 = vsel %vm250, %v8853, %v8855
  %v8905 = vsel %vm250, %v8855, %v8857
  %8954 = vrot.lane.b32.xlu0 %v8450, 125
  %v8955 = vpop.permute.xlu0 %8954
  %8956 = vrot.lane.b32.xlu0 %v8451, 125
  %v8957 = vpop.permute.xlu0 %8956
  %8958 = vrot.lane.b32.xlu0 %v8452, 125
  %v8959 = vpop.permute.xlu0 %8958
  %8960 = vrot.lane.b32.xlu0 %v8453, 125
  %v8961 = vpop.permute.xlu0 %8960
  %8962 = vrot.lane.b32.xlu0 %v8454, 125
  %v8963 = vpop.permute.xlu0 %8962
  %8964 = vrot.lane.b32.xlu0 %v8455, 125
  %v8965 = vpop.permute.xlu0 %8964
  %8966 = vrot.lane.b32.xlu0 %v8456, 125
  %v8967 = vpop.permute.xlu0 %8966
  %8968 = vrot.lane.b32.xlu0 %v8457, 125
  %v8969 = vpop.permute.xlu0 %8968
  %8970 = vrot.lane.b32.xlu0 %v8458, 125
  %v8971 = vpop.permute.xlu0 %8970
  %8972 = vrot.lane.b32.xlu0 %v8459, 125
  %v8973 = vpop.permute.xlu0 %8972
  %8974 = vrot.lane.b32.xlu0 %v8460, 125
  %v8975 = vpop.permute.xlu0 %8974
  %8976 = vrot.lane.b32.xlu0 %v8461, 125
  %v8977 = vpop.permute.xlu0 %8976
  %8978 = vrot.lane.b32.xlu0 %v8462, 125
  %v8979 = vpop.permute.xlu0 %8978
  %8980 = vrot.lane.b32.xlu0 %v8463, 125
  %v8981 = vpop.permute.xlu0 %8980
  %8982 = vrot.lane.b32.xlu0 %v8464, 125
  %v8983 = vpop.permute.xlu0 %8982
  %8984 = vrot.lane.b32.xlu0 %v8465, 125
  %v8985 = vpop.permute.xlu0 %8984
  %8986 = vrot.lane.b32.xlu0 %v8466, 125
  %v8987 = vpop.permute.xlu0 %8986
  %8988 = vrot.lane.b32.xlu0 %v8467, 125
  %v8989 = vpop.permute.xlu0 %8988
  %8990 = vrot.lane.b32.xlu0 %v8468, 125
  %v8991 = vpop.permute.xlu0 %8990
  %8992 = vrot.lane.b32.xlu0 %v8469, 125
  %v8993 = vpop.permute.xlu0 %8992
  %8994 = vrot.lane.b32.xlu0 %v8470, 125
  %v8995 = vpop.permute.xlu0 %8994
  %8996 = vrot.lane.b32.xlu0 %v8471, 125
  %v8997 = vpop.permute.xlu0 %8996
  %8998 = vrot.lane.b32.xlu0 %v8472, 125
  %v8999 = vpop.permute.xlu0 %8998
  %9000 = vrot.lane.b32.xlu0 %v8473, 125
  %v9001 = vpop.permute.xlu0 %9000
  %9002 = vrot.lane.b32.xlu0 %v8474, 125
  %v9003 = vpop.permute.xlu0 %9002
  %9004 = vrot.lane.b32.xlu0 %v8475, 125
  %v9005 = vpop.permute.xlu0 %9004
  %9006 = vrot.lane.b32.xlu0 %v8476, 125
  %v9007 = vpop.permute.xlu0 %9006
  %9008 = vrot.lane.b32.xlu0 %v8477, 125
  %v9009 = vpop.permute.xlu0 %9008
  %9010 = vrot.lane.b32.xlu0 %v8478, 125
  %v9011 = vpop.permute.xlu0 %9010
  %9012 = vrot.lane.b32.xlu0 %v8479, 125
  %v9013 = vpop.permute.xlu0 %9012
  %9014 = vrot.lane.b32.xlu0 %v8480, 125
  %v9015 = vpop.permute.xlu0 %9014
  %9016 = vrot.lane.b32.xlu0 %v8481, 125
  %v9017 = vpop.permute.xlu0 %9016
  %9018 = vrot.lane.b32.xlu0 %v8482, 125
  %v9019 = vpop.permute.xlu0 %9018
  %9020 = vrot.lane.b32.xlu0 %v8483, 125
  %v9021 = vpop.permute.xlu0 %9020
  %9022 = vrot.lane.b32.xlu0 %v8484, 125
  %v9023 = vpop.permute.xlu0 %9022
  %9024 = vrot.lane.b32.xlu0 %v8485, 125
  %v9025 = vpop.permute.xlu0 %9024
  %9026 = vrot.lane.b32.xlu0 %v8486, 125
  %v9027 = vpop.permute.xlu0 %9026
  %9028 = vrot.lane.b32.xlu0 %v8487, 125
  %v9029 = vpop.permute.xlu0 %9028
  %9030 = vrot.lane.b32.xlu0 %v8488, 125
  %v9031 = vpop.permute.xlu0 %9030
  %9032 = vrot.lane.b32.xlu0 %v8489, 125
  %v9033 = vpop.permute.xlu0 %9032
  %9034 = vrot.lane.b32.xlu0 %v8490, 125
  %v9035 = vpop.permute.xlu0 %9034
  %9036 = vrot.lane.b32.xlu0 %v8491, 125
  %v9037 = vpop.permute.xlu0 %9036
  %9038 = vrot.lane.b32.xlu0 %v8492, 125
  %v9039 = vpop.permute.xlu0 %9038
  %9040 = vrot.lane.b32.xlu0 %v8493, 125
  %v9041 = vpop.permute.xlu0 %9040
  %9042 = vrot.lane.b32.xlu0 %v8494, 125
  %v9043 = vpop.permute.xlu0 %9042
  %9044 = vrot.lane.b32.xlu0 %v8495, 125
  %v9045 = vpop.permute.xlu0 %9044
  %9046 = vrot.lane.b32.xlu0 %v8496, 125
  %v9047 = vpop.permute.xlu0 %9046
  %9048 = vrot.lane.b32.xlu0 %v8497, 125
  %v9049 = vpop.permute.xlu0 %9048
  %9050 = vrot.lane.b32.xlu0 %v8498, 125
  %v9051 = vpop.permute.xlu0 %9050
  %9052 = vrot.lane.b32.xlu0 %v8499, 125
  %v9053 = vpop.permute.xlu0 %9052
  %9054 = vrot.lane.b32.xlu0 %v8500, 125
  %v9055 = vpop.permute.xlu0 %9054
  %9056 = vrot.lane.b32.xlu0 %v8501, 125
  %v9057 = vpop.permute.xlu0 %9056
  %v9058 = vsel %vm361, %v8955, %v8957
  %v9059 = vsel %vm361, %v8957, %v8959
  %v9060 = vsel %vm361, %v8959, %v8961
  %v9061 = vsel %vm361, %v8961, %v8963
  %v9062 = vsel %vm361, %v8963, %v8965
  %v9063 = vsel %vm361, %v8965, %v8967
  %v9064 = vsel %vm361, %v8967, %v8969
  %v9065 = vsel %vm361, %v8969, %v8971
  %v9066 = vsel %vm361, %v8971, %v8973
  %v9067 = vsel %vm361, %v8973, %v8975
  %v9068 = vsel %vm361, %v8975, %v8977
  %v9069 = vsel %vm361, %v8977, %v8979
  %v9070 = vsel %vm361, %v8981, %v8983
  %v9071 = vsel %vm361, %v8983, %v8985
  %v9072 = vsel %vm361, %v8985, %v8987
  %v9073 = vsel %vm361, %v8987, %v8989
  %v9074 = vsel %vm361, %v8989, %v8991
  %v9075 = vsel %vm361, %v8991, %v8993
  %v9076 = vsel %vm361, %v8993, %v8995
  %v9077 = vsel %vm361, %v8995, %v8997
  %v9078 = vsel %vm361, %v8997, %v8999
  %v9079 = vsel %vm361, %v8999, %v9001
  %v9080 = vsel %vm361, %v9001, %v9003
  %v9081 = vsel %vm361, %v9003, %v9005
  %v9082 = vsel %vm361, %v9007, %v9009
  %v9083 = vsel %vm361, %v9009, %v9011
  %v9084 = vsel %vm361, %v9011, %v9013
  %v9085 = vsel %vm361, %v9013, %v9015
  %v9086 = vsel %vm361, %v9015, %v9017
  %v9087 = vsel %vm361, %v9017, %v9019
  %v9088 = vsel %vm361, %v9019, %v9021
  %v9089 = vsel %vm361, %v9021, %v9023
  %v9090 = vsel %vm361, %v9023, %v9025
  %v9091 = vsel %vm361, %v9025, %v9027
  %v9092 = vsel %vm361, %v9027, %v9029
  %v9093 = vsel %vm361, %v9029, %v9031
  %v9094 = vsel %vm361, %v9033, %v9035
  %v9095 = vsel %vm361, %v9035, %v9037
  %v9096 = vsel %vm361, %v9037, %v9039
  %v9097 = vsel %vm361, %v9039, %v9041
  %v9098 = vsel %vm361, %v9041, %v9043
  %v9099 = vsel %vm361, %v9043, %v9045
  %v9100 = vsel %vm361, %v9045, %v9047
  %v9101 = vsel %vm361, %v9047, %v9049
  %v9102 = vsel %vm361, %v9049, %v9051
  %v9103 = vsel %vm361, %v9051, %v9053
  %v9104 = vsel %vm361, %v9053, %v9055
  %v9105 = vsel %vm361, %v9055, %v9057
  %9154 = vrot.lane.b32.xlu0 %v8450, 124
  %v9155 = vpop.permute.xlu0 %9154
  %9156 = vrot.lane.b32.xlu0 %v8451, 124
  %v9157 = vpop.permute.xlu0 %9156
  %9158 = vrot.lane.b32.xlu0 %v8452, 124
  %v9159 = vpop.permute.xlu0 %9158
  %9160 = vrot.lane.b32.xlu0 %v8453, 124
  %v9161 = vpop.permute.xlu0 %9160
  %9162 = vrot.lane.b32.xlu0 %v8454, 124
  %v9163 = vpop.permute.xlu0 %9162
  %9164 = vrot.lane.b32.xlu0 %v8455, 124
  %v9165 = vpop.permute.xlu0 %9164
  %9166 = vrot.lane.b32.xlu0 %v8456, 124
  %v9167 = vpop.permute.xlu0 %9166
  %9168 = vrot.lane.b32.xlu0 %v8457, 124
  %v9169 = vpop.permute.xlu0 %9168
  %9170 = vrot.lane.b32.xlu0 %v8458, 124
  %v9171 = vpop.permute.xlu0 %9170
  %9172 = vrot.lane.b32.xlu0 %v8459, 124
  %v9173 = vpop.permute.xlu0 %9172
  %9174 = vrot.lane.b32.xlu0 %v8460, 124
  %v9175 = vpop.permute.xlu0 %9174
  %9176 = vrot.lane.b32.xlu0 %v8461, 124
  %v9177 = vpop.permute.xlu0 %9176
  %9178 = vrot.lane.b32.xlu0 %v8462, 124
  %v9179 = vpop.permute.xlu0 %9178
  %9180 = vrot.lane.b32.xlu0 %v8463, 124
  %v9181 = vpop.permute.xlu0 %9180
  %9182 = vrot.lane.b32.xlu0 %v8464, 124
  %v9183 = vpop.permute.xlu0 %9182
  %9184 = vrot.lane.b32.xlu0 %v8465, 124
  %v9185 = vpop.permute.xlu0 %9184
  %9186 = vrot.lane.b32.xlu0 %v8466, 124
  %v9187 = vpop.permute.xlu0 %9186
  %9188 = vrot.lane.b32.xlu0 %v8467, 124
  %v9189 = vpop.permute.xlu0 %9188
  %9190 = vrot.lane.b32.xlu0 %v8468, 124
  %v9191 = vpop.permute.xlu0 %9190
  %9192 = vrot.lane.b32.xlu0 %v8469, 124
  %v9193 = vpop.permute.xlu0 %9192
  %9194 = vrot.lane.b32.xlu0 %v8470, 124
  %v9195 = vpop.permute.xlu0 %9194
  %9196 = vrot.lane.b32.xlu0 %v8471, 124
  %v9197 = vpop.permute.xlu0 %9196
  %9198 = vrot.lane.b32.xlu0 %v8472, 124
  %v9199 = vpop.permute.xlu0 %9198
  %9200 = vrot.lane.b32.xlu0 %v8473, 124
  %v9201 = vpop.permute.xlu0 %9200
  %9202 = vrot.lane.b32.xlu0 %v8474, 124
  %v9203 = vpop.permute.xlu0 %9202
  %9204 = vrot.lane.b32.xlu0 %v8475, 124
  %v9205 = vpop.permute.xlu0 %9204
  %9206 = vrot.lane.b32.xlu0 %v8476, 124
  %v9207 = vpop.permute.xlu0 %9206
  %9208 = vrot.lane.b32.xlu0 %v8477, 124
  %v9209 = vpop.permute.xlu0 %9208
  %9210 = vrot.lane.b32.xlu0 %v8478, 124
  %v9211 = vpop.permute.xlu0 %9210
  %9212 = vrot.lane.b32.xlu0 %v8479, 124
  %v9213 = vpop.permute.xlu0 %9212
  %9214 = vrot.lane.b32.xlu0 %v8480, 124
  %v9215 = vpop.permute.xlu0 %9214
  %9216 = vrot.lane.b32.xlu0 %v8481, 124
  %v9217 = vpop.permute.xlu0 %9216
  %9218 = vrot.lane.b32.xlu0 %v8482, 124
  %v9219 = vpop.permute.xlu0 %9218
  %9220 = vrot.lane.b32.xlu0 %v8483, 124
  %v9221 = vpop.permute.xlu0 %9220
  %9222 = vrot.lane.b32.xlu0 %v8484, 124
  %v9223 = vpop.permute.xlu0 %9222
  %9224 = vrot.lane.b32.xlu0 %v8485, 124
  %v9225 = vpop.permute.xlu0 %9224
  %9226 = vrot.lane.b32.xlu0 %v8486, 124
  %v9227 = vpop.permute.xlu0 %9226
  %9228 = vrot.lane.b32.xlu0 %v8487, 124
  %v9229 = vpop.permute.xlu0 %9228
  %9230 = vrot.lane.b32.xlu0 %v8488, 124
  %v9231 = vpop.permute.xlu0 %9230
  %9232 = vrot.lane.b32.xlu0 %v8489, 124
  %v9233 = vpop.permute.xlu0 %9232
  %9234 = vrot.lane.b32.xlu0 %v8490, 124
  %v9235 = vpop.permute.xlu0 %9234
  %9236 = vrot.lane.b32.xlu0 %v8491, 124
  %v9237 = vpop.permute.xlu0 %9236
  %9238 = vrot.lane.b32.xlu0 %v8492, 124
  %v9239 = vpop.permute.xlu0 %9238
  %9240 = vrot.lane.b32.xlu0 %v8493, 124
  %v9241 = vpop.permute.xlu0 %9240
  %9242 = vrot.lane.b32.xlu0 %v8494, 124
  %v9243 = vpop.permute.xlu0 %9242
  %9244 = vrot.lane.b32.xlu0 %v8495, 124
  %v9245 = vpop.permute.xlu0 %9244
  %9246 = vrot.lane.b32.xlu0 %v8496, 124
  %v9247 = vpop.permute.xlu0 %9246
  %9248 = vrot.lane.b32.xlu0 %v8497, 124
  %v9249 = vpop.permute.xlu0 %9248
  %9250 = vrot.lane.b32.xlu0 %v8498, 124
  %v9251 = vpop.permute.xlu0 %9250
  %9252 = vrot.lane.b32.xlu0 %v8499, 124
  %v9253 = vpop.permute.xlu0 %9252
  %9254 = vrot.lane.b32.xlu0 %v8500, 124
  %v9255 = vpop.permute.xlu0 %9254
  %9256 = vrot.lane.b32.xlu0 %v8501, 124
  %v9257 = vpop.permute.xlu0 %9256
  %v9258 = vsel %vm472, %v9155, %v9157
  %v9259 = vsel %vm472, %v9157, %v9159
  %v9260 = vsel %vm472, %v9159, %v9161
  %v9261 = vsel %vm472, %v9161, %v9163
  %v9262 = vsel %vm472, %v9163, %v9165
  %v9263 = vsel %vm472, %v9165, %v9167
  %v9264 = vsel %vm472, %v9167, %v9169
  %v9265 = vsel %vm472, %v9169, %v9171
  %v9266 = vsel %vm472, %v9171, %v9173
  %v9267 = vsel %vm472, %v9173, %v9175
  %v9268 = vsel %vm472, %v9175, %v9177
  %v9269 = vsel %vm472, %v9177, %v9179
  %v9270 = vsel %vm472, %v9181, %v9183
  %v9271 = vsel %vm472, %v9183, %v9185
  %v9272 = vsel %vm472, %v9185, %v9187
  %v9273 = vsel %vm472, %v9187, %v9189
  %v9274 = vsel %vm472, %v9189, %v9191
  %v9275 = vsel %vm472, %v9191, %v9193
  %v9276 = vsel %vm472, %v9193, %v9195
  %v9277 = vsel %vm472, %v9195, %v9197
  %v9278 = vsel %vm472, %v9197, %v9199
  %v9279 = vsel %vm472, %v9199, %v9201
  %v9280 = vsel %vm472, %v9201, %v9203
  %v9281 = vsel %vm472, %v9203, %v9205
  %v9282 = vsel %vm472, %v9207, %v9209
  %v9283 = vsel %vm472, %v9209, %v9211
  %v9284 = vsel %vm472, %v9211, %v9213
  %v9285 = vsel %vm472, %v9213, %v9215
  %v9286 = vsel %vm472, %v9215, %v9217
  %v9287 = vsel %vm472, %v9217, %v9219
  %v9288 = vsel %vm472, %v9219, %v9221
  %v9289 = vsel %vm472, %v9221, %v9223
  %v9290 = vsel %vm472, %v9223, %v9225
  %v9291 = vsel %vm472, %v9225, %v9227
  %v9292 = vsel %vm472, %v9227, %v9229
  %v9293 = vsel %vm472, %v9229, %v9231
  %v9294 = vsel %vm472, %v9233, %v9235
  %v9295 = vsel %vm472, %v9235, %v9237
  %v9296 = vsel %vm472, %v9237, %v9239
  %v9297 = vsel %vm472, %v9239, %v9241
  %v9298 = vsel %vm472, %v9241, %v9243
  %v9299 = vsel %vm472, %v9243, %v9245
  %v9300 = vsel %vm472, %v9245, %v9247
  %v9301 = vsel %vm472, %v9247, %v9249
  %v9302 = vsel %vm472, %v9249, %v9251
  %v9303 = vsel %vm472, %v9251, %v9253
  %v9304 = vsel %vm472, %v9253, %v9255
  %v9305 = vsel %vm472, %v9255, %v9257
  %v9354 = vld [vmem:[%s4] sm:$0xff]
  %v9355 = vld [vmem:[%s4 + $0x8] sm:$0xff]
  %s9356 = scalar_lea.vmem %s4, 16
  %v9357 = vld [vmem:[%s9356] sm:$0xff]
  %v9358 = vld [vmem:[%s9356 + $0x8] sm:$0xff]
  %vm9359 = vcmask 261120
  %v9361 = vsel %vm9359, %v9358, 0
  %9363 = vmatpush.msra.mxu0 %v9095
  %9364 = vmatpush.msra.mxu0 %v9083
  %9365 = vmatpush.msra.mxu0 %v9071
  %9366 = vmatpush.msra.mxu0 %v9059
  %9367 = vmatpush.msra.mxu0 %v8895
  %9368 = vmatpush.msra.mxu0 %v8883
  %9369 = vmatpush.msra.mxu0 %v8871
  %9370 = vmatpush.msra.mxu0 %v8859
  %9371 = vmatpush.msra.mxu0 %v8695
  %9372 = vmatpush.msra.mxu0 %v8683
  %9373 = vmatpush.msra.mxu0 %v8671
  %9374 = vmatpush.msra.mxu0 %v8659
  %9375 = vmatpush.msra.mxu0 %v8490
  %9376 = vmatpush.msra.mxu0 %v8477
  %9377 = vmatpush.msra.mxu0 %v8464
  %9378 = vmatpush.msra.mxu0 %v8451
  %9379 = vmatmul.f32.gmra.mxu0 %v9357
  %v9380 = vpop.f32.mrf.mxu0
  %v9381 = vadd.f32 0.0, %v9380
  %9382 = vdwg.mxu0
  %9383 = vmatpush.msra.mxu0 0.0
  %9384 = vmatpush.msra.mxu0 0.0
  %9385 = vmatpush.msra.mxu0 0.0
  %9386 = vmatpush.msra.mxu0 0.0
  %9387 = vmatpush.msra.mxu0 0.0
  %9388 = vmatpush.msra.mxu0 0.0
  %9389 = vmatpush.msra.mxu0 0.0
  %9390 = vmatpush.msra.mxu0 0.0
  %9391 = vmatpush.msra.mxu0 0.0
  %9392 = vmatpush.msra.mxu0 0.0
  %9393 = vmatpush.msra.mxu0 0.0
  %9394 = vmatpush.msra.mxu0 0.0
  %9395 = vmatpush.msra.mxu0 %v9295
  %9396 = vmatpush.msra.mxu0 %v9283
  %9397 = vmatpush.msra.mxu0 %v9271
  %9398 = vmatpush.msra.mxu0 %v9259
  %9399 = vmatmul.f32.gmra.mxu0 %v9361
  %v9400 = vpop.f32.mrf.mxu0
  %v9401 = vadd.f32 %v9381, %v9400
  %9402 = vdwg.mxu0
  %9403 = vmatpush.msra.mxu0 %v9096
  %9404 = vmatpush.msra.mxu0 %v9084
  %9405 = vmatpush.msra.mxu0 %v9072
  %9406 = vmatpush.msra.mxu0 %v9060
  %9407 = vmatpush.msra.mxu0 %v8896
  %9408 = vmatpush.msra.mxu0 %v8884
  %9409 = vmatpush.msra.mxu0 %v8872
  %9410 = vmatpush.msra.mxu0 %v8860
  %9411 = vmatpush.msra.mxu0 %v8696
  %9412 = vmatpush.msra.mxu0 %v8684
  %9413 = vmatpush.msra.mxu0 %v8672
  %9414 = vmatpush.msra.mxu0 %v8660
  %9415 = vmatpush.msra.mxu0 %v8491
  %9416 = vmatpush.msra.mxu0 %v8478
  %9417 = vmatpush.msra.mxu0 %v8465
  %9418 = vmatpush.msra.mxu0 %v8452
  %9419 = vmatmul.f32.gmra.mxu0 %v9357
  %v9420 = vpop.f32.mrf.mxu0
  %v9421 = vadd.f32 0.0, %v9420
  %9422 = vdwg.mxu0
  %9423 = vmatpush.msra.mxu0 0.0
  %9424 = vmatpush.msra.mxu0 0.0
  %9425 = vmatpush.msra.mxu0 0.0
  %9426 = vmatpush.msra.mxu0 0.0
  %9427 = vmatpush.msra.mxu0 0.0
  %9428 = vmatpush.msra.mxu0 0.0
  %9429 = vmatpush.msra.mxu0 0.0
  %9430 = vmatpush.msra.mxu0 0.0
  %9431 = vmatpush.msra.mxu0 0.0
  %9432 = vmatpush.msra.mxu0 0.0
  %9433 = vmatpush.msra.mxu0 0.0
  %9434 = vmatpush.msra.mxu0 0.0
  %9435 = vmatpush.msra.mxu0 %v9296
  %9436 = vmatpush.msra.mxu0 %v9284
  %9437 = vmatpush.msra.mxu0 %v9272
  %9438 = vmatpush.msra.mxu0 %v9260
  %9439 = vmatmul.f32.gmra.mxu0 %v9361
  %v9440 = vpop.f32.mrf.mxu0
  %v9441 = vadd.f32 %v9421, %v9440
  %9442 = vdwg.mxu0
  %9443 = vmatpush.msra.mxu0 %v9097
  %9444 = vmatpush.msra.mxu0 %v9085
  %9445 = vmatpush.msra.mxu0 %v9073
  %9446 = vmatpush.msra.mxu0 %v9061
  %9447 = vmatpush.msra.mxu0 %v8897
  %9448 = vmatpush.msra.mxu0 %v8885
  %9449 = vmatpush.msra.mxu0 %v8873
  %9450 = vmatpush.msra.mxu0 %v8861
  %9451 = vmatpush.msra.mxu0 %v8697
  %9452 = vmatpush.msra.mxu0 %v8685
  %9453 = vmatpush.msra.mxu0 %v8673
  %9454 = vmatpush.msra.mxu0 %v8661
  %9455 = vmatpush.msra.mxu0 %v8492
  %9456 = vmatpush.msra.mxu0 %v8479
  %9457 = vmatpush.msra.mxu0 %v8466
  %9458 = vmatpush.msra.mxu0 %v8453
  %9459 = vmatmul.f32.gmra.mxu0 %v9357
  %v9460 = vpop.f32.mrf.mxu0
  %v9461 = vadd.f32 0.0, %v9460
  %9462 = vdwg.mxu0
  %9463 = vmatpush.msra.mxu0 0.0
  %9464 = vmatpush.msra.mxu0 0.0
  %9465 = vmatpush.msra.mxu0 0.0
  %9466 = vmatpush.msra.mxu0 0.0
  %9467 = vmatpush.msra.mxu0 0.0
  %9468 = vmatpush.msra.mxu0 0.0
  %9469 = vmatpush.msra.mxu0 0.0
  %9470 = vmatpush.msra.mxu0 0.0
  %9471 = vmatpush.msra.mxu0 0.0
  %9472 = vmatpush.msra.mxu0 0.0
  %9473 = vmatpush.msra.mxu0 0.0
  %9474 = vmatpush.msra.mxu0 0.0
  %9475 = vmatpush.msra.mxu0 %v9297
  %9476 = vmatpush.msra.mxu0 %v9285
  %9477 = vmatpush.msra.mxu0 %v9273
  %9478 = vmatpush.msra.mxu0 %v9261
  %9479 = vmatmul.f32.gmra.mxu0 %v9361
  %v9480 = vpop.f32.mrf.mxu0
  %v9481 = vadd.f32 %v9461, %v9480
  %9482 = vdwg.mxu0
  %9483 = vmatpush.msra.mxu0 %v9098
  %9484 = vmatpush.msra.mxu0 %v9086
  %9485 = vmatpush.msra.mxu0 %v9074
  %9486 = vmatpush.msra.mxu0 %v9062
  %9487 = vmatpush.msra.mxu0 %v8898
  %9488 = vmatpush.msra.mxu0 %v8886
  %9489 = vmatpush.msra.mxu0 %v8874
  %9490 = vmatpush.msra.mxu0 %v8862
  %9491 = vmatpush.msra.mxu0 %v8698
  %9492 = vmatpush.msra.mxu0 %v8686
  %9493 = vmatpush.msra.mxu0 %v8674
  %9494 = vmatpush.msra.mxu0 %v8662
  %9495 = vmatpush.msra.mxu0 %v8493
  %9496 = vmatpush.msra.mxu0 %v8480
  %9497 = vmatpush.msra.mxu0 %v8467
  %9498 = vmatpush.msra.mxu0 %v8454
  %9499 = vmatmul.f32.gmra.mxu0 %v9357
  %v9500 = vpop.f32.mrf.mxu0
  %v9501 = vadd.f32 0.0, %v9500
  %9502 = vdwg.mxu0
  %9503 = vmatpush.msra.mxu0 0.0
  %9504 = vmatpush.msra.mxu0 0.0
  %9505 = vmatpush.msra.mxu0 0.0
  %9506 = vmatpush.msra.mxu0 0.0
  %9507 = vmatpush.msra.mxu0 0.0
  %9508 = vmatpush.msra.mxu0 0.0
  %9509 = vmatpush.msra.mxu0 0.0
  %9510 = vmatpush.msra.mxu0 0.0
  %9511 = vmatpush.msra.mxu0 0.0
  %9512 = vmatpush.msra.mxu0 0.0
  %9513 = vmatpush.msra.mxu0 0.0
  %9514 = vmatpush.msra.mxu0 0.0
  %9515 = vmatpush.msra.mxu0 %v9298
  %9516 = vmatpush.msra.mxu0 %v9286
  %9517 = vmatpush.msra.mxu0 %v9274
  %9518 = vmatpush.msra.mxu0 %v9262
  %9519 = vmatmul.f32.gmra.mxu0 %v9361
  %v9520 = vpop.f32.mrf.mxu0
  %v9521 = vadd.f32 %v9501, %v9520
  %9522 = vdwg.mxu0
  %9523 = vmatpush.msra.mxu0 %v9099
  %9524 = vmatpush.msra.mxu0 %v9087
  %9525 = vmatpush.msra.mxu0 %v9075
  %9526 = vmatpush.msra.mxu0 %v9063
  %9527 = vmatpush.msra.mxu0 %v8899
  %9528 = vmatpush.msra.mxu0 %v8887
  %9529 = vmatpush.msra.mxu0 %v8875
  %9530 = vmatpush.msra.mxu0 %v8863
  %9531 = vmatpush.msra.mxu0 %v8699
  %9532 = vmatpush.msra.mxu0 %v8687
  %9533 = vmatpush.msra.mxu0 %v8675
  %9534 = vmatpush.msra.mxu0 %v8663
  %9535 = vmatpush.msra.mxu0 %v8494
  %9536 = vmatpush.msra.mxu0 %v8481
  %9537 = vmatpush.msra.mxu0 %v8468
  %9538 = vmatpush.msra.mxu0 %v8455
  %9539 = vmatmul.f32.gmra.mxu0 %v9357
  %v9540 = vpop.f32.mrf.mxu0
  %v9541 = vadd.f32 0.0, %v9540
  %9542 = vdwg.mxu0
  %9543 = vmatpush.msra.mxu0 0.0
  %9544 = vmatpush.msra.mxu0 0.0
  %9545 = vmatpush.msra.mxu0 0.0
  %9546 = vmatpush.msra.mxu0 0.0
  %9547 = vmatpush.msra.mxu0 0.0
  %9548 = vmatpush.msra.mxu0 0.0
  %9549 = vmatpush.msra.mxu0 0.0
  %9550 = vmatpush.msra.mxu0 0.0
  %9551 = vmatpush.msra.mxu0 0.0
  %9552 = vmatpush.msra.mxu0 0.0
  %9553 = vmatpush.msra.mxu0 0.0
  %9554 = vmatpush.msra.mxu0 0.0
  %9555 = vmatpush.msra.mxu0 %v9299
  %9556 = vmatpush.msra.mxu0 %v9287
  %9557 = vmatpush.msra.mxu0 %v9275
  %9558 = vmatpush.msra.mxu0 %v9263
  %9559 = vmatmul.f32.gmra.mxu0 %v9361
  %v9560 = vpop.f32.mrf.mxu0
  %v9561 = vadd.f32 %v9541, %v9560
  %9562 = vdwg.mxu0
  %9563 = vmatpush.msra.mxu0 %v9100
  %9564 = vmatpush.msra.mxu0 %v9088
  %9565 = vmatpush.msra.mxu0 %v9076
  %9566 = vmatpush.msra.mxu0 %v9064
  %9567 = vmatpush.msra.mxu0 %v8900
  %9568 = vmatpush.msra.mxu0 %v8888
  %9569 = vmatpush.msra.mxu0 %v8876
  %9570 = vmatpush.msra.mxu0 %v8864
  %9571 = vmatpush.msra.mxu0 %v8700
  %9572 = vmatpush.msra.mxu0 %v8688
  %9573 = vmatpush.msra.mxu0 %v8676
  %9574 = vmatpush.msra.mxu0 %v8664
  %9575 = vmatpush.msra.mxu0 %v8495
  %9576 = vmatpush.msra.mxu0 %v8482
  %9577 = vmatpush.msra.mxu0 %v8469
  %9578 = vmatpush.msra.mxu0 %v8456
  %9579 = vmatmul.f32.gmra.mxu0 %v9357
  %v9580 = vpop.f32.mrf.mxu0
  %v9581 = vadd.f32 0.0, %v9580
  %9582 = vdwg.mxu0
  %9583 = vmatpush.msra.mxu0 0.0
  %9584 = vmatpush.msra.mxu0 0.0
  %9585 = vmatpush.msra.mxu0 0.0
  %9586 = vmatpush.msra.mxu0 0.0
  %9587 = vmatpush.msra.mxu0 0.0
  %9588 = vmatpush.msra.mxu0 0.0
  %9589 = vmatpush.msra.mxu0 0.0
  %9590 = vmatpush.msra.mxu0 0.0
  %9591 = vmatpush.msra.mxu0 0.0
  %9592 = vmatpush.msra.mxu0 0.0
  %9593 = vmatpush.msra.mxu0 0.0
  %9594 = vmatpush.msra.mxu0 0.0
  %9595 = vmatpush.msra.mxu0 %v9300
  %9596 = vmatpush.msra.mxu0 %v9288
  %9597 = vmatpush.msra.mxu0 %v9276
  %9598 = vmatpush.msra.mxu0 %v9264
  %9599 = vmatmul.f32.gmra.mxu0 %v9361
  %v9600 = vpop.f32.mrf.mxu0
  %v9601 = vadd.f32 %v9581, %v9600
  %9602 = vdwg.mxu0
  %9603 = vmatpush.msra.mxu0 %v9101
  %9604 = vmatpush.msra.mxu0 %v9089
  %9605 = vmatpush.msra.mxu0 %v9077
  %9606 = vmatpush.msra.mxu0 %v9065
  %9607 = vmatpush.msra.mxu0 %v8901
  %9608 = vmatpush.msra.mxu0 %v8889
  %9609 = vmatpush.msra.mxu0 %v8877
  %9610 = vmatpush.msra.mxu0 %v8865
  %9611 = vmatpush.msra.mxu0 %v8701
  %9612 = vmatpush.msra.mxu0 %v8689
  %9613 = vmatpush.msra.mxu0 %v8677
  %9614 = vmatpush.msra.mxu0 %v8665
  %9615 = vmatpush.msra.mxu0 %v8496
  %9616 = vmatpush.msra.mxu0 %v8483
  %9617 = vmatpush.msra.mxu0 %v8470
  %9618 = vmatpush.msra.mxu0 %v8457
  %9619 = vmatmul.f32.gmra.mxu0 %v9357
  %v9620 = vpop.f32.mrf.mxu0
  %v9621 = vadd.f32 0.0, %v9620
  %9622 = vdwg.mxu0
  %9623 = vmatpush.msra.mxu0 0.0
  %9624 = vmatpush.msra.mxu0 0.0
  %9625 = vmatpush.msra.mxu0 0.0
  %9626 = vmatpush.msra.mxu0 0.0
  %9627 = vmatpush.msra.mxu0 0.0
  %9628 = vmatpush.msra.mxu0 0.0
  %9629 = vmatpush.msra.mxu0 0.0
  %9630 = vmatpush.msra.mxu0 0.0
  %9631 = vmatpush.msra.mxu0 0.0
  %9632 = vmatpush.msra.mxu0 0.0
  %9633 = vmatpush.msra.mxu0 0.0
  %9634 = vmatpush.msra.mxu0 0.0
  %9635 = vmatpush.msra.mxu0 %v9301
  %9636 = vmatpush.msra.mxu0 %v9289
  %9637 = vmatpush.msra.mxu0 %v9277
  %9638 = vmatpush.msra.mxu0 %v9265
  %9639 = vmatmul.f32.gmra.mxu0 %v9361
  %v9640 = vpop.f32.mrf.mxu0
  %v9641 = vadd.f32 %v9621, %v9640
  %9642 = vdwg.mxu0
  %9643 = vmatpush.msra.mxu0 %v9102
  %9644 = vmatpush.msra.mxu0 %v9090
  %9645 = vmatpush.msra.mxu0 %v9078
  %9646 = vmatpush.msra.mxu0 %v9066
  %9647 = vmatpush.msra.mxu0 %v8902
  %9648 = vmatpush.msra.mxu0 %v8890
  %9649 = vmatpush.msra.mxu0 %v8878
  %9650 = vmatpush.msra.mxu0 %v8866
  %9651 = vmatpush.msra.mxu0 %v8702
  %9652 = vmatpush.msra.mxu0 %v8690
  %9653 = vmatpush.msra.mxu0 %v8678
  %9654 = vmatpush.msra.mxu0 %v8666
  %9655 = vmatpush.msra.mxu0 %v8497
  %9656 = vmatpush.msra.mxu0 %v8484
  %9657 = vmatpush.msra.mxu0 %v8471
  %9658 = vmatpush.msra.mxu0 %v8458
  %9659 = vmatmul.f32.gmra.mxu0 %v9357
  %v9660 = vpop.f32.mrf.mxu0
  %v9661 = vadd.f32 0.0, %v9660
  %9662 = vdwg.mxu0
  %9663 = vmatpush.msra.mxu0 0.0
  %9664 = vmatpush.msra.mxu0 0.0
  %9665 = vmatpush.msra.mxu0 0.0
  %9666 = vmatpush.msra.mxu0 0.0
  %9667 = vmatpush.msra.mxu0 0.0
  %9668 = vmatpush.msra.mxu0 0.0
  %9669 = vmatpush.msra.mxu0 0.0
  %9670 = vmatpush.msra.mxu0 0.0
  %9671 = vmatpush.msra.mxu0 0.0
  %9672 = vmatpush.msra.mxu0 0.0
  %9673 = vmatpush.msra.mxu0 0.0
  %9674 = vmatpush.msra.mxu0 0.0
  %9675 = vmatpush.msra.mxu0 %v9302
  %9676 = vmatpush.msra.mxu0 %v9290
  %9677 = vmatpush.msra.mxu0 %v9278
  %9678 = vmatpush.msra.mxu0 %v9266
  %9679 = vmatmul.f32.gmra.mxu0 %v9361
  %v9680 = vpop.f32.mrf.mxu0
  %v9681 = vadd.f32 %v9661, %v9680
  %9682 = vdwg.mxu0
  %v9684 = vsel %vm9359, %v9355, 0
  %9686 = vmatpush.msra.mxu0 %v9094
  %9687 = vmatpush.msra.mxu0 %v9082
  %9688 = vmatpush.msra.mxu0 %v9070
  %9689 = vmatpush.msra.mxu0 %v9058
  %9690 = vmatpush.msra.mxu0 %v8894
  %9691 = vmatpush.msra.mxu0 %v8882
  %9692 = vmatpush.msra.mxu0 %v8870
  %9693 = vmatpush.msra.mxu0 %v8858
  %9694 = vmatpush.msra.mxu0 %v8694
  %9695 = vmatpush.msra.mxu0 %v8682
  %9696 = vmatpush.msra.mxu0 %v8670
  %9697 = vmatpush.msra.mxu0 %v8658
  %9698 = vmatpush.msra.mxu0 %v8489
  %9699 = vmatpush.msra.mxu0 %v8476
  %9700 = vmatpush.msra.mxu0 %v8463
  %9701 = vmatpush.msra.mxu0 %v8450
  %9702 = vmatmul.f32.gmra.mxu0 %v9354
  %v9703 = vpop.f32.mrf.mxu0
  %v9704 = vadd.f32 %v9401, %v9703
  %9705 = vdwg.mxu0
  %9706 = vmatpush.msra.mxu0 0.0
  %9707 = vmatpush.msra.mxu0 0.0
  %9708 = vmatpush.msra.mxu0 0.0
  %9709 = vmatpush.msra.mxu0 0.0
  %9710 = vmatpush.msra.mxu0 0.0
  %9711 = vmatpush.msra.mxu0 0.0
  %9712 = vmatpush.msra.mxu0 0.0
  %9713 = vmatpush.msra.mxu0 0.0
  %9714 = vmatpush.msra.mxu0 0.0
  %9715 = vmatpush.msra.mxu0 0.0
  %9716 = vmatpush.msra.mxu0 0.0
  %9717 = vmatpush.msra.mxu0 0.0
  %9718 = vmatpush.msra.mxu0 %v9294
  %9719 = vmatpush.msra.mxu0 %v9282
  %9720 = vmatpush.msra.mxu0 %v9270
  %9721 = vmatpush.msra.mxu0 %v9258
  %9722 = vmatmul.f32.gmra.mxu0 %v9684
  %v9723 = vpop.f32.mrf.mxu0
  %v9724 = vadd.f32 %v9704, %v9723
  %9725 = vdwg.mxu0
  %9726 = vmatpush.msra.mxu0 %v9095
  %9727 = vmatpush.msra.mxu0 %v9083
  %9728 = vmatpush.msra.mxu0 %v9071
  %9729 = vmatpush.msra.mxu0 %v9059
  %9730 = vmatpush.msra.mxu0 %v8895
  %9731 = vmatpush.msra.mxu0 %v8883
  %9732 = vmatpush.msra.mxu0 %v8871
  %9733 = vmatpush.msra.mxu0 %v8859
  %9734 = vmatpush.msra.mxu0 %v8695
  %9735 = vmatpush.msra.mxu0 %v8683
  %9736 = vmatpush.msra.mxu0 %v8671
  %9737 = vmatpush.msra.mxu0 %v8659
  %9738 = vmatpush.msra.mxu0 %v8490
  %9739 = vmatpush.msra.mxu0 %v8477
  %9740 = vmatpush.msra.mxu0 %v8464
  %9741 = vmatpush.msra.mxu0 %v8451
  %9742 = vmatmul.f32.gmra.mxu0 %v9354
  %v9743 = vpop.f32.mrf.mxu0
  %v9744 = vadd.f32 %v9441, %v9743
  %9745 = vdwg.mxu0
  %9746 = vmatpush.msra.mxu0 0.0
  %9747 = vmatpush.msra.mxu0 0.0
  %9748 = vmatpush.msra.mxu0 0.0
  %9749 = vmatpush.msra.mxu0 0.0
  %9750 = vmatpush.msra.mxu0 0.0
  %9751 = vmatpush.msra.mxu0 0.0
  %9752 = vmatpush.msra.mxu0 0.0
  %9753 = vmatpush.msra.mxu0 0.0
  %9754 = vmatpush.msra.mxu0 0.0
  %9755 = vmatpush.msra.mxu0 0.0
  %9756 = vmatpush.msra.mxu0 0.0
  %9757 = vmatpush.msra.mxu0 0.0
  %9758 = vmatpush.msra.mxu0 %v9295
  %9759 = vmatpush.msra.mxu0 %v9283
  %9760 = vmatpush.msra.mxu0 %v9271
  %9761 = vmatpush.msra.mxu0 %v9259
  %9762 = vmatmul.f32.gmra.mxu0 %v9684
  %v9763 = vpop.f32.mrf.mxu0
  %v9764 = vadd.f32 %v9744, %v9763
  %9765 = vdwg.mxu0
  %9766 = vmatpush.msra.mxu0 %v9096
  %9767 = vmatpush.msra.mxu0 %v9084
  %9768 = vmatpush.msra.mxu0 %v9072
  %9769 = vmatpush.msra.mxu0 %v9060
  %9770 = vmatpush.msra.mxu0 %v8896
  %9771 = vmatpush.msra.mxu0 %v8884
  %9772 = vmatpush.msra.mxu0 %v8872
  %9773 = vmatpush.msra.mxu0 %v8860
  %9774 = vmatpush.msra.mxu0 %v8696
  %9775 = vmatpush.msra.mxu0 %v8684
  %9776 = vmatpush.msra.mxu0 %v8672
  %9777 = vmatpush.msra.mxu0 %v8660
  %9778 = vmatpush.msra.mxu0 %v8491
  %9779 = vmatpush.msra.mxu0 %v8478
  %9780 = vmatpush.msra.mxu0 %v8465
  %9781 = vmatpush.msra.mxu0 %v8452
  %9782 = vmatmul.f32.gmra.mxu0 %v9354
  %v9783 = vpop.f32.mrf.mxu0
  %v9784 = vadd.f32 %v9481, %v9783
  %9785 = vdwg.mxu0
  %9786 = vmatpush.msra.mxu0 0.0
  %9787 = vmatpush.msra.mxu0 0.0
  %9788 = vmatpush.msra.mxu0 0.0
  %9789 = vmatpush.msra.mxu0 0.0
  %9790 = vmatpush.msra.mxu0 0.0
  %9791 = vmatpush.msra.mxu0 0.0
  %9792 = vmatpush.msra.mxu0 0.0
  %9793 = vmatpush.msra.mxu0 0.0
  %9794 = vmatpush.msra.mxu0 0.0
  %9795 = vmatpush.msra.mxu0 0.0
  %9796 = vmatpush.msra.mxu0 0.0
  %9797 = vmatpush.msra.mxu0 0.0
  %9798 = vmatpush.msra.mxu0 %v9296
  %9799 = vmatpush.msra.mxu0 %v9284
  %9800 = vmatpush.msra.mxu0 %v9272
  %9801 = vmatpush.msra.mxu0 %v9260
  %9802 = vmatmul.f32.gmra.mxu0 %v9684
  %v9803 = vpop.f32.mrf.mxu0
  %v9804 = vadd.f32 %v9784, %v9803
  %9805 = vdwg.mxu0
  %9806 = vmatpush.msra.mxu0 %v9097
  %9807 = vmatpush.msra.mxu0 %v9085
  %9808 = vmatpush.msra.mxu0 %v9073
  %9809 = vmatpush.msra.mxu0 %v9061
  %9810 = vmatpush.msra.mxu0 %v8897
  %9811 = vmatpush.msra.mxu0 %v8885
  %9812 = vmatpush.msra.mxu0 %v8873
  %9813 = vmatpush.msra.mxu0 %v8861
  %9814 = vmatpush.msra.mxu0 %v8697
  %9815 = vmatpush.msra.mxu0 %v8685
  %9816 = vmatpush.msra.mxu0 %v8673
  %9817 = vmatpush.msra.mxu0 %v8661
  %9818 = vmatpush.msra.mxu0 %v8492
  %9819 = vmatpush.msra.mxu0 %v8479
  %9820 = vmatpush.msra.mxu0 %v8466
  %9821 = vmatpush.msra.mxu0 %v8453
  %9822 = vmatmul.f32.gmra.mxu0 %v9354
  %v9823 = vpop.f32.mrf.mxu0
  %v9824 = vadd.f32 %v9521, %v9823
  %9825 = vdwg.mxu0
  %9826 = vmatpush.msra.mxu0 0.0
  %9827 = vmatpush.msra.mxu0 0.0
  %9828 = vmatpush.msra.mxu0 0.0
  %9829 = vmatpush.msra.mxu0 0.0
  %9830 = vmatpush.msra.mxu0 0.0
  %9831 = vmatpush.msra.mxu0 0.0
  %9832 = vmatpush.msra.mxu0 0.0
  %9833 = vmatpush.msra.mxu0 0.0
  %9834 = vmatpush.msra.mxu0 0.0
  %9835 = vmatpush.msra.mxu0 0.0
  %9836 = vmatpush.msra.mxu0 0.0
  %9837 = vmatpush.msra.mxu0 0.0
  %9838 = vmatpush.msra.mxu0 %v9297
  %9839 = vmatpush.msra.mxu0 %v9285
  %9840 = vmatpush.msra.mxu0 %v9273
  %9841 = vmatpush.msra.mxu0 %v9261
  %9842 = vmatmul.f32.gmra.mxu0 %v9684
  %v9843 = vpop.f32.mrf.mxu0
  %v9844 = vadd.f32 %v9824, %v9843
  %9845 = vdwg.mxu0
  %9846 = vmatpush.msra.mxu0 %v9098
  %9847 = vmatpush.msra.mxu0 %v9086
  %9848 = vmatpush.msra.mxu0 %v9074
  %9849 = vmatpush.msra.mxu0 %v9062
  %9850 = vmatpush.msra.mxu0 %v8898
  %9851 = vmatpush.msra.mxu0 %v8886
  %9852 = vmatpush.msra.mxu0 %v8874
  %9853 = vmatpush.msra.mxu0 %v8862
  %9854 = vmatpush.msra.mxu0 %v8698
  %9855 = vmatpush.msra.mxu0 %v8686
  %9856 = vmatpush.msra.mxu0 %v8674
  %9857 = vmatpush.msra.mxu0 %v8662
  %9858 = vmatpush.msra.mxu0 %v8493
  %9859 = vmatpush.msra.mxu0 %v8480
  %9860 = vmatpush.msra.mxu0 %v8467
  %9861 = vmatpush.msra.mxu0 %v8454
  %9862 = vmatmul.f32.gmra.mxu0 %v9354
  %v9863 = vpop.f32.mrf.mxu0
  %v9864 = vadd.f32 %v9561, %v9863
  %9865 = vdwg.mxu0
  %9866 = vmatpush.msra.mxu0 0.0
  %9867 = vmatpush.msra.mxu0 0.0
  %9868 = vmatpush.msra.mxu0 0.0
  %9869 = vmatpush.msra.mxu0 0.0
  %9870 = vmatpush.msra.mxu0 0.0
  %9871 = vmatpush.msra.mxu0 0.0
  %9872 = vmatpush.msra.mxu0 0.0
  %9873 = vmatpush.msra.mxu0 0.0
  %9874 = vmatpush.msra.mxu0 0.0
  %9875 = vmatpush.msra.mxu0 0.0
  %9876 = vmatpush.msra.mxu0 0.0
  %9877 = vmatpush.msra.mxu0 0.0
  %9878 = vmatpush.msra.mxu0 %v9298
  %9879 = vmatpush.msra.mxu0 %v9286
  %9880 = vmatpush.msra.mxu0 %v9274
  %9881 = vmatpush.msra.mxu0 %v9262
  %9882 = vmatmul.f32.gmra.mxu0 %v9684
  %v9883 = vpop.f32.mrf.mxu0
  %v9884 = vadd.f32 %v9864, %v9883
  %9885 = vdwg.mxu0
  %9886 = vmatpush.msra.mxu0 %v9099
  %9887 = vmatpush.msra.mxu0 %v9087
  %9888 = vmatpush.msra.mxu0 %v9075
  %9889 = vmatpush.msra.mxu0 %v9063
  %9890 = vmatpush.msra.mxu0 %v8899
  %9891 = vmatpush.msra.mxu0 %v8887
  %9892 = vmatpush.msra.mxu0 %v8875
  %9893 = vmatpush.msra.mxu0 %v8863
  %9894 = vmatpush.msra.mxu0 %v8699
  %9895 = vmatpush.msra.mxu0 %v8687
  %9896 = vmatpush.msra.mxu0 %v8675
  %9897 = vmatpush.msra.mxu0 %v8663
  %9898 = vmatpush.msra.mxu0 %v8494
  %9899 = vmatpush.msra.mxu0 %v8481
  %9900 = vmatpush.msra.mxu0 %v8468
  %9901 = vmatpush.msra.mxu0 %v8455
  %9902 = vmatmul.f32.gmra.mxu0 %v9354
  %v9903 = vpop.f32.mrf.mxu0
  %v9904 = vadd.f32 %v9601, %v9903
  %9905 = vdwg.mxu0
  %9906 = vmatpush.msra.mxu0 0.0
  %9907 = vmatpush.msra.mxu0 0.0
  %9908 = vmatpush.msra.mxu0 0.0
  %9909 = vmatpush.msra.mxu0 0.0
  %9910 = vmatpush.msra.mxu0 0.0
  %9911 = vmatpush.msra.mxu0 0.0
  %9912 = vmatpush.msra.mxu0 0.0
  %9913 = vmatpush.msra.mxu0 0.0
  %9914 = vmatpush.msra.mxu0 0.0
  %9915 = vmatpush.msra.mxu0 0.0
  %9916 = vmatpush.msra.mxu0 0.0
  %9917 = vmatpush.msra.mxu0 0.0
  %9918 = vmatpush.msra.mxu0 %v9299
  %9919 = vmatpush.msra.mxu0 %v9287
  %9920 = vmatpush.msra.mxu0 %v9275
  %9921 = vmatpush.msra.mxu0 %v9263
  %9922 = vmatmul.f32.gmra.mxu0 %v9684
  %v9923 = vpop.f32.mrf.mxu0
  %v9924 = vadd.f32 %v9904, %v9923
  %9925 = vdwg.mxu0
  %9926 = vmatpush.msra.mxu0 %v9100
  %9927 = vmatpush.msra.mxu0 %v9088
  %9928 = vmatpush.msra.mxu0 %v9076
  %9929 = vmatpush.msra.mxu0 %v9064
  %9930 = vmatpush.msra.mxu0 %v8900
  %9931 = vmatpush.msra.mxu0 %v8888
  %9932 = vmatpush.msra.mxu0 %v8876
  %9933 = vmatpush.msra.mxu0 %v8864
  %9934 = vmatpush.msra.mxu0 %v8700
  %9935 = vmatpush.msra.mxu0 %v8688
  %9936 = vmatpush.msra.mxu0 %v8676
  %9937 = vmatpush.msra.mxu0 %v8664
  %9938 = vmatpush.msra.mxu0 %v8495
  %9939 = vmatpush.msra.mxu0 %v8482
  %9940 = vmatpush.msra.mxu0 %v8469
  %9941 = vmatpush.msra.mxu0 %v8456
  %9942 = vmatmul.f32.gmra.mxu0 %v9354
  %v9943 = vpop.f32.mrf.mxu0
  %v9944 = vadd.f32 %v9641, %v9943
  %9945 = vdwg.mxu0
  %9946 = vmatpush.msra.mxu0 0.0
  %9947 = vmatpush.msra.mxu0 0.0
  %9948 = vmatpush.msra.mxu0 0.0
  %9949 = vmatpush.msra.mxu0 0.0
  %9950 = vmatpush.msra.mxu0 0.0
  %9951 = vmatpush.msra.mxu0 0.0
  %9952 = vmatpush.msra.mxu0 0.0
  %9953 = vmatpush.msra.mxu0 0.0
  %9954 = vmatpush.msra.mxu0 0.0
  %9955 = vmatpush.msra.mxu0 0.0
  %9956 = vmatpush.msra.mxu0 0.0
  %9957 = vmatpush.msra.mxu0 0.0
  %9958 = vmatpush.msra.mxu0 %v9300
  %9959 = vmatpush.msra.mxu0 %v9288
  %9960 = vmatpush.msra.mxu0 %v9276
  %9961 = vmatpush.msra.mxu0 %v9264
  %9962 = vmatmul.f32.gmra.mxu0 %v9684
  %v9963 = vpop.f32.mrf.mxu0
  %v9964 = vadd.f32 %v9944, %v9963
  %9965 = vdwg.mxu0
  %9966 = vmatpush.msra.mxu0 %v9101
  %9967 = vmatpush.msra.mxu0 %v9089
  %9968 = vmatpush.msra.mxu0 %v9077
  %9969 = vmatpush.msra.mxu0 %v9065
  %9970 = vmatpush.msra.mxu0 %v8901
  %9971 = vmatpush.msra.mxu0 %v8889
  %9972 = vmatpush.msra.mxu0 %v8877
  %9973 = vmatpush.msra.mxu0 %v8865
  %9974 = vmatpush.msra.mxu0 %v8701
  %9975 = vmatpush.msra.mxu0 %v8689
  %9976 = vmatpush.msra.mxu0 %v8677
  %9977 = vmatpush.msra.mxu0 %v8665
  %9978 = vmatpush.msra.mxu0 %v8496
  %9979 = vmatpush.msra.mxu0 %v8483
  %9980 = vmatpush.msra.mxu0 %v8470
  %9981 = vmatpush.msra.mxu0 %v8457
  %9982 = vmatmul.f32.gmra.mxu0 %v9354
  %v9983 = vpop.f32.mrf.mxu0
  %v9984 = vadd.f32 %v9681, %v9983
  %9985 = vdwg.mxu0
  %9986 = vmatpush.msra.mxu0 0.0
  %9987 = vmatpush.msra.mxu0 0.0
  %9988 = vmatpush.msra.mxu0 0.0
  %9989 = vmatpush.msra.mxu0 0.0
  %9990 = vmatpush.msra.mxu0 0.0
  %9991 = vmatpush.msra.mxu0 0.0
  %9992 = vmatpush.msra.mxu0 0.0
  %9993 = vmatpush.msra.mxu0 0.0
  %9994 = vmatpush.msra.mxu0 0.0
  %9995 = vmatpush.msra.mxu0 0.0
  %9996 = vmatpush.msra.mxu0 0.0
  %9997 = vmatpush.msra.mxu0 0.0
  %9998 = vmatpush.msra.mxu0 %v9301
  %9999 = vmatpush.msra.mxu0 %v9289
  %10000 = vmatpush.msra.mxu0 %v9277
  %10001 = vmatpush.msra.mxu0 %v9265
  %10002 = vmatmul.f32.gmra.mxu0 %v9684
  %v10003 = vpop.f32.mrf.mxu0
  %v10004 = vadd.f32 %v9984, %v10003
  %10005 = vdwg.mxu0
  %s10006 = scalar_lea.vmem %s4, 32
  %v10007 = vld [vmem:[%s10006] sm:$0xff]
  %v10008 = vld [vmem:[%s10006 + $0x8] sm:$0xff]
  %v10010 = vsel %vm9359, %v10008, 0
  %10012 = vmatpush.msra.mxu0 %v9096
  %10013 = vmatpush.msra.mxu0 %v9084
  %10014 = vmatpush.msra.mxu0 %v9072
  %10015 = vmatpush.msra.mxu0 %v9060
  %10016 = vmatpush.msra.mxu0 %v8896
  %10017 = vmatpush.msra.mxu0 %v8884
  %10018 = vmatpush.msra.mxu0 %v8872
  %10019 = vmatpush.msra.mxu0 %v8860
  %10020 = vmatpush.msra.mxu0 %v8696
  %10021 = vmatpush.msra.mxu0 %v8684
  %10022 = vmatpush.msra.mxu0 %v8672
  %10023 = vmatpush.msra.mxu0 %v8660
  %10024 = vmatpush.msra.mxu0 %v8491
  %10025 = vmatpush.msra.mxu0 %v8478
  %10026 = vmatpush.msra.mxu0 %v8465
  %10027 = vmatpush.msra.mxu0 %v8452
  %10028 = vmatmul.f32.gmra.mxu0 %v10007
  %v10029 = vpop.f32.mrf.mxu0
  %v10030 = vadd.f32 0.0, %v10029
  %10031 = vdwg.mxu0
  %10032 = vmatpush.msra.mxu0 0.0
  %10033 = vmatpush.msra.mxu0 0.0
  %10034 = vmatpush.msra.mxu0 0.0
  %10035 = vmatpush.msra.mxu0 0.0
  %10036 = vmatpush.msra.mxu0 0.0
  %10037 = vmatpush.msra.mxu0 0.0
  %10038 = vmatpush.msra.mxu0 0.0
  %10039 = vmatpush.msra.mxu0 0.0
  %10040 = vmatpush.msra.mxu0 0.0
  %10041 = vmatpush.msra.mxu0 0.0
  %10042 = vmatpush.msra.mxu0 0.0
  %10043 = vmatpush.msra.mxu0 0.0
  %10044 = vmatpush.msra.mxu0 %v9296
  %10045 = vmatpush.msra.mxu0 %v9284
  %10046 = vmatpush.msra.mxu0 %v9272
  %10047 = vmatpush.msra.mxu0 %v9260
  %10048 = vmatmul.f32.gmra.mxu0 %v10010
  %v10049 = vpop.f32.mrf.mxu0
  %v10050 = vadd.f32 %v10030, %v10049
  %10051 = vdwg.mxu0
  %10052 = vmatpush.msra.mxu0 %v9097
  %10053 = vmatpush.msra.mxu0 %v9085
  %10054 = vmatpush.msra.mxu0 %v9073
  %10055 = vmatpush.msra.mxu0 %v9061
  %10056 = vmatpush.msra.mxu0 %v8897
  %10057 = vmatpush.msra.mxu0 %v8885
  %10058 = vmatpush.msra.mxu0 %v8873
  %10059 = vmatpush.msra.mxu0 %v8861
  %10060 = vmatpush.msra.mxu0 %v8697
  %10061 = vmatpush.msra.mxu0 %v8685
  %10062 = vmatpush.msra.mxu0 %v8673
  %10063 = vmatpush.msra.mxu0 %v8661
  %10064 = vmatpush.msra.mxu0 %v8492
  %10065 = vmatpush.msra.mxu0 %v8479
  %10066 = vmatpush.msra.mxu0 %v8466
  %10067 = vmatpush.msra.mxu0 %v8453
  %10068 = vmatmul.f32.gmra.mxu0 %v10007
  %v10069 = vpop.f32.mrf.mxu0
  %v10070 = vadd.f32 0.0, %v10069
  %10071 = vdwg.mxu0
  %10072 = vmatpush.msra.mxu0 0.0
  %10073 = vmatpush.msra.mxu0 0.0
  %10074 = vmatpush.msra.mxu0 0.0
  %10075 = vmatpush.msra.mxu0 0.0
  %10076 = vmatpush.msra.mxu0 0.0
  %10077 = vmatpush.msra.mxu0 0.0
  %10078 = vmatpush.msra.mxu0 0.0
  %10079 = vmatpush.msra.mxu0 0.0
  %10080 = vmatpush.msra.mxu0 0.0
  %10081 = vmatpush.msra.mxu0 0.0
  %10082 = vmatpush.msra.mxu0 0.0
  %10083 = vmatpush.msra.mxu0 0.0
  %10084 = vmatpush.msra.mxu0 %v9297
  %10085 = vmatpush.msra.mxu0 %v9285
  %10086 = vmatpush.msra.mxu0 %v9273
  %10087 = vmatpush.msra.mxu0 %v9261
  %10088 = vmatmul.f32.gmra.mxu0 %v10010
  %v10089 = vpop.f32.mrf.mxu0
  %v10090 = vadd.f32 %v10070, %v10089
  %10091 = vdwg.mxu0
  %10092 = vmatpush.msra.mxu0 %v9098
  %10093 = vmatpush.msra.mxu0 %v9086
  %10094 = vmatpush.msra.mxu0 %v9074
  %10095 = vmatpush.msra.mxu0 %v9062
  %10096 = vmatpush.msra.mxu0 %v8898
  %10097 = vmatpush.msra.mxu0 %v8886
  %10098 = vmatpush.msra.mxu0 %v8874
  %10099 = vmatpush.msra.mxu0 %v8862
  %10100 = vmatpush.msra.mxu0 %v8698
  %10101 = vmatpush.msra.mxu0 %v8686
  %10102 = vmatpush.msra.mxu0 %v8674
  %10103 = vmatpush.msra.mxu0 %v8662
  %10104 = vmatpush.msra.mxu0 %v8493
  %10105 = vmatpush.msra.mxu0 %v8480
  %10106 = vmatpush.msra.mxu0 %v8467
  %10107 = vmatpush.msra.mxu0 %v8454
  %10108 = vmatmul.f32.gmra.mxu0 %v10007
  %v10109 = vpop.f32.mrf.mxu0
  %v10110 = vadd.f32 0.0, %v10109
  %10111 = vdwg.mxu0
  %10112 = vmatpush.msra.mxu0 0.0
  %10113 = vmatpush.msra.mxu0 0.0
  %10114 = vmatpush.msra.mxu0 0.0
  %10115 = vmatpush.msra.mxu0 0.0
  %10116 = vmatpush.msra.mxu0 0.0
  %10117 = vmatpush.msra.mxu0 0.0
  %10118 = vmatpush.msra.mxu0 0.0
  %10119 = vmatpush.msra.mxu0 0.0
  %10120 = vmatpush.msra.mxu0 0.0
  %10121 = vmatpush.msra.mxu0 0.0
  %10122 = vmatpush.msra.mxu0 0.0
  %10123 = vmatpush.msra.mxu0 0.0
  %10124 = vmatpush.msra.mxu0 %v9298
  %10125 = vmatpush.msra.mxu0 %v9286
  %10126 = vmatpush.msra.mxu0 %v9274
  %10127 = vmatpush.msra.mxu0 %v9262
  %10128 = vmatmul.f32.gmra.mxu0 %v10010
  %v10129 = vpop.f32.mrf.mxu0
  %v10130 = vadd.f32 %v10110, %v10129
  %10131 = vdwg.mxu0
  %10132 = vmatpush.msra.mxu0 %v9099
  %10133 = vmatpush.msra.mxu0 %v9087
  %10134 = vmatpush.msra.mxu0 %v9075
  %10135 = vmatpush.msra.mxu0 %v9063
  %10136 = vmatpush.msra.mxu0 %v8899
  %10137 = vmatpush.msra.mxu0 %v8887
  %10138 = vmatpush.msra.mxu0 %v8875
  %10139 = vmatpush.msra.mxu0 %v8863
  %10140 = vmatpush.msra.mxu0 %v8699
  %10141 = vmatpush.msra.mxu0 %v8687
  %10142 = vmatpush.msra.mxu0 %v8675
  %10143 = vmatpush.msra.mxu0 %v8663
  %10144 = vmatpush.msra.mxu0 %v8494
  %10145 = vmatpush.msra.mxu0 %v8481
  %10146 = vmatpush.msra.mxu0 %v8468
  %10147 = vmatpush.msra.mxu0 %v8455
  %10148 = vmatmul.f32.gmra.mxu0 %v10007
  %v10149 = vpop.f32.mrf.mxu0
  %v10150 = vadd.f32 0.0, %v10149
  %10151 = vdwg.mxu0
  %10152 = vmatpush.msra.mxu0 0.0
  %10153 = vmatpush.msra.mxu0 0.0
  %10154 = vmatpush.msra.mxu0 0.0
  %10155 = vmatpush.msra.mxu0 0.0
  %10156 = vmatpush.msra.mxu0 0.0
  %10157 = vmatpush.msra.mxu0 0.0
  %10158 = vmatpush.msra.mxu0 0.0
  %10159 = vmatpush.msra.mxu0 0.0
  %10160 = vmatpush.msra.mxu0 0.0
  %10161 = vmatpush.msra.mxu0 0.0
  %10162 = vmatpush.msra.mxu0 0.0
  %10163 = vmatpush.msra.mxu0 0.0
  %10164 = vmatpush.msra.mxu0 %v9299
  %10165 = vmatpush.msra.mxu0 %v9287
  %10166 = vmatpush.msra.mxu0 %v9275
  %10167 = vmatpush.msra.mxu0 %v9263
  %10168 = vmatmul.f32.gmra.mxu0 %v10010
  %v10169 = vpop.f32.mrf.mxu0
  %v10170 = vadd.f32 %v10150, %v10169
  %10171 = vdwg.mxu0
  %10172 = vmatpush.msra.mxu0 %v9100
  %10173 = vmatpush.msra.mxu0 %v9088
  %10174 = vmatpush.msra.mxu0 %v9076
  %10175 = vmatpush.msra.mxu0 %v9064
  %10176 = vmatpush.msra.mxu0 %v8900
  %10177 = vmatpush.msra.mxu0 %v8888
  %10178 = vmatpush.msra.mxu0 %v8876
  %10179 = vmatpush.msra.mxu0 %v8864
  %10180 = vmatpush.msra.mxu0 %v8700
  %10181 = vmatpush.msra.mxu0 %v8688
  %10182 = vmatpush.msra.mxu0 %v8676
  %10183 = vmatpush.msra.mxu0 %v8664
  %10184 = vmatpush.msra.mxu0 %v8495
  %10185 = vmatpush.msra.mxu0 %v8482
  %10186 = vmatpush.msra.mxu0 %v8469
  %10187 = vmatpush.msra.mxu0 %v8456
  %10188 = vmatmul.f32.gmra.mxu0 %v10007
  %v10189 = vpop.f32.mrf.mxu0
  %v10190 = vadd.f32 0.0, %v10189
  %10191 = vdwg.mxu0
  %10192 = vmatpush.msra.mxu0 0.0
  %10193 = vmatpush.msra.mxu0 0.0
  %10194 = vmatpush.msra.mxu0 0.0
  %10195 = vmatpush.msra.mxu0 0.0
  %10196 = vmatpush.msra.mxu0 0.0
  %10197 = vmatpush.msra.mxu0 0.0
  %10198 = vmatpush.msra.mxu0 0.0
  %10199 = vmatpush.msra.mxu0 0.0
  %10200 = vmatpush.msra.mxu0 0.0
  %10201 = vmatpush.msra.mxu0 0.0
  %10202 = vmatpush.msra.mxu0 0.0
  %10203 = vmatpush.msra.mxu0 0.0
  %10204 = vmatpush.msra.mxu0 %v9300
  %10205 = vmatpush.msra.mxu0 %v9288
  %10206 = vmatpush.msra.mxu0 %v9276
  %10207 = vmatpush.msra.mxu0 %v9264
  %10208 = vmatmul.f32.gmra.mxu0 %v10010
  %v10209 = vpop.f32.mrf.mxu0
  %v10210 = vadd.f32 %v10190, %v10209
  %10211 = vdwg.mxu0
  %10212 = vmatpush.msra.mxu0 %v9101
  %10213 = vmatpush.msra.mxu0 %v9089
  %10214 = vmatpush.msra.mxu0 %v9077
  %10215 = vmatpush.msra.mxu0 %v9065
  %10216 = vmatpush.msra.mxu0 %v8901
  %10217 = vmatpush.msra.mxu0 %v8889
  %10218 = vmatpush.msra.mxu0 %v8877
  %10219 = vmatpush.msra.mxu0 %v8865
  %10220 = vmatpush.msra.mxu0 %v8701
  %10221 = vmatpush.msra.mxu0 %v8689
  %10222 = vmatpush.msra.mxu0 %v8677
  %10223 = vmatpush.msra.mxu0 %v8665
  %10224 = vmatpush.msra.mxu0 %v8496
  %10225 = vmatpush.msra.mxu0 %v8483
  %10226 = vmatpush.msra.mxu0 %v8470
  %10227 = vmatpush.msra.mxu0 %v8457
  %10228 = vmatmul.f32.gmra.mxu0 %v10007
  %v10229 = vpop.f32.mrf.mxu0
  %v10230 = vadd.f32 0.0, %v10229
  %10231 = vdwg.mxu0
  %10232 = vmatpush.msra.mxu0 0.0
  %10233 = vmatpush.msra.mxu0 0.0
  %10234 = vmatpush.msra.mxu0 0.0
  %10235 = vmatpush.msra.mxu0 0.0
  %10236 = vmatpush.msra.mxu0 0.0
  %10237 = vmatpush.msra.mxu0 0.0
  %10238 = vmatpush.msra.mxu0 0.0
  %10239 = vmatpush.msra.mxu0 0.0
  %10240 = vmatpush.msra.mxu0 0.0
  %10241 = vmatpush.msra.mxu0 0.0
  %10242 = vmatpush.msra.mxu0 0.0
  %10243 = vmatpush.msra.mxu0 0.0
  %10244 = vmatpush.msra.mxu0 %v9301
  %10245 = vmatpush.msra.mxu0 %v9289
  %10246 = vmatpush.msra.mxu0 %v9277
  %10247 = vmatpush.msra.mxu0 %v9265
  %10248 = vmatmul.f32.gmra.mxu0 %v10010
  %v10249 = vpop.f32.mrf.mxu0
  %v10250 = vadd.f32 %v10230, %v10249
  %10251 = vdwg.mxu0
  %10252 = vmatpush.msra.mxu0 %v9102
  %10253 = vmatpush.msra.mxu0 %v9090
  %10254 = vmatpush.msra.mxu0 %v9078
  %10255 = vmatpush.msra.mxu0 %v9066
  %10256 = vmatpush.msra.mxu0 %v8902
  %10257 = vmatpush.msra.mxu0 %v8890
  %10258 = vmatpush.msra.mxu0 %v8878
  %10259 = vmatpush.msra.mxu0 %v8866
  %10260 = vmatpush.msra.mxu0 %v8702
  %10261 = vmatpush.msra.mxu0 %v8690
  %10262 = vmatpush.msra.mxu0 %v8678
  %10263 = vmatpush.msra.mxu0 %v8666
  %10264 = vmatpush.msra.mxu0 %v8497
  %10265 = vmatpush.msra.mxu0 %v8484
  %10266 = vmatpush.msra.mxu0 %v8471
  %10267 = vmatpush.msra.mxu0 %v8458
  %10268 = vmatmul.f32.gmra.mxu0 %v10007
  %v10269 = vpop.f32.mrf.mxu0
  %v10270 = vadd.f32 0.0, %v10269
  %10271 = vdwg.mxu0
  %10272 = vmatpush.msra.mxu0 0.0
  %10273 = vmatpush.msra.mxu0 0.0
  %10274 = vmatpush.msra.mxu0 0.0
  %10275 = vmatpush.msra.mxu0 0.0
  %10276 = vmatpush.msra.mxu0 0.0
  %10277 = vmatpush.msra.mxu0 0.0
  %10278 = vmatpush.msra.mxu0 0.0
  %10279 = vmatpush.msra.mxu0 0.0
  %10280 = vmatpush.msra.mxu0 0.0
  %10281 = vmatpush.msra.mxu0 0.0
  %10282 = vmatpush.msra.mxu0 0.0
  %10283 = vmatpush.msra.mxu0 0.0
  %10284 = vmatpush.msra.mxu0 %v9302
  %10285 = vmatpush.msra.mxu0 %v9290
  %10286 = vmatpush.msra.mxu0 %v9278
  %10287 = vmatpush.msra.mxu0 %v9266
  %10288 = vmatmul.f32.gmra.mxu0 %v10010
  %v10289 = vpop.f32.mrf.mxu0
  %v10290 = vadd.f32 %v10270, %v10289
  %10291 = vdwg.mxu0
  %10292 = vmatpush.msra.mxu0 %v9103
  %10293 = vmatpush.msra.mxu0 %v9091
  %10294 = vmatpush.msra.mxu0 %v9079
  %10295 = vmatpush.msra.mxu0 %v9067
  %10296 = vmatpush.msra.mxu0 %v8903
  %10297 = vmatpush.msra.mxu0 %v8891
  %10298 = vmatpush.msra.mxu0 %v8879
  %10299 = vmatpush.msra.mxu0 %v8867
  %10300 = vmatpush.msra.mxu0 %v8703
  %10301 = vmatpush.msra.mxu0 %v8691
  %10302 = vmatpush.msra.mxu0 %v8679
  %10303 = vmatpush.msra.mxu0 %v8667
  %10304 = vmatpush.msra.mxu0 %v8498
  %10305 = vmatpush.msra.mxu0 %v8485
  %10306 = vmatpush.msra.mxu0 %v8472
  %10307 = vmatpush.msra.mxu0 %v8459
  %10308 = vmatmul.f32.gmra.mxu0 %v10007
  %v10309 = vpop.f32.mrf.mxu0
  %v10310 = vadd.f32 0.0, %v10309
  %10311 = vdwg.mxu0
  %10312 = vmatpush.msra.mxu0 0.0
  %10313 = vmatpush.msra.mxu0 0.0
  %10314 = vmatpush.msra.mxu0 0.0
  %10315 = vmatpush.msra.mxu0 0.0
  %10316 = vmatpush.msra.mxu0 0.0
  %10317 = vmatpush.msra.mxu0 0.0
  %10318 = vmatpush.msra.mxu0 0.0
  %10319 = vmatpush.msra.mxu0 0.0
  %10320 = vmatpush.msra.mxu0 0.0
  %10321 = vmatpush.msra.mxu0 0.0
  %10322 = vmatpush.msra.mxu0 0.0
  %10323 = vmatpush.msra.mxu0 0.0
  %10324 = vmatpush.msra.mxu0 %v9303
  %10325 = vmatpush.msra.mxu0 %v9291
  %10326 = vmatpush.msra.mxu0 %v9279
  %10327 = vmatpush.msra.mxu0 %v9267
  %10328 = vmatmul.f32.gmra.mxu0 %v10010
  %v10329 = vpop.f32.mrf.mxu0
  %v10330 = vadd.f32 %v10310, %v10329
  %10331 = vdwg.mxu0
  %v10332 = vadd.f32 %v9724, %v10050
  %v10333 = vadd.f32 %v9764, %v10090
  %v10334 = vadd.f32 %v9804, %v10130
  %v10335 = vadd.f32 %v9844, %v10170
  %v10336 = vadd.f32 %v9884, %v10210
  %v10337 = vadd.f32 %v9924, %v10250
  %v10338 = vadd.f32 %v9964, %v10290
  %v10339 = vadd.f32 %v10004, %v10330
  %s10340 = scalar_lea.vmem %s4, 48
  %v10341 = vld [vmem:[%s10340] sm:$0xff]
  %v10342 = vld [vmem:[%s10340 + $0x8] sm:$0xff]
  %v10344 = vsel %vm9359, %v10342, 0
  %10346 = vmatpush.msra.mxu0 %v9097
  %10347 = vmatpush.msra.mxu0 %v9085
  %10348 = vmatpush.msra.mxu0 %v9073
  %10349 = vmatpush.msra.mxu0 %v9061
  %10350 = vmatpush.msra.mxu0 %v8897
  %10351 = vmatpush.msra.mxu0 %v8885
  %10352 = vmatpush.msra.mxu0 %v8873
  %10353 = vmatpush.msra.mxu0 %v8861
  %10354 = vmatpush.msra.mxu0 %v8697
  %10355 = vmatpush.msra.mxu0 %v8685
  %10356 = vmatpush.msra.mxu0 %v8673
  %10357 = vmatpush.msra.mxu0 %v8661
  %10358 = vmatpush.msra.mxu0 %v8492
  %10359 = vmatpush.msra.mxu0 %v8479
  %10360 = vmatpush.msra.mxu0 %v8466
  %10361 = vmatpush.msra.mxu0 %v8453
  %10362 = vmatmul.f32.gmra.mxu0 %v10341
  %v10363 = vpop.f32.mrf.mxu0
  %v10364 = vadd.f32 0.0, %v10363
  %10365 = vdwg.mxu0
  %10366 = vmatpush.msra.mxu0 0.0
  %10367 = vmatpush.msra.mxu0 0.0
  %10368 = vmatpush.msra.mxu0 0.0
  %10369 = vmatpush.msra.mxu0 0.0
  %10370 = vmatpush.msra.mxu0 0.0
  %10371 = vmatpush.msra.mxu0 0.0
  %10372 = vmatpush.msra.mxu0 0.0
  %10373 = vmatpush.msra.mxu0 0.0
  %10374 = vmatpush.msra.mxu0 0.0
  %10375 = vmatpush.msra.mxu0 0.0
  %10376 = vmatpush.msra.mxu0 0.0
  %10377 = vmatpush.msra.mxu0 0.0
  %10378 = vmatpush.msra.mxu0 %v9297
  %10379 = vmatpush.msra.mxu0 %v9285
  %10380 = vmatpush.msra.mxu0 %v9273
  %10381 = vmatpush.msra.mxu0 %v9261
  %10382 = vmatmul.f32.gmra.mxu0 %v10344
  %v10383 = vpop.f32.mrf.mxu0
  %v10384 = vadd.f32 %v10364, %v10383
  %10385 = vdwg.mxu0
  %10386 = vmatpush.msra.mxu0 %v9098
  %10387 = vmatpush.msra.mxu0 %v9086
  %10388 = vmatpush.msra.mxu0 %v9074
  %10389 = vmatpush.msra.mxu0 %v9062
  %10390 = vmatpush.msra.mxu0 %v8898
  %10391 = vmatpush.msra.mxu0 %v8886
  %10392 = vmatpush.msra.mxu0 %v8874
  %10393 = vmatpush.msra.mxu0 %v8862
  %10394 = vmatpush.msra.mxu0 %v8698
  %10395 = vmatpush.msra.mxu0 %v8686
  %10396 = vmatpush.msra.mxu0 %v8674
  %10397 = vmatpush.msra.mxu0 %v8662
  %10398 = vmatpush.msra.mxu0 %v8493
  %10399 = vmatpush.msra.mxu0 %v8480
  %10400 = vmatpush.msra.mxu0 %v8467
  %10401 = vmatpush.msra.mxu0 %v8454
  %10402 = vmatmul.f32.gmra.mxu0 %v10341
  %v10403 = vpop.f32.mrf.mxu0
  %v10404 = vadd.f32 0.0, %v10403
  %10405 = vdwg.mxu0
  %10406 = vmatpush.msra.mxu0 0.0
  %10407 = vmatpush.msra.mxu0 0.0
  %10408 = vmatpush.msra.mxu0 0.0
  %10409 = vmatpush.msra.mxu0 0.0
  %10410 = vmatpush.msra.mxu0 0.0
  %10411 = vmatpush.msra.mxu0 0.0
  %10412 = vmatpush.msra.mxu0 0.0
  %10413 = vmatpush.msra.mxu0 0.0
  %10414 = vmatpush.msra.mxu0 0.0
  %10415 = vmatpush.msra.mxu0 0.0
  %10416 = vmatpush.msra.mxu0 0.0
  %10417 = vmatpush.msra.mxu0 0.0
  %10418 = vmatpush.msra.mxu0 %v9298
  %10419 = vmatpush.msra.mxu0 %v9286
  %10420 = vmatpush.msra.mxu0 %v9274
  %10421 = vmatpush.msra.mxu0 %v9262
  %10422 = vmatmul.f32.gmra.mxu0 %v10344
  %v10423 = vpop.f32.mrf.mxu0
  %v10424 = vadd.f32 %v10404, %v10423
  %10425 = vdwg.mxu0
  %10426 = vmatpush.msra.mxu0 %v9099
  %10427 = vmatpush.msra.mxu0 %v9087
  %10428 = vmatpush.msra.mxu0 %v9075
  %10429 = vmatpush.msra.mxu0 %v9063
  %10430 = vmatpush.msra.mxu0 %v8899
  %10431 = vmatpush.msra.mxu0 %v8887
  %10432 = vmatpush.msra.mxu0 %v8875
  %10433 = vmatpush.msra.mxu0 %v8863
  %10434 = vmatpush.msra.mxu0 %v8699
  %10435 = vmatpush.msra.mxu0 %v8687
  %10436 = vmatpush.msra.mxu0 %v8675
  %10437 = vmatpush.msra.mxu0 %v8663
  %10438 = vmatpush.msra.mxu0 %v8494
  %10439 = vmatpush.msra.mxu0 %v8481
  %10440 = vmatpush.msra.mxu0 %v8468
  %10441 = vmatpush.msra.mxu0 %v8455
  %10442 = vmatmul.f32.gmra.mxu0 %v10341
  %v10443 = vpop.f32.mrf.mxu0
  %v10444 = vadd.f32 0.0, %v10443
  %10445 = vdwg.mxu0
  %10446 = vmatpush.msra.mxu0 0.0
  %10447 = vmatpush.msra.mxu0 0.0
  %10448 = vmatpush.msra.mxu0 0.0
  %10449 = vmatpush.msra.mxu0 0.0
  %10450 = vmatpush.msra.mxu0 0.0
  %10451 = vmatpush.msra.mxu0 0.0
  %10452 = vmatpush.msra.mxu0 0.0
  %10453 = vmatpush.msra.mxu0 0.0
  %10454 = vmatpush.msra.mxu0 0.0
  %10455 = vmatpush.msra.mxu0 0.0
  %10456 = vmatpush.msra.mxu0 0.0
  %10457 = vmatpush.msra.mxu0 0.0
  %10458 = vmatpush.msra.mxu0 %v9299
  %10459 = vmatpush.msra.mxu0 %v9287
  %10460 = vmatpush.msra.mxu0 %v9275
  %10461 = vmatpush.msra.mxu0 %v9263
  %10462 = vmatmul.f32.gmra.mxu0 %v10344
  %v10463 = vpop.f32.mrf.mxu0
  %v10464 = vadd.f32 %v10444, %v10463
  %10465 = vdwg.mxu0
  %10466 = vmatpush.msra.mxu0 %v9100
  %10467 = vmatpush.msra.mxu0 %v9088
  %10468 = vmatpush.msra.mxu0 %v9076
  %10469 = vmatpush.msra.mxu0 %v9064
  %10470 = vmatpush.msra.mxu0 %v8900
  %10471 = vmatpush.msra.mxu0 %v8888
  %10472 = vmatpush.msra.mxu0 %v8876
  %10473 = vmatpush.msra.mxu0 %v8864
  %10474 = vmatpush.msra.mxu0 %v8700
  %10475 = vmatpush.msra.mxu0 %v8688
  %10476 = vmatpush.msra.mxu0 %v8676
  %10477 = vmatpush.msra.mxu0 %v8664
  %10478 = vmatpush.msra.mxu0 %v8495
  %10479 = vmatpush.msra.mxu0 %v8482
  %10480 = vmatpush.msra.mxu0 %v8469
  %10481 = vmatpush.msra.mxu0 %v8456
  %10482 = vmatmul.f32.gmra.mxu0 %v10341
  %v10483 = vpop.f32.mrf.mxu0
  %v10484 = vadd.f32 0.0, %v10483
  %10485 = vdwg.mxu0
  %10486 = vmatpush.msra.mxu0 0.0
  %10487 = vmatpush.msra.mxu0 0.0
  %10488 = vmatpush.msra.mxu0 0.0
  %10489 = vmatpush.msra.mxu0 0.0
  %10490 = vmatpush.msra.mxu0 0.0
  %10491 = vmatpush.msra.mxu0 0.0
  %10492 = vmatpush.msra.mxu0 0.0
  %10493 = vmatpush.msra.mxu0 0.0
  %10494 = vmatpush.msra.mxu0 0.0
  %10495 = vmatpush.msra.mxu0 0.0
  %10496 = vmatpush.msra.mxu0 0.0
  %10497 = vmatpush.msra.mxu0 0.0
  %10498 = vmatpush.msra.mxu0 %v9300
  %10499 = vmatpush.msra.mxu0 %v9288
  %10500 = vmatpush.msra.mxu0 %v9276
  %10501 = vmatpush.msra.mxu0 %v9264
  %10502 = vmatmul.f32.gmra.mxu0 %v10344
  %v10503 = vpop.f32.mrf.mxu0
  %v10504 = vadd.f32 %v10484, %v10503
  %10505 = vdwg.mxu0
  %10506 = vmatpush.msra.mxu0 %v9101
  %10507 = vmatpush.msra.mxu0 %v9089
  %10508 = vmatpush.msra.mxu0 %v9077
  %10509 = vmatpush.msra.mxu0 %v9065
  %10510 = vmatpush.msra.mxu0 %v8901
  %10511 = vmatpush.msra.mxu0 %v8889
  %10512 = vmatpush.msra.mxu0 %v8877
  %10513 = vmatpush.msra.mxu0 %v8865
  %10514 = vmatpush.msra.mxu0 %v8701
  %10515 = vmatpush.msra.mxu0 %v8689
  %10516 = vmatpush.msra.mxu0 %v8677
  %10517 = vmatpush.msra.mxu0 %v8665
  %10518 = vmatpush.msra.mxu0 %v8496
  %10519 = vmatpush.msra.mxu0 %v8483
  %10520 = vmatpush.msra.mxu0 %v8470
  %10521 = vmatpush.msra.mxu0 %v8457
  %10522 = vmatmul.f32.gmra.mxu0 %v10341
  %v10523 = vpop.f32.mrf.mxu0
  %v10524 = vadd.f32 0.0, %v10523
  %10525 = vdwg.mxu0
  %10526 = vmatpush.msra.mxu0 0.0
  %10527 = vmatpush.msra.mxu0 0.0
  %10528 = vmatpush.msra.mxu0 0.0
  %10529 = vmatpush.msra.mxu0 0.0
  %10530 = vmatpush.msra.mxu0 0.0
  %10531 = vmatpush.msra.mxu0 0.0
  %10532 = vmatpush.msra.mxu0 0.0
  %10533 = vmatpush.msra.mxu0 0.0
  %10534 = vmatpush.msra.mxu0 0.0
  %10535 = vmatpush.msra.mxu0 0.0
  %10536 = vmatpush.msra.mxu0 0.0
  %10537 = vmatpush.msra.mxu0 0.0
  %10538 = vmatpush.msra.mxu0 %v9301
  %10539 = vmatpush.msra.mxu0 %v9289
  %10540 = vmatpush.msra.mxu0 %v9277
  %10541 = vmatpush.msra.mxu0 %v9265
  %10542 = vmatmul.f32.gmra.mxu0 %v10344
  %v10543 = vpop.f32.mrf.mxu0
  %v10544 = vadd.f32 %v10524, %v10543
  %10545 = vdwg.mxu0
  %10546 = vmatpush.msra.mxu0 %v9102
  %10547 = vmatpush.msra.mxu0 %v9090
  %10548 = vmatpush.msra.mxu0 %v9078
  %10549 = vmatpush.msra.mxu0 %v9066
  %10550 = vmatpush.msra.mxu0 %v8902
  %10551 = vmatpush.msra.mxu0 %v8890
  %10552 = vmatpush.msra.mxu0 %v8878
  %10553 = vmatpush.msra.mxu0 %v8866
  %10554 = vmatpush.msra.mxu0 %v8702
  %10555 = vmatpush.msra.mxu0 %v8690
  %10556 = vmatpush.msra.mxu0 %v8678
  %10557 = vmatpush.msra.mxu0 %v8666
  %10558 = vmatpush.msra.mxu0 %v8497
  %10559 = vmatpush.msra.mxu0 %v8484
  %10560 = vmatpush.msra.mxu0 %v8471
  %10561 = vmatpush.msra.mxu0 %v8458
  %10562 = vmatmul.f32.gmra.mxu0 %v10341
  %v10563 = vpop.f32.mrf.mxu0
  %v10564 = vadd.f32 0.0, %v10563
  %10565 = vdwg.mxu0
  %10566 = vmatpush.msra.mxu0 0.0
  %10567 = vmatpush.msra.mxu0 0.0
  %10568 = vmatpush.msra.mxu0 0.0
  %10569 = vmatpush.msra.mxu0 0.0
  %10570 = vmatpush.msra.mxu0 0.0
  %10571 = vmatpush.msra.mxu0 0.0
  %10572 = vmatpush.msra.mxu0 0.0
  %10573 = vmatpush.msra.mxu0 0.0
  %10574 = vmatpush.msra.mxu0 0.0
  %10575 = vmatpush.msra.mxu0 0.0
  %10576 = vmatpush.msra.mxu0 0.0
  %10577 = vmatpush.msra.mxu0 0.0
  %10578 = vmatpush.msra.mxu0 %v9302
  %10579 = vmatpush.msra.mxu0 %v9290
  %10580 = vmatpush.msra.mxu0 %v9278
  %10581 = vmatpush.msra.mxu0 %v9266
  %10582 = vmatmul.f32.gmra.mxu0 %v10344
  %v10583 = vpop.f32.mrf.mxu0
  %v10584 = vadd.f32 %v10564, %v10583
  %10585 = vdwg.mxu0
  %10586 = vmatpush.msra.mxu0 %v9103
  %10587 = vmatpush.msra.mxu0 %v9091
  %10588 = vmatpush.msra.mxu0 %v9079
  %10589 = vmatpush.msra.mxu0 %v9067
  %10590 = vmatpush.msra.mxu0 %v8903
  %10591 = vmatpush.msra.mxu0 %v8891
  %10592 = vmatpush.msra.mxu0 %v8879
  %10593 = vmatpush.msra.mxu0 %v8867
  %10594 = vmatpush.msra.mxu0 %v8703
  %10595 = vmatpush.msra.mxu0 %v8691
  %10596 = vmatpush.msra.mxu0 %v8679
  %10597 = vmatpush.msra.mxu0 %v8667
  %10598 = vmatpush.msra.mxu0 %v8498
  %10599 = vmatpush.msra.mxu0 %v8485
  %10600 = vmatpush.msra.mxu0 %v8472
  %10601 = vmatpush.msra.mxu0 %v8459
  %10602 = vmatmul.f32.gmra.mxu0 %v10341
  %v10603 = vpop.f32.mrf.mxu0
  %v10604 = vadd.f32 0.0, %v10603
  %10605 = vdwg.mxu0
  %10606 = vmatpush.msra.mxu0 0.0
  %10607 = vmatpush.msra.mxu0 0.0
  %10608 = vmatpush.msra.mxu0 0.0
  %10609 = vmatpush.msra.mxu0 0.0
  %10610 = vmatpush.msra.mxu0 0.0
  %10611 = vmatpush.msra.mxu0 0.0
  %10612 = vmatpush.msra.mxu0 0.0
  %10613 = vmatpush.msra.mxu0 0.0
  %10614 = vmatpush.msra.mxu0 0.0
  %10615 = vmatpush.msra.mxu0 0.0
  %10616 = vmatpush.msra.mxu0 0.0
  %10617 = vmatpush.msra.mxu0 0.0
  %10618 = vmatpush.msra.mxu0 %v9303
  %10619 = vmatpush.msra.mxu0 %v9291
  %10620 = vmatpush.msra.mxu0 %v9279
  %10621 = vmatpush.msra.mxu0 %v9267
  %10622 = vmatmul.f32.gmra.mxu0 %v10344
  %v10623 = vpop.f32.mrf.mxu0
  %v10624 = vadd.f32 %v10604, %v10623
  %10625 = vdwg.mxu0
  %10626 = vmatpush.msra.mxu0 %v9104
  %10627 = vmatpush.msra.mxu0 %v9092
  %10628 = vmatpush.msra.mxu0 %v9080
  %10629 = vmatpush.msra.mxu0 %v9068
  %10630 = vmatpush.msra.mxu0 %v8904
  %10631 = vmatpush.msra.mxu0 %v8892
  %10632 = vmatpush.msra.mxu0 %v8880
  %10633 = vmatpush.msra.mxu0 %v8868
  %10634 = vmatpush.msra.mxu0 %v8704
  %10635 = vmatpush.msra.mxu0 %v8692
  %10636 = vmatpush.msra.mxu0 %v8680
  %10637 = vmatpush.msra.mxu0 %v8668
  %10638 = vmatpush.msra.mxu0 %v8499
  %10639 = vmatpush.msra.mxu0 %v8486
  %10640 = vmatpush.msra.mxu0 %v8473
  %10641 = vmatpush.msra.mxu0 %v8460
  %10642 = vmatmul.f32.gmra.mxu0 %v10341
  %v10643 = vpop.f32.mrf.mxu0
  %v10644 = vadd.f32 0.0, %v10643
  %10645 = vdwg.mxu0
  %10646 = vmatpush.msra.mxu0 0.0
  %10647 = vmatpush.msra.mxu0 0.0
  %10648 = vmatpush.msra.mxu0 0.0
  %10649 = vmatpush.msra.mxu0 0.0
  %10650 = vmatpush.msra.mxu0 0.0
  %10651 = vmatpush.msra.mxu0 0.0
  %10652 = vmatpush.msra.mxu0 0.0
  %10653 = vmatpush.msra.mxu0 0.0
  %10654 = vmatpush.msra.mxu0 0.0
  %10655 = vmatpush.msra.mxu0 0.0
  %10656 = vmatpush.msra.mxu0 0.0
  %10657 = vmatpush.msra.mxu0 0.0
  %10658 = vmatpush.msra.mxu0 %v9304
  %10659 = vmatpush.msra.mxu0 %v9292
  %10660 = vmatpush.msra.mxu0 %v9280
  %10661 = vmatpush.msra.mxu0 %v9268
  %10662 = vmatmul.f32.gmra.mxu0 %v10344
  %v10663 = vpop.f32.mrf.mxu0
  %v10664 = vadd.f32 %v10644, %v10663
  %10665 = vdwg.mxu0
  %v10666 = vadd.f32 %v10332, %v10384
  %v10667 = vadd.f32 %v10333, %v10424
  %v10668 = vadd.f32 %v10334, %v10464
  %v10669 = vadd.f32 %v10335, %v10504
  %v10670 = vadd.f32 %v10336, %v10544
  %v10671 = vadd.f32 %v10337, %v10584
  %v10672 = vadd.f32 %v10338, %v10624
  %v10673 = vadd.f32 %v10339, %v10664
  %s10674 = scalar_lea.vmem %s4, 64
  %v10675 = vld [vmem:[%s10674] sm:$0xff]
  %v10676 = vld [vmem:[%s10674 + $0x8] sm:$0xff]
  %v10678 = vsel %vm9359, %v10676, 0
  %10680 = vmatpush.msra.mxu0 %v9098
  %10681 = vmatpush.msra.mxu0 %v9086
  %10682 = vmatpush.msra.mxu0 %v9074
  %10683 = vmatpush.msra.mxu0 %v9062
  %10684 = vmatpush.msra.mxu0 %v8898
  %10685 = vmatpush.msra.mxu0 %v8886
  %10686 = vmatpush.msra.mxu0 %v8874
  %10687 = vmatpush.msra.mxu0 %v8862
  %10688 = vmatpush.msra.mxu0 %v8698
  %10689 = vmatpush.msra.mxu0 %v8686
  %10690 = vmatpush.msra.mxu0 %v8674
  %10691 = vmatpush.msra.mxu0 %v8662
  %10692 = vmatpush.msra.mxu0 %v8493
  %10693 = vmatpush.msra.mxu0 %v8480
  %10694 = vmatpush.msra.mxu0 %v8467
  %10695 = vmatpush.msra.mxu0 %v8454
  %10696 = vmatmul.f32.gmra.mxu0 %v10675
  %v10697 = vpop.f32.mrf.mxu0
  %v10698 = vadd.f32 0.0, %v10697
  %10699 = vdwg.mxu0
  %10700 = vmatpush.msra.mxu0 0.0
  %10701 = vmatpush.msra.mxu0 0.0
  %10702 = vmatpush.msra.mxu0 0.0
  %10703 = vmatpush.msra.mxu0 0.0
  %10704 = vmatpush.msra.mxu0 0.0
  %10705 = vmatpush.msra.mxu0 0.0
  %10706 = vmatpush.msra.mxu0 0.0
  %10707 = vmatpush.msra.mxu0 0.0
  %10708 = vmatpush.msra.mxu0 0.0
  %10709 = vmatpush.msra.mxu0 0.0
  %10710 = vmatpush.msra.mxu0 0.0
  %10711 = vmatpush.msra.mxu0 0.0
  %10712 = vmatpush.msra.mxu0 %v9298
  %10713 = vmatpush.msra.mxu0 %v9286
  %10714 = vmatpush.msra.mxu0 %v9274
  %10715 = vmatpush.msra.mxu0 %v9262
  %10716 = vmatmul.f32.gmra.mxu0 %v10678
  %v10717 = vpop.f32.mrf.mxu0
  %v10718 = vadd.f32 %v10698, %v10717
  %10719 = vdwg.mxu0
  %10720 = vmatpush.msra.mxu0 %v9099
  %10721 = vmatpush.msra.mxu0 %v9087
  %10722 = vmatpush.msra.mxu0 %v9075
  %10723 = vmatpush.msra.mxu0 %v9063
  %10724 = vmatpush.msra.mxu0 %v8899
  %10725 = vmatpush.msra.mxu0 %v8887
  %10726 = vmatpush.msra.mxu0 %v8875
  %10727 = vmatpush.msra.mxu0 %v8863
  %10728 = vmatpush.msra.mxu0 %v8699
  %10729 = vmatpush.msra.mxu0 %v8687
  %10730 = vmatpush.msra.mxu0 %v8675
  %10731 = vmatpush.msra.mxu0 %v8663
  %10732 = vmatpush.msra.mxu0 %v8494
  %10733 = vmatpush.msra.mxu0 %v8481
  %10734 = vmatpush.msra.mxu0 %v8468
  %10735 = vmatpush.msra.mxu0 %v8455
  %10736 = vmatmul.f32.gmra.mxu0 %v10675
  %v10737 = vpop.f32.mrf.mxu0
  %v10738 = vadd.f32 0.0, %v10737
  %10739 = vdwg.mxu0
  %10740 = vmatpush.msra.mxu0 0.0
  %10741 = vmatpush.msra.mxu0 0.0
  %10742 = vmatpush.msra.mxu0 0.0
  %10743 = vmatpush.msra.mxu0 0.0
  %10744 = vmatpush.msra.mxu0 0.0
  %10745 = vmatpush.msra.mxu0 0.0
  %10746 = vmatpush.msra.mxu0 0.0
  %10747 = vmatpush.msra.mxu0 0.0
  %10748 = vmatpush.msra.mxu0 0.0
  %10749 = vmatpush.msra.mxu0 0.0
  %10750 = vmatpush.msra.mxu0 0.0
  %10751 = vmatpush.msra.mxu0 0.0
  %10752 = vmatpush.msra.mxu0 %v9299
  %10753 = vmatpush.msra.mxu0 %v9287
  %10754 = vmatpush.msra.mxu0 %v9275
  %10755 = vmatpush.msra.mxu0 %v9263
  %10756 = vmatmul.f32.gmra.mxu0 %v10678
  %v10757 = vpop.f32.mrf.mxu0
  %v10758 = vadd.f32 %v10738, %v10757
  %10759 = vdwg.mxu0
  %10760 = vmatpush.msra.mxu0 %v9100
  %10761 = vmatpush.msra.mxu0 %v9088
  %10762 = vmatpush.msra.mxu0 %v9076
  %10763 = vmatpush.msra.mxu0 %v9064
  %10764 = vmatpush.msra.mxu0 %v8900
  %10765 = vmatpush.msra.mxu0 %v8888
  %10766 = vmatpush.msra.mxu0 %v8876
  %10767 = vmatpush.msra.mxu0 %v8864
  %10768 = vmatpush.msra.mxu0 %v8700
  %10769 = vmatpush.msra.mxu0 %v8688
  %10770 = vmatpush.msra.mxu0 %v8676
  %10771 = vmatpush.msra.mxu0 %v8664
  %10772 = vmatpush.msra.mxu0 %v8495
  %10773 = vmatpush.msra.mxu0 %v8482
  %10774 = vmatpush.msra.mxu0 %v8469
  %10775 = vmatpush.msra.mxu0 %v8456
  %10776 = vmatmul.f32.gmra.mxu0 %v10675
  %v10777 = vpop.f32.mrf.mxu0
  %v10778 = vadd.f32 0.0, %v10777
  %10779 = vdwg.mxu0
  %10780 = vmatpush.msra.mxu0 0.0
  %10781 = vmatpush.msra.mxu0 0.0
  %10782 = vmatpush.msra.mxu0 0.0
  %10783 = vmatpush.msra.mxu0 0.0
  %10784 = vmatpush.msra.mxu0 0.0
  %10785 = vmatpush.msra.mxu0 0.0
  %10786 = vmatpush.msra.mxu0 0.0
  %10787 = vmatpush.msra.mxu0 0.0
  %10788 = vmatpush.msra.mxu0 0.0
  %10789 = vmatpush.msra.mxu0 0.0
  %10790 = vmatpush.msra.mxu0 0.0
  %10791 = vmatpush.msra.mxu0 0.0
  %10792 = vmatpush.msra.mxu0 %v9300
  %10793 = vmatpush.msra.mxu0 %v9288
  %10794 = vmatpush.msra.mxu0 %v9276
  %10795 = vmatpush.msra.mxu0 %v9264
  %10796 = vmatmul.f32.gmra.mxu0 %v10678
  %v10797 = vpop.f32.mrf.mxu0
  %v10798 = vadd.f32 %v10778, %v10797
  %10799 = vdwg.mxu0
  %10800 = vmatpush.msra.mxu0 %v9101
  %10801 = vmatpush.msra.mxu0 %v9089
  %10802 = vmatpush.msra.mxu0 %v9077
  %10803 = vmatpush.msra.mxu0 %v9065
  %10804 = vmatpush.msra.mxu0 %v8901
  %10805 = vmatpush.msra.mxu0 %v8889
  %10806 = vmatpush.msra.mxu0 %v8877
  %10807 = vmatpush.msra.mxu0 %v8865
  %10808 = vmatpush.msra.mxu0 %v8701
  %10809 = vmatpush.msra.mxu0 %v8689
  %10810 = vmatpush.msra.mxu0 %v8677
  %10811 = vmatpush.msra.mxu0 %v8665
  %10812 = vmatpush.msra.mxu0 %v8496
  %10813 = vmatpush.msra.mxu0 %v8483
  %10814 = vmatpush.msra.mxu0 %v8470
  %10815 = vmatpush.msra.mxu0 %v8457
  %10816 = vmatmul.f32.gmra.mxu0 %v10675
  %v10817 = vpop.f32.mrf.mxu0
  %v10818 = vadd.f32 0.0, %v10817
  %10819 = vdwg.mxu0
  %10820 = vmatpush.msra.mxu0 0.0
  %10821 = vmatpush.msra.mxu0 0.0
  %10822 = vmatpush.msra.mxu0 0.0
  %10823 = vmatpush.msra.mxu0 0.0
  %10824 = vmatpush.msra.mxu0 0.0
  %10825 = vmatpush.msra.mxu0 0.0
  %10826 = vmatpush.msra.mxu0 0.0
  %10827 = vmatpush.msra.mxu0 0.0
  %10828 = vmatpush.msra.mxu0 0.0
  %10829 = vmatpush.msra.mxu0 0.0
  %10830 = vmatpush.msra.mxu0 0.0
  %10831 = vmatpush.msra.mxu0 0.0
  %10832 = vmatpush.msra.mxu0 %v9301
  %10833 = vmatpush.msra.mxu0 %v9289
  %10834 = vmatpush.msra.mxu0 %v9277
  %10835 = vmatpush.msra.mxu0 %v9265
  %10836 = vmatmul.f32.gmra.mxu0 %v10678
  %v10837 = vpop.f32.mrf.mxu0
  %v10838 = vadd.f32 %v10818, %v10837
  %10839 = vdwg.mxu0
  %10840 = vmatpush.msra.mxu0 %v9102
  %10841 = vmatpush.msra.mxu0 %v9090
  %10842 = vmatpush.msra.mxu0 %v9078
  %10843 = vmatpush.msra.mxu0 %v9066
  %10844 = vmatpush.msra.mxu0 %v8902
  %10845 = vmatpush.msra.mxu0 %v8890
  %10846 = vmatpush.msra.mxu0 %v8878
  %10847 = vmatpush.msra.mxu0 %v8866
  %10848 = vmatpush.msra.mxu0 %v8702
  %10849 = vmatpush.msra.mxu0 %v8690
  %10850 = vmatpush.msra.mxu0 %v8678
  %10851 = vmatpush.msra.mxu0 %v8666
  %10852 = vmatpush.msra.mxu0 %v8497
  %10853 = vmatpush.msra.mxu0 %v8484
  %10854 = vmatpush.msra.mxu0 %v8471
  %10855 = vmatpush.msra.mxu0 %v8458
  %10856 = vmatmul.f32.gmra.mxu0 %v10675
  %v10857 = vpop.f32.mrf.mxu0
  %v10858 = vadd.f32 0.0, %v10857
  %10859 = vdwg.mxu0
  %10860 = vmatpush.msra.mxu0 0.0
  %10861 = vmatpush.msra.mxu0 0.0
  %10862 = vmatpush.msra.mxu0 0.0
  %10863 = vmatpush.msra.mxu0 0.0
  %10864 = vmatpush.msra.mxu0 0.0
  %10865 = vmatpush.msra.mxu0 0.0
  %10866 = vmatpush.msra.mxu0 0.0
  %10867 = vmatpush.msra.mxu0 0.0
  %10868 = vmatpush.msra.mxu0 0.0
  %10869 = vmatpush.msra.mxu0 0.0
  %10870 = vmatpush.msra.mxu0 0.0
  %10871 = vmatpush.msra.mxu0 0.0
  %10872 = vmatpush.msra.mxu0 %v9302
  %10873 = vmatpush.msra.mxu0 %v9290
  %10874 = vmatpush.msra.mxu0 %v9278
  %10875 = vmatpush.msra.mxu0 %v9266
  %10876 = vmatmul.f32.gmra.mxu0 %v10678
  %v10877 = vpop.f32.mrf.mxu0
  %v10878 = vadd.f32 %v10858, %v10877
  %10879 = vdwg.mxu0
  %10880 = vmatpush.msra.mxu0 %v9103
  %10881 = vmatpush.msra.mxu0 %v9091
  %10882 = vmatpush.msra.mxu0 %v9079
  %10883 = vmatpush.msra.mxu0 %v9067
  %10884 = vmatpush.msra.mxu0 %v8903
  %10885 = vmatpush.msra.mxu0 %v8891
  %10886 = vmatpush.msra.mxu0 %v8879
  %10887 = vmatpush.msra.mxu0 %v8867
  %10888 = vmatpush.msra.mxu0 %v8703
  %10889 = vmatpush.msra.mxu0 %v8691
  %10890 = vmatpush.msra.mxu0 %v8679
  %10891 = vmatpush.msra.mxu0 %v8667
  %10892 = vmatpush.msra.mxu0 %v8498
  %10893 = vmatpush.msra.mxu0 %v8485
  %10894 = vmatpush.msra.mxu0 %v8472
  %10895 = vmatpush.msra.mxu0 %v8459
  %10896 = vmatmul.f32.gmra.mxu0 %v10675
  %v10897 = vpop.f32.mrf.mxu0
  %v10898 = vadd.f32 0.0, %v10897
  %10899 = vdwg.mxu0
  %10900 = vmatpush.msra.mxu0 0.0
  %10901 = vmatpush.msra.mxu0 0.0
  %10902 = vmatpush.msra.mxu0 0.0
  %10903 = vmatpush.msra.mxu0 0.0
  %10904 = vmatpush.msra.mxu0 0.0
  %10905 = vmatpush.msra.mxu0 0.0
  %10906 = vmatpush.msra.mxu0 0.0
  %10907 = vmatpush.msra.mxu0 0.0
  %10908 = vmatpush.msra.mxu0 0.0
  %10909 = vmatpush.msra.mxu0 0.0
  %10910 = vmatpush.msra.mxu0 0.0
  %10911 = vmatpush.msra.mxu0 0.0
  %10912 = vmatpush.msra.mxu0 %v9303
  %10913 = vmatpush.msra.mxu0 %v9291
  %10914 = vmatpush.msra.mxu0 %v9279
  %10915 = vmatpush.msra.mxu0 %v9267
  %10916 = vmatmul.f32.gmra.mxu0 %v10678
  %v10917 = vpop.f32.mrf.mxu0
  %v10918 = vadd.f32 %v10898, %v10917
  %10919 = vdwg.mxu0
  %10920 = vmatpush.msra.mxu0 %v9104
  %10921 = vmatpush.msra.mxu0 %v9092
  %10922 = vmatpush.msra.mxu0 %v9080
  %10923 = vmatpush.msra.mxu0 %v9068
  %10924 = vmatpush.msra.mxu0 %v8904
  %10925 = vmatpush.msra.mxu0 %v8892
  %10926 = vmatpush.msra.mxu0 %v8880
  %10927 = vmatpush.msra.mxu0 %v8868
  %10928 = vmatpush.msra.mxu0 %v8704
  %10929 = vmatpush.msra.mxu0 %v8692
  %10930 = vmatpush.msra.mxu0 %v8680
  %10931 = vmatpush.msra.mxu0 %v8668
  %10932 = vmatpush.msra.mxu0 %v8499
  %10933 = vmatpush.msra.mxu0 %v8486
  %10934 = vmatpush.msra.mxu0 %v8473
  %10935 = vmatpush.msra.mxu0 %v8460
  %10936 = vmatmul.f32.gmra.mxu0 %v10675
  %v10937 = vpop.f32.mrf.mxu0
  %v10938 = vadd.f32 0.0, %v10937
  %10939 = vdwg.mxu0
  %10940 = vmatpush.msra.mxu0 0.0
  %10941 = vmatpush.msra.mxu0 0.0
  %10942 = vmatpush.msra.mxu0 0.0
  %10943 = vmatpush.msra.mxu0 0.0
  %10944 = vmatpush.msra.mxu0 0.0
  %10945 = vmatpush.msra.mxu0 0.0
  %10946 = vmatpush.msra.mxu0 0.0
  %10947 = vmatpush.msra.mxu0 0.0
  %10948 = vmatpush.msra.mxu0 0.0
  %10949 = vmatpush.msra.mxu0 0.0
  %10950 = vmatpush.msra.mxu0 0.0
  %10951 = vmatpush.msra.mxu0 0.0
  %10952 = vmatpush.msra.mxu0 %v9304
  %10953 = vmatpush.msra.mxu0 %v9292
  %10954 = vmatpush.msra.mxu0 %v9280
  %10955 = vmatpush.msra.mxu0 %v9268
  %10956 = vmatmul.f32.gmra.mxu0 %v10678
  %v10957 = vpop.f32.mrf.mxu0
  %v10958 = vadd.f32 %v10938, %v10957
  %10959 = vdwg.mxu0
  %10960 = vmatpush.msra.mxu0 %v9105
  %10961 = vmatpush.msra.mxu0 %v9093
  %10962 = vmatpush.msra.mxu0 %v9081
  %10963 = vmatpush.msra.mxu0 %v9069
  %10964 = vmatpush.msra.mxu0 %v8905
  %10965 = vmatpush.msra.mxu0 %v8893
  %10966 = vmatpush.msra.mxu0 %v8881
  %10967 = vmatpush.msra.mxu0 %v8869
  %10968 = vmatpush.msra.mxu0 %v8705
  %10969 = vmatpush.msra.mxu0 %v8693
  %10970 = vmatpush.msra.mxu0 %v8681
  %10971 = vmatpush.msra.mxu0 %v8669
  %10972 = vmatpush.msra.mxu0 %v8500
  %10973 = vmatpush.msra.mxu0 %v8487
  %10974 = vmatpush.msra.mxu0 %v8474
  %10975 = vmatpush.msra.mxu0 %v8461
  %10976 = vmatmul.f32.gmra.mxu0 %v10675
  %v10977 = vpop.f32.mrf.mxu0
  %v10978 = vadd.f32 0.0, %v10977
  %10979 = vdwg.mxu0
  %10980 = vmatpush.msra.mxu0 0.0
  %10981 = vmatpush.msra.mxu0 0.0
  %10982 = vmatpush.msra.mxu0 0.0
  %10983 = vmatpush.msra.mxu0 0.0
  %10984 = vmatpush.msra.mxu0 0.0
  %10985 = vmatpush.msra.mxu0 0.0
  %10986 = vmatpush.msra.mxu0 0.0
  %10987 = vmatpush.msra.mxu0 0.0
  %10988 = vmatpush.msra.mxu0 0.0
  %10989 = vmatpush.msra.mxu0 0.0
  %10990 = vmatpush.msra.mxu0 0.0
  %10991 = vmatpush.msra.mxu0 0.0
  %10992 = vmatpush.msra.mxu0 %v9305
  %10993 = vmatpush.msra.mxu0 %v9293
  %10994 = vmatpush.msra.mxu0 %v9281
  %10995 = vmatpush.msra.mxu0 %v9269
  %10996 = vmatmul.f32.gmra.mxu0 %v10678
  %v10997 = vpop.f32.mrf.mxu0
  %v10998 = vadd.f32 %v10978, %v10997
  %10999 = vdwg.mxu0
  %v11000 = vadd.f32 %v10666, %v10718
  %v11001 = vadd.f32 %v10667, %v10758
  %v11002 = vadd.f32 %v10668, %v10798
  %v11003 = vadd.f32 %v10669, %v10838
  %v11004 = vadd.f32 %v10670, %v10878
  %v11005 = vadd.f32 %v10671, %v10918
  %v11006 = vadd.f32 %v10672, %v10958
  %v11007 = vadd.f32 %v10673, %v10998
  %11008 = vset.pattern.permute.xlu0 3
  %11009 = vperm.xlu0 %11008, %v23
  %v11010 = vpop.permute.xlu0 %11009
  %v11012 = vadd.f32 %v11000, %v11010
  %v11013 = vadd.f32 %v11001, %v11010
  %v11014 = vadd.f32 %v11002, %v11010
  %v11015 = vadd.f32 %v11003, %v11010
  %v11016 = vadd.f32 %v11004, %v11010
  %v11017 = vadd.f32 %v11005, %v11010
  %v11018 = vadd.f32 %v11006, %v11010
  %v11019 = vadd.f32 %v11007, %v11010
  %v11020 = vmax.f32 %v11012, 0.0
  %v11021 = vmax.f32 %v11013, 0.0
  %v11022 = vmax.f32 %v11014, 0.0
  %v11023 = vmax.f32 %v11015, 0.0
  %v11024 = vmax.f32 %v11016, 0.0
  %v11025 = vmax.f32 %v11017, 0.0
  %v11026 = vmax.f32 %v11018, 0.0
  %v11027 = vmax.f32 %v11019, 0.0
  %11028 = vst [vmem:[%s6] sm:$0xff] %v11020
  %11029 = vst [vmem:[%s6 + $0x8] sm:$0xff] %v11021
  %11030 = vst [vmem:[%s6 + $0x10] sm:$0xff] %v11022
  %11031 = vst [vmem:[%s6 + $0x18] sm:$0xff] %v11023
  %11032 = vst [vmem:[%s6 + $0x20] sm:$0xff] %v11024
  %11033 = vst [vmem:[%s6 + $0x28] sm:$0xff] %v11025
  %11034 = vst [vmem:[%s6 + $0x30] sm:$0xff] %v11026
  %11035 = vst [vmem:[%s6 + $0x38] sm:$0xff] %v11027
  // Predicated region
  $region26: #{decoder_ca_pallas.1} parent=0 // pred_check
    _
  $region27: #{decoder_ca_pallas.1} parent=0 // pred_check_branch
    %11037 = sbr.rel (0) target = $region29
  $region28: #{decoder_ca_pallas.1} parent=0 // pred_region
    _
  $region29: #{decoder_ca_pallas.1} parent=0 // pred_fallthru
    _
  // Predicated region
  $region30: #{decoder_ca_pallas.1} parent=0 // pred_check
    _
  $region31: #{decoder_ca_pallas.1} parent=0 // pred_check_branch
    %11039 = sbr.rel (0) target = $region33
  $region32: #{decoder_ca_pallas.1} parent=0 // pred_region
    _
  $region33: #{decoder_ca_pallas.1} parent=0 // pred_fallthru
    _

</llo_original>
